<compile_context>
chip_gen: v5e
topology: v5e:2x2
jax: 0.10.0
libtpu: 0.0.40
codegen_flags: <defaults>
</compile_context>

<pallas_src>
import jax
import jax.numpy as jnp
from jax.experimental import pallas as pl
from jax.experimental.pallas import tpu as pltpu

KH = KW = 4
LRELU_A = 0.2


# ---------------------------------------------------------------------------
# per-generation VMEM budget (don't share v7x's 64 MiB budget on v5e/v6e)
# ---------------------------------------------------------------------------
def _vmem_budget():
    kind = ""
    try:
        kind = jax.devices()[0].device_kind.lower()
    except Exception:
        pass
    if "v7" in kind:                       # 64 MiB physical per TensorCore
        return 24 << 20, 40 << 20
    if "v5" in kind or "v6" in kind:       # 128 MiB physical
        return 40 << 20, 64 << 20
    return 12 << 20, None                  # unknown backend: stay conservative


def _padded_bytes(rows, cols, itemsize):
    # (8, 128) tile padding estimate for a 2-D VMEM slab
    return (-(-rows // 8) * 8) * (-(-cols // 128) * 128) * itemsize


# TODO(synk): for production image sizes on v7x, halo-tile the resident input
# along H (manual make_async_copy window) instead of keeping the whole padded
# image per batch element in VMEM; at the test shapes TH == Ho always.
def _pick_row_tile(Ho, Wo_pad, Kx, Coutx, P, Hb, budget):
    # double-buffered resident inputs + weights
    fixed = 2 * P * Hb * (_padded_bytes(Wo_pad, Kx, 2) + _padded_bytes(Wo_pad, KW, 4))
    fixed += 2 * (KH * _padded_bytes(Kx, Coutx, 2) + KH * _padded_bytes(1, KW, 4)
                  + _padded_bytes(1, Coutx, 4) + _padded_bytes(1, 1, 4))
    for th in range(Ho, 0, -1):
        if Ho % th:
            continue
        m = th * Wo_pad
        per_tile = 2 * (_padded_bytes(m, Coutx, 2) + _padded_bytes(m, 1, 4))   # outputs
        per_tile += _padded_bytes(m, Coutx, 4) + _padded_bytes(m, Kx, 4)       # acc + patch
        if fixed + per_tile <= budget:
            return th
    return 1


# ---------------------------------------------------------------------------
# host-side prep: zero pad, dx->channel pack, row-phase split for stride 2
# ---------------------------------------------------------------------------
def _pack_input(x, stride, Wo_pad, dtype):
    """(N,H,W,C) -> (N, P, Hb, Wo_pad, 4*C).

    1-px zero pad; the 4 kernel-column taps are packed into the channel axis
    (index dx*C + ch); for stride 2 the rows are split into 2 phases so every
    in-kernel access is a contiguous whole-row slice."""
    N, H, W, C = x.shape
    Wo = (W + 2 - KW) // stride + 1
    xp = jnp.pad(x, ((0, 0), (1, 1), (1, 1), (0, 0)))
    cols = [xp[:, :, dx: dx + stride * (Wo - 1) + 1: stride, :] for dx in range(KW)]
    xc = jnp.concatenate(cols, axis=-1)                      # (N, Hp, Wo, 4*C)
    if stride == 1:
        xb = xc[:, None]                                     # (N, 1, Hp, Wo, 4C)
        rows = tuple((0, i) for i in range(KH))              # (phase, dy) per kernel row
    elif stride == 2:
        if xc.shape[1] % 2:
            xc = jnp.pad(xc, ((0, 0), (0, 1), (0, 0), (0, 0)))
        Hb = xc.shape[1] // 2
        xb = xc.reshape(N, Hb, 2, Wo, 4 * C).transpose(0, 2, 1, 3, 4)
        rows = tuple((i % 2, i // 2) for i in range(KH))
    else:
        raise NotImplementedError("TexD only uses stride 1 or 2")
    if Wo_pad > Wo:
        xb = jnp.pad(xb, ((0, 0), (0, 0), (0, 0), (0, Wo_pad - Wo), (0, 0)))
    return xb.astype(dtype), rows


def _pack_weight(w, dtype):
    """(Cout, Cin, 4, 4) OIHW -> (4, 4*Cin, Cout); contraction row = dx*Cin + cin."""
    Cout, Cin = w.shape[0], w.shape[1]
    wt = jnp.transpose(w, (2, 3, 1, 0)).reshape(KH, KW * Cin, Cout)
    return wt.astype(dtype)


# ---------------------------------------------------------------------------
# fused per-layer kernel: x conv (MXU, bf16 ops / f32 acc) + mask conv (VPU)
# ---------------------------------------------------------------------------
def _make_pair_kernel(rows, TH, Wo_pad, Kx, Coutx, act):
    M = TH * Wo_pad

    def kernel(x_ref, m_ref, wx_ref, wm_ref, bx_ref, bm_ref, ox_ref, om_ref):
        # x_ref: (P, Hb, Wo_pad, Kx) bf16   m_ref: (P, Hb, Wo_pad, 4) f32
        # wx_ref: (4, Kx, Coutx) bf16       wm_ref: (4, 1, 4) f32
        # bx_ref: (1, Coutx) f32            bm_ref: (1, 1) f32
        # ox_ref: (M, Coutx)                om_ref: (M, 1) f32
        row0 = pl.program_id(1) * TH

        accx = None
        accm = None
        for i, (ph, dy) in enumerate(rows):
            # whole-row slice: page-axis offset only -> no sublane misalignment
            px = x_ref[ph, pl.ds(row0 + dy, TH), :, :].reshape(M, Kx)
            d = jnp.dot(px, wx_ref[i], preferred_element_type=jnp.float32)
            accx = d if accx is None else accx + d

            pm = m_ref[ph, pl.ds(row0 + dy, TH), :, :].reshape(M, KW)
            pm = pm * wm_ref[i]                       # (M,4)*(1,4) on the VPU
            accm = pm if accm is None else accm + pm

        accx = accx + bx_ref[...]
        if act == "lrelu":
            # CustomLeakyReLU: 0.5*(1+a)*x + 0.5*(1-a)*|x|
            accx = 0.5 * (1.0 + LRELU_A) * accx + 0.5 * (1.0 - LRELU_A) * jnp.abs(accx)
        elif act == "sigmoid":
            accx = jax.nn.sigmoid(accx)
        ox_ref[...] = accx.astype(ox_ref.dtype)

        accm = jnp.sum(accm, axis=-1, keepdims=True) + bm_ref[...]
        om_ref[...] = accm.astype(om_ref.dtype)

    return kernel


# ---------------------------------------------------------------------------
# one fused TexD layer: CustomConv(+activation) on x and CustomConvMask on m
# ---------------------------------------------------------------------------
def conv_pair(x, m, wx, bx, wm, bm, *, stride, act, out_dtype=jnp.bfloat16):
    """x: (N,H,W,Cin), m: (N,H,W,1) NHWC.  wx: (Coutx,Cin,4,4), wm: (1,1,4,4).
    Returns (x_out (N,Ho,Wo,Coutx) out_dtype, m_out (N,Ho,Wo,1) float32)."""
    N, H, W, Cin = x.shape
    assert m.shape == (N, H, W, 1)
    Coutx = wx.shape[0]
    Ho = (H + 2 - KH) // stride + 1
    Wo = (W + 2 - KW) // stride + 1
    # multiple of 16 -> the in-kernel flatten is a free re-label even for bf16
    Wo_pad = max(16, -(-Wo // 16) * 16)

    xb, rows = _pack_input(x, stride, Wo_pad, jnp.bfloat16)
    mb, _ = _pack_input(m, stride, Wo_pad, jnp.float32)
    _, P, Hb, _, Kx = xb.shape

    wxp = _pack_weight(wx, jnp.bfloat16)                 # (4, 4*Cin, Coutx)
    wmp = wm.reshape(KH, 1, KW).astype(jnp.float32)      # (4, 1, 4)
    bxp = bx.reshape(1, Coutx).astype(jnp.float32)
    bmp = bm.reshape(1, 1).astype(jnp.float32)

    budget, vmem_limit = _vmem_budget()
    TH = _pick_row_tile(Ho, Wo_pad, Kx, Coutx, P, Hb, budget)
    R = Ho // TH

    kernel = _make_pair_kernel(rows, TH, Wo_pad, Kx, Coutx, act)

    cp_kwargs = dict(dimension_semantics=("parallel", "parallel"))
    if vmem_limit is not None:
        cp_kwargs["vmem_limit_bytes"] = int(vmem_limit)

    ox, om = pl.pallas_call(
        kernel,
        out_shape=(
            jax.ShapeDtypeStruct((N, Ho * Wo_pad, Coutx), out_dtype),
            jax.ShapeDtypeStruct((N, Ho * Wo_pad, 1), jnp.float32),
        ),
        grid_spec=pl.GridSpec(
            grid=(N, R),
            in_specs=[
                # packed inputs: one batch element per grid step, resident
                # across the row-tile axis
                pl.BlockSpec((None, P, Hb, Wo_pad, Kx), lambda n, r: (n, 0, 0, 0, 0)),
                pl.BlockSpec((None, P, Hb, Wo_pad, KW), lambda n, r: (n, 0, 0, 0, 0)),
                # small weights + biases stay resident in VMEM
                pl.BlockSpec((KH, Kx, Coutx), lambda n, r: (0, 0, 0)),
                pl.BlockSpec((KH, 1, KW), lambda n, r: (0, 0, 0)),
                pl.BlockSpec((1, Coutx), lambda n, r: (0, 0)),
                pl.BlockSpec((1, 1), lambda n, r: (0, 0)),
            ],
            out_specs=[
                pl.BlockSpec((None, TH * Wo_pad, Coutx), lambda n, r: (n, r, 0)),
                pl.BlockSpec((None, TH * Wo_pad, 1), lambda n, r: (n, r, 0)),
            ],
        ),
        compiler_params=pltpu.CompilerParams(**cp_kwargs),
    )(xb, mb, wxp, wmp, bxp, bmp)

    # free reshape + cheap slice dropping the lane-padding columns; stays NHWC
    x_out = ox.reshape(N, Ho, Wo_pad, Coutx)[:, :, :Wo, :]
    m_out = om.reshape(N, Ho, Wo_pad, 1)[:, :, :Wo, :]
    return x_out, m_out


# ---------------------------------------------------------------------------
# full TexD forward (NHWC internally, NCHW at the module boundary)
# ---------------------------------------------------------------------------
def texd_forward(params, inp_nchw, mask_nchw):
    x = jnp.transpose(inp_nchw, (0, 2, 3, 1))
    m = jnp.transpose(mask_nchw, (0, 2, 3, 1))

    x, m = conv_pair(x, m, params["conv1"]["w"], params["conv1"]["b"],
                     params["conv_mask1"]["w"], params["conv_mask1"]["b"],
                     stride=2, act="lrelu")
    for i, s in enumerate((2, 2, 1)):          # n_layers = 3, stride 1 on last
        x, m = conv_pair(x, m, params["convs"][i]["w"], params["convs"][i]["b"],
                         params["conv_masks"][i]["w"], params["conv_masks"][i]["b"],
                         stride=s, act="lrelu")
    out, mc = conv_pair(x, m, params["final_conv"]["w"], params["final_conv"]["b"],
                        params["final_conv_mask"]["w"], params["final_conv_mask"]["b"],
                        stride=1, act="sigmoid", out_dtype=jnp.float32)
    out_mask = (mc > 0.1).astype(jnp.float32)

    return (jnp.transpose(out, (0, 3, 1, 2)),
            jnp.transpose(out_mask, (0, 3, 1, 2)))


# ---------------------------------------------------------------------------
# parameter init mirroring the PyTorch module
# ---------------------------------------------------------------------------
def init_texd_params(key):
    def conv_init(k, cin, cout):
        kw_, kb_ = jax.random.split(k)
        w = 0.02 * jax.random.normal(kw_, (cout, cin, 4, 4), dtype=jnp.float32)
        bound = 1.0 / float((cin * 16) ** 0.5)
        b = jax.random.uniform(kb_, (cout,), dtype=jnp.float32,
                               minval=-bound, maxval=bound)
        return {"w": w, "b": b}

    def mask_init(k, cin=1):
        w = jnp.full((1, cin, 4, 4), 1.0 / 16.0, dtype=jnp.float32)
        bound = 1.0 / float((cin * 16) ** 0.5)
        b = jax.random.uniform(k, (1,), dtype=jnp.float32,
                               minval=-bound, maxval=bound)
        return {"w": w, "b": b}

    keys = jax.random.split(key, 10)
    ndf = 64
    params = {"conv1": conv_init(keys[0], 6, ndf),
              "conv_mask1": mask_init(keys[1]),
              "convs": [], "conv_masks": []}
    in_ch = ndf
    for i in range(3):
        out_ch = ndf * min(2 ** (i + 1), 2)            # = 128 every layer
        params["convs"].append(conv_init(keys[2 + 2 * i], in_ch, out_ch))
        params["conv_masks"].append(mask_init(keys[3 + 2 * i]))
        in_ch = out_ch
    params["final_conv"] = conv_init(keys[8], in_ch, 1)
    params["final_conv_mask"] = mask_init(keys[9])
    return params


# ---------------------------------------------------------------------------
# pure-JAX reference (lax.conv, HIGHEST precision) for correctness check
# ---------------------------------------------------------------------------
def _conv_ref(x, w, b, stride):
    xp = jnp.pad(x, ((0, 0), (0, 0), (1, 1), (1, 1)))
    y = jax.lax.conv_general_dilated(
        xp, w, window_strides=(stride, stride), padding="VALID",
        dimension_numbers=("NCHW", "OIHW", "NCHW"),
        precision=jax.lax.Precision.HIGHEST)
    return y + b.reshape(1, -1, 1, 1)


def _lrelu_ref(x, a=LRELU_A):
    return 0.5 * (1 + a) * x + 0.5 * (1 - a) * jnp.abs(x)


def texd_reference(params, inp, mask):
    x = _lrelu_ref(_conv_ref(inp, params["conv1"]["w"], params["conv1"]["b"], 2))
    m = _conv_ref(mask, params["conv_mask1"]["w"], params["conv_mask1"]["b"], 2)
    for i, s in enumerate((2, 2, 1)):
        x = _lrelu_ref(_conv_ref(x, params["convs"][i]["w"],
                                 params["convs"][i]["b"], s))
        m = _conv_ref(m, params["conv_masks"][i]["w"],
                      params["conv_masks"][i]["b"], s)
    out = jax.nn.sigmoid(_conv_ref(x, params["final_conv"]["w"],
                                   params["final_conv"]["b"], 1))
    mc = _conv_ref(m, params["final_conv_mask"]["w"],
                   params["final_conv_mask"]["b"], 1)
    return out, (mc > 0.1).astype(jnp.float32), mc


if __name__ == "__main__":
    key = jax.random.PRNGKey(0)
    kp, kx, km = jax.random.split(key, 3)
    params = init_texd_params(kp)

    # Smallest spatial size the 5-deep k=4 conv stack supports.
    N, H, W = 2, 32, 32
    x = jax.random.normal(kx, (N, 6, H, W), dtype=jnp.float32)
    mask = (jax.random.uniform(km, (N, 1, H, W)) > 0.3).astype(jnp.float32)

    fwd = jax.jit(texd_forward)
    out, out_mask = jax.block_until_ready(fwd(params, x, mask))

    ref_out, ref_mask, ref_mc = texd_reference(params, x, mask)

    assert out.shape == ref_out.shape == (N, 1, 2, 2), (out.shape, ref_out.shape)
    assert out_mask.shape == ref_mask.shape == (N, 1, 2, 2)
    # bf16 MXU operands / f32 accumulation vs a Precision.HIGHEST f32 reference.
    assert jnp.allclose(out, ref_out, atol=1e-2, rtol=1e-2), \
        float(jnp.max(jnp.abs(out - ref_out)))
    # hard 0.1 threshold: only require agreement where the reference is safely
    # away from the threshold (robustness, not a functional difference).
    safe = jnp.abs(ref_mc - 0.1) > 1e-3
    assert bool(jnp.all((out_mask == ref_mask) | ~safe))

    print("KERNEL_OK")
</pallas_src>

<mosaic_0001>
module attributes {stable_mosaic.version = 11 : i64} {
  func.func @kernel(%arg0: i32, %arg1: i32, %arg2: memref<1x2x17x16x24xbf16, #tpu.memory_space<vmem>>, %arg3: memref<1x2x17x16x4xf32, #tpu.memory_space<vmem>>, %arg4: memref<4x24x64xbf16, #tpu.memory_space<vmem>>, %arg5: memref<4x1x4xf32, #tpu.memory_space<vmem>>, %arg6: memref<1x64xf32, #tpu.memory_space<vmem>>, %arg7: memref<1x1xf32, #tpu.memory_space<vmem>>, %arg8: memref<1x256x64xbf16, #tpu.memory_space<vmem>>, %arg9: memref<1x256x1xf32, #tpu.memory_space<vmem>>) attributes {dimension_semantics = [#tpu.dimension_semantics<parallel>, #tpu.dimension_semantics<parallel>], iteration_bounds = array<i64: 2, 1>, scalar_prefetch = 0 : i64, scratch_operands = 0 : i64, tpu.core_type = #tpu.core_type<tc>, window_params = [{transform_indices = @transform_0, window_bounds = array<i64: 1, 2, 17, 16, 24>}, {transform_indices = @transform_1, window_bounds = array<i64: 1, 2, 17, 16, 4>}, {pipeline_mode = #tpu.pipeline_mode<synchronous>, transform_indices = @transform_2, window_bounds = array<i64: 4, 24, 64>}, {pipeline_mode = #tpu.pipeline_mode<synchronous>, transform_indices = @transform_3, window_bounds = array<i64: 4, 1, 4>}, {pipeline_mode = #tpu.pipeline_mode<synchronous>, transform_indices = @transform_4, window_bounds = array<i64: 1, 64>}, {pipeline_mode = #tpu.pipeline_mode<synchronous>, transform_indices = @transform_5, window_bounds = array<i64: 1, 1>}, {transform_indices = @transform_6, window_bounds = array<i64: 1, 256, 64>}, {transform_indices = @transform_7, window_bounds = array<i64: 1, 256, 1>}]} {
    %c16_i32 = arith.constant 16 : i32
    %0 = arith.muli %arg1, %c16_i32 : i32
    %c0_i32 = arith.constant 0 : i32
    %1 = arith.addi %0, %c0_i32 : i32
    %c0 = arith.constant 0 : index
    %c0_0 = arith.constant 0 : index
    %2 = arith.index_cast %1 : i32 to index
    %c0_1 = arith.constant 0 : index
    %c0_2 = arith.constant 0 : index
    %3 = vector.load %arg2[%c0, %c0_0, %2, %c0_1, %c0_2] : memref<1x2x17x16x24xbf16, #tpu.memory_space<vmem>>, vector<1x1x16x16x24xbf16>
    %4 = vector.shape_cast %3 : vector<1x1x16x16x24xbf16> to vector<16x16x24xbf16>
    %5 = vector.shape_cast %4 : vector<16x16x24xbf16> to vector<256x24xbf16>
    %c0_3 = arith.constant 0 : index
    %c0_4 = arith.constant 0 : index
    %c0_5 = arith.constant 0 : index
    %6 = vector.load %arg4[%c0_3, %c0_4, %c0_5] : memref<4x24x64xbf16, #tpu.memory_space<vmem>>, vector<1x24x64xbf16>
    %7 = vector.shape_cast %6 : vector<1x24x64xbf16> to vector<24x64xbf16>
    %cst = arith.constant dense<0.000000e+00> : vector<256x64xf32>
    %8 = tpu.matmul %5, %7, %cst {dimension_numbers = #tpu.dot_dimension_numbers<[1], [0], [0], [1], [0, 0, 1, 1], [], []>} : vector<256x24xbf16>, vector<24x64xbf16>, vector<256x64xf32> -> vector<256x64xf32>
    %c0_i32_6 = arith.constant 0 : i32
    %9 = arith.addi %0, %c0_i32_6 : i32
    %c0_7 = arith.constant 0 : index
    %c0_8 = arith.constant 0 : index
    %10 = arith.index_cast %9 : i32 to index
    %c0_9 = arith.constant 0 : index
    %c0_10 = arith.constant 0 : index
    %11 = vector.load %arg3[%c0_7, %c0_8, %10, %c0_9, %c0_10] : memref<1x2x17x16x4xf32, #tpu.memory_space<vmem>>, vector<1x1x16x16x4xf32>
    %12 = vector.shape_cast %11 : vector<1x1x16x16x4xf32> to vector<16x16x4xf32>
    %13 = vector.shape_cast %12 : vector<16x16x4xf32> to vector<256x4xf32>
    %c0_11 = arith.constant 0 : index
    %c0_12 = arith.constant 0 : index
    %c0_13 = arith.constant 0 : index
    %14 = vector.load %arg5[%c0_11, %c0_12, %c0_13] : memref<4x1x4xf32, #tpu.memory_space<vmem>>, vector<1x1x4xf32>
    %15 = vector.shape_cast %14 : vector<1x1x4xf32> to vector<1x4xf32>
    %16 = vector.broadcast %15 : vector<1x4xf32> to vector<256x4xf32>
    %17 = arith.mulf %13, %16 : vector<256x4xf32>
    %c0_i32_14 = arith.constant 0 : i32
    %18 = arith.addi %0, %c0_i32_14 : i32
    %c0_15 = arith.constant 0 : index
    %c1 = arith.constant 1 : index
    %19 = arith.index_cast %18 : i32 to index
    %c0_16 = arith.constant 0 : index
    %c0_17 = arith.constant 0 : index
    %20 = vector.load %arg2[%c0_15, %c1, %19, %c0_16, %c0_17] : memref<1x2x17x16x24xbf16, #tpu.memory_space<vmem>>, vector<1x1x16x16x24xbf16>
    %21 = vector.shape_cast %20 : vector<1x1x16x16x24xbf16> to vector<16x16x24xbf16>
    %22 = vector.shape_cast %21 : vector<16x16x24xbf16> to vector<256x24xbf16>
    %c1_18 = arith.constant 1 : index
    %c0_19 = arith.constant 0 : index
    %c0_20 = arith.constant 0 : index
    %23 = vector.load %arg4[%c1_18, %c0_19, %c0_20] : memref<4x24x64xbf16, #tpu.memory_space<vmem>>, vector<1x24x64xbf16>
    %24 = vector.shape_cast %23 : vector<1x24x64xbf16> to vector<24x64xbf16>
    %cst_21 = arith.constant dense<0.000000e+00> : vector<256x64xf32>
    %25 = tpu.matmul %22, %24, %cst_21 {dimension_numbers = #tpu.dot_dimension_numbers<[1], [0], [0], [1], [0, 0, 1, 1], [], []>} : vector<256x24xbf16>, vector<24x64xbf16>, vector<256x64xf32> -> vector<256x64xf32>
    %26 = arith.addf %8, %25 : vector<256x64xf32>
    %c0_i32_22 = arith.constant 0 : i32
    %27 = arith.addi %0, %c0_i32_22 : i32
    %c0_23 = arith.constant 0 : index
    %c1_24 = arith.constant 1 : index
    %28 = arith.index_cast %27 : i32 to index
    %c0_25 = arith.constant 0 : index
    %c0_26 = arith.constant 0 : index
    %29 = vector.load %arg3[%c0_23, %c1_24, %28, %c0_25, %c0_26] : memref<1x2x17x16x4xf32, #tpu.memory_space<vmem>>, vector<1x1x16x16x4xf32>
    %30 = vector.shape_cast %29 : vector<1x1x16x16x4xf32> to vector<16x16x4xf32>
    %31 = vector.shape_cast %30 : vector<16x16x4xf32> to vector<256x4xf32>
    %c1_27 = arith.constant 1 : index
    %c0_28 = arith.constant 0 : index
    %c0_29 = arith.constant 0 : index
    %32 = vector.load %arg5[%c1_27, %c0_28, %c0_29] : memref<4x1x4xf32, #tpu.memory_space<vmem>>, vector<1x1x4xf32>
    %33 = vector.shape_cast %32 : vector<1x1x4xf32> to vector<1x4xf32>
    %34 = vector.broadcast %33 : vector<1x4xf32> to vector<256x4xf32>
    %35 = arith.mulf %31, %34 : vector<256x4xf32>
    %36 = arith.addf %17, %35 : vector<256x4xf32>
    %c1_i32 = arith.constant 1 : i32
    %37 = arith.addi %0, %c1_i32 : i32
    %c0_30 = arith.constant 0 : index
    %c0_31 = arith.constant 0 : index
    %38 = arith.index_cast %37 : i32 to index
    %c0_32 = arith.constant 0 : index
    %c0_33 = arith.constant 0 : index
    %39 = vector.load %arg2[%c0_30, %c0_31, %38, %c0_32, %c0_33] : memref<1x2x17x16x24xbf16, #tpu.memory_space<vmem>>, vector<1x1x16x16x24xbf16>
    %40 = vector.shape_cast %39 : vector<1x1x16x16x24xbf16> to vector<16x16x24xbf16>
    %41 = vector.shape_cast %40 : vector<16x16x24xbf16> to vector<256x24xbf16>
    %c2 = arith.constant 2 : index
    %c0_34 = arith.constant 0 : index
    %c0_35 = arith.constant 0 : index
    %42 = vector.load %arg4[%c2, %c0_34, %c0_35] : memref<4x24x64xbf16, #tpu.memory_space<vmem>>, vector<1x24x64xbf16>
    %43 = vector.shape_cast %42 : vector<1x24x64xbf16> to vector<24x64xbf16>
    %cst_36 = arith.constant dense<0.000000e+00> : vector<256x64xf32>
    %44 = tpu.matmul %41, %43, %cst_36 {dimension_numbers = #tpu.dot_dimension_numbers<[1], [0], [0], [1], [0, 0, 1, 1], [], []>} : vector<256x24xbf16>, vector<24x64xbf16>, vector<256x64xf32> -> vector<256x64xf32>
    %45 = arith.addf %26, %44 : vector<256x64xf32>
    %c1_i32_37 = arith.constant 1 : i32
    %46 = arith.addi %0, %c1_i32_37 : i32
    %c0_38 = arith.constant 0 : index
    %c0_39 = arith.constant 0 : index
    %47 = arith.index_cast %46 : i32 to index
    %c0_40 = arith.constant 0 : index
    %c0_41 = arith.constant 0 : index
    %48 = vector.load %arg3[%c0_38, %c0_39, %47, %c0_40, %c0_41] : memref<1x2x17x16x4xf32, #tpu.memory_space<vmem>>, vector<1x1x16x16x4xf32>
    %49 = vector.shape_cast %48 : vector<1x1x16x16x4xf32> to vector<16x16x4xf32>
    %50 = vector.shape_cast %49 : vector<16x16x4xf32> to vector<256x4xf32>
    %c2_42 = arith.constant 2 : index
    %c0_43 = arith.constant 0 : index
    %c0_44 = arith.constant 0 : index
    %51 = vector.load %arg5[%c2_42, %c0_43, %c0_44] : memref<4x1x4xf32, #tpu.memory_space<vmem>>, vector<1x1x4xf32>
    %52 = vector.shape_cast %51 : vector<1x1x4xf32> to vector<1x4xf32>
    %53 = vector.broadcast %52 : vector<1x4xf32> to vector<256x4xf32>
    %54 = arith.mulf %50, %53 : vector<256x4xf32>
    %55 = arith.addf %36, %54 : vector<256x4xf32>
    %c1_i32_45 = arith.constant 1 : i32
    %56 = arith.addi %0, %c1_i32_45 : i32
    %c0_46 = arith.constant 0 : index
    %c1_47 = arith.constant 1 : index
    %57 = arith.index_cast %56 : i32 to index
    %c0_48 = arith.constant 0 : index
    %c0_49 = arith.constant 0 : index
    %58 = vector.load %arg2[%c0_46, %c1_47, %57, %c0_48, %c0_49] : memref<1x2x17x16x24xbf16, #tpu.memory_space<vmem>>, vector<1x1x16x16x24xbf16>
    %59 = vector.shape_cast %58 : vector<1x1x16x16x24xbf16> to vector<16x16x24xbf16>
    %60 = vector.shape_cast %59 : vector<16x16x24xbf16> to vector<256x24xbf16>
    %c3 = arith.constant 3 : index
    %c0_50 = arith.constant 0 : index
    %c0_51 = arith.constant 0 : index
    %61 = vector.load %arg4[%c3, %c0_50, %c0_51] : memref<4x24x64xbf16, #tpu.memory_space<vmem>>, vector<1x24x64xbf16>
    %62 = vector.shape_cast %61 : vector<1x24x64xbf16> to vector<24x64xbf16>
    %cst_52 = arith.constant dense<0.000000e+00> : vector<256x64xf32>
    %63 = tpu.matmul %60, %62, %cst_52 {dimension_numbers = #tpu.dot_dimension_numbers<[1], [0], [0], [1], [0, 0, 1, 1], [], []>} : vector<256x24xbf16>, vector<24x64xbf16>, vector<256x64xf32> -> vector<256x64xf32>
    %64 = arith.addf %45, %63 : vector<256x64xf32>
    %c1_i32_53 = arith.constant 1 : i32
    %65 = arith.addi %0, %c1_i32_53 : i32
    %c0_54 = arith.constant 0 : index
    %c1_55 = arith.constant 1 : index
    %66 = arith.index_cast %65 : i32 to index
    %c0_56 = arith.constant 0 : index
    %c0_57 = arith.constant 0 : index
    %67 = vector.load %arg3[%c0_54, %c1_55, %66, %c0_56, %c0_57] : memref<1x2x17x16x4xf32, #tpu.memory_space<vmem>>, vector<1x1x16x16x4xf32>
    %68 = vector.shape_cast %67 : vector<1x1x16x16x4xf32> to vector<16x16x4xf32>
    %69 = vector.shape_cast %68 : vector<16x16x4xf32> to vector<256x4xf32>
    %c3_58 = arith.constant 3 : index
    %c0_59 = arith.constant 0 : index
    %c0_60 = arith.constant 0 : index
    %70 = vector.load %arg5[%c3_58, %c0_59, %c0_60] : memref<4x1x4xf32, #tpu.memory_space<vmem>>, vector<1x1x4xf32>
    %71 = vector.shape_cast %70 : vector<1x1x4xf32> to vector<1x4xf32>
    %72 = vector.broadcast %71 : vector<1x4xf32> to vector<256x4xf32>
    %73 = arith.mulf %69, %72 : vector<256x4xf32>
    %74 = arith.addf %55, %73 : vector<256x4xf32>
    %c0_61 = arith.constant 0 : index
    %c0_62 = arith.constant 0 : index
    %75 = vector.load %arg6[%c0_61, %c0_62] : memref<1x64xf32, #tpu.memory_space<vmem>>, vector<1x64xf32>
    %76 = vector.broadcast %75 : vector<1x64xf32> to vector<256x64xf32>
    %77 = arith.addf %64, %76 : vector<256x64xf32>
    %cst_63 = arith.constant 6.000000e-01 : f32
    %78 = vector.broadcast %cst_63 : f32 to vector<256x64xf32>
    %79 = arith.mulf %78, %77 : vector<256x64xf32>
    %80 = math.absf %77 : vector<256x64xf32>
    %cst_64 = arith.constant 4.000000e-01 : f32
    %81 = vector.broadcast %cst_64 : f32 to vector<256x64xf32>
    %82 = arith.mulf %81, %80 : vector<256x64xf32>
    %83 = arith.addf %79, %82 : vector<256x64xf32>
    %84 = arith.truncf %83 : vector<256x64xf32> to vector<256x64xbf16>
    %c0_65 = arith.constant 0 : index
    %c0_66 = arith.constant 0 : index
    %c0_67 = arith.constant 0 : index
    %85 = vector.load %arg8[%c0_65, %c0_66, %c0_67] : memref<1x256x64xbf16, #tpu.memory_space<vmem>>, vector<1x256x64xbf16>
    %86 = vector.shape_cast %85 : vector<1x256x64xbf16> to vector<256x64xbf16>
    %87 = vector.shape_cast %84 : vector<256x64xbf16> to vector<1x256x64xbf16>
    tpu.vector_store %arg8[%c0_65, %c0_66, %c0_67], %87 {strides = array<i32>} : memref<1x256x64xbf16, #tpu.memory_space<vmem>>, vector<1x256x64xbf16>,
    %cst_68 = arith.constant dense<0.000000e+00> : vector<256xf32>
    %88 = vector.multi_reduction <add>, %74, %cst_68 [1] : vector<256x4xf32> to vector<256xf32>
    %89 = vector.shape_cast %88 : vector<256xf32> to vector<256x1xf32>
    %c0_69 = arith.constant 0 : index
    %c0_70 = arith.constant 0 : index
    %90 = vector.load %arg7[%c0_69, %c0_70] : memref<1x1xf32, #tpu.memory_space<vmem>>, vector<1x1xf32>
    %91 = vector.broadcast %90 : vector<1x1xf32> to vector<256x1xf32>
    %92 = arith.addf %89, %91 : vector<256x1xf32>
    %c0_71 = arith.constant 0 : index
    %c0_72 = arith.constant 0 : index
    %c0_73 = arith.constant 0 : index
    %93 = vector.load %arg9[%c0_71, %c0_72, %c0_73] : memref<1x256x1xf32, #tpu.memory_space<vmem>>, vector<1x256x1xf32>
    %94 = vector.shape_cast %93 : vector<1x256x1xf32> to vector<256x1xf32>
    %95 = vector.shape_cast %92 : vector<256x1xf32> to vector<1x256x1xf32>
    tpu.vector_store %arg9[%c0_71, %c0_72, %c0_73], %95 {strides = array<i32>} : memref<1x256x1xf32, #tpu.memory_space<vmem>>, vector<1x256x1xf32>,
    return
  }
  func.func @transform_0(%arg0: i32, %arg1: i32) -> (i32, i32, i32, i32, i32) {
    %c0_i32 = arith.constant 0 : i32
    %c0_i32_0 = arith.constant 0 : i32
    %c0_i32_1 = arith.constant 0 : i32
    %c0_i32_2 = arith.constant 0 : i32
    %c0_i32_3 = arith.constant 0 : i32
    return %arg0, %c0_i32, %c0_i32_0, %c0_i32_1, %c0_i32_2 : i32, i32, i32, i32, i32
  }
  func.func @transform_1(%arg0: i32, %arg1: i32) -> (i32, i32, i32, i32, i32) {
    %c0_i32 = arith.constant 0 : i32
    %c0_i32_0 = arith.constant 0 : i32
    %c0_i32_1 = arith.constant 0 : i32
    %c0_i32_2 = arith.constant 0 : i32
    %c0_i32_3 = arith.constant 0 : i32
    return %arg0, %c0_i32, %c0_i32_0, %c0_i32_1, %c0_i32_2 : i32, i32, i32, i32, i32
  }
  func.func @transform_2(%arg0: i32, %arg1: i32) -> (i32, i32, i32) {
    %c0_i32 = arith.constant 0 : i32
    %c0_i32_0 = arith.constant 0 : i32
    %c0_i32_1 = arith.constant 0 : i32
    %c0_i32_2 = arith.constant 0 : i32
    return %c0_i32, %c0_i32_0, %c0_i32_1 : i32, i32, i32
  }
  func.func @transform_3(%arg0: i32, %arg1: i32) -> (i32, i32, i32) {
    %c0_i32 = arith.constant 0 : i32
    %c0_i32_0 = arith.constant 0 : i32
    %c0_i32_1 = arith.constant 0 : i32
    %c0_i32_2 = arith.constant 0 : i32
    return %c0_i32, %c0_i32_0, %c0_i32_1 : i32, i32, i32
  }
  func.func @transform_4(%arg0: i32, %arg1: i32) -> (i32, i32) {
    %c0_i32 = arith.constant 0 : i32
    %c0_i32_0 = arith.constant 0 : i32
    %c0_i32_1 = arith.constant 0 : i32
    return %c0_i32, %c0_i32_0 : i32, i32
  }
  func.func @transform_5(%arg0: i32, %arg1: i32) -> (i32, i32) {
    %c0_i32 = arith.constant 0 : i32
    %c0_i32_0 = arith.constant 0 : i32
    %c0_i32_1 = arith.constant 0 : i32
    return %c0_i32, %c0_i32_0 : i32, i32
  }
  func.func @transform_6(%arg0: i32, %arg1: i32) -> (i32, i32, i32) {
    %c0_i32 = arith.constant 0 : i32
    %c0_i32_0 = arith.constant 0 : i32
    return %arg0, %arg1, %c0_i32 : i32, i32, i32
  }
  func.func @transform_7(%arg0: i32, %arg1: i32) -> (i32, i32, i32) {
    %c0_i32 = arith.constant 0 : i32
    %c0_i32_0 = arith.constant 0 : i32
    return %arg0, %arg1, %c0_i32 : i32, i32, i32
  }
}

module attributes {stable_mosaic.version = 11 : i64} {
  func.func @kernel(%arg0: i32, %arg1: i32, %arg2: memref<1x2x9x16x256xbf16, #tpu.memory_space<vmem>>, %arg3: memref<1x2x9x16x4xf32, #tpu.memory_space<vmem>>, %arg4: memref<4x256x128xbf16, #tpu.memory_space<vmem>>, %arg5: memref<4x1x4xf32, #tpu.memory_space<vmem>>, %arg6: memref<1x128xf32, #tpu.memory_space<vmem>>, %arg7: memref<1x1xf32, #tpu.memory_space<vmem>>, %arg8: memref<1x128x128xbf16, #tpu.memory_space<vmem>>, %arg9: memref<1x128x1xf32, #tpu.memory_space<vmem>>) attributes {dimension_semantics = [#tpu.dimension_semantics<parallel>, #tpu.dimension_semantics<parallel>], iteration_bounds = array<i64: 2, 1>, scalar_prefetch = 0 : i64, scratch_operands = 0 : i64, tpu.core_type = #tpu.core_type<tc>, window_params = [{transform_indices = @transform_0, window_bounds = array<i64: 1, 2, 9, 16, 256>}, {transform_indices = @transform_1, window_bounds = array<i64: 1, 2, 9, 16, 4>}, {pipeline_mode = #tpu.pipeline_mode<synchronous>, transform_indices = @transform_2, window_bounds = array<i64: 4, 256, 128>}, {pipeline_mode = #tpu.pipeline_mode<synchronous>, transform_indices = @transform_3, window_bounds = array<i64: 4, 1, 4>}, {pipeline_mode = #tpu.pipeline_mode<synchronous>, transform_indices = @transform_4, window_bounds = array<i64: 1, 128>}, {pipeline_mode = #tpu.pipeline_mode<synchronous>, transform_indices = @transform_5, window_bounds = array<i64: 1, 1>}, {transform_indices = @transform_6, window_bounds = array<i64: 1, 128, 128>}, {transform_indices = @transform_7, window_bounds = array<i64: 1, 128, 1>}]} {
    %c8_i32 = arith.constant 8 : i32
    %0 = arith.muli %arg1, %c8_i32 : i32
    %c0_i32 = arith.constant 0 : i32
    %1 = arith.addi %0, %c0_i32 : i32
    %c0 = arith.constant 0 : index
    %c0_0 = arith.constant 0 : index
    %2 = arith.index_cast %1 : i32 to index
    %c0_1 = arith.constant 0 : index
    %c0_2 = arith.constant 0 : index
    %3 = vector.load %arg2[%c0, %c0_0, %2, %c0_1, %c0_2] : memref<1x2x9x16x256xbf16, #tpu.memory_space<vmem>>, vector<1x1x8x16x256xbf16>
    %4 = vector.shape_cast %3 : vector<1x1x8x16x256xbf16> to vector<8x16x256xbf16>
    %5 = vector.shape_cast %4 : vector<8x16x256xbf16> to vector<128x256xbf16>
    %c0_3 = arith.constant 0 : index
    %c0_4 = arith.constant 0 : index
    %c0_5 = arith.constant 0 : index
    %6 = vector.load %arg4[%c0_3, %c0_4, %c0_5] : memref<4x256x128xbf16, #tpu.memory_space<vmem>>, vector<1x256x128xbf16>
    %7 = vector.shape_cast %6 : vector<1x256x128xbf16> to vector<256x128xbf16>
    %cst = arith.constant dense<0.000000e+00> : vector<128x128xf32>
    %8 = tpu.matmul %5, %7, %cst {dimension_numbers = #tpu.dot_dimension_numbers<[1], [0], [0], [1], [0, 0, 1, 1], [], []>} : vector<128x256xbf16>, vector<256x128xbf16>, vector<128x128xf32> -> vector<128x128xf32>
    %c0_i32_6 = arith.constant 0 : i32
    %9 = arith.addi %0, %c0_i32_6 : i32
    %c0_7 = arith.constant 0 : index
    %c0_8 = arith.constant 0 : index
    %10 = arith.index_cast %9 : i32 to index
    %c0_9 = arith.constant 0 : index
    %c0_10 = arith.constant 0 : index
    %11 = vector.load %arg3[%c0_7, %c0_8, %10, %c0_9, %c0_10] : memref<1x2x9x16x4xf32, #tpu.memory_space<vmem>>, vector<1x1x8x16x4xf32>
    %12 = vector.shape_cast %11 : vector<1x1x8x16x4xf32> to vector<8x16x4xf32>
    %13 = vector.shape_cast %12 : vector<8x16x4xf32> to vector<128x4xf32>
    %c0_11 = arith.constant 0 : index
    %c0_12 = arith.constant 0 : index
    %c0_13 = arith.constant 0 : index
    %14 = vector.load %arg5[%c0_11, %c0_12, %c0_13] : memref<4x1x4xf32, #tpu.memory_space<vmem>>, vector<1x1x4xf32>
    %15 = vector.shape_cast %14 : vector<1x1x4xf32> to vector<1x4xf32>
    %16 = vector.broadcast %15 : vector<1x4xf32> to vector<128x4xf32>
    %17 = arith.mulf %13, %16 : vector<128x4xf32>
    %c0_i32_14 = arith.constant 0 : i32
    %18 = arith.addi %0, %c0_i32_14 : i32
    %c0_15 = arith.constant 0 : index
    %c1 = arith.constant 1 : index
    %19 = arith.index_cast %18 : i32 to index
    %c0_16 = arith.constant 0 : index
    %c0_17 = arith.constant 0 : index
    %20 = vector.load %arg2[%c0_15, %c1, %19, %c0_16, %c0_17] : memref<1x2x9x16x256xbf16, #tpu.memory_space<vmem>>, vector<1x1x8x16x256xbf16>
    %21 = vector.shape_cast %20 : vector<1x1x8x16x256xbf16> to vector<8x16x256xbf16>
    %22 = vector.shape_cast %21 : vector<8x16x256xbf16> to vector<128x256xbf16>
    %c1_18 = arith.constant 1 : index
    %c0_19 = arith.constant 0 : index
    %c0_20 = arith.constant 0 : index
    %23 = vector.load %arg4[%c1_18, %c0_19, %c0_20] : memref<4x256x128xbf16, #tpu.memory_space<vmem>>, vector<1x256x128xbf16>
    %24 = vector.shape_cast %23 : vector<1x256x128xbf16> to vector<256x128xbf16>
    %cst_21 = arith.constant dense<0.000000e+00> : vector<128x128xf32>
    %25 = tpu.matmul %22, %24, %cst_21 {dimension_numbers = #tpu.dot_dimension_numbers<[1], [0], [0], [1], [0, 0, 1, 1], [], []>} : vector<128x256xbf16>, vector<256x128xbf16>, vector<128x128xf32> -> vector<128x128xf32>
    %26 = arith.addf %8, %25 : vector<128x128xf32>
    %c0_i32_22 = arith.constant 0 : i32
    %27 = arith.addi %0, %c0_i32_22 : i32
    %c0_23 = arith.constant 0 : index
    %c1_24 = arith.constant 1 : index
    %28 = arith.index_cast %27 : i32 to index
    %c0_25 = arith.constant 0 : index
    %c0_26 = arith.constant 0 : index
    %29 = vector.load %arg3[%c0_23, %c1_24, %28, %c0_25, %c0_26] : memref<1x2x9x16x4xf32, #tpu.memory_space<vmem>>, vector<1x1x8x16x4xf32>
    %30 = vector.shape_cast %29 : vector<1x1x8x16x4xf32> to vector<8x16x4xf32>
    %31 = vector.shape_cast %30 : vector<8x16x4xf32> to vector<128x4xf32>
    %c1_27 = arith.constant 1 : index
    %c0_28 = arith.constant 0 : index
    %c0_29 = arith.constant 0 : index
    %32 = vector.load %arg5[%c1_27, %c0_28, %c0_29] : memref<4x1x4xf32, #tpu.memory_space<vmem>>, vector<1x1x4xf32>
    %33 = vector.shape_cast %32 : vector<1x1x4xf32> to vector<1x4xf32>
    %34 = vector.broadcast %33 : vector<1x4xf32> to vector<128x4xf32>
    %35 = arith.mulf %31, %34 : vector<128x4xf32>
    %36 = arith.addf %17, %35 : vector<128x4xf32>
    %c1_i32 = arith.constant 1 : i32
    %37 = arith.addi %0, %c1_i32 : i32
    %c0_30 = arith.constant 0 : index
    %c0_31 = arith.constant 0 : index
    %38 = arith.index_cast %37 : i32 to index
    %c0_32 = arith.constant 0 : index
    %c0_33 = arith.constant 0 : index
    %39 = vector.load %arg2[%c0_30, %c0_31, %38, %c0_32, %c0_33] : memref<1x2x9x16x256xbf16, #tpu.memory_space<vmem>>, vector<1x1x8x16x256xbf16>
    %40 = vector.shape_cast %39 : vector<1x1x8x16x256xbf16> to vector<8x16x256xbf16>
    %41 = vector.shape_cast %40 : vector<8x16x256xbf16> to vector<128x256xbf16>
    %c2 = arith.constant 2 : index
    %c0_34 = arith.constant 0 : index
    %c0_35 = arith.constant 0 : index
    %42 = vector.load %arg4[%c2, %c0_34, %c0_35] : memref<4x256x128xbf16, #tpu.memory_space<vmem>>, vector<1x256x128xbf16>
    %43 = vector.shape_cast %42 : vector<1x256x128xbf16> to vector<256x128xbf16>
    %cst_36 = arith.constant dense<0.000000e+00> : vector<128x128xf32>
    %44 = tpu.matmul %41, %43, %cst_36 {dimension_numbers = #tpu.dot_dimension_numbers<[1], [0], [0], [1], [0, 0, 1, 1], [], []>} : vector<128x256xbf16>, vector<256x128xbf16>, vector<128x128xf32> -> vector<128x128xf32>
    %45 = arith.addf %26, %44 : vector<128x128xf32>
    %c1_i32_37 = arith.constant 1 : i32
    %46 = arith.addi %0, %c1_i32_37 : i32
    %c0_38 = arith.constant 0 : index
    %c0_39 = arith.constant 0 : index
    %47 = arith.index_cast %46 : i32 to index
    %c0_40 = arith.constant 0 : index
    %c0_41 = arith.constant 0 : index
    %48 = vector.load %arg3[%c0_38, %c0_39, %47, %c0_40, %c0_41] : memref<1x2x9x16x4xf32, #tpu.memory_space<vmem>>, vector<1x1x8x16x4xf32>
    %49 = vector.shape_cast %48 : vector<1x1x8x16x4xf32> to vector<8x16x4xf32>
    %50 = vector.shape_cast %49 : vector<8x16x4xf32> to vector<128x4xf32>
    %c2_42 = arith.constant 2 : index
    %c0_43 = arith.constant 0 : index
    %c0_44 = arith.constant 0 : index
    %51 = vector.load %arg5[%c2_42, %c0_43, %c0_44] : memref<4x1x4xf32, #tpu.memory_space<vmem>>, vector<1x1x4xf32>
    %52 = vector.shape_cast %51 : vector<1x1x4xf32> to vector<1x4xf32>
    %53 = vector.broadcast %52 : vector<1x4xf32> to vector<128x4xf32>
    %54 = arith.mulf %50, %53 : vector<128x4xf32>
    %55 = arith.addf %36, %54 : vector<128x4xf32>
    %c1_i32_45 = arith.constant 1 : i32
    %56 = arith.addi %0, %c1_i32_45 : i32
    %c0_46 = arith.constant 0 : index
    %c1_47 = arith.constant 1 : index
    %57 = arith.index_cast %56 : i32 to index
    %c0_48 = arith.constant 0 : index
    %c0_49 = arith.constant 0 : index
    %58 = vector.load %arg2[%c0_46, %c1_47, %57, %c0_48, %c0_49] : memref<1x2x9x16x256xbf16, #tpu.memory_space<vmem>>, vector<1x1x8x16x256xbf16>
    %59 = vector.shape_cast %58 : vector<1x1x8x16x256xbf16> to vector<8x16x256xbf16>
    %60 = vector.shape_cast %59 : vector<8x16x256xbf16> to vector<128x256xbf16>
    %c3 = arith.constant 3 : index
    %c0_50 = arith.constant 0 : index
    %c0_51 = arith.constant 0 : index
    %61 = vector.load %arg4[%c3, %c0_50, %c0_51] : memref<4x256x128xbf16, #tpu.memory_space<vmem>>, vector<1x256x128xbf16>
    %62 = vector.shape_cast %61 : vector<1x256x128xbf16> to vector<256x128xbf16>
    %cst_52 = arith.constant dense<0.000000e+00> : vector<128x128xf32>
    %63 = tpu.matmul %60, %62, %cst_52 {dimension_numbers = #tpu.dot_dimension_numbers<[1], [0], [0], [1], [0, 0, 1, 1], [], []>} : vector<128x256xbf16>, vector<256x128xbf16>, vector<128x128xf32> -> vector<128x128xf32>
    %64 = arith.addf %45, %63 : vector<128x128xf32>
    %c1_i32_53 = arith.constant 1 : i32
    %65 = arith.addi %0, %c1_i32_53 : i32
    %c0_54 = arith.constant 0 : index
    %c1_55 = arith.constant 1 : index
    %66 = arith.index_cast %65 : i32 to index
    %c0_56 = arith.constant 0 : index
    %c0_57 = arith.constant 0 : index
    %67 = vector.load %arg3[%c0_54, %c1_55, %66, %c0_56, %c0_57] : memref<1x2x9x16x4xf32, #tpu.memory_space<vmem>>, vector<1x1x8x16x4xf32>
    %68 = vector.shape_cast %67 : vector<1x1x8x16x4xf32> to vector<8x16x4xf32>
    %69 = vector.shape_cast %68 : vector<8x16x4xf32> to vector<128x4xf32>
    %c3_58 = arith.constant 3 : index
    %c0_59 = arith.constant 0 : index
    %c0_60 = arith.constant 0 : index
    %70 = vector.load %arg5[%c3_58, %c0_59, %c0_60] : memref<4x1x4xf32, #tpu.memory_space<vmem>>, vector<1x1x4xf32>
    %71 = vector.shape_cast %70 : vector<1x1x4xf32> to vector<1x4xf32>
    %72 = vector.broadcast %71 : vector<1x4xf32> to vector<128x4xf32>
    %73 = arith.mulf %69, %72 : vector<128x4xf32>
    %74 = arith.addf %55, %73 : vector<128x4xf32>
    %c0_61 = arith.constant 0 : index
    %c0_62 = arith.constant 0 : index
    %75 = vector.load %arg6[%c0_61, %c0_62] : memref<1x128xf32, #tpu.memory_space<vmem>>, vector<1x128xf32>
    %76 = vector.broadcast %75 : vector<1x128xf32> to vector<128x128xf32>
    %77 = arith.addf %64, %76 : vector<128x128xf32>
    %cst_63 = arith.constant 6.000000e-01 : f32
    %78 = vector.broadcast %cst_63 : f32 to vector<128x128xf32>
    %79 = arith.mulf %78, %77 : vector<128x128xf32>
    %80 = math.absf %77 : vector<128x128xf32>
    %cst_64 = arith.constant 4.000000e-01 : f32
    %81 = vector.broadcast %cst_64 : f32 to vector<128x128xf32>
    %82 = arith.mulf %81, %80 : vector<128x128xf32>
    %83 = arith.addf %79, %82 : vector<128x128xf32>
    %84 = arith.truncf %83 : vector<128x128xf32> to vector<128x128xbf16>
    %c0_65 = arith.constant 0 : index
    %c0_66 = arith.constant 0 : index
    %c0_67 = arith.constant 0 : index
    %85 = vector.load %arg8[%c0_65, %c0_66, %c0_67] : memref<1x128x128xbf16, #tpu.memory_space<vmem>>, vector<1x128x128xbf16>
    %86 = vector.shape_cast %85 : vector<1x128x128xbf16> to vector<128x128xbf16>
    %87 = vector.shape_cast %84 : vector<128x128xbf16> to vector<1x128x128xbf16>
    tpu.vector_store %arg8[%c0_65, %c0_66, %c0_67], %87 {strides = array<i32>} : memref<1x128x128xbf16, #tpu.memory_space<vmem>>, vector<1x128x128xbf16>,
    %cst_68 = arith.constant dense<0.000000e+00> : vector<128xf32>
    %88 = vector.multi_reduction <add>, %74, %cst_68 [1] : vector<128x4xf32> to vector<128xf32>
    %89 = vector.shape_cast %88 : vector<128xf32> to vector<128x1xf32>
    %c0_69 = arith.constant 0 : index
    %c0_70 = arith.constant 0 : index
    %90 = vector.load %arg7[%c0_69, %c0_70] : memref<1x1xf32, #tpu.memory_space<vmem>>, vector<1x1xf32>
    %91 = vector.broadcast %90 : vector<1x1xf32> to vector<128x1xf32>
    %92 = arith.addf %89, %91 : vector<128x1xf32>
    %c0_71 = arith.constant 0 : index
    %c0_72 = arith.constant 0 : index
    %c0_73 = arith.constant 0 : index
    %93 = vector.load %arg9[%c0_71, %c0_72, %c0_73] : memref<1x128x1xf32, #tpu.memory_space<vmem>>, vector<1x128x1xf32>
    %94 = vector.shape_cast %93 : vector<1x128x1xf32> to vector<128x1xf32>
    %95 = vector.shape_cast %92 : vector<128x1xf32> to vector<1x128x1xf32>
    tpu.vector_store %arg9[%c0_71, %c0_72, %c0_73], %95 {strides = array<i32>} : memref<1x128x1xf32, #tpu.memory_space<vmem>>, vector<1x128x1xf32>,
    return
  }
  func.func @transform_0(%arg0: i32, %arg1: i32) -> (i32, i32, i32, i32, i32) {
    %c0_i32 = arith.constant 0 : i32
    %c0_i32_0 = arith.constant 0 : i32
    %c0_i32_1 = arith.constant 0 : i32
    %c0_i32_2 = arith.constant 0 : i32
    %c0_i32_3 = arith.constant 0 : i32
    return %arg0, %c0_i32, %c0_i32_0, %c0_i32_1, %c0_i32_2 : i32, i32, i32, i32, i32
  }
  func.func @transform_1(%arg0: i32, %arg1: i32) -> (i32, i32, i32, i32, i32) {
    %c0_i32 = arith.constant 0 : i32
    %c0_i32_0 = arith.constant 0 : i32
    %c0_i32_1 = arith.constant 0 : i32
    %c0_i32_2 = arith.constant 0 : i32
    %c0_i32_3 = arith.constant 0 : i32
    return %arg0, %c0_i32, %c0_i32_0, %c0_i32_1, %c0_i32_2 : i32, i32, i32, i32, i32
  }
  func.func @transform_2(%arg0: i32, %arg1: i32) -> (i32, i32, i32) {
    %c0_i32 = arith.constant 0 : i32
    %c0_i32_0 = arith.constant 0 : i32
    %c0_i32_1 = arith.constant 0 : i32
    %c0_i32_2 = arith.constant 0 : i32
    return %c0_i32, %c0_i32_0, %c0_i32_1 : i32, i32, i32
  }
  func.func @transform_3(%arg0: i32, %arg1: i32) -> (i32, i32, i32) {
    %c0_i32 = arith.constant 0 : i32
    %c0_i32_0 = arith.constant 0 : i32
    %c0_i32_1 = arith.constant 0 : i32
    %c0_i32_2 = arith.constant 0 : i32
    return %c0_i32, %c0_i32_0, %c0_i32_1 : i32, i32, i32
  }
  func.func @transform_4(%arg0: i32, %arg1: i32) -> (i32, i32) {
    %c0_i32 = arith.constant 0 : i32
    %c0_i32_0 = arith.constant 0 : i32
    %c0_i32_1 = arith.constant 0 : i32
    return %c0_i32, %c0_i32_0 : i32, i32
  }
  func.func @transform_5(%arg0: i32, %arg1: i32) -> (i32, i32) {
    %c0_i32 = arith.constant 0 : i32
    %c0_i32_0 = arith.constant 0 : i32
    %c0_i32_1 = arith.constant 0 : i32
    return %c0_i32, %c0_i32_0 : i32, i32
  }
  func.func @transform_6(%arg0: i32, %arg1: i32) -> (i32, i32, i32) {
    %c0_i32 = arith.constant 0 : i32
    %c0_i32_0 = arith.constant 0 : i32
    return %arg0, %arg1, %c0_i32 : i32, i32, i32
  }
  func.func @transform_7(%arg0: i32, %arg1: i32) -> (i32, i32, i32) {
    %c0_i32 = arith.constant 0 : i32
    %c0_i32_0 = arith.constant 0 : i32
    return %arg0, %arg1, %c0_i32 : i32, i32, i32
  }
}

module attributes {stable_mosaic.version = 11 : i64} {
  func.func @kernel(%arg0: i32, %arg1: i32, %arg2: memref<1x2x5x16x512xbf16, #tpu.memory_space<vmem>>, %arg3: memref<1x2x5x16x4xf32, #tpu.memory_space<vmem>>, %arg4: memref<4x512x128xbf16, #tpu.memory_space<vmem>>, %arg5: memref<4x1x4xf32, #tpu.memory_space<vmem>>, %arg6: memref<1x128xf32, #tpu.memory_space<vmem>>, %arg7: memref<1x1xf32, #tpu.memory_space<vmem>>, %arg8: memref<1x64x128xbf16, #tpu.memory_space<vmem>>, %arg9: memref<1x64x1xf32, #tpu.memory_space<vmem>>) attributes {dimension_semantics = [#tpu.dimension_semantics<parallel>, #tpu.dimension_semantics<parallel>], iteration_bounds = array<i64: 2, 1>, scalar_prefetch = 0 : i64, scratch_operands = 0 : i64, tpu.core_type = #tpu.core_type<tc>, window_params = [{transform_indices = @transform_0, window_bounds = array<i64: 1, 2, 5, 16, 512>}, {transform_indices = @transform_1, window_bounds = array<i64: 1, 2, 5, 16, 4>}, {pipeline_mode = #tpu.pipeline_mode<synchronous>, transform_indices = @transform_2, window_bounds = array<i64: 4, 512, 128>}, {pipeline_mode = #tpu.pipeline_mode<synchronous>, transform_indices = @transform_3, window_bounds = array<i64: 4, 1, 4>}, {pipeline_mode = #tpu.pipeline_mode<synchronous>, transform_indices = @transform_4, window_bounds = array<i64: 1, 128>}, {pipeline_mode = #tpu.pipeline_mode<synchronous>, transform_indices = @transform_5, window_bounds = array<i64: 1, 1>}, {transform_indices = @transform_6, window_bounds = array<i64: 1, 64, 128>}, {transform_indices = @transform_7, window_bounds = array<i64: 1, 64, 1>}]} {
    %c4_i32 = arith.constant 4 : i32
    %0 = arith.muli %arg1, %c4_i32 : i32
    %c0_i32 = arith.constant 0 : i32
    %1 = arith.addi %0, %c0_i32 : i32
    %c0 = arith.constant 0 : index
    %c0_0 = arith.constant 0 : index
    %2 = arith.index_cast %1 : i32 to index
    %c0_1 = arith.constant 0 : index
    %c0_2 = arith.constant 0 : index
    %3 = vector.load %arg2[%c0, %c0_0, %2, %c0_1, %c0_2] : memref<1x2x5x16x512xbf16, #tpu.memory_space<vmem>>, vector<1x1x4x16x512xbf16>
    %4 = vector.shape_cast %3 : vector<1x1x4x16x512xbf16> to vector<4x16x512xbf16>
    %5 = vector.shape_cast %4 : vector<4x16x512xbf16> to vector<64x512xbf16>
    %c0_3 = arith.constant 0 : index
    %c0_4 = arith.constant 0 : index
    %c0_5 = arith.constant 0 : index
    %6 = vector.load %arg4[%c0_3, %c0_4, %c0_5] : memref<4x512x128xbf16, #tpu.memory_space<vmem>>, vector<1x512x128xbf16>
    %7 = vector.shape_cast %6 : vector<1x512x128xbf16> to vector<512x128xbf16>
    %cst = arith.constant dense<0.000000e+00> : vector<64x128xf32>
    %8 = tpu.matmul %5, %7, %cst {dimension_numbers = #tpu.dot_dimension_numbers<[1], [0], [0], [1], [0, 0, 1, 1], [], []>} : vector<64x512xbf16>, vector<512x128xbf16>, vector<64x128xf32> -> vector<64x128xf32>
    %c0_i32_6 = arith.constant 0 : i32
    %9 = arith.addi %0, %c0_i32_6 : i32
    %c0_7 = arith.constant 0 : index
    %c0_8 = arith.constant 0 : index
    %10 = arith.index_cast %9 : i32 to index
    %c0_9 = arith.constant 0 : index
    %c0_10 = arith.constant 0 : index
    %11 = vector.load %arg3[%c0_7, %c0_8, %10, %c0_9, %c0_10] : memref<1x2x5x16x4xf32, #tpu.memory_space<vmem>>, vector<1x1x4x16x4xf32>
    %12 = vector.shape_cast %11 : vector<1x1x4x16x4xf32> to vector<4x16x4xf32>
    %13 = vector.shape_cast %12 : vector<4x16x4xf32> to vector<64x4xf32>
    %c0_11 = arith.constant 0 : index
    %c0_12 = arith.constant 0 : index
    %c0_13 = arith.constant 0 : index
    %14 = vector.load %arg5[%c0_11, %c0_12, %c0_13] : memref<4x1x4xf32, #tpu.memory_space<vmem>>, vector<1x1x4xf32>
    %15 = vector.shape_cast %14 : vector<1x1x4xf32> to vector<1x4xf32>
    %16 = vector.broadcast %15 : vector<1x4xf32> to vector<64x4xf32>
    %17 = arith.mulf %13, %16 : vector<64x4xf32>
    %c0_i32_14 = arith.constant 0 : i32
    %18 = arith.addi %0, %c0_i32_14 : i32
    %c0_15 = arith.constant 0 : index
    %c1 = arith.constant 1 : index
    %19 = arith.index_cast %18 : i32 to index
    %c0_16 = arith.constant 0 : index
    %c0_17 = arith.constant 0 : index
    %20 = vector.load %arg2[%c0_15, %c1, %19, %c0_16, %c0_17] : memref<1x2x5x16x512xbf16, #tpu.memory_space<vmem>>, vector<1x1x4x16x512xbf16>
    %21 = vector.shape_cast %20 : vector<1x1x4x16x512xbf16> to vector<4x16x512xbf16>
    %22 = vector.shape_cast %21 : vector<4x16x512xbf16> to vector<64x512xbf16>
    %c1_18 = arith.constant 1 : index
    %c0_19 = arith.constant 0 : index
    %c0_20 = arith.constant 0 : index
    %23 = vector.load %arg4[%c1_18, %c0_19, %c0_20] : memref<4x512x128xbf16, #tpu.memory_space<vmem>>, vector<1x512x128xbf16>
    %24 = vector.shape_cast %23 : vector<1x512x128xbf16> to vector<512x128xbf16>
    %cst_21 = arith.constant dense<0.000000e+00> : vector<64x128xf32>
    %25 = tpu.matmul %22, %24, %cst_21 {dimension_numbers = #tpu.dot_dimension_numbers<[1], [0], [0], [1], [0, 0, 1, 1], [], []>} : vector<64x512xbf16>, vector<512x128xbf16>, vector<64x128xf32> -> vector<64x128xf32>
    %26 = arith.addf %8, %25 : vector<64x128xf32>
    %c0_i32_22 = arith.constant 0 : i32
    %27 = arith.addi %0, %c0_i32_22 : i32
    %c0_23 = arith.constant 0 : index
    %c1_24 = arith.constant 1 : index
    %28 = arith.index_cast %27 : i32 to index
    %c0_25 = arith.constant 0 : index
    %c0_26 = arith.constant 0 : index
    %29 = vector.load %arg3[%c0_23, %c1_24, %28, %c0_25, %c0_26] : memref<1x2x5x16x4xf32, #tpu.memory_space<vmem>>, vector<1x1x4x16x4xf32>
    %30 = vector.shape_cast %29 : vector<1x1x4x16x4xf32> to vector<4x16x4xf32>
    %31 = vector.shape_cast %30 : vector<4x16x4xf32> to vector<64x4xf32>
    %c1_27 = arith.constant 1 : index
    %c0_28 = arith.constant 0 : index
    %c0_29 = arith.constant 0 : index
    %32 = vector.load %arg5[%c1_27, %c0_28, %c0_29] : memref<4x1x4xf32, #tpu.memory_space<vmem>>, vector<1x1x4xf32>
    %33 = vector.shape_cast %32 : vector<1x1x4xf32> to vector<1x4xf32>
    %34 = vector.broadcast %33 : vector<1x4xf32> to vector<64x4xf32>
    %35 = arith.mulf %31, %34 : vector<64x4xf32>
    %36 = arith.addf %17, %35 : vector<64x4xf32>
    %c1_i32 = arith.constant 1 : i32
    %37 = arith.addi %0, %c1_i32 : i32
    %c0_30 = arith.constant 0 : index
    %c0_31 = arith.constant 0 : index
    %38 = arith.index_cast %37 : i32 to index
    %c0_32 = arith.constant 0 : index
    %c0_33 = arith.constant 0 : index
    %39 = vector.load %arg2[%c0_30, %c0_31, %38, %c0_32, %c0_33] : memref<1x2x5x16x512xbf16, #tpu.memory_space<vmem>>, vector<1x1x4x16x512xbf16>
    %40 = vector.shape_cast %39 : vector<1x1x4x16x512xbf16> to vector<4x16x512xbf16>
    %41 = vector.shape_cast %40 : vector<4x16x512xbf16> to vector<64x512xbf16>
    %c2 = arith.constant 2 : index
    %c0_34 = arith.constant 0 : index
    %c0_35 = arith.constant 0 : index
    %42 = vector.load %arg4[%c2, %c0_34, %c0_35] : memref<4x512x128xbf16, #tpu.memory_space<vmem>>, vector<1x512x128xbf16>
    %43 = vector.shape_cast %42 : vector<1x512x128xbf16> to vector<512x128xbf16>
    %cst_36 = arith.constant dense<0.000000e+00> : vector<64x128xf32>
    %44 = tpu.matmul %41, %43, %cst_36 {dimension_numbers = #tpu.dot_dimension_numbers<[1], [0], [0], [1], [0, 0, 1, 1], [], []>} : vector<64x512xbf16>, vector<512x128xbf16>, vector<64x128xf32> -> vector<64x128xf32>
    %45 = arith.addf %26, %44 : vector<64x128xf32>
    %c1_i32_37 = arith.constant 1 : i32
    %46 = arith.addi %0, %c1_i32_37 : i32
    %c0_38 = arith.constant 0 : index
    %c0_39 = arith.constant 0 : index
    %47 = arith.index_cast %46 : i32 to index
    %c0_40 = arith.constant 0 : index
    %c0_41 = arith.constant 0 : index
    %48 = vector.load %arg3[%c0_38, %c0_39, %47, %c0_40, %c0_41] : memref<1x2x5x16x4xf32, #tpu.memory_space<vmem>>, vector<1x1x4x16x4xf32>
    %49 = vector.shape_cast %48 : vector<1x1x4x16x4xf32> to vector<4x16x4xf32>
    %50 = vector.shape_cast %49 : vector<4x16x4xf32> to vector<64x4xf32>
    %c2_42 = arith.constant 2 : index
    %c0_43 = arith.constant 0 : index
    %c0_44 = arith.constant 0 : index
    %51 = vector.load %arg5[%c2_42, %c0_43, %c0_44] : memref<4x1x4xf32, #tpu.memory_space<vmem>>, vector<1x1x4xf32>
    %52 = vector.shape_cast %51 : vector<1x1x4xf32> to vector<1x4xf32>
    %53 = vector.broadcast %52 : vector<1x4xf32> to vector<64x4xf32>
    %54 = arith.mulf %50, %53 : vector<64x4xf32>
    %55 = arith.addf %36, %54 : vector<64x4xf32>
    %c1_i32_45 = arith.constant 1 : i32
    %56 = arith.addi %0, %c1_i32_45 : i32
    %c0_46 = arith.constant 0 : index
    %c1_47 = arith.constant 1 : index
    %57 = arith.index_cast %56 : i32 to index
    %c0_48 = arith.constant 0 : index
    %c0_49 = arith.constant 0 : index
    %58 = vector.load %arg2[%c0_46, %c1_47, %57, %c0_48, %c0_49] : memref<1x2x5x16x512xbf16, #tpu.memory_space<vmem>>, vector<1x1x4x16x512xbf16>
    %59 = vector.shape_cast %58 : vector<1x1x4x16x512xbf16> to vector<4x16x512xbf16>
    %60 = vector.shape_cast %59 : vector<4x16x512xbf16> to vector<64x512xbf16>
    %c3 = arith.constant 3 : index
    %c0_50 = arith.constant 0 : index
    %c0_51 = arith.constant 0 : index
    %61 = vector.load %arg4[%c3, %c0_50, %c0_51] : memref<4x512x128xbf16, #tpu.memory_space<vmem>>, vector<1x512x128xbf16>
    %62 = vector.shape_cast %61 : vector<1x512x128xbf16> to vector<512x128xbf16>
    %cst_52 = arith.constant dense<0.000000e+00> : vector<64x128xf32>
    %63 = tpu.matmul %60, %62, %cst_52 {dimension_numbers = #tpu.dot_dimension_numbers<[1], [0], [0], [1], [0, 0, 1, 1], [], []>} : vector<64x512xbf16>, vector<512x128xbf16>, vector<64x128xf32> -> vector<64x128xf32>
    %64 = arith.addf %45, %63 : vector<64x128xf32>
    %c1_i32_53 = arith.constant 1 : i32
    %65 = arith.addi %0, %c1_i32_53 : i32
    %c0_54 = arith.constant 0 : index
    %c1_55 = arith.constant 1 : index
    %66 = arith.index_cast %65 : i32 to index
    %c0_56 = arith.constant 0 : index
    %c0_57 = arith.constant 0 : index
    %67 = vector.load %arg3[%c0_54, %c1_55, %66, %c0_56, %c0_57] : memref<1x2x5x16x4xf32, #tpu.memory_space<vmem>>, vector<1x1x4x16x4xf32>
    %68 = vector.shape_cast %67 : vector<1x1x4x16x4xf32> to vector<4x16x4xf32>
    %69 = vector.shape_cast %68 : vector<4x16x4xf32> to vector<64x4xf32>
    %c3_58 = arith.constant 3 : index
    %c0_59 = arith.constant 0 : index
    %c0_60 = arith.constant 0 : index
    %70 = vector.load %arg5[%c3_58, %c0_59, %c0_60] : memref<4x1x4xf32, #tpu.memory_space<vmem>>, vector<1x1x4xf32>
    %71 = vector.shape_cast %70 : vector<1x1x4xf32> to vector<1x4xf32>
    %72 = vector.broadcast %71 : vector<1x4xf32> to vector<64x4xf32>
    %73 = arith.mulf %69, %72 : vector<64x4xf32>
    %74 = arith.addf %55, %73 : vector<64x4xf32>
    %c0_61 = arith.constant 0 : index
    %c0_62 = arith.constant 0 : index
    %75 = vector.load %arg6[%c0_61, %c0_62] : memref<1x128xf32, #tpu.memory_space<vmem>>, vector<1x128xf32>
    %76 = vector.broadcast %75 : vector<1x128xf32> to vector<64x128xf32>
    %77 = arith.addf %64, %76 : vector<64x128xf32>
    %cst_63 = arith.constant 6.000000e-01 : f32
    %78 = vector.broadcast %cst_63 : f32 to vector<64x128xf32>
    %79 = arith.mulf %78, %77 : vector<64x128xf32>
    %80 = math.absf %77 : vector<64x128xf32>
    %cst_64 = arith.constant 4.000000e-01 : f32
    %81 = vector.broadcast %cst_64 : f32 to vector<64x128xf32>
    %82 = arith.mulf %81, %80 : vector<64x128xf32>
    %83 = arith.addf %79, %82 : vector<64x128xf32>
    %84 = arith.truncf %83 : vector<64x128xf32> to vector<64x128xbf16>
    %c0_65 = arith.constant 0 : index
    %c0_66 = arith.constant 0 : index
    %c0_67 = arith.constant 0 : index
    %85 = vector.load %arg8[%c0_65, %c0_66, %c0_67] : memref<1x64x128xbf16, #tpu.memory_space<vmem>>, vector<1x64x128xbf16>
    %86 = vector.shape_cast %85 : vector<1x64x128xbf16> to vector<64x128xbf16>
    %87 = vector.shape_cast %84 : vector<64x128xbf16> to vector<1x64x128xbf16>
    tpu.vector_store %arg8[%c0_65, %c0_66, %c0_67], %87 {strides = array<i32>} : memref<1x64x128xbf16, #tpu.memory_space<vmem>>, vector<1x64x128xbf16>,
    %cst_68 = arith.constant dense<0.000000e+00> : vector<64xf32>
    %88 = vector.multi_reduction <add>, %74, %cst_68 [1] : vector<64x4xf32> to vector<64xf32>
    %89 = vector.shape_cast %88 : vector<64xf32> to vector<64x1xf32>
    %c0_69 = arith.constant 0 : index
    %c0_70 = arith.constant 0 : index
    %90 = vector.load %arg7[%c0_69, %c0_70] : memref<1x1xf32, #tpu.memory_space<vmem>>, vector<1x1xf32>
    %91 = vector.broadcast %90 : vector<1x1xf32> to vector<64x1xf32>
    %92 = arith.addf %89, %91 : vector<64x1xf32>
    %c0_71 = arith.constant 0 : index
    %c0_72 = arith.constant 0 : index
    %c0_73 = arith.constant 0 : index
    %93 = vector.load %arg9[%c0_71, %c0_72, %c0_73] : memref<1x64x1xf32, #tpu.memory_space<vmem>>, vector<1x64x1xf32>
    %94 = vector.shape_cast %93 : vector<1x64x1xf32> to vector<64x1xf32>
    %95 = vector.shape_cast %92 : vector<64x1xf32> to vector<1x64x1xf32>
    tpu.vector_store %arg9[%c0_71, %c0_72, %c0_73], %95 {strides = array<i32>} : memref<1x64x1xf32, #tpu.memory_space<vmem>>, vector<1x64x1xf32>,
    return
  }
  func.func @transform_0(%arg0: i32, %arg1: i32) -> (i32, i32, i32, i32, i32) {
    %c0_i32 = arith.constant 0 : i32
    %c0_i32_0 = arith.constant 0 : i32
    %c0_i32_1 = arith.constant 0 : i32
    %c0_i32_2 = arith.constant 0 : i32
    %c0_i32_3 = arith.constant 0 : i32
    return %arg0, %c0_i32, %c0_i32_0, %c0_i32_1, %c0_i32_2 : i32, i32, i32, i32, i32
  }
  func.func @transform_1(%arg0: i32, %arg1: i32) -> (i32, i32, i32, i32, i32) {
    %c0_i32 = arith.constant 0 : i32
    %c0_i32_0 = arith.constant 0 : i32
    %c0_i32_1 = arith.constant 0 : i32
    %c0_i32_2 = arith.constant 0 : i32
    %c0_i32_3 = arith.constant 0 : i32
    return %arg0, %c0_i32, %c0_i32_0, %c0_i32_1, %c0_i32_2 : i32, i32, i32, i32, i32
  }
  func.func @transform_2(%arg0: i32, %arg1: i32) -> (i32, i32, i32) {
    %c0_i32 = arith.constant 0 : i32
    %c0_i32_0 = arith.constant 0 : i32
    %c0_i32_1 = arith.constant 0 : i32
    %c0_i32_2 = arith.constant 0 : i32
    return %c0_i32, %c0_i32_0, %c0_i32_1 : i32, i32, i32
  }
  func.func @transform_3(%arg0: i32, %arg1: i32) -> (i32, i32, i32) {
    %c0_i32 = arith.constant 0 : i32
    %c0_i32_0 = arith.constant 0 : i32
    %c0_i32_1 = arith.constant 0 : i32
    %c0_i32_2 = arith.constant 0 : i32
    return %c0_i32, %c0_i32_0, %c0_i32_1 : i32, i32, i32
  }
  func.func @transform_4(%arg0: i32, %arg1: i32) -> (i32, i32) {
    %c0_i32 = arith.constant 0 : i32
    %c0_i32_0 = arith.constant 0 : i32
    %c0_i32_1 = arith.constant 0 : i32
    return %c0_i32, %c0_i32_0 : i32, i32
  }
  func.func @transform_5(%arg0: i32, %arg1: i32) -> (i32, i32) {
    %c0_i32 = arith.constant 0 : i32
    %c0_i32_0 = arith.constant 0 : i32
    %c0_i32_1 = arith.constant 0 : i32
    return %c0_i32, %c0_i32_0 : i32, i32
  }
  func.func @transform_6(%arg0: i32, %arg1: i32) -> (i32, i32, i32) {
    %c0_i32 = arith.constant 0 : i32
    %c0_i32_0 = arith.constant 0 : i32
    return %arg0, %arg1, %c0_i32 : i32, i32, i32
  }
  func.func @transform_7(%arg0: i32, %arg1: i32) -> (i32, i32, i32) {
    %c0_i32 = arith.constant 0 : i32
    %c0_i32_0 = arith.constant 0 : i32
    return %arg0, %arg1, %c0_i32 : i32, i32, i32
  }
}

module attributes {stable_mosaic.version = 11 : i64} {
  func.func @kernel(%arg0: i32, %arg1: i32, %arg2: memref<1x1x6x16x512xbf16, #tpu.memory_space<vmem>>, %arg3: memref<1x1x6x16x4xf32, #tpu.memory_space<vmem>>, %arg4: memref<4x512x128xbf16, #tpu.memory_space<vmem>>, %arg5: memref<4x1x4xf32, #tpu.memory_space<vmem>>, %arg6: memref<1x128xf32, #tpu.memory_space<vmem>>, %arg7: memref<1x1xf32, #tpu.memory_space<vmem>>, %arg8: memref<1x48x128xbf16, #tpu.memory_space<vmem>>, %arg9: memref<1x48x1xf32, #tpu.memory_space<vmem>>) attributes {dimension_semantics = [#tpu.dimension_semantics<parallel>, #tpu.dimension_semantics<parallel>], iteration_bounds = array<i64: 2, 1>, scalar_prefetch = 0 : i64, scratch_operands = 0 : i64, tpu.core_type = #tpu.core_type<tc>, window_params = [{transform_indices = @transform_0, window_bounds = array<i64: 1, 1, 6, 16, 512>}, {transform_indices = @transform_1, window_bounds = array<i64: 1, 1, 6, 16, 4>}, {pipeline_mode = #tpu.pipeline_mode<synchronous>, transform_indices = @transform_2, window_bounds = array<i64: 4, 512, 128>}, {pipeline_mode = #tpu.pipeline_mode<synchronous>, transform_indices = @transform_3, window_bounds = array<i64: 4, 1, 4>}, {pipeline_mode = #tpu.pipeline_mode<synchronous>, transform_indices = @transform_4, window_bounds = array<i64: 1, 128>}, {pipeline_mode = #tpu.pipeline_mode<synchronous>, transform_indices = @transform_5, window_bounds = array<i64: 1, 1>}, {transform_indices = @transform_6, window_bounds = array<i64: 1, 48, 128>}, {transform_indices = @transform_7, window_bounds = array<i64: 1, 48, 1>}]} {
    %c3_i32 = arith.constant 3 : i32
    %0 = arith.muli %arg1, %c3_i32 : i32
    %c0_i32 = arith.constant 0 : i32
    %1 = arith.addi %0, %c0_i32 : i32
    %c0 = arith.constant 0 : index
    %c0_0 = arith.constant 0 : index
    %2 = arith.index_cast %1 : i32 to index
    %c0_1 = arith.constant 0 : index
    %c0_2 = arith.constant 0 : index
    %3 = vector.load %arg2[%c0, %c0_0, %2, %c0_1, %c0_2] : memref<1x1x6x16x512xbf16, #tpu.memory_space<vmem>>, vector<1x1x3x16x512xbf16>
    %4 = vector.shape_cast %3 : vector<1x1x3x16x512xbf16> to vector<3x16x512xbf16>
    %5 = vector.shape_cast %4 : vector<3x16x512xbf16> to vector<48x512xbf16>
    %c0_3 = arith.constant 0 : index
    %c0_4 = arith.constant 0 : index
    %c0_5 = arith.constant 0 : index
    %6 = vector.load %arg4[%c0_3, %c0_4, %c0_5] : memref<4x512x128xbf16, #tpu.memory_space<vmem>>, vector<1x512x128xbf16>
    %7 = vector.shape_cast %6 : vector<1x512x128xbf16> to vector<512x128xbf16>
    %cst = arith.constant dense<0.000000e+00> : vector<48x128xf32>
    %8 = tpu.matmul %5, %7, %cst {dimension_numbers = #tpu.dot_dimension_numbers<[1], [0], [0], [1], [0, 0, 1, 1], [], []>} : vector<48x512xbf16>, vector<512x128xbf16>, vector<48x128xf32> -> vector<48x128xf32>
    %c0_i32_6 = arith.constant 0 : i32
    %9 = arith.addi %0, %c0_i32_6 : i32
    %c0_7 = arith.constant 0 : index
    %c0_8 = arith.constant 0 : index
    %10 = arith.index_cast %9 : i32 to index
    %c0_9 = arith.constant 0 : index
    %c0_10 = arith.constant 0 : index
    %11 = vector.load %arg3[%c0_7, %c0_8, %10, %c0_9, %c0_10] : memref<1x1x6x16x4xf32, #tpu.memory_space<vmem>>, vector<1x1x3x16x4xf32>
    %12 = vector.shape_cast %11 : vector<1x1x3x16x4xf32> to vector<3x16x4xf32>
    %13 = vector.shape_cast %12 : vector<3x16x4xf32> to vector<48x4xf32>
    %c0_11 = arith.constant 0 : index
    %c0_12 = arith.constant 0 : index
    %c0_13 = arith.constant 0 : index
    %14 = vector.load %arg5[%c0_11, %c0_12, %c0_13] : memref<4x1x4xf32, #tpu.memory_space<vmem>>, vector<1x1x4xf32>
    %15 = vector.shape_cast %14 : vector<1x1x4xf32> to vector<1x4xf32>
    %16 = vector.broadcast %15 : vector<1x4xf32> to vector<48x4xf32>
    %17 = arith.mulf %13, %16 : vector<48x4xf32>
    %c1_i32 = arith.constant 1 : i32
    %18 = arith.addi %0, %c1_i32 : i32
    %c0_14 = arith.constant 0 : index
    %c0_15 = arith.constant 0 : index
    %19 = arith.index_cast %18 : i32 to index
    %c0_16 = arith.constant 0 : index
    %c0_17 = arith.constant 0 : index
    %20 = vector.load %arg2[%c0_14, %c0_15, %19, %c0_16, %c0_17] : memref<1x1x6x16x512xbf16, #tpu.memory_space<vmem>>, vector<1x1x3x16x512xbf16>
    %21 = vector.shape_cast %20 : vector<1x1x3x16x512xbf16> to vector<3x16x512xbf16>
    %22 = vector.shape_cast %21 : vector<3x16x512xbf16> to vector<48x512xbf16>
    %c1 = arith.constant 1 : index
    %c0_18 = arith.constant 0 : index
    %c0_19 = arith.constant 0 : index
    %23 = vector.load %arg4[%c1, %c0_18, %c0_19] : memref<4x512x128xbf16, #tpu.memory_space<vmem>>, vector<1x512x128xbf16>
    %24 = vector.shape_cast %23 : vector<1x512x128xbf16> to vector<512x128xbf16>
    %cst_20 = arith.constant dense<0.000000e+00> : vector<48x128xf32>
    %25 = tpu.matmul %22, %24, %cst_20 {dimension_numbers = #tpu.dot_dimension_numbers<[1], [0], [0], [1], [0, 0, 1, 1], [], []>} : vector<48x512xbf16>, vector<512x128xbf16>, vector<48x128xf32> -> vector<48x128xf32>
    %26 = arith.addf %8, %25 : vector<48x128xf32>
    %c1_i32_21 = arith.constant 1 : i32
    %27 = arith.addi %0, %c1_i32_21 : i32
    %c0_22 = arith.constant 0 : index
    %c0_23 = arith.constant 0 : index
    %28 = arith.index_cast %27 : i32 to index
    %c0_24 = arith.constant 0 : index
    %c0_25 = arith.constant 0 : index
    %29 = vector.load %arg3[%c0_22, %c0_23, %28, %c0_24, %c0_25] : memref<1x1x6x16x4xf32, #tpu.memory_space<vmem>>, vector<1x1x3x16x4xf32>
    %30 = vector.shape_cast %29 : vector<1x1x3x16x4xf32> to vector<3x16x4xf32>
    %31 = vector.shape_cast %30 : vector<3x16x4xf32> to vector<48x4xf32>
    %c1_26 = arith.constant 1 : index
    %c0_27 = arith.constant 0 : index
    %c0_28 = arith.constant 0 : index
    %32 = vector.load %arg5[%c1_26, %c0_27, %c0_28] : memref<4x1x4xf32, #tpu.memory_space<vmem>>, vector<1x1x4xf32>
    %33 = vector.shape_cast %32 : vector<1x1x4xf32> to vector<1x4xf32>
    %34 = vector.broadcast %33 : vector<1x4xf32> to vector<48x4xf32>
    %35 = arith.mulf %31, %34 : vector<48x4xf32>
    %36 = arith.addf %17, %35 : vector<48x4xf32>
    %c2_i32 = arith.constant 2 : i32
    %37 = arith.addi %0, %c2_i32 : i32
    %c0_29 = arith.constant 0 : index
    %c0_30 = arith.constant 0 : index
    %38 = arith.index_cast %37 : i32 to index
    %c0_31 = arith.constant 0 : index
    %c0_32 = arith.constant 0 : index
    %39 = vector.load %arg2[%c0_29, %c0_30, %38, %c0_31, %c0_32] : memref<1x1x6x16x512xbf16, #tpu.memory_space<vmem>>, vector<1x1x3x16x512xbf16>
    %40 = vector.shape_cast %39 : vector<1x1x3x16x512xbf16> to vector<3x16x512xbf16>
    %41 = vector.shape_cast %40 : vector<3x16x512xbf16> to vector<48x512xbf16>
    %c2 = arith.constant 2 : index
    %c0_33 = arith.constant 0 : index
    %c0_34 = arith.constant 0 : index
    %42 = vector.load %arg4[%c2, %c0_33, %c0_34] : memref<4x512x128xbf16, #tpu.memory_space<vmem>>, vector<1x512x128xbf16>
    %43 = vector.shape_cast %42 : vector<1x512x128xbf16> to vector<512x128xbf16>
    %cst_35 = arith.constant dense<0.000000e+00> : vector<48x128xf32>
    %44 = tpu.matmul %41, %43, %cst_35 {dimension_numbers = #tpu.dot_dimension_numbers<[1], [0], [0], [1], [0, 0, 1, 1], [], []>} : vector<48x512xbf16>, vector<512x128xbf16>, vector<48x128xf32> -> vector<48x128xf32>
    %45 = arith.addf %26, %44 : vector<48x128xf32>
    %c2_i32_36 = arith.constant 2 : i32
    %46 = arith.addi %0, %c2_i32_36 : i32
    %c0_37 = arith.constant 0 : index
    %c0_38 = arith.constant 0 : index
    %47 = arith.index_cast %46 : i32 to index
    %c0_39 = arith.constant 0 : index
    %c0_40 = arith.constant 0 : index
    %48 = vector.load %arg3[%c0_37, %c0_38, %47, %c0_39, %c0_40] : memref<1x1x6x16x4xf32, #tpu.memory_space<vmem>>, vector<1x1x3x16x4xf32>
    %49 = vector.shape_cast %48 : vector<1x1x3x16x4xf32> to vector<3x16x4xf32>
    %50 = vector.shape_cast %49 : vector<3x16x4xf32> to vector<48x4xf32>
    %c2_41 = arith.constant 2 : index
    %c0_42 = arith.constant 0 : index
    %c0_43 = arith.constant 0 : index
    %51 = vector.load %arg5[%c2_41, %c0_42, %c0_43] : memref<4x1x4xf32, #tpu.memory_space<vmem>>, vector<1x1x4xf32>
    %52 = vector.shape_cast %51 : vector<1x1x4xf32> to vector<1x4xf32>
    %53 = vector.broadcast %52 : vector<1x4xf32> to vector<48x4xf32>
    %54 = arith.mulf %50, %53 : vector<48x4xf32>
    %55 = arith.addf %36, %54 : vector<48x4xf32>
    %c3_i32_44 = arith.constant 3 : i32
    %56 = arith.addi %0, %c3_i32_44 : i32
    %c0_45 = arith.constant 0 : index
    %c0_46 = arith.constant 0 : index
    %57 = arith.index_cast %56 : i32 to index
    %c0_47 = arith.constant 0 : index
    %c0_48 = arith.constant 0 : index
    %58 = vector.load %arg2[%c0_45, %c0_46, %57, %c0_47, %c0_48] : memref<1x1x6x16x512xbf16, #tpu.memory_space<vmem>>, vector<1x1x3x16x512xbf16>
    %59 = vector.shape_cast %58 : vector<1x1x3x16x512xbf16> to vector<3x16x512xbf16>
    %60 = vector.shape_cast %59 : vector<3x16x512xbf16> to vector<48x512xbf16>
    %c3 = arith.constant 3 : index
    %c0_49 = arith.constant 0 : index
    %c0_50 = arith.constant 0 : index
    %61 = vector.load %arg4[%c3, %c0_49, %c0_50] : memref<4x512x128xbf16, #tpu.memory_space<vmem>>, vector<1x512x128xbf16>
    %62 = vector.shape_cast %61 : vector<1x512x128xbf16> to vector<512x128xbf16>
    %cst_51 = arith.constant dense<0.000000e+00> : vector<48x128xf32>
    %63 = tpu.matmul %60, %62, %cst_51 {dimension_numbers = #tpu.dot_dimension_numbers<[1], [0], [0], [1], [0, 0, 1, 1], [], []>} : vector<48x512xbf16>, vector<512x128xbf16>, vector<48x128xf32> -> vector<48x128xf32>
    %64 = arith.addf %45, %63 : vector<48x128xf32>
    %c3_i32_52 = arith.constant 3 : i32
    %65 = arith.addi %0, %c3_i32_52 : i32
    %c0_53 = arith.constant 0 : index
    %c0_54 = arith.constant 0 : index
    %66 = arith.index_cast %65 : i32 to index
    %c0_55 = arith.constant 0 : index
    %c0_56 = arith.constant 0 : index
    %67 = vector.load %arg3[%c0_53, %c0_54, %66, %c0_55, %c0_56] : memref<1x1x6x16x4xf32, #tpu.memory_space<vmem>>, vector<1x1x3x16x4xf32>
    %68 = vector.shape_cast %67 : vector<1x1x3x16x4xf32> to vector<3x16x4xf32>
    %69 = vector.shape_cast %68 : vector<3x16x4xf32> to vector<48x4xf32>
    %c3_57 = arith.constant 3 : index
    %c0_58 = arith.constant 0 : index
    %c0_59 = arith.constant 0 : index
    %70 = vector.load %arg5[%c3_57, %c0_58, %c0_59] : memref<4x1x4xf32, #tpu.memory_space<vmem>>, vector<1x1x4xf32>
    %71 = vector.shape_cast %70 : vector<1x1x4xf32> to vector<1x4xf32>
    %72 = vector.broadcast %71 : vector<1x4xf32> to vector<48x4xf32>
    %73 = arith.mulf %69, %72 : vector<48x4xf32>
    %74 = arith.addf %55, %73 : vector<48x4xf32>
    %c0_60 = arith.constant 0 : index
    %c0_61 = arith.constant 0 : index
    %75 = vector.load %arg6[%c0_60, %c0_61] : memref<1x128xf32, #tpu.memory_space<vmem>>, vector<1x128xf32>
    %76 = vector.broadcast %75 : vector<1x128xf32> to vector<48x128xf32>
    %77 = arith.addf %64, %76 : vector<48x128xf32>
    %cst_62 = arith.constant 6.000000e-01 : f32
    %78 = vector.broadcast %cst_62 : f32 to vector<48x128xf32>
    %79 = arith.mulf %78, %77 : vector<48x128xf32>
    %80 = math.absf %77 : vector<48x128xf32>
    %cst_63 = arith.constant 4.000000e-01 : f32
    %81 = vector.broadcast %cst_63 : f32 to vector<48x128xf32>
    %82 = arith.mulf %81, %80 : vector<48x128xf32>
    %83 = arith.addf %79, %82 : vector<48x128xf32>
    %84 = arith.truncf %83 : vector<48x128xf32> to vector<48x128xbf16>
    %c0_64 = arith.constant 0 : index
    %c0_65 = arith.constant 0 : index
    %c0_66 = arith.constant 0 : index
    %85 = vector.load %arg8[%c0_64, %c0_65, %c0_66] : memref<1x48x128xbf16, #tpu.memory_space<vmem>>, vector<1x48x128xbf16>
    %86 = vector.shape_cast %85 : vector<1x48x128xbf16> to vector<48x128xbf16>
    %87 = vector.shape_cast %84 : vector<48x128xbf16> to vector<1x48x128xbf16>
    tpu.vector_store %arg8[%c0_64, %c0_65, %c0_66], %87 {strides = array<i32>} : memref<1x48x128xbf16, #tpu.memory_space<vmem>>, vector<1x48x128xbf16>,
    %cst_67 = arith.constant dense<0.000000e+00> : vector<48xf32>
    %88 = vector.multi_reduction <add>, %74, %cst_67 [1] : vector<48x4xf32> to vector<48xf32>
    %89 = vector.shape_cast %88 : vector<48xf32> to vector<48x1xf32>
    %c0_68 = arith.constant 0 : index
    %c0_69 = arith.constant 0 : index
    %90 = vector.load %arg7[%c0_68, %c0_69] : memref<1x1xf32, #tpu.memory_space<vmem>>, vector<1x1xf32>
    %91 = vector.broadcast %90 : vector<1x1xf32> to vector<48x1xf32>
    %92 = arith.addf %89, %91 : vector<48x1xf32>
    %c0_70 = arith.constant 0 : index
    %c0_71 = arith.constant 0 : index
    %c0_72 = arith.constant 0 : index
    %93 = vector.load %arg9[%c0_70, %c0_71, %c0_72] : memref<1x48x1xf32, #tpu.memory_space<vmem>>, vector<1x48x1xf32>
    %94 = vector.shape_cast %93 : vector<1x48x1xf32> to vector<48x1xf32>
    %95 = vector.shape_cast %92 : vector<48x1xf32> to vector<1x48x1xf32>
    tpu.vector_store %arg9[%c0_70, %c0_71, %c0_72], %95 {strides = array<i32>} : memref<1x48x1xf32, #tpu.memory_space<vmem>>, vector<1x48x1xf32>,
    return
  }
  func.func @transform_0(%arg0: i32, %arg1: i32) -> (i32, i32, i32, i32, i32) {
    %c0_i32 = arith.constant 0 : i32
    %c0_i32_0 = arith.constant 0 : i32
    %c0_i32_1 = arith.constant 0 : i32
    %c0_i32_2 = arith.constant 0 : i32
    %c0_i32_3 = arith.constant 0 : i32
    return %arg0, %c0_i32, %c0_i32_0, %c0_i32_1, %c0_i32_2 : i32, i32, i32, i32, i32
  }
  func.func @transform_1(%arg0: i32, %arg1: i32) -> (i32, i32, i32, i32, i32) {
    %c0_i32 = arith.constant 0 : i32
    %c0_i32_0 = arith.constant 0 : i32
    %c0_i32_1 = arith.constant 0 : i32
    %c0_i32_2 = arith.constant 0 : i32
    %c0_i32_3 = arith.constant 0 : i32
    return %arg0, %c0_i32, %c0_i32_0, %c0_i32_1, %c0_i32_2 : i32, i32, i32, i32, i32
  }
  func.func @transform_2(%arg0: i32, %arg1: i32) -> (i32, i32, i32) {
    %c0_i32 = arith.constant 0 : i32
    %c0_i32_0 = arith.constant 0 : i32
    %c0_i32_1 = arith.constant 0 : i32
    %c0_i32_2 = arith.constant 0 : i32
    return %c0_i32, %c0_i32_0, %c0_i32_1 : i32, i32, i32
  }
  func.func @transform_3(%arg0: i32, %arg1: i32) -> (i32, i32, i32) {
    %c0_i32 = arith.constant 0 : i32
    %c0_i32_0 = arith.constant 0 : i32
    %c0_i32_1 = arith.constant 0 : i32
    %c0_i32_2 = arith.constant 0 : i32
    return %c0_i32, %c0_i32_0, %c0_i32_1 : i32, i32, i32
  }
  func.func @transform_4(%arg0: i32, %arg1: i32) -> (i32, i32) {
    %c0_i32 = arith.constant 0 : i32
    %c0_i32_0 = arith.constant 0 : i32
    %c0_i32_1 = arith.constant 0 : i32
    return %c0_i32, %c0_i32_0 : i32, i32
  }
  func.func @transform_5(%arg0: i32, %arg1: i32) -> (i32, i32) {
    %c0_i32 = arith.constant 0 : i32
    %c0_i32_0 = arith.constant 0 : i32
    %c0_i32_1 = arith.constant 0 : i32
    return %c0_i32, %c0_i32_0 : i32, i32
  }
  func.func @transform_6(%arg0: i32, %arg1: i32) -> (i32, i32, i32) {
    %c0_i32 = arith.constant 0 : i32
    %c0_i32_0 = arith.constant 0 : i32
    return %arg0, %arg1, %c0_i32 : i32, i32, i32
  }
  func.func @transform_7(%arg0: i32, %arg1: i32) -> (i32, i32, i32) {
    %c0_i32 = arith.constant 0 : i32
    %c0_i32_0 = arith.constant 0 : i32
    return %arg0, %arg1, %c0_i32 : i32, i32, i32
  }
}

module attributes {stable_mosaic.version = 11 : i64} {
  func.func @kernel(%arg0: i32, %arg1: i32, %arg2: memref<1x1x5x16x512xbf16, #tpu.memory_space<vmem>>, %arg3: memref<1x1x5x16x4xf32, #tpu.memory_space<vmem>>, %arg4: memref<4x512x1xbf16, #tpu.memory_space<vmem>>, %arg5: memref<4x1x4xf32, #tpu.memory_space<vmem>>, %arg6: memref<1x1xf32, #tpu.memory_space<vmem>>, %arg7: memref<1x1xf32, #tpu.memory_space<vmem>>, %arg8: memref<1x32x1xf32, #tpu.memory_space<vmem>>, %arg9: memref<1x32x1xf32, #tpu.memory_space<vmem>>) attributes {dimension_semantics = [#tpu.dimension_semantics<parallel>, #tpu.dimension_semantics<parallel>], iteration_bounds = array<i64: 2, 1>, scalar_prefetch = 0 : i64, scratch_operands = 0 : i64, tpu.core_type = #tpu.core_type<tc>, window_params = [{transform_indices = @transform_0, window_bounds = array<i64: 1, 1, 5, 16, 512>}, {transform_indices = @transform_1, window_bounds = array<i64: 1, 1, 5, 16, 4>}, {pipeline_mode = #tpu.pipeline_mode<synchronous>, transform_indices = @transform_2, window_bounds = array<i64: 4, 512, 1>}, {pipeline_mode = #tpu.pipeline_mode<synchronous>, transform_indices = @transform_3, window_bounds = array<i64: 4, 1, 4>}, {pipeline_mode = #tpu.pipeline_mode<synchronous>, transform_indices = @transform_4, window_bounds = array<i64: 1, 1>}, {pipeline_mode = #tpu.pipeline_mode<synchronous>, transform_indices = @transform_5, window_bounds = array<i64: 1, 1>}, {transform_indices = @transform_6, window_bounds = array<i64: 1, 32, 1>}, {transform_indices = @transform_7, window_bounds = array<i64: 1, 32, 1>}]} {
    %c2_i32 = arith.constant 2 : i32
    %0 = arith.muli %arg1, %c2_i32 : i32
    %c0_i32 = arith.constant 0 : i32
    %1 = arith.addi %0, %c0_i32 : i32
    %c0 = arith.constant 0 : index
    %c0_0 = arith.constant 0 : index
    %2 = arith.index_cast %1 : i32 to index
    %c0_1 = arith.constant 0 : index
    %c0_2 = arith.constant 0 : index
    %3 = vector.load %arg2[%c0, %c0_0, %2, %c0_1, %c0_2] : memref<1x1x5x16x512xbf16, #tpu.memory_space<vmem>>, vector<1x1x2x16x512xbf16>
    %4 = vector.shape_cast %3 : vector<1x1x2x16x512xbf16> to vector<2x16x512xbf16>
    %5 = vector.shape_cast %4 : vector<2x16x512xbf16> to vector<32x512xbf16>
    %c0_3 = arith.constant 0 : index
    %c0_4 = arith.constant 0 : index
    %c0_5 = arith.constant 0 : index
    %6 = vector.load %arg4[%c0_3, %c0_4, %c0_5] : memref<4x512x1xbf16, #tpu.memory_space<vmem>>, vector<1x512x1xbf16>
    %7 = vector.shape_cast %6 : vector<1x512x1xbf16> to vector<512x1xbf16>
    %cst = arith.constant dense<0.000000e+00> : vector<32x1xf32>
    %8 = tpu.matmul %5, %7, %cst {dimension_numbers = #tpu.dot_dimension_numbers<[1], [0], [0], [1], [0, 0, 1, 1], [], []>} : vector<32x512xbf16>, vector<512x1xbf16>, vector<32x1xf32> -> vector<32x1xf32>
    %c0_i32_6 = arith.constant 0 : i32
    %9 = arith.addi %0, %c0_i32_6 : i32
    %c0_7 = arith.constant 0 : index
    %c0_8 = arith.constant 0 : index
    %10 = arith.index_cast %9 : i32 to index
    %c0_9 = arith.constant 0 : index
    %c0_10 = arith.constant 0 : index
    %11 = vector.load %arg3[%c0_7, %c0_8, %10, %c0_9, %c0_10] : memref<1x1x5x16x4xf32, #tpu.memory_space<vmem>>, vector<1x1x2x16x4xf32>
    %12 = vector.shape_cast %11 : vector<1x1x2x16x4xf32> to vector<2x16x4xf32>
    %13 = vector.shape_cast %12 : vector<2x16x4xf32> to vector<32x4xf32>
    %c0_11 = arith.constant 0 : index
    %c0_12 = arith.constant 0 : index
    %c0_13 = arith.constant 0 : index
    %14 = vector.load %arg5[%c0_11, %c0_12, %c0_13] : memref<4x1x4xf32, #tpu.memory_space<vmem>>, vector<1x1x4xf32>
    %15 = vector.shape_cast %14 : vector<1x1x4xf32> to vector<1x4xf32>
    %16 = vector.broadcast %15 : vector<1x4xf32> to vector<32x4xf32>
    %17 = arith.mulf %13, %16 : vector<32x4xf32>
    %c1_i32 = arith.constant 1 : i32
    %18 = arith.addi %0, %c1_i32 : i32
    %c0_14 = arith.constant 0 : index
    %c0_15 = arith.constant 0 : index
    %19 = arith.index_cast %18 : i32 to index
    %c0_16 = arith.constant 0 : index
    %c0_17 = arith.constant 0 : index
    %20 = vector.load %arg2[%c0_14, %c0_15, %19, %c0_16, %c0_17] : memref<1x1x5x16x512xbf16, #tpu.memory_space<vmem>>, vector<1x1x2x16x512xbf16>
    %21 = vector.shape_cast %20 : vector<1x1x2x16x512xbf16> to vector<2x16x512xbf16>
    %22 = vector.shape_cast %21 : vector<2x16x512xbf16> to vector<32x512xbf16>
    %c1 = arith.constant 1 : index
    %c0_18 = arith.constant 0 : index
    %c0_19 = arith.constant 0 : index
    %23 = vector.load %arg4[%c1, %c0_18, %c0_19] : memref<4x512x1xbf16, #tpu.memory_space<vmem>>, vector<1x512x1xbf16>
    %24 = vector.shape_cast %23 : vector<1x512x1xbf16> to vector<512x1xbf16>
    %cst_20 = arith.constant dense<0.000000e+00> : vector<32x1xf32>
    %25 = tpu.matmul %22, %24, %cst_20 {dimension_numbers = #tpu.dot_dimension_numbers<[1], [0], [0], [1], [0, 0, 1, 1], [], []>} : vector<32x512xbf16>, vector<512x1xbf16>, vector<32x1xf32> -> vector<32x1xf32>
    %26 = arith.addf %8, %25 : vector<32x1xf32>
    %c1_i32_21 = arith.constant 1 : i32
    %27 = arith.addi %0, %c1_i32_21 : i32
    %c0_22 = arith.constant 0 : index
    %c0_23 = arith.constant 0 : index
    %28 = arith.index_cast %27 : i32 to index
    %c0_24 = arith.constant 0 : index
    %c0_25 = arith.constant 0 : index
    %29 = vector.load %arg3[%c0_22, %c0_23, %28, %c0_24, %c0_25] : memref<1x1x5x16x4xf32, #tpu.memory_space<vmem>>, vector<1x1x2x16x4xf32>
    %30 = vector.shape_cast %29 : vector<1x1x2x16x4xf32> to vector<2x16x4xf32>
    %31 = vector.shape_cast %30 : vector<2x16x4xf32> to vector<32x4xf32>
    %c1_26 = arith.constant 1 : index
    %c0_27 = arith.constant 0 : index
    %c0_28 = arith.constant 0 : index
    %32 = vector.load %arg5[%c1_26, %c0_27, %c0_28] : memref<4x1x4xf32, #tpu.memory_space<vmem>>, vector<1x1x4xf32>
    %33 = vector.shape_cast %32 : vector<1x1x4xf32> to vector<1x4xf32>
    %34 = vector.broadcast %33 : vector<1x4xf32> to vector<32x4xf32>
    %35 = arith.mulf %31, %34 : vector<32x4xf32>
    %36 = arith.addf %17, %35 : vector<32x4xf32>
    %c2_i32_29 = arith.constant 2 : i32
    %37 = arith.addi %0, %c2_i32_29 : i32
    %c0_30 = arith.constant 0 : index
    %c0_31 = arith.constant 0 : index
    %38 = arith.index_cast %37 : i32 to index
    %c0_32 = arith.constant 0 : index
    %c0_33 = arith.constant 0 : index
    %39 = vector.load %arg2[%c0_30, %c0_31, %38, %c0_32, %c0_33] : memref<1x1x5x16x512xbf16, #tpu.memory_space<vmem>>, vector<1x1x2x16x512xbf16>
    %40 = vector.shape_cast %39 : vector<1x1x2x16x512xbf16> to vector<2x16x512xbf16>
    %41 = vector.shape_cast %40 : vector<2x16x512xbf16> to vector<32x512xbf16>
    %c2 = arith.constant 2 : index
    %c0_34 = arith.constant 0 : index
    %c0_35 = arith.constant 0 : index
    %42 = vector.load %arg4[%c2, %c0_34, %c0_35] : memref<4x512x1xbf16, #tpu.memory_space<vmem>>, vector<1x512x1xbf16>
    %43 = vector.shape_cast %42 : vector<1x512x1xbf16> to vector<512x1xbf16>
    %cst_36 = arith.constant dense<0.000000e+00> : vector<32x1xf32>
    %44 = tpu.matmul %41, %43, %cst_36 {dimension_numbers = #tpu.dot_dimension_numbers<[1], [0], [0], [1], [0, 0, 1, 1], [], []>} : vector<32x512xbf16>, vector<512x1xbf16>, vector<32x1xf32> -> vector<32x1xf32>
    %45 = arith.addf %26, %44 : vector<32x1xf32>
    %c2_i32_37 = arith.constant 2 : i32
    %46 = arith.addi %0, %c2_i32_37 : i32
    %c0_38 = arith.constant 0 : index
    %c0_39 = arith.constant 0 : index
    %47 = arith.index_cast %46 : i32 to index
    %c0_40 = arith.constant 0 : index
    %c0_41 = arith.constant 0 : index
    %48 = vector.load %arg3[%c0_38, %c0_39, %47, %c0_40, %c0_41] : memref<1x1x5x16x4xf32, #tpu.memory_space<vmem>>, vector<1x1x2x16x4xf32>
    %49 = vector.shape_cast %48 : vector<1x1x2x16x4xf32> to vector<2x16x4xf32>
    %50 = vector.shape_cast %49 : vector<2x16x4xf32> to vector<32x4xf32>
    %c2_42 = arith.constant 2 : index
    %c0_43 = arith.constant 0 : index
    %c0_44 = arith.constant 0 : index
    %51 = vector.load %arg5[%c2_42, %c0_43, %c0_44] : memref<4x1x4xf32, #tpu.memory_space<vmem>>, vector<1x1x4xf32>
    %52 = vector.shape_cast %51 : vector<1x1x4xf32> to vector<1x4xf32>
    %53 = vector.broadcast %52 : vector<1x4xf32> to vector<32x4xf32>
    %54 = arith.mulf %50, %53 : vector<32x4xf32>
    %55 = arith.addf %36, %54 : vector<32x4xf32>
    %c3_i32 = arith.constant 3 : i32
    %56 = arith.addi %0, %c3_i32 : i32
    %c0_45 = arith.constant 0 : index
    %c0_46 = arith.constant 0 : index
    %57 = arith.index_cast %56 : i32 to index
    %c0_47 = arith.constant 0 : index
    %c0_48 = arith.constant 0 : index
    %58 = vector.load %arg2[%c0_45, %c0_46, %57, %c0_47, %c0_48] : memref<1x1x5x16x512xbf16, #tpu.memory_space<vmem>>, vector<1x1x2x16x512xbf16>
    %59 = vector.shape_cast %58 : vector<1x1x2x16x512xbf16> to vector<2x16x512xbf16>
    %60 = vector.shape_cast %59 : vector<2x16x512xbf16> to vector<32x512xbf16>
    %c3 = arith.constant 3 : index
    %c0_49 = arith.constant 0 : index
    %c0_50 = arith.constant 0 : index
    %61 = vector.load %arg4[%c3, %c0_49, %c0_50] : memref<4x512x1xbf16, #tpu.memory_space<vmem>>, vector<1x512x1xbf16>
    %62 = vector.shape_cast %61 : vector<1x512x1xbf16> to vector<512x1xbf16>
    %cst_51 = arith.constant dense<0.000000e+00> : vector<32x1xf32>
    %63 = tpu.matmul %60, %62, %cst_51 {dimension_numbers = #tpu.dot_dimension_numbers<[1], [0], [0], [1], [0, 0, 1, 1], [], []>} : vector<32x512xbf16>, vector<512x1xbf16>, vector<32x1xf32> -> vector<32x1xf32>
    %64 = arith.addf %45, %63 : vector<32x1xf32>
    %c3_i32_52 = arith.constant 3 : i32
    %65 = arith.addi %0, %c3_i32_52 : i32
    %c0_53 = arith.constant 0 : index
    %c0_54 = arith.constant 0 : index
    %66 = arith.index_cast %65 : i32 to index
    %c0_55 = arith.constant 0 : index
    %c0_56 = arith.constant 0 : index
    %67 = vector.load %arg3[%c0_53, %c0_54, %66, %c0_55, %c0_56] : memref<1x1x5x16x4xf32, #tpu.memory_space<vmem>>, vector<1x1x2x16x4xf32>
    %68 = vector.shape_cast %67 : vector<1x1x2x16x4xf32> to vector<2x16x4xf32>
    %69 = vector.shape_cast %68 : vector<2x16x4xf32> to vector<32x4xf32>
    %c3_57 = arith.constant 3 : index
    %c0_58 = arith.constant 0 : index
    %c0_59 = arith.constant 0 : index
    %70 = vector.load %arg5[%c3_57, %c0_58, %c0_59] : memref<4x1x4xf32, #tpu.memory_space<vmem>>, vector<1x1x4xf32>
    %71 = vector.shape_cast %70 : vector<1x1x4xf32> to vector<1x4xf32>
    %72 = vector.broadcast %71 : vector<1x4xf32> to vector<32x4xf32>
    %73 = arith.mulf %69, %72 : vector<32x4xf32>
    %74 = arith.addf %55, %73 : vector<32x4xf32>
    %c0_60 = arith.constant 0 : index
    %c0_61 = arith.constant 0 : index
    %75 = vector.load %arg6[%c0_60, %c0_61] : memref<1x1xf32, #tpu.memory_space<vmem>>, vector<1x1xf32>
    %76 = vector.broadcast %75 : vector<1x1xf32> to vector<32x1xf32>
    %77 = arith.addf %64, %76 : vector<32x1xf32>
    %78 = arith.negf %77 : vector<32x1xf32>
    %79 = math.exp %78 : vector<32x1xf32>
    %cst_62 = arith.constant 1.000000e+00 : f32
    %80 = vector.broadcast %cst_62 : f32 to vector<32x1xf32>
    %81 = arith.addf %80, %79 : vector<32x1xf32>
    %82 = arith.divf %80, %81 : vector<32x1xf32>
    %c0_63 = arith.constant 0 : index
    %c0_64 = arith.constant 0 : index
    %c0_65 = arith.constant 0 : index
    %83 = vector.load %arg8[%c0_63, %c0_64, %c0_65] : memref<1x32x1xf32, #tpu.memory_space<vmem>>, vector<1x32x1xf32>
    %84 = vector.shape_cast %83 : vector<1x32x1xf32> to vector<32x1xf32>
    %85 = vector.shape_cast %82 : vector<32x1xf32> to vector<1x32x1xf32>
    tpu.vector_store %arg8[%c0_63, %c0_64, %c0_65], %85 {strides = array<i32>} : memref<1x32x1xf32, #tpu.memory_space<vmem>>, vector<1x32x1xf32>,
    %cst_66 = arith.constant dense<0.000000e+00> : vector<32xf32>
    %86 = vector.multi_reduction <add>, %74, %cst_66 [1] : vector<32x4xf32> to vector<32xf32>
    %87 = vector.shape_cast %86 : vector<32xf32> to vector<32x1xf32>
    %c0_67 = arith.constant 0 : index
    %c0_68 = arith.constant 0 : index
    %88 = vector.load %arg7[%c0_67, %c0_68] : memref<1x1xf32, #tpu.memory_space<vmem>>, vector<1x1xf32>
    %89 = vector.broadcast %88 : vector<1x1xf32> to vector<32x1xf32>
    %90 = arith.addf %87, %89 : vector<32x1xf32>
    %c0_69 = arith.constant 0 : index
    %c0_70 = arith.constant 0 : index
    %c0_71 = arith.constant 0 : index
    %91 = vector.load %arg9[%c0_69, %c0_70, %c0_71] : memref<1x32x1xf32, #tpu.memory_space<vmem>>, vector<1x32x1xf32>
    %92 = vector.shape_cast %91 : vector<1x32x1xf32> to vector<32x1xf32>
    %93 = vector.shape_cast %90 : vector<32x1xf32> to vector<1x32x1xf32>
    tpu.vector_store %arg9[%c0_69, %c0_70, %c0_71], %93 {strides = array<i32>} : memref<1x32x1xf32, #tpu.memory_space<vmem>>, vector<1x32x1xf32>,
    return
  }
  func.func @transform_0(%arg0: i32, %arg1: i32) -> (i32, i32, i32, i32, i32) {
    %c0_i32 = arith.constant 0 : i32
    %c0_i32_0 = arith.constant 0 : i32
    %c0_i32_1 = arith.constant 0 : i32
    %c0_i32_2 = arith.constant 0 : i32
    %c0_i32_3 = arith.constant 0 : i32
    return %arg0, %c0_i32, %c0_i32_0, %c0_i32_1, %c0_i32_2 : i32, i32, i32, i32, i32
  }
  func.func @transform_1(%arg0: i32, %arg1: i32) -> (i32, i32, i32, i32, i32) {
    %c0_i32 = arith.constant 0 : i32
    %c0_i32_0 = arith.constant 0 : i32
    %c0_i32_1 = arith.constant 0 : i32
    %c0_i32_2 = arith.constant 0 : i32
    %c0_i32_3 = arith.constant 0 : i32
    return %arg0, %c0_i32, %c0_i32_0, %c0_i32_1, %c0_i32_2 : i32, i32, i32, i32, i32
  }
  func.func @transform_2(%arg0: i32, %arg1: i32) -> (i32, i32, i32) {
    %c0_i32 = arith.constant 0 : i32
    %c0_i32_0 = arith.constant 0 : i32
    %c0_i32_1 = arith.constant 0 : i32
    %c0_i32_2 = arith.constant 0 : i32
    return %c0_i32, %c0_i32_0, %c0_i32_1 : i32, i32, i32
  }
  func.func @transform_3(%arg0: i32, %arg1: i32) -> (i32, i32, i32) {
    %c0_i32 = arith.constant 0 : i32
    %c0_i32_0 = arith.constant 0 : i32
    %c0_i32_1 = arith.constant 0 : i32
    %c0_i32_2 = arith.constant 0 : i32
    return %c0_i32, %c0_i32_0, %c0_i32_1 : i32, i32, i32
  }
  func.func @transform_4(%arg0: i32, %arg1: i32) -> (i32, i32) {
    %c0_i32 = arith.constant 0 : i32
    %c0_i32_0 = arith.constant 0 : i32
    %c0_i32_1 = arith.constant 0 : i32
    return %c0_i32, %c0_i32_0 : i32, i32
  }
  func.func @transform_5(%arg0: i32, %arg1: i32) -> (i32, i32) {
    %c0_i32 = arith.constant 0 : i32
    %c0_i32_0 = arith.constant 0 : i32
    %c0_i32_1 = arith.constant 0 : i32
    return %c0_i32, %c0_i32_0 : i32, i32
  }
  func.func @transform_6(%arg0: i32, %arg1: i32) -> (i32, i32, i32) {
    %c0_i32 = arith.constant 0 : i32
    %c0_i32_0 = arith.constant 0 : i32
    return %arg0, %arg1, %c0_i32 : i32, i32, i32
  }
  func.func @transform_7(%arg0: i32, %arg1: i32) -> (i32, i32, i32) {
    %c0_i32 = arith.constant 0 : i32
    %c0_i32_0 = arith.constant 0 : i32
    return %arg0, %arg1, %c0_i32 : i32, i32, i32
  }
}

</mosaic_0001>

<llo_original>
// kernel: texd_forward.5
$region0: #{texd_forward.5}
  #allocation0 [shape = 'u32[]', space=smem, size = 0x4, offset = 0x4, fixed_abs, tag = 'smem constant byte address 0x4 - core index']
  #allocation1 [shape = 'u32[72,128]{1,0:T(1,128)}', space=vmem, size = 0x9000, scoped, tag = 'internal scratch']
  #allocation2 [shape = 'f32[1,1]{1,0:T(1,128)S(1)}', space=vmem, size = 0x200, scoped, tag = 'scoped memory for texd_forward.5']
  %s0 = inlined_call_operand.vmem [shape: bf16[2,2,17,16,24], index: 0, kind: input, shape index: {}]
  %s1 = inlined_call_operand.vmem [shape: f32[2,2,17,16,4], index: 1, kind: input, shape index: {}]
  %s2 = inlined_call_operand.vmem [shape: bf16[4,24,64], index: 2, kind: input, shape index: {}]
  %s3 = inlined_call_operand.vmem [shape: f32[4,1,4], index: 3, kind: input, shape index: {}]
  %s4 = inlined_call_operand.vmem [shape: f32[1,64], index: 4, kind: input, shape index: {}]
  %s5 = inlined_call_operand.<no memory space> [shape: f32[1,1], index: 5, kind: input, shape index: {}]
  %s6 = inlined_call_operand.vmem [shape: bf16[2,256,64], index: 6, kind: output, shape index: {0}]
  %s7 = inlined_call_operand.vmem [shape: f32[2,256,1], index: 7, kind: output, shape index: {1}]
  %8 = xla_tuple %s6, %s7
  %s9 = sld [smem:[#allocation0]]
  $region65: #{texd_forward.5} parent=0
    _
  %s11 = ssub.s32 1, %s9
  %s12 = scalar_select 0, %s11, %s9
  %v13 = vstv %s5
  %14 = vst [vmem:[#allocation2] sm:$0x1] %v13
  loop: start=0, step=1, limit=4
  $region2: #{texd_forward.5} parent=0 // loop_pre_header
    _
  $region3: #{texd_forward.5} parent=0 // loop_header
    %s16 = sphi 0, %s20
    %p17 = scmp.ge.s32.totalorder %s16, 4
    %s23 = sphi 0, %s35
    %s24 = sphi 0, %s31
    %s25 = sphi 0, %s23
    %s26 = sphi 0, %s24
    %s27 = sphi 0, %s25
    %s28 = sphi 0, %s26
    %s38 = sphi 0, %s40
    %s41 = sphi 0, %s38
    %s42 = sphi 0, %s41
    %s58 = sphi 0, %s42
    %s64 = sphi 0, %s66
    %s67 = sphi 0, %s64
    %s68 = sphi 0, %s67
    %s84 = sphi 0, %s68
    %s88 = sphi 0, %s88
    %s90 = sphi 0, %s88
    %s91 = sphi 0, %s90
    %s105 = sphi 0, %s91
    %s109 = sphi 0, %s109
    %s111 = sphi 0, %s109
    %s112 = sphi 0, %s111
    %s126 = sphi 0, %s112
    %s130 = sphi 0, %s130
    %s132 = sphi 0, %s130
    %s133 = sphi 0, %s132
    %s147 = sphi 0, %s133
    %s151 = sphi 0, %s151
    %s153 = sphi 0, %s151
    %s154 = sphi 0, %s153
    %s168 = sphi 0, %s154
    %s176 = sphi 0, %s178
    %s179 = sphi 0, %s176
    %s180 = sphi 0, %s179
    %s196 = sphi 0, %s180
    %s204 = sphi 0, %s206
    %s207 = sphi 0, %s204
    %s208 = sphi 0, %s207
    %s224 = sphi 0, %s208
  $region4: #{texd_forward.5} parent=0 // loop_header_branch
    %19 = sbr.rel (%p17) target = $region8
  $region5: #{texd_forward.5} parent=0 // loop_body
    %s21 = ssub.s32 %s16, 1
    %s22 = ssub.s32 %s16, 2
    %s29 = sadd.s32 1, %s24
    %p30 = scmp.ge.s32.totalorder %s29, 1
    %s31 = scalar_select %p30, 0, %s29
    %s32 = sadd.s32 1, %s23
    %s33 = scalar_select %p30, %s32, %s23
    %p34 = scmp.ge.s32.totalorder %s33, 2
    %s35 = scalar_select %p34, 0, %s33
    %s36 = ssub.s32 %s23, %s35
    %p37 = scmp.eq.s32.totalorder %s36, 0
    %s39 = sadd.s32 %s38, 1
    %s40 = scalar_select %p37, %s38, %s39
    %p43 = pneg %p37
    %p44 = scmp.eq.s32.totalorder %s16, 1
    %p45 = por %p43, %p44
    %p46 = scmp.ne.s32.totalorder %s38, %s41
    %p47 = scmp.eq.s32.totalorder %s16, 0
    %p48 = por %p46, %p47
    %p49 = scmp.ne.s32.totalorder %s38, %s41
    %p50 = scmp.eq.s32.totalorder %s21, 1
    %p51 = por %p49, %p50
    %p52 = scmp.ne.s32.totalorder %s41, %s42
    %p53 = scmp.eq.s32.totalorder %s21, 0
    %p54 = por %p52, %p53
    %p55 = scmp.ne.s32.totalorder %s41, %s42
    %p56 = scmp.eq.s32.totalorder %s22, 1
    %p57 = por %p55, %p56
    %p59 = scmp.ne.s32.totalorder %s42, %s58
    %p60 = scmp.eq.s32.totalorder %s22, 0
    %p61 = por %p59, %p60
    %s62 = ssub.s32 %s23, %s35
    %p63 = scmp.eq.s32.totalorder %s62, 0
    %s65 = sadd.s32 %s64, 1
    %s66 = scalar_select %p63, %s64, %s65
    %p69 = pneg %p63
    %p70 = scmp.eq.s32.totalorder %s16, 1
    %p71 = por %p69, %p70
    %p72 = scmp.ne.s32.totalorder %s64, %s67
    %p73 = scmp.eq.s32.totalorder %s16, 0
    %p74 = por %p72, %p73
    %p75 = scmp.ne.s32.totalorder %s64, %s67
    %p76 = scmp.eq.s32.totalorder %s21, 1
    %p77 = por %p75, %p76
    %p78 = scmp.ne.s32.totalorder %s67, %s68
    %p79 = scmp.eq.s32.totalorder %s21, 0
    %p80 = por %p78, %p79
    %p81 = scmp.ne.s32.totalorder %s67, %s68
    %p82 = scmp.eq.s32.totalorder %s22, 1
    %p83 = por %p81, %p82
    %p85 = scmp.ne.s32.totalorder %s68, %s84
    %p86 = scmp.eq.s32.totalorder %s22, 0
    %p87 = por %p85, %p86
    %s89 = sadd.s32 %s88, 1
    %p92 = scmp.eq.s32.totalorder %s16, 1
    %p93 = scmp.ne.s32.totalorder %s88, %s90
    %p94 = scmp.eq.s32.totalorder %s16, 0
    %p95 = por %p93, %p94
    %p96 = scmp.ne.s32.totalorder %s88, %s90
    %p97 = scmp.eq.s32.totalorder %s21, 1
    %p98 = por %p96, %p97
    %p99 = scmp.ne.s32.totalorder %s90, %s91
    %p100 = scmp.eq.s32.totalorder %s21, 0
    %p101 = por %p99, %p100
    %p102 = scmp.ne.s32.totalorder %s90, %s91
    %p103 = scmp.eq.s32.totalorder %s22, 1
    %p104 = por %p102, %p103
    %p106 = scmp.ne.s32.totalorder %s91, %s105
    %p107 = scmp.eq.s32.totalorder %s22, 0
    %p108 = por %p106, %p107
    %s110 = sadd.s32 %s109, 1
    %p113 = scmp.eq.s32.totalorder %s16, 1
    %p114 = scmp.ne.s32.totalorder %s109, %s111
    %p115 = scmp.eq.s32.totalorder %s16, 0
    %p116 = por %p114, %p115
    %p117 = scmp.ne.s32.totalorder %s109, %s111
    %p118 = scmp.eq.s32.totalorder %s21, 1
    %p119 = por %p117, %p118
    %p120 = scmp.ne.s32.totalorder %s111, %s112
    %p121 = scmp.eq.s32.totalorder %s21, 0
    %p122 = por %p120, %p121
    %p123 = scmp.ne.s32.totalorder %s111, %s112
    %p124 = scmp.eq.s32.totalorder %s22, 1
    %p125 = por %p123, %p124
    %p127 = scmp.ne.s32.totalorder %s112, %s126
    %p128 = scmp.eq.s32.totalorder %s22, 0
    %p129 = por %p127, %p128
    %s131 = sadd.s32 %s130, 1
    %p134 = scmp.eq.s32.totalorder %s16, 1
    %p135 = scmp.ne.s32.totalorder %s130, %s132
    %p136 = scmp.eq.s32.totalorder %s16, 0
    %p137 = por %p135, %p136
    %p138 = scmp.ne.s32.totalorder %s130, %s132
    %p139 = scmp.eq.s32.totalorder %s21, 1
    %p140 = por %p138, %p139
    %p141 = scmp.ne.s32.totalorder %s132, %s133
    %p142 = scmp.eq.s32.totalorder %s21, 0
    %p143 = por %p141, %p142
    %p144 = scmp.ne.s32.totalorder %s132, %s133
    %p145 = scmp.eq.s32.totalorder %s22, 1
    %p146 = por %p144, %p145
    %p148 = scmp.ne.s32.totalorder %s133, %s147
    %p149 = scmp.eq.s32.totalorder %s22, 0
    %p150 = por %p148, %p149
    %s152 = sadd.s32 %s151, 1
    %p155 = scmp.eq.s32.totalorder %s16, 1
    %p156 = scmp.ne.s32.totalorder %s151, %s153
    %p157 = scmp.eq.s32.totalorder %s16, 0
    %p158 = por %p156, %p157
    %p159 = scmp.ne.s32.totalorder %s151, %s153
    %p160 = scmp.eq.s32.totalorder %s21, 1
    %p161 = por %p159, %p160
    %p162 = scmp.ne.s32.totalorder %s153, %s154
    %p163 = scmp.eq.s32.totalorder %s21, 0
    %p164 = por %p162, %p163
    %p165 = scmp.ne.s32.totalorder %s153, %s154
    %p166 = scmp.eq.s32.totalorder %s22, 1
    %p167 = por %p165, %p166
    %p169 = scmp.ne.s32.totalorder %s154, %s168
    %p170 = scmp.eq.s32.totalorder %s22, 0
    %p171 = por %p169, %p170
    %s172 = ssub.s32 %s23, %s35
    %s173 = ssub.s32 %s24, %s31
    %s174 = sor.u32 %s172, %s173
    %p175 = scmp.eq.s32.totalorder %s174, 0
    %s177 = sadd.s32 %s176, 1
    %s178 = scalar_select %p175, %s176, %s177
    %p181 = pneg %p175
    %p182 = scmp.eq.s32.totalorder %s16, 1
    %p183 = por %p181, %p182
    %p184 = scmp.ne.s32.totalorder %s176, %s179
    %p185 = scmp.eq.s32.totalorder %s16, 0
    %p186 = por %p184, %p185
    %p187 = scmp.ne.s32.totalorder %s176, %s179
    %p188 = scmp.eq.s32.totalorder %s21, 1
    %p189 = por %p187, %p188
    %p190 = scmp.ne.s32.totalorder %s179, %s180
    %p191 = scmp.eq.s32.totalorder %s21, 0
    %p192 = por %p190, %p191
    %p193 = scmp.ne.s32.totalorder %s179, %s180
    %p194 = scmp.eq.s32.totalorder %s22, 1
    %p195 = por %p193, %p194
    %p197 = scmp.ne.s32.totalorder %s180, %s196
    %p198 = scmp.eq.s32.totalorder %s22, 0
    %p199 = por %p197, %p198
    %s200 = ssub.s32 %s23, %s35
    %s201 = ssub.s32 %s24, %s31
    %s202 = sor.u32 %s200, %s201
    %p203 = scmp.eq.s32.totalorder %s202, 0
    %s205 = sadd.s32 %s204, 1
    %s206 = scalar_select %p203, %s204, %s205
    %p209 = pneg %p203
    %p210 = scmp.eq.s32.totalorder %s16, 1
    %p211 = por %p209, %p210
    %p212 = scmp.ne.s32.totalorder %s204, %s207
    %p213 = scmp.eq.s32.totalorder %s16, 0
    %p214 = por %p212, %p213
    %p215 = scmp.ne.s32.totalorder %s204, %s207
    %p216 = scmp.eq.s32.totalorder %s21, 1
    %p217 = por %p215, %p216
    %p218 = scmp.ne.s32.totalorder %s207, %s208
    %p219 = scmp.eq.s32.totalorder %s21, 0
    %p220 = por %p218, %p219
    %p221 = scmp.ne.s32.totalorder %s207, %s208
    %p222 = scmp.eq.s32.totalorder %s22, 1
    %p223 = por %p221, %p222
    %p225 = scmp.ne.s32.totalorder %s208, %s224
    %p226 = scmp.eq.s32.totalorder %s22, 0
    %p227 = por %p225, %p226
    %p228 = scmp.le.s32.totalorder 1, %s16
    %p229 = scmp.lt.s32.totalorder %s16, 3
    %p230 = pnand %p228, %p229
    %p231 = pneg %p230
    // Predicated region
    $region9: #{texd_forward.5} parent=5 // pred_check
      _
    $region10: #{texd_forward.5} parent=5 // pred_check_branch
      %233 = sbr.rel (%p230) target = $region12
    $region11: #{texd_forward.5} parent=5 // pred_region
      %s234 = ssub.s32 %s16, 1
      // Predicated region
      $region13: #{texd_forward.5} parent=11 // pred_check
        %p235 = pneg %p101
      $region14: #{texd_forward.5} parent=11 // pred_check_branch
        %237 = sbr.rel (%p235) target = $region16
      $region15: #{texd_forward.5} parent=11 // pred_region
        _
      $region16: #{texd_forward.5} parent=11 // pred_fallthru
        _
      // Predicated region
      $region17: #{texd_forward.5} parent=11 // pred_check
        %p238 = pneg %p122
      $region18: #{texd_forward.5} parent=11 // pred_check_branch
        %240 = sbr.rel (%p238) target = $region20
      $region19: #{texd_forward.5} parent=11 // pred_region
        _
      $region20: #{texd_forward.5} parent=11 // pred_fallthru
        _
      // Predicated region
      $region21: #{texd_forward.5} parent=11 // pred_check
        %p241 = pneg %p143
      $region22: #{texd_forward.5} parent=11 // pred_check_branch
        %243 = sbr.rel (%p241) target = $region24
      $region23: #{texd_forward.5} parent=11 // pred_region
        _
      $region24: #{texd_forward.5} parent=11 // pred_fallthru
        _
      // Predicated region
      $region25: #{texd_forward.5} parent=11 // pred_check
        %p244 = pneg %p164
      $region26: #{texd_forward.5} parent=11 // pred_check_branch
        %246 = sbr.rel (%p244) target = $region28
      $region27: #{texd_forward.5} parent=11 // pred_region
        _
      $region28: #{texd_forward.5} parent=11 // pred_fallthru
        _
    $region12: #{texd_forward.5} parent=5 // pred_fallthru
      _
    %p247 = scmp.lt.s32.totalorder %s16, 2
    // Predicated region
    $region29: #{texd_forward.5} parent=5 // pred_check
      %p248 = pneg %p247
    $region30: #{texd_forward.5} parent=5 // pred_check_branch
      %250 = sbr.rel (%p248) target = $region32
    $region31: #{texd_forward.5} parent=5 // pred_region
      // Predicated region
      $region33: #{texd_forward.5} parent=31 // pred_check
        %p251 = pneg %p48
      $region34: #{texd_forward.5} parent=31 // pred_check_branch
        %253 = sbr.rel (%p251) target = $region36
      $region35: #{texd_forward.5} parent=31 // pred_region
        %p254 = scmp.lt.s32.totalorder %s23, 1
        %s255 = scalar_select %p254, %s23, 1
        %s256 = smul.addr %s255, 68
        %s257 = smul.addr %s256, 4
        %s258 = scalar_lea.vmem %s0, %s257
      $region36: #{texd_forward.5} parent=31 // pred_fallthru
        _
      // Predicated region
      $region37: #{texd_forward.5} parent=31 // pred_check
        %p259 = pneg %p74
      $region38: #{texd_forward.5} parent=31 // pred_check_branch
        %261 = sbr.rel (%p259) target = $region40
      $region39: #{texd_forward.5} parent=31 // pred_region
        %p262 = scmp.lt.s32.totalorder %s23, 1
        %s263 = scalar_select %p262, %s23, 1
        %s264 = smul.addr %s263, 68
        %s265 = smul.addr %s264, 8
        %s266 = scalar_lea.vmem %s1, %s265
      $region40: #{texd_forward.5} parent=31 // pred_fallthru
        _
    $region32: #{texd_forward.5} parent=5 // pred_fallthru
      _
    %p267 = scmp.le.s32.totalorder 1, %s16
    %p268 = scmp.lt.s32.totalorder %s16, 3
    %p269 = pnand %p267, %p268
    %p270 = pneg %p269
    // Predicated region
    $region41: #{texd_forward.5} parent=5 // pred_check
      _
    $region42: #{texd_forward.5} parent=5 // pred_check_branch
      %272 = sbr.rel (%p269) target = $region44
    $region43: #{texd_forward.5} parent=5 // pred_region
      %s273 = ssub.s32 %s16, 1
      %p274 = scmp.lt.s32.totalorder %s25, 1
      %s275 = scalar_select %p274, %s25, 1
      %s276 = smul.addr %s275, 68
      %s277 = smul.addr %s276, 4
      %s278 = scalar_lea.vmem %s0, %s277
      %p279 = pneg %p54
      %p280 = pneg %p51
      %p281 = scmp.lt.s32.totalorder %s25, 1
      %s282 = scalar_select %p281, %s25, 1
      %s283 = smul.addr %s282, 68
      %s284 = smul.addr %s283, 8
      %s285 = scalar_lea.vmem %s1, %s284
      %p286 = pneg %p80
      %p287 = pneg %p77
      %p288 = pneg %p101
      %p289 = pneg %p98
      %p290 = pneg %p122
      %p291 = pneg %p119
      %p292 = pneg %p143
      %p293 = pneg %p140
      %p294 = pneg %p164
      %p295 = pneg %p161
      %p296 = pneg %p192
      %p297 = pneg %p189
      %s298 = smul.u32 32, %s26
      %p299 = scmp.lt.s32.totalorder %s25, 1
      %s300 = scalar_select %p299, %s25, 1
      %p301 = scmp.lt.s32.totalorder %s298, 31
      %s302 = scalar_select %p301, %s298, 31
      %s303 = smul.addr %s300, 32
      %s304 = sadd.s32 %s302, %s303
      %s305 = smul.addr %s304, 4
      %s306 = scalar_lea.vmem %s6, %s305
      %p307 = pneg %p220
      %p308 = pneg %p217
      %s309 = smul.u32 32, %s26
      %p310 = scmp.lt.s32.totalorder %s25, 1
      %s311 = scalar_select %p310, %s25, 1
      %p312 = scmp.lt.s32.totalorder %s309, 31
      %s313 = scalar_select %p312, %s309, 31
      %s314 = smul.addr %s311, 32
      %s315 = sadd.s32 %s313, %s314
      %s316 = smul.addr %s315, 8
      %s317 = scalar_lea.vmem %s7, %s316
      %p318 = scmp.lt.s32.totalorder %s25, 1
      %s319 = scalar_select %p318, %s25, 1
      %s320 = smul.addr %s319, 68
      %s321 = smul.addr %s320, 4
      %s322 = scalar_lea.vmem %s0, %s321
      %p323 = scmp.lt.s32.totalorder %s25, 1
      %s324 = scalar_select %p323, %s25, 1
      %s325 = smul.addr %s324, 68
      %s326 = smul.addr %s325, 8
      %s327 = scalar_lea.vmem %s1, %s326
      %s328 = smul.u32 32, %s26
      %p329 = scmp.lt.s32.totalorder %s25, 1
      %s330 = scalar_select %p329, %s25, 1
      %p331 = scmp.lt.s32.totalorder %s328, 31
      %s332 = scalar_select %p331, %s328, 31
      %s333 = smul.addr %s330, 32
      %s334 = sadd.s32 %s332, %s333
      %s335 = smul.addr %s334, 4
      %s336 = scalar_lea.vmem %s6, %s335
      %s337 = smul.u32 32, %s26
      %s338 = smul.u32 32, %s26
      %p339 = scmp.lt.s32.totalorder %s25, 1
      %s340 = scalar_select %p339, %s25, 1
      %p341 = scmp.lt.s32.totalorder %s338, 31
      %s342 = scalar_select %p341, %s338, 31
      %s343 = smul.addr %s340, 32
      %s344 = sadd.s32 %s342, %s343
      %s345 = smul.addr %s344, 8
      %s346 = scalar_lea.vmem %s7, %s345
      %s347 = smul.u32 32, %s26
      %s349 = smul.u32 %s26, 16
      %s350 = smul.u32 %s349, 2
      %s351 = smul.addr %s350, 4
      %s352 = scalar_lea.vmem %s322, %s351
      %v353 = vld [vmem:[%s352] sm:$0xf]
      %v354 = vld [vmem:[%s352 + $0x4] sm:$0xf]
      %v355 = vld [vmem:[%s352 + $0x8] sm:$0xf]
      %v356 = vld [vmem:[%s352 + $0xc] sm:$0xf]
      %v357 = vld [vmem:[%s352 + $0x10] sm:$0xf]
      %v358 = vld [vmem:[%s352 + $0x14] sm:$0xf]
      %v359 = vld [vmem:[%s352 + $0x18] sm:$0xf]
      %v360 = vld [vmem:[%s352 + $0x1c] sm:$0xf]
      %v361 = vld [vmem:[%s352 + $0x20] sm:$0xf]
      %v362 = vld [vmem:[%s352 + $0x24] sm:$0xf]
      %v363 = vld [vmem:[%s352 + $0x28] sm:$0xf]
      %v364 = vld [vmem:[%s352 + $0x2c] sm:$0xf]
      %v365 = vld [vmem:[%s352 + $0x30] sm:$0xf]
      %v366 = vld [vmem:[%s352 + $0x34] sm:$0xf]
      %v367 = vld [vmem:[%s352 + $0x38] sm:$0xf]
      %v368 = vld [vmem:[%s352 + $0x3c] sm:$0xf]
      %v369 = vld [vmem:[%s352 + $0x40] sm:$0xf]
      %v370 = vld [vmem:[%s352 + $0x44] sm:$0xf]
      %v371 = vld [vmem:[%s352 + $0x48] sm:$0xf]
      %v372 = vld [vmem:[%s352 + $0x4c] sm:$0xf]
      %v373 = vld [vmem:[%s352 + $0x50] sm:$0xf]
      %v374 = vld [vmem:[%s352 + $0x54] sm:$0xf]
      %v375 = vld [vmem:[%s352 + $0x58] sm:$0xf]
      %v376 = vld [vmem:[%s352 + $0x5c] sm:$0xf]
      %v377 = vld [vmem:[%s352 + $0x60] sm:$0xf]
      %v378 = vld [vmem:[%s352 + $0x64] sm:$0xf]
      %v379 = vld [vmem:[%s352 + $0x68] sm:$0xf]
      %v380 = vld [vmem:[%s352 + $0x6c] sm:$0xf]
      %v381 = vld [vmem:[%s352 + $0x70] sm:$0xf]
      %v382 = vld [vmem:[%s352 + $0x74] sm:$0xf]
      %v383 = vld [vmem:[%s352 + $0x78] sm:$0xf]
      %v384 = vld [vmem:[%s352 + $0x7c] sm:$0xf]
      %v385 = vld [vmem:[%s2] sm:$0xf]
      %v386 = vld [vmem:[%s2 + $0x4] sm:$0xf]
      %v387 = vld [vmem:[%s2 + $0x8] sm:$0xf]
      %s388 = smul.u32 %s349, 16
      %s389 = scalar_lea.vmem %s327, %s388
      %v390 = vld [vmem:[%s389] sm:$0xff]
      %v391 = vld [vmem:[%s389 + $0x8] sm:$0xff]
      %v392 = vld [vmem:[%s389 + $0x10] sm:$0xff]
      %v393 = vld [vmem:[%s389 + $0x18] sm:$0xff]
      %v394 = vld [vmem:[%s389 + $0x20] sm:$0xff]
      %v395 = vld [vmem:[%s389 + $0x28] sm:$0xff]
      %v396 = vld [vmem:[%s389 + $0x30] sm:$0xff]
      %v397 = vld [vmem:[%s389 + $0x38] sm:$0xff]
      %v398 = vld [vmem:[%s389 + $0x40] sm:$0xff]
      %v399 = vld [vmem:[%s389 + $0x48] sm:$0xff]
      %v400 = vld [vmem:[%s389 + $0x50] sm:$0xff]
      %v401 = vld [vmem:[%s389 + $0x58] sm:$0xff]
      %v402 = vld [vmem:[%s389 + $0x60] sm:$0xff]
      %v403 = vld [vmem:[%s389 + $0x68] sm:$0xff]
      %v404 = vld [vmem:[%s389 + $0x70] sm:$0xff]
      %v405 = vld [vmem:[%s389 + $0x78] sm:$0xff]
      %v406 = vld [vmem:[%s389 + $0x80] sm:$0xff]
      %v407 = vld [vmem:[%s389 + $0x88] sm:$0xff]
      %v408 = vld [vmem:[%s389 + $0x90] sm:$0xff]
      %v409 = vld [vmem:[%s389 + $0x98] sm:$0xff]
      %v410 = vld [vmem:[%s389 + $0xa0] sm:$0xff]
      %v411 = vld [vmem:[%s389 + $0xa8] sm:$0xff]
      %v412 = vld [vmem:[%s389 + $0xb0] sm:$0xff]
      %v413 = vld [vmem:[%s389 + $0xb8] sm:$0xff]
      %v414 = vld [vmem:[%s389 + $0xc0] sm:$0xff]
      %v415 = vld [vmem:[%s389 + $0xc8] sm:$0xff]
      %v416 = vld [vmem:[%s389 + $0xd0] sm:$0xff]
      %v417 = vld [vmem:[%s389 + $0xd8] sm:$0xff]
      %v418 = vld [vmem:[%s389 + $0xe0] sm:$0xff]
      %v419 = vld [vmem:[%s389 + $0xe8] sm:$0xff]
      %v420 = vld [vmem:[%s389 + $0xf0] sm:$0xff]
      %v421 = vld [vmem:[%s389 + $0xf8] sm:$0xff]
      %v422 = vld [vmem:[%s3] sm:$0x1]
      %v424 = vperm.slane %v422, 0
      %v426 = vmul.f32 %v390, %v424
      %v427 = vmul.f32 %v391, %v424
      %v428 = vmul.f32 %v392, %v424
      %v429 = vmul.f32 %v393, %v424
      %v430 = vmul.f32 %v394, %v424
      %v431 = vmul.f32 %v395, %v424
      %v432 = vmul.f32 %v396, %v424
      %v433 = vmul.f32 %v397, %v424
      %v434 = vmul.f32 %v398, %v424
      %v435 = vmul.f32 %v399, %v424
      %v436 = vmul.f32 %v400, %v424
      %v437 = vmul.f32 %v401, %v424
      %v438 = vmul.f32 %v402, %v424
      %v439 = vmul.f32 %v403, %v424
      %v440 = vmul.f32 %v404, %v424
      %v441 = vmul.f32 %v405, %v424
      %v442 = vmul.f32 %v406, %v424
      %v443 = vmul.f32 %v407, %v424
      %v444 = vmul.f32 %v408, %v424
      %v445 = vmul.f32 %v409, %v424
      %v446 = vmul.f32 %v410, %v424
      %v447 = vmul.f32 %v411, %v424
      %v448 = vmul.f32 %v412, %v424
      %v449 = vmul.f32 %v413, %v424
      %v450 = vmul.f32 %v414, %v424
      %v451 = vmul.f32 %v415, %v424
      %v452 = vmul.f32 %v416, %v424
      %v453 = vmul.f32 %v417, %v424
      %v454 = vmul.f32 %v418, %v424
      %v455 = vmul.f32 %v419, %v424
      %v456 = vmul.f32 %v420, %v424
      %v457 = vmul.f32 %v421, %v424
      %s458 = sadd.s32 %s350, 34
      %s459 = smul.addr %s458, 4
      %s460 = scalar_lea.vmem %s322, %s459
      %v461 = vld [vmem:[%s460] sm:$0xf]
      %v462 = vld [vmem:[%s460 + $0x4] sm:$0xf]
      %v463 = vld [vmem:[%s460 + $0x8] sm:$0xf]
      %v464 = vld [vmem:[%s460 + $0xc] sm:$0xf]
      %v465 = vld [vmem:[%s460 + $0x10] sm:$0xf]
      %v466 = vld [vmem:[%s460 + $0x14] sm:$0xf]
      %v467 = vld [vmem:[%s460 + $0x18] sm:$0xf]
      %v468 = vld [vmem:[%s460 + $0x1c] sm:$0xf]
      %v469 = vld [vmem:[%s460 + $0x20] sm:$0xf]
      %v470 = vld [vmem:[%s460 + $0x24] sm:$0xf]
      %v471 = vld [vmem:[%s460 + $0x28] sm:$0xf]
      %v472 = vld [vmem:[%s460 + $0x2c] sm:$0xf]
      %v473 = vld [vmem:[%s460 + $0x30] sm:$0xf]
      %v474 = vld [vmem:[%s460 + $0x34] sm:$0xf]
      %v475 = vld [vmem:[%s460 + $0x38] sm:$0xf]
      %v476 = vld [vmem:[%s460 + $0x3c] sm:$0xf]
      %v477 = vld [vmem:[%s460 + $0x40] sm:$0xf]
      %v478 = vld [vmem:[%s460 + $0x44] sm:$0xf]
      %v479 = vld [vmem:[%s460 + $0x48] sm:$0xf]
      %v480 = vld [vmem:[%s460 + $0x4c] sm:$0xf]
      %v481 = vld [vmem:[%s460 + $0x50] sm:$0xf]
      %v482 = vld [vmem:[%s460 + $0x54] sm:$0xf]
      %v483 = vld [vmem:[%s460 + $0x58] sm:$0xf]
      %v484 = vld [vmem:[%s460 + $0x5c] sm:$0xf]
      %v485 = vld [vmem:[%s460 + $0x60] sm:$0xf]
      %v486 = vld [vmem:[%s460 + $0x64] sm:$0xf]
      %v487 = vld [vmem:[%s460 + $0x68] sm:$0xf]
      %v488 = vld [vmem:[%s460 + $0x6c] sm:$0xf]
      %v489 = vld [vmem:[%s460 + $0x70] sm:$0xf]
      %v490 = vld [vmem:[%s460 + $0x74] sm:$0xf]
      %v491 = vld [vmem:[%s460 + $0x78] sm:$0xf]
      %v492 = vld [vmem:[%s460 + $0x7c] sm:$0xf]
      %s493 = scalar_lea.vmem %s2, 12
      %v494 = vld [vmem:[%s493] sm:$0xf]
      %v495 = vld [vmem:[%s493 + $0x4] sm:$0xf]
      %v496 = vld [vmem:[%s493 + $0x8] sm:$0xf]
      %v529 = vunpack.c.l.b16 %v461
      %v530 = vunpack.c.l.b16 %v462
      %v531 = vunpack.c.l.b16 %v463
      %v532 = vunpack.c.l.b16 %v464
      %v533 = vunpack.c.l.b16 %v465
      %v534 = vunpack.c.l.b16 %v466
      %v535 = vunpack.c.l.b16 %v467
      %v536 = vunpack.c.l.b16 %v468
      %v537 = vunpack.c.l.b16 %v469
      %v538 = vunpack.c.l.b16 %v470
      %v539 = vunpack.c.l.b16 %v471
      %v540 = vunpack.c.l.b16 %v472
      %v541 = vunpack.c.l.b16 %v473
      %v542 = vunpack.c.l.b16 %v474
      %v543 = vunpack.c.l.b16 %v475
      %v544 = vunpack.c.l.b16 %v476
      %v545 = vunpack.c.l.b16 %v477
      %v546 = vunpack.c.l.b16 %v478
      %v547 = vunpack.c.l.b16 %v479
      %v548 = vunpack.c.l.b16 %v480
      %v549 = vunpack.c.l.b16 %v481
      %v550 = vunpack.c.l.b16 %v482
      %v551 = vunpack.c.l.b16 %v483
      %v552 = vunpack.c.l.b16 %v484
      %v553 = vunpack.c.l.b16 %v485
      %v554 = vunpack.c.l.b16 %v486
      %v555 = vunpack.c.l.b16 %v487
      %v556 = vunpack.c.l.b16 %v488
      %v557 = vunpack.c.l.b16 %v489
      %v558 = vunpack.c.l.b16 %v490
      %v559 = vunpack.c.l.b16 %v491
      %v560 = vunpack.c.l.b16 %v492
      %v561 = vpack.c.b16 %v530, %v529
      %v562 = vpack.c.b16 %v532, %v531
      %v563 = vpack.c.b16 %v534, %v533
      %v564 = vpack.c.b16 %v536, %v535
      %v565 = vpack.c.b16 %v538, %v537
      %v566 = vpack.c.b16 %v540, %v539
      %v567 = vpack.c.b16 %v542, %v541
      %v568 = vpack.c.b16 %v544, %v543
      %v569 = vpack.c.b16 %v546, %v545
      %v570 = vpack.c.b16 %v548, %v547
      %v571 = vpack.c.b16 %v550, %v549
      %v572 = vpack.c.b16 %v552, %v551
      %v573 = vpack.c.b16 %v554, %v553
      %v574 = vpack.c.b16 %v556, %v555
      %v575 = vpack.c.b16 %v558, %v557
      %v576 = vpack.c.b16 %v560, %v559
      %v580 = vunpack.c.l.b16 %v494
      %v581 = vunpack.c.l.b16 %v495
      %v582 = vunpack.c.l.b16 %v496
      %v583 = vpack.c.b16 %v581, %v580
      %v584 = vpack.c.b16 %v582, %v582
      %vm586 = vcmask 195584
      %v588 = vsel %vm586, %v561, 0
      %v591 = vsel %vm586, %v562, 0
      %v594 = vsel %vm586, %v563, 0
      %v597 = vsel %vm586, %v564, 0
      %v600 = vsel %vm586, %v565, 0
      %v603 = vsel %vm586, %v566, 0
      %v606 = vsel %vm586, %v567, 0
      %v609 = vsel %vm586, %v568, 0
      %v612 = vsel %vm586, %v569, 0
      %v615 = vsel %vm586, %v570, 0
      %v618 = vsel %vm586, %v571, 0
      %v621 = vsel %vm586, %v572, 0
      %v624 = vsel %vm586, %v573, 0
      %v627 = vsel %vm586, %v574, 0
      %v630 = vsel %vm586, %v575, 0
      %v633 = vsel %vm586, %v576, 0
      %vm635 = vcmask 1043456
      %v637 = vsel %vm635, %v584, 0
      %639 = vmatpush.bf16.msra.mxu0 0
      %640 = vmatpush.bf16.msra.mxu0 0
      %641 = vmatpush.bf16.msra.mxu0 0
      %642 = vmatpush.bf16.msra.mxu0 0
      %643 = vmatpush.bf16.msra.mxu0 0
      %644 = vmatpush.bf16.msra.mxu0 0
      %645 = vmatpush.bf16.msra.mxu0 %v637
      %646 = vmatpush.bf16.msra.mxu0 %v583
      %647 = vmatmul.bf16.gmra.mxu0 %v588
      %v648 = vpop.f32.mrf.mxu0
      %v649 = vadd.f32 0.0, %v648
      %v650 = vpop.f32.mrf.mxu0
      %v651 = vadd.f32 0.0, %v650
      %652 = vmatmul.bf16.gmra.mxu0 %v591
      %v653 = vpop.f32.mrf.mxu0
      %v654 = vadd.f32 0.0, %v653
      %v655 = vpop.f32.mrf.mxu0
      %v656 = vadd.f32 0.0, %v655
      %657 = vmatmul.bf16.gmra.mxu0 %v594
      %v658 = vpop.f32.mrf.mxu0
      %v659 = vadd.f32 0.0, %v658
      %v660 = vpop.f32.mrf.mxu0
      %v661 = vadd.f32 0.0, %v660
      %662 = vmatmul.bf16.gmra.mxu0 %v597
      %v663 = vpop.f32.mrf.mxu0
      %v664 = vadd.f32 0.0, %v663
      %v665 = vpop.f32.mrf.mxu0
      %v666 = vadd.f32 0.0, %v665
      %667 = vmatmul.bf16.gmra.mxu0 %v600
      %v668 = vpop.f32.mrf.mxu0
      %v669 = vadd.f32 0.0, %v668
      %v670 = vpop.f32.mrf.mxu0
      %v671 = vadd.f32 0.0, %v670
      %672 = vmatmul.bf16.gmra.mxu0 %v603
      %v673 = vpop.f32.mrf.mxu0
      %v674 = vadd.f32 0.0, %v673
      %v675 = vpop.f32.mrf.mxu0
      %v676 = vadd.f32 0.0, %v675
      %677 = vmatmul.bf16.gmra.mxu0 %v606
      %v678 = vpop.f32.mrf.mxu0
      %v679 = vadd.f32 0.0, %v678
      %v680 = vpop.f32.mrf.mxu0
      %v681 = vadd.f32 0.0, %v680
      %682 = vmatmul.bf16.gmra.mxu0 %v609
      %v683 = vpop.f32.mrf.mxu0
      %v684 = vadd.f32 0.0, %v683
      %v685 = vpop.f32.mrf.mxu0
      %v686 = vadd.f32 0.0, %v685
      %687 = vmatmul.bf16.gmra.mxu0 %v612
      %v688 = vpop.f32.mrf.mxu0
      %v689 = vadd.f32 0.0, %v688
      %v690 = vpop.f32.mrf.mxu0
      %v691 = vadd.f32 0.0, %v690
      %692 = vmatmul.bf16.gmra.mxu0 %v615
      %v693 = vpop.f32.mrf.mxu0
      %v694 = vadd.f32 0.0, %v693
      %v695 = vpop.f32.mrf.mxu0
      %v696 = vadd.f32 0.0, %v695
      %697 = vmatmul.bf16.gmra.mxu0 %v618
      %v698 = vpop.f32.mrf.mxu0
      %v699 = vadd.f32 0.0, %v698
      %v700 = vpop.f32.mrf.mxu0
      %v701 = vadd.f32 0.0, %v700
      %702 = vmatmul.bf16.gmra.mxu0 %v621
      %v703 = vpop.f32.mrf.mxu0
      %v704 = vadd.f32 0.0, %v703
      %v705 = vpop.f32.mrf.mxu0
      %v706 = vadd.f32 0.0, %v705
      %707 = vmatmul.bf16.gmra.mxu0 %v624
      %v708 = vpop.f32.mrf.mxu0
      %v709 = vadd.f32 0.0, %v708
      %v710 = vpop.f32.mrf.mxu0
      %v711 = vadd.f32 0.0, %v710
      %712 = vmatmul.bf16.gmra.mxu0 %v627
      %v713 = vpop.f32.mrf.mxu0
      %v714 = vadd.f32 0.0, %v713
      %v715 = vpop.f32.mrf.mxu0
      %v716 = vadd.f32 0.0, %v715
      %717 = vmatmul.bf16.gmra.mxu0 %v630
      %v718 = vpop.f32.mrf.mxu0
      %v719 = vadd.f32 0.0, %v718
      %v720 = vpop.f32.mrf.mxu0
      %v721 = vadd.f32 0.0, %v720
      %722 = vmatmul.bf16.gmra.mxu0 %v633
      %v723 = vpop.f32.mrf.mxu0
      %v724 = vadd.f32 0.0, %v723
      %v725 = vpop.f32.mrf.mxu0
      %v726 = vadd.f32 0.0, %v725
      %727 = vdwg.mxu0
      %v760 = vunpack.c.l.b16 %v353
      %v761 = vunpack.c.l.b16 %v354
      %v762 = vunpack.c.l.b16 %v355
      %v763 = vunpack.c.l.b16 %v356
      %v764 = vunpack.c.l.b16 %v357
      %v765 = vunpack.c.l.b16 %v358
      %v766 = vunpack.c.l.b16 %v359
      %v767 = vunpack.c.l.b16 %v360
      %v768 = vunpack.c.l.b16 %v361
      %v769 = vunpack.c.l.b16 %v362
      %v770 = vunpack.c.l.b16 %v363
      %v771 = vunpack.c.l.b16 %v364
      %v772 = vunpack.c.l.b16 %v365
      %v773 = vunpack.c.l.b16 %v366
      %v774 = vunpack.c.l.b16 %v367
      %v775 = vunpack.c.l.b16 %v368
      %v776 = vunpack.c.l.b16 %v369
      %v777 = vunpack.c.l.b16 %v370
      %v778 = vunpack.c.l.b16 %v371
      %v779 = vunpack.c.l.b16 %v372
      %v780 = vunpack.c.l.b16 %v373
      %v781 = vunpack.c.l.b16 %v374
      %v782 = vunpack.c.l.b16 %v375
      %v783 = vunpack.c.l.b16 %v376
      %v784 = vunpack.c.l.b16 %v377
      %v785 = vunpack.c.l.b16 %v378
      %v786 = vunpack.c.l.b16 %v379
      %v787 = vunpack.c.l.b16 %v380
      %v788 = vunpack.c.l.b16 %v381
      %v789 = vunpack.c.l.b16 %v382
      %v790 = vunpack.c.l.b16 %v383
      %v791 = vunpack.c.l.b16 %v384
      %v792 = vpack.c.b16 %v761, %v760
      %v793 = vpack.c.b16 %v763, %v762
      %v794 = vpack.c.b16 %v765, %v764
      %v795 = vpack.c.b16 %v767, %v766
      %v796 = vpack.c.b16 %v769, %v768
      %v797 = vpack.c.b16 %v771, %v770
      %v798 = vpack.c.b16 %v773, %v772
      %v799 = vpack.c.b16 %v775, %v774
      %v800 = vpack.c.b16 %v777, %v776
      %v801 = vpack.c.b16 %v779, %v778
      %v802 = vpack.c.b16 %v781, %v780
      %v803 = vpack.c.b16 %v783, %v782
      %v804 = vpack.c.b16 %v785, %v784
      %v805 = vpack.c.b16 %v787, %v786
      %v806 = vpack.c.b16 %v789, %v788
      %v807 = vpack.c.b16 %v791, %v790
      %v811 = vunpack.c.l.b16 %v385
      %v812 = vunpack.c.l.b16 %v386
      %v813 = vunpack.c.l.b16 %v387
      %v814 = vpack.c.b16 %v812, %v811
      %v815 = vpack.c.b16 %v813, %v813
      %v818 = vsel %vm586, %v792, 0
      %v821 = vsel %vm586, %v793, 0
      %v824 = vsel %vm586, %v794, 0
      %v827 = vsel %vm586, %v795, 0
      %v830 = vsel %vm586, %v796, 0
      %v833 = vsel %vm586, %v797, 0
      %v836 = vsel %vm586, %v798, 0
      %v839 = vsel %vm586, %v799, 0
      %v842 = vsel %vm586, %v800, 0
      %v845 = vsel %vm586, %v801, 0
      %v848 = vsel %vm586, %v802, 0
      %v851 = vsel %vm586, %v803, 0
      %v854 = vsel %vm586, %v804, 0
      %v857 = vsel %vm586, %v805, 0
      %v860 = vsel %vm586, %v806, 0
      %v863 = vsel %vm586, %v807, 0
      %v866 = vsel %vm635, %v815, 0
      %868 = vmatpush.bf16.msra.mxu0 0
      %869 = vmatpush.bf16.msra.mxu0 0
      %870 = vmatpush.bf16.msra.mxu0 0
      %871 = vmatpush.bf16.msra.mxu0 0
      %872 = vmatpush.bf16.msra.mxu0 0
      %873 = vmatpush.bf16.msra.mxu0 0
      %874 = vmatpush.bf16.msra.mxu0 %v866
      %875 = vmatpush.bf16.msra.mxu0 %v814
      %876 = vmatmul.bf16.gmra.mxu0 %v818
      %v877 = vpop.f32.mrf.mxu0
      %v878 = vadd.f32 %v649, %v877
      %v879 = vpop.f32.mrf.mxu0
      %v880 = vadd.f32 %v651, %v879
      %881 = vmatmul.bf16.gmra.mxu0 %v821
      %v882 = vpop.f32.mrf.mxu0
      %v883 = vadd.f32 %v654, %v882
      %v884 = vpop.f32.mrf.mxu0
      %v885 = vadd.f32 %v656, %v884
      %886 = vmatmul.bf16.gmra.mxu0 %v824
      %v887 = vpop.f32.mrf.mxu0
      %v888 = vadd.f32 %v659, %v887
      %v889 = vpop.f32.mrf.mxu0
      %v890 = vadd.f32 %v661, %v889
      %891 = vmatmul.bf16.gmra.mxu0 %v827
      %v892 = vpop.f32.mrf.mxu0
      %v893 = vadd.f32 %v664, %v892
      %v894 = vpop.f32.mrf.mxu0
      %v895 = vadd.f32 %v666, %v894
      %896 = vmatmul.bf16.gmra.mxu0 %v830
      %v897 = vpop.f32.mrf.mxu0
      %v898 = vadd.f32 %v669, %v897
      %v899 = vpop.f32.mrf.mxu0
      %v900 = vadd.f32 %v671, %v899
      %901 = vmatmul.bf16.gmra.mxu0 %v833
      %v902 = vpop.f32.mrf.mxu0
      %v903 = vadd.f32 %v674, %v902
      %v904 = vpop.f32.mrf.mxu0
      %v905 = vadd.f32 %v676, %v904
      %906 = vmatmul.bf16.gmra.mxu0 %v836
      %v907 = vpop.f32.mrf.mxu0
      %v908 = vadd.f32 %v679, %v907
      %v909 = vpop.f32.mrf.mxu0
      %v910 = vadd.f32 %v681, %v909
      %911 = vmatmul.bf16.gmra.mxu0 %v839
      %v912 = vpop.f32.mrf.mxu0
      %v913 = vadd.f32 %v684, %v912
      %v914 = vpop.f32.mrf.mxu0
      %v915 = vadd.f32 %v686, %v914
      %916 = vmatmul.bf16.gmra.mxu0 %v842
      %v917 = vpop.f32.mrf.mxu0
      %v918 = vadd.f32 %v689, %v917
      %v919 = vpop.f32.mrf.mxu0
      %v920 = vadd.f32 %v691, %v919
      %921 = vmatmul.bf16.gmra.mxu0 %v845
      %v922 = vpop.f32.mrf.mxu0
      %v923 = vadd.f32 %v694, %v922
      %v924 = vpop.f32.mrf.mxu0
      %v925 = vadd.f32 %v696, %v924
      %926 = vmatmul.bf16.gmra.mxu0 %v848
      %v927 = vpop.f32.mrf.mxu0
      %v928 = vadd.f32 %v699, %v927
      %v929 = vpop.f32.mrf.mxu0
      %v930 = vadd.f32 %v701, %v929
      %931 = vmatmul.bf16.gmra.mxu0 %v851
      %v932 = vpop.f32.mrf.mxu0
      %v933 = vadd.f32 %v704, %v932
      %v934 = vpop.f32.mrf.mxu0
      %v935 = vadd.f32 %v706, %v934
      %936 = vmatmul.bf16.gmra.mxu0 %v854
      %v937 = vpop.f32.mrf.mxu0
      %v938 = vadd.f32 %v709, %v937
      %v939 = vpop.f32.mrf.mxu0
      %v940 = vadd.f32 %v711, %v939
      %941 = vmatmul.bf16.gmra.mxu0 %v857
      %v942 = vpop.f32.mrf.mxu0
      %v943 = vadd.f32 %v714, %v942
      %v944 = vpop.f32.mrf.mxu0
      %v945 = vadd.f32 %v716, %v944
      %946 = vmatmul.bf16.gmra.mxu0 %v860
      %v947 = vpop.f32.mrf.mxu0
      %v948 = vadd.f32 %v719, %v947
      %v949 = vpop.f32.mrf.mxu0
      %v950 = vadd.f32 %v721, %v949
      %951 = vmatmul.bf16.gmra.mxu0 %v863
      %v952 = vpop.f32.mrf.mxu0
      %v953 = vadd.f32 %v724, %v952
      %v954 = vpop.f32.mrf.mxu0
      %v955 = vadd.f32 %v726, %v954
      %956 = vdwg.mxu0
      %s957 = sadd.s32 %s388, 272
      %s958 = scalar_lea.vmem %s327, %s957
      %v959 = vld [vmem:[%s958] sm:$0xff]
      %v960 = vld [vmem:[%s958 + $0x8] sm:$0xff]
      %v961 = vld [vmem:[%s958 + $0x10] sm:$0xff]
      %v962 = vld [vmem:[%s958 + $0x18] sm:$0xff]
      %v963 = vld [vmem:[%s958 + $0x20] sm:$0xff]
      %v964 = vld [vmem:[%s958 + $0x28] sm:$0xff]
      %v965 = vld [vmem:[%s958 + $0x30] sm:$0xff]
      %v966 = vld [vmem:[%s958 + $0x38] sm:$0xff]
      %v967 = vld [vmem:[%s958 + $0x40] sm:$0xff]
      %v968 = vld [vmem:[%s958 + $0x48] sm:$0xff]
      %v969 = vld [vmem:[%s958 + $0x50] sm:$0xff]
      %v970 = vld [vmem:[%s958 + $0x58] sm:$0xff]
      %v971 = vld [vmem:[%s958 + $0x60] sm:$0xff]
      %v972 = vld [vmem:[%s958 + $0x68] sm:$0xff]
      %v973 = vld [vmem:[%s958 + $0x70] sm:$0xff]
      %v974 = vld [vmem:[%s958 + $0x78] sm:$0xff]
      %v975 = vld [vmem:[%s958 + $0x80] sm:$0xff]
      %v976 = vld [vmem:[%s958 + $0x88] sm:$0xff]
      %v977 = vld [vmem:[%s958 + $0x90] sm:$0xff]
      %v978 = vld [vmem:[%s958 + $0x98] sm:$0xff]
      %v979 = vld [vmem:[%s958 + $0xa0] sm:$0xff]
      %v980 = vld [vmem:[%s958 + $0xa8] sm:$0xff]
      %v981 = vld [vmem:[%s958 + $0xb0] sm:$0xff]
      %v982 = vld [vmem:[%s958 + $0xb8] sm:$0xff]
      %v983 = vld [vmem:[%s958 + $0xc0] sm:$0xff]
      %v984 = vld [vmem:[%s958 + $0xc8] sm:$0xff]
      %v985 = vld [vmem:[%s958 + $0xd0] sm:$0xff]
      %v986 = vld [vmem:[%s958 + $0xd8] sm:$0xff]
      %v987 = vld [vmem:[%s958 + $0xe0] sm:$0xff]
      %v988 = vld [vmem:[%s958 + $0xe8] sm:$0xff]
      %v989 = vld [vmem:[%s958 + $0xf0] sm:$0xff]
      %v990 = vld [vmem:[%s958 + $0xf8] sm:$0xff]
      %s991 = scalar_lea.vmem %s3, 1
      %v992 = vld [vmem:[%s991] sm:$0x1]
      %v994 = vperm.slane %v992, 0
      %v996 = vmul.f32 %v959, %v994
      %v997 = vmul.f32 %v960, %v994
      %v998 = vmul.f32 %v961, %v994
      %v999 = vmul.f32 %v962, %v994
      %v1000 = vmul.f32 %v963, %v994
      %v1001 = vmul.f32 %v964, %v994
      %v1002 = vmul.f32 %v965, %v994
      %v1003 = vmul.f32 %v966, %v994
      %v1004 = vmul.f32 %v967, %v994
      %v1005 = vmul.f32 %v968, %v994
      %v1006 = vmul.f32 %v969, %v994
      %v1007 = vmul.f32 %v970, %v994
      %v1008 = vmul.f32 %v971, %v994
      %v1009 = vmul.f32 %v972, %v994
      %v1010 = vmul.f32 %v973, %v994
      %v1011 = vmul.f32 %v974, %v994
      %v1012 = vmul.f32 %v975, %v994
      %v1013 = vmul.f32 %v976, %v994
      %v1014 = vmul.f32 %v977, %v994
      %v1015 = vmul.f32 %v978, %v994
      %v1016 = vmul.f32 %v979, %v994
      %v1017 = vmul.f32 %v980, %v994
      %v1018 = vmul.f32 %v981, %v994
      %v1019 = vmul.f32 %v982, %v994
      %v1020 = vmul.f32 %v983, %v994
      %v1021 = vmul.f32 %v984, %v994
      %v1022 = vmul.f32 %v985, %v994
      %v1023 = vmul.f32 %v986, %v994
      %v1024 = vmul.f32 %v987, %v994
      %v1025 = vmul.f32 %v988, %v994
      %v1026 = vmul.f32 %v989, %v994
      %v1027 = vmul.f32 %v990, %v994
      %v1028 = vadd.f32 %v426, %v996
      %v1029 = vadd.f32 %v427, %v997
      %v1030 = vadd.f32 %v428, %v998
      %v1031 = vadd.f32 %v429, %v999
      %v1032 = vadd.f32 %v430, %v1000
      %v1033 = vadd.f32 %v431, %v1001
      %v1034 = vadd.f32 %v432, %v1002
      %v1035 = vadd.f32 %v433, %v1003
      %v1036 = vadd.f32 %v434, %v1004
      %v1037 = vadd.f32 %v435, %v1005
      %v1038 = vadd.f32 %v436, %v1006
      %v1039 = vadd.f32 %v437, %v1007
      %v1040 = vadd.f32 %v438, %v1008
      %v1041 = vadd.f32 %v439, %v1009
      %v1042 = vadd.f32 %v440, %v1010
      %v1043 = vadd.f32 %v441, %v1011
      %v1044 = vadd.f32 %v442, %v1012
      %v1045 = vadd.f32 %v443, %v1013
      %v1046 = vadd.f32 %v444, %v1014
      %v1047 = vadd.f32 %v445, %v1015
      %v1048 = vadd.f32 %v446, %v1016
      %v1049 = vadd.f32 %v447, %v1017
      %v1050 = vadd.f32 %v448, %v1018
      %v1051 = vadd.f32 %v449, %v1019
      %v1052 = vadd.f32 %v450, %v1020
      %v1053 = vadd.f32 %v451, %v1021
      %v1054 = vadd.f32 %v452, %v1022
      %v1055 = vadd.f32 %v453, %v1023
      %v1056 = vadd.f32 %v454, %v1024
      %v1057 = vadd.f32 %v455, %v1025
      %v1058 = vadd.f32 %v456, %v1026
      %v1059 = vadd.f32 %v457, %v1027
      %s1060 = sadd.s32 %s349, 1
      %s1061 = smul.u32 %s1060, 2
      %s1062 = smul.addr %s1061, 4
      %s1063 = scalar_lea.vmem %s322, %s1062
      %v1064 = vld [vmem:[%s1063] sm:$0xf]
      %v1065 = vld [vmem:[%s1063 + $0x4] sm:$0xf]
      %v1066 = vld [vmem:[%s1063 + $0x8] sm:$0xf]
      %v1067 = vld [vmem:[%s1063 + $0xc] sm:$0xf]
      %v1068 = vld [vmem:[%s1063 + $0x10] sm:$0xf]
      %v1069 = vld [vmem:[%s1063 + $0x14] sm:$0xf]
      %v1070 = vld [vmem:[%s1063 + $0x18] sm:$0xf]
      %v1071 = vld [vmem:[%s1063 + $0x1c] sm:$0xf]
      %v1072 = vld [vmem:[%s1063 + $0x20] sm:$0xf]
      %v1073 = vld [vmem:[%s1063 + $0x24] sm:$0xf]
      %v1074 = vld [vmem:[%s1063 + $0x28] sm:$0xf]
      %v1075 = vld [vmem:[%s1063 + $0x2c] sm:$0xf]
      %v1076 = vld [vmem:[%s1063 + $0x30] sm:$0xf]
      %v1077 = vld [vmem:[%s1063 + $0x34] sm:$0xf]
      %v1078 = vld [vmem:[%s1063 + $0x38] sm:$0xf]
      %v1079 = vld [vmem:[%s1063 + $0x3c] sm:$0xf]
      %v1080 = vld [vmem:[%s1063 + $0x40] sm:$0xf]
      %v1081 = vld [vmem:[%s1063 + $0x44] sm:$0xf]
      %v1082 = vld [vmem:[%s1063 + $0x48] sm:$0xf]
      %v1083 = vld [vmem:[%s1063 + $0x4c] sm:$0xf]
      %v1084 = vld [vmem:[%s1063 + $0x50] sm:$0xf]
      %v1085 = vld [vmem:[%s1063 + $0x54] sm:$0xf]
      %v1086 = vld [vmem:[%s1063 + $0x58] sm:$0xf]
      %v1087 = vld [vmem:[%s1063 + $0x5c] sm:$0xf]
      %v1088 = vld [vmem:[%s1063 + $0x60] sm:$0xf]
      %v1089 = vld [vmem:[%s1063 + $0x64] sm:$0xf]
      %v1090 = vld [vmem:[%s1063 + $0x68] sm:$0xf]
      %v1091 = vld [vmem:[%s1063 + $0x6c] sm:$0xf]
      %v1092 = vld [vmem:[%s1063 + $0x70] sm:$0xf]
      %v1093 = vld [vmem:[%s1063 + $0x74] sm:$0xf]
      %v1094 = vld [vmem:[%s1063 + $0x78] sm:$0xf]
      %v1095 = vld [vmem:[%s1063 + $0x7c] sm:$0xf]
      %s1096 = scalar_lea.vmem %s2, 24
      %v1097 = vld [vmem:[%s1096] sm:$0xf]
      %v1098 = vld [vmem:[%s1096 + $0x4] sm:$0xf]
      %v1099 = vld [vmem:[%s1096 + $0x8] sm:$0xf]
      %v1132 = vunpack.c.l.b16 %v1064
      %v1133 = vunpack.c.l.b16 %v1065
      %v1134 = vunpack.c.l.b16 %v1066
      %v1135 = vunpack.c.l.b16 %v1067
      %v1136 = vunpack.c.l.b16 %v1068
      %v1137 = vunpack.c.l.b16 %v1069
      %v1138 = vunpack.c.l.b16 %v1070
      %v1139 = vunpack.c.l.b16 %v1071
      %v1140 = vunpack.c.l.b16 %v1072
      %v1141 = vunpack.c.l.b16 %v1073
      %v1142 = vunpack.c.l.b16 %v1074
      %v1143 = vunpack.c.l.b16 %v1075
      %v1144 = vunpack.c.l.b16 %v1076
      %v1145 = vunpack.c.l.b16 %v1077
      %v1146 = vunpack.c.l.b16 %v1078
      %v1147 = vunpack.c.l.b16 %v1079
      %v1148 = vunpack.c.l.b16 %v1080
      %v1149 = vunpack.c.l.b16 %v1081
      %v1150 = vunpack.c.l.b16 %v1082
      %v1151 = vunpack.c.l.b16 %v1083
      %v1152 = vunpack.c.l.b16 %v1084
      %v1153 = vunpack.c.l.b16 %v1085
      %v1154 = vunpack.c.l.b16 %v1086
      %v1155 = vunpack.c.l.b16 %v1087
      %v1156 = vunpack.c.l.b16 %v1088
      %v1157 = vunpack.c.l.b16 %v1089
      %v1158 = vunpack.c.l.b16 %v1090
      %v1159 = vunpack.c.l.b16 %v1091
      %v1160 = vunpack.c.l.b16 %v1092
      %v1161 = vunpack.c.l.b16 %v1093
      %v1162 = vunpack.c.l.b16 %v1094
      %v1163 = vunpack.c.l.b16 %v1095
      %v1164 = vpack.c.b16 %v1133, %v1132
      %v1165 = vpack.c.b16 %v1135, %v1134
      %v1166 = vpack.c.b16 %v1137, %v1136
      %v1167 = vpack.c.b16 %v1139, %v1138
      %v1168 = vpack.c.b16 %v1141, %v1140
      %v1169 = vpack.c.b16 %v1143, %v1142
      %v1170 = vpack.c.b16 %v1145, %v1144
      %v1171 = vpack.c.b16 %v1147, %v1146
      %v1172 = vpack.c.b16 %v1149, %v1148
      %v1173 = vpack.c.b16 %v1151, %v1150
      %v1174 = vpack.c.b16 %v1153, %v1152
      %v1175 = vpack.c.b16 %v1155, %v1154
      %v1176 = vpack.c.b16 %v1157, %v1156
      %v1177 = vpack.c.b16 %v1159, %v1158
      %v1178 = vpack.c.b16 %v1161, %v1160
      %v1179 = vpack.c.b16 %v1163, %v1162
      %v1183 = vunpack.c.l.b16 %v1097
      %v1184 = vunpack.c.l.b16 %v1098
      %v1185 = vunpack.c.l.b16 %v1099
      %v1186 = vpack.c.b16 %v1184, %v1183
      %v1187 = vpack.c.b16 %v1185, %v1185
      %v1190 = vsel %vm586, %v1164, 0
      %v1193 = vsel %vm586, %v1165, 0
      %v1196 = vsel %vm586, %v1166, 0
      %v1199 = vsel %vm586, %v1167, 0
      %v1202 = vsel %vm586, %v1168, 0
      %v1205 = vsel %vm586, %v1169, 0
      %v1208 = vsel %vm586, %v1170, 0
      %v1211 = vsel %vm586, %v1171, 0
      %v1214 = vsel %vm586, %v1172, 0
      %v1217 = vsel %vm586, %v1173, 0
      %v1220 = vsel %vm586, %v1174, 0
      %v1223 = vsel %vm586, %v1175, 0
      %v1226 = vsel %vm586, %v1176, 0
      %v1229 = vsel %vm586, %v1177, 0
      %v1232 = vsel %vm586, %v1178, 0
      %v1235 = vsel %vm586, %v1179, 0
      %v1238 = vsel %vm635, %v1187, 0
      %1240 = vmatpush.bf16.msra.mxu0 0
      %1241 = vmatpush.bf16.msra.mxu0 0
      %1242 = vmatpush.bf16.msra.mxu0 0
      %1243 = vmatpush.bf16.msra.mxu0 0
      %1244 = vmatpush.bf16.msra.mxu0 0
      %1245 = vmatpush.bf16.msra.mxu0 0
      %1246 = vmatpush.bf16.msra.mxu0 %v1238
      %1247 = vmatpush.bf16.msra.mxu0 %v1186
      %1248 = vmatmul.bf16.gmra.mxu0 %v1190
      %v1249 = vpop.f32.mrf.mxu0
      %v1250 = vadd.f32 0.0, %v1249
      %v1251 = vpop.f32.mrf.mxu0
      %v1252 = vadd.f32 0.0, %v1251
      %1253 = vmatmul.bf16.gmra.mxu0 %v1193
      %v1254 = vpop.f32.mrf.mxu0
      %v1255 = vadd.f32 0.0, %v1254
      %v1256 = vpop.f32.mrf.mxu0
      %v1257 = vadd.f32 0.0, %v1256
      %1258 = vmatmul.bf16.gmra.mxu0 %v1196
      %v1259 = vpop.f32.mrf.mxu0
      %v1260 = vadd.f32 0.0, %v1259
      %v1261 = vpop.f32.mrf.mxu0
      %v1262 = vadd.f32 0.0, %v1261
      %1263 = vmatmul.bf16.gmra.mxu0 %v1199
      %v1264 = vpop.f32.mrf.mxu0
      %v1265 = vadd.f32 0.0, %v1264
      %v1266 = vpop.f32.mrf.mxu0
      %v1267 = vadd.f32 0.0, %v1266
      %1268 = vmatmul.bf16.gmra.mxu0 %v1202
      %v1269 = vpop.f32.mrf.mxu0
      %v1270 = vadd.f32 0.0, %v1269
      %v1271 = vpop.f32.mrf.mxu0
      %v1272 = vadd.f32 0.0, %v1271
      %1273 = vmatmul.bf16.gmra.mxu0 %v1205
      %v1274 = vpop.f32.mrf.mxu0
      %v1275 = vadd.f32 0.0, %v1274
      %v1276 = vpop.f32.mrf.mxu0
      %v1277 = vadd.f32 0.0, %v1276
      %1278 = vmatmul.bf16.gmra.mxu0 %v1208
      %v1279 = vpop.f32.mrf.mxu0
      %v1280 = vadd.f32 0.0, %v1279
      %v1281 = vpop.f32.mrf.mxu0
      %v1282 = vadd.f32 0.0, %v1281
      %1283 = vmatmul.bf16.gmra.mxu0 %v1211
      %v1284 = vpop.f32.mrf.mxu0
      %v1285 = vadd.f32 0.0, %v1284
      %v1286 = vpop.f32.mrf.mxu0
      %v1287 = vadd.f32 0.0, %v1286
      %1288 = vmatmul.bf16.gmra.mxu0 %v1214
      %v1289 = vpop.f32.mrf.mxu0
      %v1290 = vadd.f32 0.0, %v1289
      %v1291 = vpop.f32.mrf.mxu0
      %v1292 = vadd.f32 0.0, %v1291
      %1293 = vmatmul.bf16.gmra.mxu0 %v1217
      %v1294 = vpop.f32.mrf.mxu0
      %v1295 = vadd.f32 0.0, %v1294
      %v1296 = vpop.f32.mrf.mxu0
      %v1297 = vadd.f32 0.0, %v1296
      %1298 = vmatmul.bf16.gmra.mxu0 %v1220
      %v1299 = vpop.f32.mrf.mxu0
      %v1300 = vadd.f32 0.0, %v1299
      %v1301 = vpop.f32.mrf.mxu0
      %v1302 = vadd.f32 0.0, %v1301
      %1303 = vmatmul.bf16.gmra.mxu0 %v1223
      %v1304 = vpop.f32.mrf.mxu0
      %v1305 = vadd.f32 0.0, %v1304
      %v1306 = vpop.f32.mrf.mxu0
      %v1307 = vadd.f32 0.0, %v1306
      %1308 = vmatmul.bf16.gmra.mxu0 %v1226
      %v1309 = vpop.f32.mrf.mxu0
      %v1310 = vadd.f32 0.0, %v1309
      %v1311 = vpop.f32.mrf.mxu0
      %v1312 = vadd.f32 0.0, %v1311
      %1313 = vmatmul.bf16.gmra.mxu0 %v1229
      %v1314 = vpop.f32.mrf.mxu0
      %v1315 = vadd.f32 0.0, %v1314
      %v1316 = vpop.f32.mrf.mxu0
      %v1317 = vadd.f32 0.0, %v1316
      %1318 = vmatmul.bf16.gmra.mxu0 %v1232
      %v1319 = vpop.f32.mrf.mxu0
      %v1320 = vadd.f32 0.0, %v1319
      %v1321 = vpop.f32.mrf.mxu0
      %v1322 = vadd.f32 0.0, %v1321
      %1323 = vmatmul.bf16.gmra.mxu0 %v1235
      %v1324 = vpop.f32.mrf.mxu0
      %v1325 = vadd.f32 0.0, %v1324
      %v1326 = vpop.f32.mrf.mxu0
      %v1327 = vadd.f32 0.0, %v1326
      %1328 = vdwg.mxu0
      %v1329 = vadd.f32 %v878, %v1250
      %v1330 = vadd.f32 %v880, %v1252
      %v1331 = vadd.f32 %v883, %v1255
      %v1332 = vadd.f32 %v885, %v1257
      %v1333 = vadd.f32 %v888, %v1260
      %v1334 = vadd.f32 %v890, %v1262
      %v1335 = vadd.f32 %v893, %v1265
      %v1336 = vadd.f32 %v895, %v1267
      %v1337 = vadd.f32 %v898, %v1270
      %v1338 = vadd.f32 %v900, %v1272
      %v1339 = vadd.f32 %v903, %v1275
      %v1340 = vadd.f32 %v905, %v1277
      %v1341 = vadd.f32 %v908, %v1280
      %v1342 = vadd.f32 %v910, %v1282
      %v1343 = vadd.f32 %v913, %v1285
      %v1344 = vadd.f32 %v915, %v1287
      %v1345 = vadd.f32 %v918, %v1290
      %v1346 = vadd.f32 %v920, %v1292
      %v1347 = vadd.f32 %v923, %v1295
      %v1348 = vadd.f32 %v925, %v1297
      %v1349 = vadd.f32 %v928, %v1300
      %v1350 = vadd.f32 %v930, %v1302
      %v1351 = vadd.f32 %v933, %v1305
      %v1352 = vadd.f32 %v935, %v1307
      %v1353 = vadd.f32 %v938, %v1310
      %v1354 = vadd.f32 %v940, %v1312
      %v1355 = vadd.f32 %v943, %v1315
      %v1356 = vadd.f32 %v945, %v1317
      %v1357 = vadd.f32 %v948, %v1320
      %v1358 = vadd.f32 %v950, %v1322
      %v1359 = vadd.f32 %v953, %v1325
      %v1360 = vadd.f32 %v955, %v1327
      %s1361 = smul.u32 %s1060, 16
      %s1362 = scalar_lea.vmem %s327, %s1361
      %v1363 = vld [vmem:[%s1362] sm:$0xff]
      %v1364 = vld [vmem:[%s1362 + $0x8] sm:$0xff]
      %v1365 = vld [vmem:[%s1362 + $0x10] sm:$0xff]
      %v1366 = vld [vmem:[%s1362 + $0x18] sm:$0xff]
      %v1367 = vld [vmem:[%s1362 + $0x20] sm:$0xff]
      %v1368 = vld [vmem:[%s1362 + $0x28] sm:$0xff]
      %v1369 = vld [vmem:[%s1362 + $0x30] sm:$0xff]
      %v1370 = vld [vmem:[%s1362 + $0x38] sm:$0xff]
      %v1371 = vld [vmem:[%s1362 + $0x40] sm:$0xff]
      %v1372 = vld [vmem:[%s1362 + $0x48] sm:$0xff]
      %v1373 = vld [vmem:[%s1362 + $0x50] sm:$0xff]
      %v1374 = vld [vmem:[%s1362 + $0x58] sm:$0xff]
      %v1375 = vld [vmem:[%s1362 + $0x60] sm:$0xff]
      %v1376 = vld [vmem:[%s1362 + $0x68] sm:$0xff]
      %v1377 = vld [vmem:[%s1362 + $0x70] sm:$0xff]
      %v1378 = vld [vmem:[%s1362 + $0x78] sm:$0xff]
      %v1379 = vld [vmem:[%s1362 + $0x80] sm:$0xff]
      %v1380 = vld [vmem:[%s1362 + $0x88] sm:$0xff]
      %v1381 = vld [vmem:[%s1362 + $0x90] sm:$0xff]
      %v1382 = vld [vmem:[%s1362 + $0x98] sm:$0xff]
      %v1383 = vld [vmem:[%s1362 + $0xa0] sm:$0xff]
      %v1384 = vld [vmem:[%s1362 + $0xa8] sm:$0xff]
      %v1385 = vld [vmem:[%s1362 + $0xb0] sm:$0xff]
      %v1386 = vld [vmem:[%s1362 + $0xb8] sm:$0xff]
      %v1387 = vld [vmem:[%s1362 + $0xc0] sm:$0xff]
      %v1388 = vld [vmem:[%s1362 + $0xc8] sm:$0xff]
      %v1389 = vld [vmem:[%s1362 + $0xd0] sm:$0xff]
      %v1390 = vld [vmem:[%s1362 + $0xd8] sm:$0xff]
      %v1391 = vld [vmem:[%s1362 + $0xe0] sm:$0xff]
      %v1392 = vld [vmem:[%s1362 + $0xe8] sm:$0xff]
      %v1393 = vld [vmem:[%s1362 + $0xf0] sm:$0xff]
      %v1394 = vld [vmem:[%s1362 + $0xf8] sm:$0xff]
      %s1395 = scalar_lea.vmem %s3, 2
      %v1396 = vld [vmem:[%s1395] sm:$0x1]
      %v1398 = vperm.slane %v1396, 0
      %v1400 = vmul.f32 %v1363, %v1398
      %v1401 = vmul.f32 %v1364, %v1398
      %v1402 = vmul.f32 %v1365, %v1398
      %v1403 = vmul.f32 %v1366, %v1398
      %v1404 = vmul.f32 %v1367, %v1398
      %v1405 = vmul.f32 %v1368, %v1398
      %v1406 = vmul.f32 %v1369, %v1398
      %v1407 = vmul.f32 %v1370, %v1398
      %v1408 = vmul.f32 %v1371, %v1398
      %v1409 = vmul.f32 %v1372, %v1398
      %v1410 = vmul.f32 %v1373, %v1398
      %v1411 = vmul.f32 %v1374, %v1398
      %v1412 = vmul.f32 %v1375, %v1398
      %v1413 = vmul.f32 %v1376, %v1398
      %v1414 = vmul.f32 %v1377, %v1398
      %v1415 = vmul.f32 %v1378, %v1398
      %v1416 = vmul.f32 %v1379, %v1398
      %v1417 = vmul.f32 %v1380, %v1398
      %v1418 = vmul.f32 %v1381, %v1398
      %v1419 = vmul.f32 %v1382, %v1398
      %v1420 = vmul.f32 %v1383, %v1398
      %v1421 = vmul.f32 %v1384, %v1398
      %v1422 = vmul.f32 %v1385, %v1398
      %v1423 = vmul.f32 %v1386, %v1398
      %v1424 = vmul.f32 %v1387, %v1398
      %v1425 = vmul.f32 %v1388, %v1398
      %v1426 = vmul.f32 %v1389, %v1398
      %v1427 = vmul.f32 %v1390, %v1398
      %v1428 = vmul.f32 %v1391, %v1398
      %v1429 = vmul.f32 %v1392, %v1398
      %v1430 = vmul.f32 %v1393, %v1398
      %v1431 = vmul.f32 %v1394, %v1398
      %v1432 = vadd.f32 %v1028, %v1400
      %v1433 = vadd.f32 %v1029, %v1401
      %v1434 = vadd.f32 %v1030, %v1402
      %v1435 = vadd.f32 %v1031, %v1403
      %v1436 = vadd.f32 %v1032, %v1404
      %v1437 = vadd.f32 %v1033, %v1405
      %v1438 = vadd.f32 %v1034, %v1406
      %v1439 = vadd.f32 %v1035, %v1407
      %v1440 = vadd.f32 %v1036, %v1408
      %v1441 = vadd.f32 %v1037, %v1409
      %v1442 = vadd.f32 %v1038, %v1410
      %v1443 = vadd.f32 %v1039, %v1411
      %v1444 = vadd.f32 %v1040, %v1412
      %v1445 = vadd.f32 %v1041, %v1413
      %v1446 = vadd.f32 %v1042, %v1414
      %v1447 = vadd.f32 %v1043, %v1415
      %v1448 = vadd.f32 %v1044, %v1416
      %v1449 = vadd.f32 %v1045, %v1417
      %v1450 = vadd.f32 %v1046, %v1418
      %v1451 = vadd.f32 %v1047, %v1419
      %v1452 = vadd.f32 %v1048, %v1420
      %v1453 = vadd.f32 %v1049, %v1421
      %v1454 = vadd.f32 %v1050, %v1422
      %v1455 = vadd.f32 %v1051, %v1423
      %v1456 = vadd.f32 %v1052, %v1424
      %v1457 = vadd.f32 %v1053, %v1425
      %v1458 = vadd.f32 %v1054, %v1426
      %v1459 = vadd.f32 %v1055, %v1427
      %v1460 = vadd.f32 %v1056, %v1428
      %v1461 = vadd.f32 %v1057, %v1429
      %v1462 = vadd.f32 %v1058, %v1430
      %v1463 = vadd.f32 %v1059, %v1431
      %s1464 = sadd.s32 %s1061, 34
      %s1465 = smul.addr %s1464, 4
      %s1466 = scalar_lea.vmem %s322, %s1465
      %v1467 = vld [vmem:[%s1466] sm:$0xf]
      %v1468 = vld [vmem:[%s1466 + $0x4] sm:$0xf]
      %v1469 = vld [vmem:[%s1466 + $0x8] sm:$0xf]
      %v1470 = vld [vmem:[%s1466 + $0xc] sm:$0xf]
      %v1471 = vld [vmem:[%s1466 + $0x10] sm:$0xf]
      %v1472 = vld [vmem:[%s1466 + $0x14] sm:$0xf]
      %v1473 = vld [vmem:[%s1466 + $0x18] sm:$0xf]
      %v1474 = vld [vmem:[%s1466 + $0x1c] sm:$0xf]
      %v1475 = vld [vmem:[%s1466 + $0x20] sm:$0xf]
      %v1476 = vld [vmem:[%s1466 + $0x24] sm:$0xf]
      %v1477 = vld [vmem:[%s1466 + $0x28] sm:$0xf]
      %v1478 = vld [vmem:[%s1466 + $0x2c] sm:$0xf]
      %v1479 = vld [vmem:[%s1466 + $0x30] sm:$0xf]
      %v1480 = vld [vmem:[%s1466 + $0x34] sm:$0xf]
      %v1481 = vld [vmem:[%s1466 + $0x38] sm:$0xf]
      %v1482 = vld [vmem:[%s1466 + $0x3c] sm:$0xf]
      %v1483 = vld [vmem:[%s1466 + $0x40] sm:$0xf]
      %v1484 = vld [vmem:[%s1466 + $0x44] sm:$0xf]
      %v1485 = vld [vmem:[%s1466 + $0x48] sm:$0xf]
      %v1486 = vld [vmem:[%s1466 + $0x4c] sm:$0xf]
      %v1487 = vld [vmem:[%s1466 + $0x50] sm:$0xf]
      %v1488 = vld [vmem:[%s1466 + $0x54] sm:$0xf]
      %v1489 = vld [vmem:[%s1466 + $0x58] sm:$0xf]
      %v1490 = vld [vmem:[%s1466 + $0x5c] sm:$0xf]
      %v1491 = vld [vmem:[%s1466 + $0x60] sm:$0xf]
      %v1492 = vld [vmem:[%s1466 + $0x64] sm:$0xf]
      %v1493 = vld [vmem:[%s1466 + $0x68] sm:$0xf]
      %v1494 = vld [vmem:[%s1466 + $0x6c] sm:$0xf]
      %v1495 = vld [vmem:[%s1466 + $0x70] sm:$0xf]
      %v1496 = vld [vmem:[%s1466 + $0x74] sm:$0xf]
      %v1497 = vld [vmem:[%s1466 + $0x78] sm:$0xf]
      %v1498 = vld [vmem:[%s1466 + $0x7c] sm:$0xf]
      %s1499 = scalar_lea.vmem %s2, 36
      %v1500 = vld [vmem:[%s1499] sm:$0xf]
      %v1501 = vld [vmem:[%s1499 + $0x4] sm:$0xf]
      %v1502 = vld [vmem:[%s1499 + $0x8] sm:$0xf]
      %v1535 = vunpack.c.l.b16 %v1467
      %v1536 = vunpack.c.l.b16 %v1468
      %v1537 = vunpack.c.l.b16 %v1469
      %v1538 = vunpack.c.l.b16 %v1470
      %v1539 = vunpack.c.l.b16 %v1471
      %v1540 = vunpack.c.l.b16 %v1472
      %v1541 = vunpack.c.l.b16 %v1473
      %v1542 = vunpack.c.l.b16 %v1474
      %v1543 = vunpack.c.l.b16 %v1475
      %v1544 = vunpack.c.l.b16 %v1476
      %v1545 = vunpack.c.l.b16 %v1477
      %v1546 = vunpack.c.l.b16 %v1478
      %v1547 = vunpack.c.l.b16 %v1479
      %v1548 = vunpack.c.l.b16 %v1480
      %v1549 = vunpack.c.l.b16 %v1481
      %v1550 = vunpack.c.l.b16 %v1482
      %v1551 = vunpack.c.l.b16 %v1483
      %v1552 = vunpack.c.l.b16 %v1484
      %v1553 = vunpack.c.l.b16 %v1485
      %v1554 = vunpack.c.l.b16 %v1486
      %v1555 = vunpack.c.l.b16 %v1487
      %v1556 = vunpack.c.l.b16 %v1488
      %v1557 = vunpack.c.l.b16 %v1489
      %v1558 = vunpack.c.l.b16 %v1490
      %v1559 = vunpack.c.l.b16 %v1491
      %v1560 = vunpack.c.l.b16 %v1492
      %v1561 = vunpack.c.l.b16 %v1493
      %v1562 = vunpack.c.l.b16 %v1494
      %v1563 = vunpack.c.l.b16 %v1495
      %v1564 = vunpack.c.l.b16 %v1496
      %v1565 = vunpack.c.l.b16 %v1497
      %v1566 = vunpack.c.l.b16 %v1498
      %v1567 = vpack.c.b16 %v1536, %v1535
      %v1568 = vpack.c.b16 %v1538, %v1537
      %v1569 = vpack.c.b16 %v1540, %v1539
      %v1570 = vpack.c.b16 %v1542, %v1541
      %v1571 = vpack.c.b16 %v1544, %v1543
      %v1572 = vpack.c.b16 %v1546, %v1545
      %v1573 = vpack.c.b16 %v1548, %v1547
      %v1574 = vpack.c.b16 %v1550, %v1549
      %v1575 = vpack.c.b16 %v1552, %v1551
      %v1576 = vpack.c.b16 %v1554, %v1553
      %v1577 = vpack.c.b16 %v1556, %v1555
      %v1578 = vpack.c.b16 %v1558, %v1557
      %v1579 = vpack.c.b16 %v1560, %v1559
      %v1580 = vpack.c.b16 %v1562, %v1561
      %v1581 = vpack.c.b16 %v1564, %v1563
      %v1582 = vpack.c.b16 %v1566, %v1565
      %v1586 = vunpack.c.l.b16 %v1500
      %v1587 = vunpack.c.l.b16 %v1501
      %v1588 = vunpack.c.l.b16 %v1502
      %v1589 = vpack.c.b16 %v1587, %v1586
      %v1590 = vpack.c.b16 %v1588, %v1588
      %v1593 = vsel %vm586, %v1567, 0
      %v1596 = vsel %vm586, %v1568, 0
      %v1599 = vsel %vm586, %v1569, 0
      %v1602 = vsel %vm586, %v1570, 0
      %v1605 = vsel %vm586, %v1571, 0
      %v1608 = vsel %vm586, %v1572, 0
      %v1611 = vsel %vm586, %v1573, 0
      %v1614 = vsel %vm586, %v1574, 0
      %v1617 = vsel %vm586, %v1575, 0
      %v1620 = vsel %vm586, %v1576, 0
      %v1623 = vsel %vm586, %v1577, 0
      %v1626 = vsel %vm586, %v1578, 0
      %v1629 = vsel %vm586, %v1579, 0
      %v1632 = vsel %vm586, %v1580, 0
      %v1635 = vsel %vm586, %v1581, 0
      %v1638 = vsel %vm586, %v1582, 0
      %v1641 = vsel %vm635, %v1590, 0
      %1643 = vmatpush.bf16.msra.mxu0 0
      %1644 = vmatpush.bf16.msra.mxu0 0
      %1645 = vmatpush.bf16.msra.mxu0 0
      %1646 = vmatpush.bf16.msra.mxu0 0
      %1647 = vmatpush.bf16.msra.mxu0 0
      %1648 = vmatpush.bf16.msra.mxu0 0
      %1649 = vmatpush.bf16.msra.mxu0 %v1641
      %1650 = vmatpush.bf16.msra.mxu0 %v1589
      %1651 = vmatmul.bf16.gmra.mxu0 %v1593
      %v1652 = vpop.f32.mrf.mxu0
      %v1653 = vadd.f32 0.0, %v1652
      %v1654 = vpop.f32.mrf.mxu0
      %v1655 = vadd.f32 0.0, %v1654
      %1656 = vmatmul.bf16.gmra.mxu0 %v1596
      %v1657 = vpop.f32.mrf.mxu0
      %v1658 = vadd.f32 0.0, %v1657
      %v1659 = vpop.f32.mrf.mxu0
      %v1660 = vadd.f32 0.0, %v1659
      %1661 = vmatmul.bf16.gmra.mxu0 %v1599
      %v1662 = vpop.f32.mrf.mxu0
      %v1663 = vadd.f32 0.0, %v1662
      %v1664 = vpop.f32.mrf.mxu0
      %v1665 = vadd.f32 0.0, %v1664
      %1666 = vmatmul.bf16.gmra.mxu0 %v1602
      %v1667 = vpop.f32.mrf.mxu0
      %v1668 = vadd.f32 0.0, %v1667
      %v1669 = vpop.f32.mrf.mxu0
      %v1670 = vadd.f32 0.0, %v1669
      %1671 = vmatmul.bf16.gmra.mxu0 %v1605
      %v1672 = vpop.f32.mrf.mxu0
      %v1673 = vadd.f32 0.0, %v1672
      %v1674 = vpop.f32.mrf.mxu0
      %v1675 = vadd.f32 0.0, %v1674
      %1676 = vmatmul.bf16.gmra.mxu0 %v1608
      %v1677 = vpop.f32.mrf.mxu0
      %v1678 = vadd.f32 0.0, %v1677
      %v1679 = vpop.f32.mrf.mxu0
      %v1680 = vadd.f32 0.0, %v1679
      %1681 = vmatmul.bf16.gmra.mxu0 %v1611
      %v1682 = vpop.f32.mrf.mxu0
      %v1683 = vadd.f32 0.0, %v1682
      %v1684 = vpop.f32.mrf.mxu0
      %v1685 = vadd.f32 0.0, %v1684
      %1686 = vmatmul.bf16.gmra.mxu0 %v1614
      %v1687 = vpop.f32.mrf.mxu0
      %v1688 = vadd.f32 0.0, %v1687
      %v1689 = vpop.f32.mrf.mxu0
      %v1690 = vadd.f32 0.0, %v1689
      %1691 = vmatmul.bf16.gmra.mxu0 %v1617
      %v1692 = vpop.f32.mrf.mxu0
      %v1693 = vadd.f32 0.0, %v1692
      %v1694 = vpop.f32.mrf.mxu0
      %v1695 = vadd.f32 0.0, %v1694
      %1696 = vmatmul.bf16.gmra.mxu0 %v1620
      %v1697 = vpop.f32.mrf.mxu0
      %v1698 = vadd.f32 0.0, %v1697
      %v1699 = vpop.f32.mrf.mxu0
      %v1700 = vadd.f32 0.0, %v1699
      %1701 = vmatmul.bf16.gmra.mxu0 %v1623
      %v1702 = vpop.f32.mrf.mxu0
      %v1703 = vadd.f32 0.0, %v1702
      %v1704 = vpop.f32.mrf.mxu0
      %v1705 = vadd.f32 0.0, %v1704
      %1706 = vmatmul.bf16.gmra.mxu0 %v1626
      %v1707 = vpop.f32.mrf.mxu0
      %v1708 = vadd.f32 0.0, %v1707
      %v1709 = vpop.f32.mrf.mxu0
      %v1710 = vadd.f32 0.0, %v1709
      %1711 = vmatmul.bf16.gmra.mxu0 %v1629
      %v1712 = vpop.f32.mrf.mxu0
      %v1713 = vadd.f32 0.0, %v1712
      %v1714 = vpop.f32.mrf.mxu0
      %v1715 = vadd.f32 0.0, %v1714
      %1716 = vmatmul.bf16.gmra.mxu0 %v1632
      %v1717 = vpop.f32.mrf.mxu0
      %v1718 = vadd.f32 0.0, %v1717
      %v1719 = vpop.f32.mrf.mxu0
      %v1720 = vadd.f32 0.0, %v1719
      %1721 = vmatmul.bf16.gmra.mxu0 %v1635
      %v1722 = vpop.f32.mrf.mxu0
      %v1723 = vadd.f32 0.0, %v1722
      %v1724 = vpop.f32.mrf.mxu0
      %v1725 = vadd.f32 0.0, %v1724
      %1726 = vmatmul.bf16.gmra.mxu0 %v1638
      %v1727 = vpop.f32.mrf.mxu0
      %v1728 = vadd.f32 0.0, %v1727
      %v1729 = vpop.f32.mrf.mxu0
      %v1730 = vadd.f32 0.0, %v1729
      %1731 = vdwg.mxu0
      %v1732 = vadd.f32 %v1329, %v1653
      %v1733 = vadd.f32 %v1330, %v1655
      %v1734 = vadd.f32 %v1331, %v1658
      %v1735 = vadd.f32 %v1332, %v1660
      %v1736 = vadd.f32 %v1333, %v1663
      %v1737 = vadd.f32 %v1334, %v1665
      %v1738 = vadd.f32 %v1335, %v1668
      %v1739 = vadd.f32 %v1336, %v1670
      %v1740 = vadd.f32 %v1337, %v1673
      %v1741 = vadd.f32 %v1338, %v1675
      %v1742 = vadd.f32 %v1339, %v1678
      %v1743 = vadd.f32 %v1340, %v1680
      %v1744 = vadd.f32 %v1341, %v1683
      %v1745 = vadd.f32 %v1342, %v1685
      %v1746 = vadd.f32 %v1343, %v1688
      %v1747 = vadd.f32 %v1344, %v1690
      %v1748 = vadd.f32 %v1345, %v1693
      %v1749 = vadd.f32 %v1346, %v1695
      %v1750 = vadd.f32 %v1347, %v1698
      %v1751 = vadd.f32 %v1348, %v1700
      %v1752 = vadd.f32 %v1349, %v1703
      %v1753 = vadd.f32 %v1350, %v1705
      %v1754 = vadd.f32 %v1351, %v1708
      %v1755 = vadd.f32 %v1352, %v1710
      %v1756 = vadd.f32 %v1353, %v1713
      %v1757 = vadd.f32 %v1354, %v1715
      %v1758 = vadd.f32 %v1355, %v1718
      %v1759 = vadd.f32 %v1356, %v1720
      %v1760 = vadd.f32 %v1357, %v1723
      %v1761 = vadd.f32 %v1358, %v1725
      %v1762 = vadd.f32 %v1359, %v1728
      %v1763 = vadd.f32 %v1360, %v1730
      %s1764 = sadd.s32 %s1361, 272
      %s1765 = scalar_lea.vmem %s327, %s1764
      %v1766 = vld [vmem:[%s1765] sm:$0xff]
      %v1767 = vld [vmem:[%s1765 + $0x8] sm:$0xff]
      %v1768 = vld [vmem:[%s1765 + $0x10] sm:$0xff]
      %v1769 = vld [vmem:[%s1765 + $0x18] sm:$0xff]
      %v1770 = vld [vmem:[%s1765 + $0x20] sm:$0xff]
      %v1771 = vld [vmem:[%s1765 + $0x28] sm:$0xff]
      %v1772 = vld [vmem:[%s1765 + $0x30] sm:$0xff]
      %v1773 = vld [vmem:[%s1765 + $0x38] sm:$0xff]
      %v1774 = vld [vmem:[%s1765 + $0x40] sm:$0xff]
      %v1775 = vld [vmem:[%s1765 + $0x48] sm:$0xff]
      %v1776 = vld [vmem:[%s1765 + $0x50] sm:$0xff]
      %v1777 = vld [vmem:[%s1765 + $0x58] sm:$0xff]
      %v1778 = vld [vmem:[%s1765 + $0x60] sm:$0xff]
      %v1779 = vld [vmem:[%s1765 + $0x68] sm:$0xff]
      %v1780 = vld [vmem:[%s1765 + $0x70] sm:$0xff]
      %v1781 = vld [vmem:[%s1765 + $0x78] sm:$0xff]
      %v1782 = vld [vmem:[%s1765 + $0x80] sm:$0xff]
      %v1783 = vld [vmem:[%s1765 + $0x88] sm:$0xff]
      %v1784 = vld [vmem:[%s1765 + $0x90] sm:$0xff]
      %v1785 = vld [vmem:[%s1765 + $0x98] sm:$0xff]
      %v1786 = vld [vmem:[%s1765 + $0xa0] sm:$0xff]
      %v1787 = vld [vmem:[%s1765 + $0xa8] sm:$0xff]
      %v1788 = vld [vmem:[%s1765 + $0xb0] sm:$0xff]
      %v1789 = vld [vmem:[%s1765 + $0xb8] sm:$0xff]
      %v1790 = vld [vmem:[%s1765 + $0xc0] sm:$0xff]
      %v1791 = vld [vmem:[%s1765 + $0xc8] sm:$0xff]
      %v1792 = vld [vmem:[%s1765 + $0xd0] sm:$0xff]
      %v1793 = vld [vmem:[%s1765 + $0xd8] sm:$0xff]
      %v1794 = vld [vmem:[%s1765 + $0xe0] sm:$0xff]
      %v1795 = vld [vmem:[%s1765 + $0xe8] sm:$0xff]
      %v1796 = vld [vmem:[%s1765 + $0xf0] sm:$0xff]
      %v1797 = vld [vmem:[%s1765 + $0xf8] sm:$0xff]
      %s1798 = scalar_lea.vmem %s3, 3
      %v1799 = vld [vmem:[%s1798] sm:$0x1]
      %v1801 = vperm.slane %v1799, 0
      %v1803 = vmul.f32 %v1766, %v1801
      %v1804 = vmul.f32 %v1767, %v1801
      %v1805 = vmul.f32 %v1768, %v1801
      %v1806 = vmul.f32 %v1769, %v1801
      %v1807 = vmul.f32 %v1770, %v1801
      %v1808 = vmul.f32 %v1771, %v1801
      %v1809 = vmul.f32 %v1772, %v1801
      %v1810 = vmul.f32 %v1773, %v1801
      %v1811 = vmul.f32 %v1774, %v1801
      %v1812 = vmul.f32 %v1775, %v1801
      %v1813 = vmul.f32 %v1776, %v1801
      %v1814 = vmul.f32 %v1777, %v1801
      %v1815 = vmul.f32 %v1778, %v1801
      %v1816 = vmul.f32 %v1779, %v1801
      %v1817 = vmul.f32 %v1780, %v1801
      %v1818 = vmul.f32 %v1781, %v1801
      %v1819 = vmul.f32 %v1782, %v1801
      %v1820 = vmul.f32 %v1783, %v1801
      %v1821 = vmul.f32 %v1784, %v1801
      %v1822 = vmul.f32 %v1785, %v1801
      %v1823 = vmul.f32 %v1786, %v1801
      %v1824 = vmul.f32 %v1787, %v1801
      %v1825 = vmul.f32 %v1788, %v1801
      %v1826 = vmul.f32 %v1789, %v1801
      %v1827 = vmul.f32 %v1790, %v1801
      %v1828 = vmul.f32 %v1791, %v1801
      %v1829 = vmul.f32 %v1792, %v1801
      %v1830 = vmul.f32 %v1793, %v1801
      %v1831 = vmul.f32 %v1794, %v1801
      %v1832 = vmul.f32 %v1795, %v1801
      %v1833 = vmul.f32 %v1796, %v1801
      %v1834 = vmul.f32 %v1797, %v1801
      %v1835 = vadd.f32 %v1432, %v1803
      %v1836 = vadd.f32 %v1433, %v1804
      %v1837 = vadd.f32 %v1434, %v1805
      %v1838 = vadd.f32 %v1435, %v1806
      %v1839 = vadd.f32 %v1436, %v1807
      %v1840 = vadd.f32 %v1437, %v1808
      %v1841 = vadd.f32 %v1438, %v1809
      %v1842 = vadd.f32 %v1439, %v1810
      %v1843 = vadd.f32 %v1440, %v1811
      %v1844 = vadd.f32 %v1441, %v1812
      %v1845 = vadd.f32 %v1442, %v1813
      %v1846 = vadd.f32 %v1443, %v1814
      %v1847 = vadd.f32 %v1444, %v1815
      %v1848 = vadd.f32 %v1445, %v1816
      %v1849 = vadd.f32 %v1446, %v1817
      %v1850 = vadd.f32 %v1447, %v1818
      %v1851 = vadd.f32 %v1448, %v1819
      %v1852 = vadd.f32 %v1449, %v1820
      %v1853 = vadd.f32 %v1450, %v1821
      %v1854 = vadd.f32 %v1451, %v1822
      %v1855 = vadd.f32 %v1452, %v1823
      %v1856 = vadd.f32 %v1453, %v1824
      %v1857 = vadd.f32 %v1454, %v1825
      %v1858 = vadd.f32 %v1455, %v1826
      %v1859 = vadd.f32 %v1456, %v1827
      %v1860 = vadd.f32 %v1457, %v1828
      %v1861 = vadd.f32 %v1458, %v1829
      %v1862 = vadd.f32 %v1459, %v1830
      %v1863 = vadd.f32 %v1460, %v1831
      %v1864 = vadd.f32 %v1461, %v1832
      %v1865 = vadd.f32 %v1462, %v1833
      %v1866 = vadd.f32 %v1463, %v1834
      %v1867 = vld [vmem:[%s4] sm:$0x1]
      %v1869 = vperm.slane %v1867, 0
      %v1871 = vadd.f32 %v1732, %v1869
      %v1872 = vadd.f32 %v1733, %v1869
      %v1873 = vadd.f32 %v1734, %v1869
      %v1874 = vadd.f32 %v1735, %v1869
      %v1875 = vadd.f32 %v1736, %v1869
      %v1876 = vadd.f32 %v1737, %v1869
      %v1877 = vadd.f32 %v1738, %v1869
      %v1878 = vadd.f32 %v1739, %v1869
      %v1879 = vadd.f32 %v1740, %v1869
      %v1880 = vadd.f32 %v1741, %v1869
      %v1881 = vadd.f32 %v1742, %v1869
      %v1882 = vadd.f32 %v1743, %v1869
      %v1883 = vadd.f32 %v1744, %v1869
      %v1884 = vadd.f32 %v1745, %v1869
      %v1885 = vadd.f32 %v1746, %v1869
      %v1886 = vadd.f32 %v1747, %v1869
      %v1887 = vadd.f32 %v1748, %v1869
      %v1888 = vadd.f32 %v1749, %v1869
      %v1889 = vadd.f32 %v1750, %v1869
      %v1890 = vadd.f32 %v1751, %v1869
      %v1891 = vadd.f32 %v1752, %v1869
      %v1892 = vadd.f32 %v1753, %v1869
      %v1893 = vadd.f32 %v1754, %v1869
      %v1894 = vadd.f32 %v1755, %v1869
      %v1895 = vadd.f32 %v1756, %v1869
      %v1896 = vadd.f32 %v1757, %v1869
      %v1897 = vadd.f32 %v1758, %v1869
      %v1898 = vadd.f32 %v1759, %v1869
      %v1899 = vadd.f32 %v1760, %v1869
      %v1900 = vadd.f32 %v1761, %v1869
      %v1901 = vadd.f32 %v1762, %v1869
      %v1902 = vadd.f32 %v1763, %v1869
      %v1903 = vmul.f32 %v1871, 0.6
      %v1904 = vmul.f32 %v1872, 0.6
      %v1905 = vmul.f32 %v1873, 0.6
      %v1906 = vmul.f32 %v1874, 0.6
      %v1907 = vmul.f32 %v1875, 0.6
      %v1908 = vmul.f32 %v1876, 0.6
      %v1909 = vmul.f32 %v1877, 0.6
      %v1910 = vmul.f32 %v1878, 0.6
      %v1911 = vmul.f32 %v1879, 0.6
      %v1912 = vmul.f32 %v1880, 0.6
      %v1913 = vmul.f32 %v1881, 0.6
      %v1914 = vmul.f32 %v1882, 0.6
      %v1915 = vmul.f32 %v1883, 0.6
      %v1916 = vmul.f32 %v1884, 0.6
      %v1917 = vmul.f32 %v1885, 0.6
      %v1918 = vmul.f32 %v1886, 0.6
      %v1919 = vmul.f32 %v1887, 0.6
      %v1920 = vmul.f32 %v1888, 0.6
      %v1921 = vmul.f32 %v1889, 0.6
      %v1922 = vmul.f32 %v1890, 0.6
      %v1923 = vmul.f32 %v1891, 0.6
      %v1924 = vmul.f32 %v1892, 0.6
      %v1925 = vmul.f32 %v1893, 0.6
      %v1926 = vmul.f32 %v1894, 0.6
      %v1927 = vmul.f32 %v1895, 0.6
      %v1928 = vmul.f32 %v1896, 0.6
      %v1929 = vmul.f32 %v1897, 0.6
      %v1930 = vmul.f32 %v1898, 0.6
      %v1931 = vmul.f32 %v1899, 0.6
      %v1932 = vmul.f32 %v1900, 0.6
      %v1933 = vmul.f32 %v1901, 0.6
      %v1934 = vmul.f32 %v1902, 0.6
      %v1935 = vand.u32 2147483647, %v1871
      %v1936 = vand.u32 2147483647, %v1872
      %v1937 = vand.u32 2147483647, %v1873
      %v1938 = vand.u32 2147483647, %v1874
      %v1939 = vand.u32 2147483647, %v1875
      %v1940 = vand.u32 2147483647, %v1876
      %v1941 = vand.u32 2147483647, %v1877
      %v1942 = vand.u32 2147483647, %v1878
      %v1943 = vand.u32 2147483647, %v1879
      %v1944 = vand.u32 2147483647, %v1880
      %v1945 = vand.u32 2147483647, %v1881
      %v1946 = vand.u32 2147483647, %v1882
      %v1947 = vand.u32 2147483647, %v1883
      %v1948 = vand.u32 2147483647, %v1884
      %v1949 = vand.u32 2147483647, %v1885
      %v1950 = vand.u32 2147483647, %v1886
      %v1951 = vand.u32 2147483647, %v1887
      %v1952 = vand.u32 2147483647, %v1888
      %v1953 = vand.u32 2147483647, %v1889
      %v1954 = vand.u32 2147483647, %v1890
      %v1955 = vand.u32 2147483647, %v1891
      %v1956 = vand.u32 2147483647, %v1892
      %v1957 = vand.u32 2147483647, %v1893
      %v1958 = vand.u32 2147483647, %v1894
      %v1959 = vand.u32 2147483647, %v1895
      %v1960 = vand.u32 2147483647, %v1896
      %v1961 = vand.u32 2147483647, %v1897
      %v1962 = vand.u32 2147483647, %v1898
      %v1963 = vand.u32 2147483647, %v1899
      %v1964 = vand.u32 2147483647, %v1900
      %v1965 = vand.u32 2147483647, %v1901
      %v1966 = vand.u32 2147483647, %v1902
      %v1967 = vmul.f32 %v1935, 0.4
      %v1968 = vmul.f32 %v1936, 0.4
      %v1969 = vmul.f32 %v1937, 0.4
      %v1970 = vmul.f32 %v1938, 0.4
      %v1971 = vmul.f32 %v1939, 0.4
      %v1972 = vmul.f32 %v1940, 0.4
      %v1973 = vmul.f32 %v1941, 0.4
      %v1974 = vmul.f32 %v1942, 0.4
      %v1975 = vmul.f32 %v1943, 0.4
      %v1976 = vmul.f32 %v1944, 0.4
      %v1977 = vmul.f32 %v1945, 0.4
      %v1978 = vmul.f32 %v1946, 0.4
      %v1979 = vmul.f32 %v1947, 0.4
      %v1980 = vmul.f32 %v1948, 0.4
      %v1981 = vmul.f32 %v1949, 0.4
      %v1982 = vmul.f32 %v1950, 0.4
      %v1983 = vmul.f32 %v1951, 0.4
      %v1984 = vmul.f32 %v1952, 0.4
      %v1985 = vmul.f32 %v1953, 0.4
      %v1986 = vmul.f32 %v1954, 0.4
      %v1987 = vmul.f32 %v1955, 0.4
      %v1988 = vmul.f32 %v1956, 0.4
      %v1989 = vmul.f32 %v1957, 0.4
      %v1990 = vmul.f32 %v1958, 0.4
      %v1991 = vmul.f32 %v1959, 0.4
      %v1992 = vmul.f32 %v1960, 0.4
      %v1993 = vmul.f32 %v1961, 0.4
      %v1994 = vmul.f32 %v1962, 0.4
      %v1995 = vmul.f32 %v1963, 0.4
      %v1996 = vmul.f32 %v1964, 0.4
      %v1997 = vmul.f32 %v1965, 0.4
      %v1998 = vmul.f32 %v1966, 0.4
      %v1999 = vadd.f32 %v1903, %v1967
      %v2000 = vadd.f32 %v1904, %v1968
      %v2001 = vadd.f32 %v1905, %v1969
      %v2002 = vadd.f32 %v1906, %v1970
      %v2003 = vadd.f32 %v1907, %v1971
      %v2004 = vadd.f32 %v1908, %v1972
      %v2005 = vadd.f32 %v1909, %v1973
      %v2006 = vadd.f32 %v1910, %v1974
      %v2007 = vadd.f32 %v1911, %v1975
      %v2008 = vadd.f32 %v1912, %v1976
      %v2009 = vadd.f32 %v1913, %v1977
      %v2010 = vadd.f32 %v1914, %v1978
      %v2011 = vadd.f32 %v1915, %v1979
      %v2012 = vadd.f32 %v1916, %v1980
      %v2013 = vadd.f32 %v1917, %v1981
      %v2014 = vadd.f32 %v1918, %v1982
      %v2015 = vadd.f32 %v1919, %v1983
      %v2016 = vadd.f32 %v1920, %v1984
      %v2017 = vadd.f32 %v1921, %v1985
      %v2018 = vadd.f32 %v1922, %v1986
      %v2019 = vadd.f32 %v1923, %v1987
      %v2020 = vadd.f32 %v1924, %v1988
      %v2021 = vadd.f32 %v1925, %v1989
      %v2022 = vadd.f32 %v1926, %v1990
      %v2023 = vadd.f32 %v1927, %v1991
      %v2024 = vadd.f32 %v1928, %v1992
      %v2025 = vadd.f32 %v1929, %v1993
      %v2026 = vadd.f32 %v1930, %v1994
      %v2027 = vadd.f32 %v1931, %v1995
      %v2028 = vadd.f32 %v1932, %v1996
      %v2029 = vadd.f32 %v1933, %v1997
      %v2030 = vadd.f32 %v1934, %v1998
      %v2031 = vpack.c.bf16 %v1999, %v1999
      %v2032 = vpack.c.bf16 %v2000, %v2000
      %v2033 = vpack.c.bf16 %v2001, %v2001
      %v2034 = vpack.c.bf16 %v2002, %v2002
      %v2035 = vpack.c.bf16 %v2003, %v2003
      %v2036 = vpack.c.bf16 %v2004, %v2004
      %v2037 = vpack.c.bf16 %v2005, %v2005
      %v2038 = vpack.c.bf16 %v2006, %v2006
      %v2039 = vpack.c.bf16 %v2007, %v2007
      %v2040 = vpack.c.bf16 %v2008, %v2008
      %v2041 = vpack.c.bf16 %v2009, %v2009
      %v2042 = vpack.c.bf16 %v2010, %v2010
      %v2043 = vpack.c.bf16 %v2011, %v2011
      %v2044 = vpack.c.bf16 %v2012, %v2012
      %v2045 = vpack.c.bf16 %v2013, %v2013
      %v2046 = vpack.c.bf16 %v2014, %v2014
      %v2047 = vpack.c.bf16 %v2015, %v2015
      %v2048 = vpack.c.bf16 %v2016, %v2016
      %v2049 = vpack.c.bf16 %v2017, %v2017
      %v2050 = vpack.c.bf16 %v2018, %v2018
      %v2051 = vpack.c.bf16 %v2019, %v2019
      %v2052 = vpack.c.bf16 %v2020, %v2020
      %v2053 = vpack.c.bf16 %v2021, %v2021
      %v2054 = vpack.c.bf16 %v2022, %v2022
      %v2055 = vpack.c.bf16 %v2023, %v2023
      %v2056 = vpack.c.bf16 %v2024, %v2024
      %v2057 = vpack.c.bf16 %v2025, %v2025
      %v2058 = vpack.c.bf16 %v2026, %v2026
      %v2059 = vpack.c.bf16 %v2027, %v2027
      %v2060 = vpack.c.bf16 %v2028, %v2028
      %v2061 = vpack.c.bf16 %v2029, %v2029
      %v2062 = vpack.c.bf16 %v2030, %v2030
      %vm2063 = vcmask 519168
      %2064 = vst.msk [vmem:[%s336] sm:$0xf] %vm2063, %v2031
      %2065 = vst.msk [vmem:[%s336 + $0x4] sm:$0xf] %vm2063, %v2032
      %2066 = vst.msk [vmem:[%s336 + $0x8] sm:$0xf] %vm2063, %v2033
      %2067 = vst.msk [vmem:[%s336 + $0xc] sm:$0xf] %vm2063, %v2034
      %2068 = vst.msk [vmem:[%s336 + $0x10] sm:$0xf] %vm2063, %v2035
      %2069 = vst.msk [vmem:[%s336 + $0x14] sm:$0xf] %vm2063, %v2036
      %2070 = vst.msk [vmem:[%s336 + $0x18] sm:$0xf] %vm2063, %v2037
      %2071 = vst.msk [vmem:[%s336 + $0x1c] sm:$0xf] %vm2063, %v2038
      %2072 = vst.msk [vmem:[%s336 + $0x20] sm:$0xf] %vm2063, %v2039
      %2073 = vst.msk [vmem:[%s336 + $0x24] sm:$0xf] %vm2063, %v2040
      %2074 = vst.msk [vmem:[%s336 + $0x28] sm:$0xf] %vm2063, %v2041
      %2075 = vst.msk [vmem:[%s336 + $0x2c] sm:$0xf] %vm2063, %v2042
      %2076 = vst.msk [vmem:[%s336 + $0x30] sm:$0xf] %vm2063, %v2043
      %2077 = vst.msk [vmem:[%s336 + $0x34] sm:$0xf] %vm2063, %v2044
      %2078 = vst.msk [vmem:[%s336 + $0x38] sm:$0xf] %vm2063, %v2045
      %2079 = vst.msk [vmem:[%s336 + $0x3c] sm:$0xf] %vm2063, %v2046
      %2080 = vst.msk [vmem:[%s336 + $0x40] sm:$0xf] %vm2063, %v2047
      %2081 = vst.msk [vmem:[%s336 + $0x44] sm:$0xf] %vm2063, %v2048
      %2082 = vst.msk [vmem:[%s336 + $0x48] sm:$0xf] %vm2063, %v2049
      %2083 = vst.msk [vmem:[%s336 + $0x4c] sm:$0xf] %vm2063, %v2050
      %2084 = vst.msk [vmem:[%s336 + $0x50] sm:$0xf] %vm2063, %v2051
      %2085 = vst.msk [vmem:[%s336 + $0x54] sm:$0xf] %vm2063, %v2052
      %2086 = vst.msk [vmem:[%s336 + $0x58] sm:$0xf] %vm2063, %v2053
      %2087 = vst.msk [vmem:[%s336 + $0x5c] sm:$0xf] %vm2063, %v2054
      %2088 = vst.msk [vmem:[%s336 + $0x60] sm:$0xf] %vm2063, %v2055
      %2089 = vst.msk [vmem:[%s336 + $0x64] sm:$0xf] %vm2063, %v2056
      %2090 = vst.msk [vmem:[%s336 + $0x68] sm:$0xf] %vm2063, %v2057
      %2091 = vst.msk [vmem:[%s336 + $0x6c] sm:$0xf] %vm2063, %v2058
      %2092 = vst.msk [vmem:[%s336 + $0x70] sm:$0xf] %vm2063, %v2059
      %2093 = vst.msk [vmem:[%s336 + $0x74] sm:$0xf] %vm2063, %v2060
      %2094 = vst.msk [vmem:[%s336 + $0x78] sm:$0xf] %vm2063, %v2061
      %2095 = vst.msk [vmem:[%s336 + $0x7c] sm:$0xf] %vm2063, %v2062
      %vm2096 = vcmask 31744
      %v2097 = vsel %vm2096, %v1835, 0.0
      %2098 = vadd.xlane.f32.xlu0 %v2097
      %v2099 = vpop.xlane.xlu0 %2098
      %v2100 = vsel %vm2096, %v1836, 0.0
      %2101 = vadd.xlane.f32.xlu0 %v2100
      %v2102 = vpop.xlane.xlu0 %2101
      %v2103 = vsel %vm2096, %v1837, 0.0
      %2104 = vadd.xlane.f32.xlu0 %v2103
      %v2105 = vpop.xlane.xlu0 %2104
      %v2106 = vsel %vm2096, %v1838, 0.0
      %2107 = vadd.xlane.f32.xlu0 %v2106
      %v2108 = vpop.xlane.xlu0 %2107
      %v2109 = vsel %vm2096, %v1839, 0.0
      %2110 = vadd.xlane.f32.xlu0 %v2109
      %v2111 = vpop.xlane.xlu0 %2110
      %v2112 = vsel %vm2096, %v1840, 0.0
      %2113 = vadd.xlane.f32.xlu0 %v2112
      %v2114 = vpop.xlane.xlu0 %2113
      %v2115 = vsel %vm2096, %v1841, 0.0
      %2116 = vadd.xlane.f32.xlu0 %v2115
      %v2117 = vpop.xlane.xlu0 %2116
      %v2118 = vsel %vm2096, %v1842, 0.0
      %2119 = vadd.xlane.f32.xlu0 %v2118
      %v2120 = vpop.xlane.xlu0 %2119
      %v2121 = vsel %vm2096, %v1843, 0.0
      %2122 = vadd.xlane.f32.xlu0 %v2121
      %v2123 = vpop.xlane.xlu0 %2122
      %v2124 = vsel %vm2096, %v1844, 0.0
      %2125 = vadd.xlane.f32.xlu0 %v2124
      %v2126 = vpop.xlane.xlu0 %2125
      %v2127 = vsel %vm2096, %v1845, 0.0
      %2128 = vadd.xlane.f32.xlu0 %v2127
      %v2129 = vpop.xlane.xlu0 %2128
      %v2130 = vsel %vm2096, %v1846, 0.0
      %2131 = vadd.xlane.f32.xlu0 %v2130
      %v2132 = vpop.xlane.xlu0 %2131
      %v2133 = vsel %vm2096, %v1847, 0.0
      %2134 = vadd.xlane.f32.xlu0 %v2133
      %v2135 = vpop.xlane.xlu0 %2134
      %v2136 = vsel %vm2096, %v1848, 0.0
      %2137 = vadd.xlane.f32.xlu0 %v2136
      %v2138 = vpop.xlane.xlu0 %2137
      %v2139 = vsel %vm2096, %v1849, 0.0
      %2140 = vadd.xlane.f32.xlu0 %v2139
      %v2141 = vpop.xlane.xlu0 %2140
      %v2142 = vsel %vm2096, %v1850, 0.0
      %2143 = vadd.xlane.f32.xlu0 %v2142
      %v2144 = vpop.xlane.xlu0 %2143
      %v2145 = vsel %vm2096, %v1851, 0.0
      %2146 = vadd.xlane.f32.xlu0 %v2145
      %v2147 = vpop.xlane.xlu0 %2146
      %v2148 = vsel %vm2096, %v1852, 0.0
      %2149 = vadd.xlane.f32.xlu0 %v2148
      %v2150 = vpop.xlane.xlu0 %2149
      %v2151 = vsel %vm2096, %v1853, 0.0
      %2152 = vadd.xlane.f32.xlu0 %v2151
      %v2153 = vpop.xlane.xlu0 %2152
      %v2154 = vsel %vm2096, %v1854, 0.0
      %2155 = vadd.xlane.f32.xlu0 %v2154
      %v2156 = vpop.xlane.xlu0 %2155
      %v2157 = vsel %vm2096, %v1855, 0.0
      %2158 = vadd.xlane.f32.xlu0 %v2157
      %v2159 = vpop.xlane.xlu0 %2158
      %v2160 = vsel %vm2096, %v1856, 0.0
      %2161 = vadd.xlane.f32.xlu0 %v2160
      %v2162 = vpop.xlane.xlu0 %2161
      %v2163 = vsel %vm2096, %v1857, 0.0
      %2164 = vadd.xlane.f32.xlu0 %v2163
      %v2165 = vpop.xlane.xlu0 %2164
      %v2166 = vsel %vm2096, %v1858, 0.0
      %2167 = vadd.xlane.f32.xlu0 %v2166
      %v2168 = vpop.xlane.xlu0 %2167
      %v2169 = vsel %vm2096, %v1859, 0.0
      %2170 = vadd.xlane.f32.xlu0 %v2169
      %v2171 = vpop.xlane.xlu0 %2170
      %v2172 = vsel %vm2096, %v1860, 0.0
      %2173 = vadd.xlane.f32.xlu0 %v2172
      %v2174 = vpop.xlane.xlu0 %2173
      %v2175 = vsel %vm2096, %v1861, 0.0
      %2176 = vadd.xlane.f32.xlu0 %v2175
      %v2177 = vpop.xlane.xlu0 %2176
      %v2178 = vsel %vm2096, %v1862, 0.0
      %2179 = vadd.xlane.f32.xlu0 %v2178
      %v2180 = vpop.xlane.xlu0 %2179
      %v2181 = vsel %vm2096, %v1863, 0.0
      %2182 = vadd.xlane.f32.xlu0 %v2181
      %v2183 = vpop.xlane.xlu0 %2182
      %v2184 = vsel %vm2096, %v1864, 0.0
      %2185 = vadd.xlane.f32.xlu0 %v2184
      %v2186 = vpop.xlane.xlu0 %2185
      %v2187 = vsel %vm2096, %v1865, 0.0
      %2188 = vadd.xlane.f32.xlu0 %v2187
      %v2189 = vpop.xlane.xlu0 %2188
      %v2190 = vsel %vm2096, %v1866, 0.0
      %2191 = vadd.xlane.f32.xlu0 %v2190
      %v2192 = vpop.xlane.xlu0 %2191
      %v2193 = vld [vmem:[#allocation2] sm:$0x1]
      %v2195 = vperm.slane %v2193, 0
      %v2197 = vadd.f32 %v2099, %v2195
      %v2198 = vadd.f32 %v2102, %v2195
      %v2199 = vadd.f32 %v2105, %v2195
      %v2200 = vadd.f32 %v2108, %v2195
      %v2201 = vadd.f32 %v2111, %v2195
      %v2202 = vadd.f32 %v2114, %v2195
      %v2203 = vadd.f32 %v2117, %v2195
      %v2204 = vadd.f32 %v2120, %v2195
      %v2205 = vadd.f32 %v2123, %v2195
      %v2206 = vadd.f32 %v2126, %v2195
      %v2207 = vadd.f32 %v2129, %v2195
      %v2208 = vadd.f32 %v2132, %v2195
      %v2209 = vadd.f32 %v2135, %v2195
      %v2210 = vadd.f32 %v2138, %v2195
      %v2211 = vadd.f32 %v2141, %v2195
      %v2212 = vadd.f32 %v2144, %v2195
      %v2213 = vadd.f32 %v2147, %v2195
      %v2214 = vadd.f32 %v2150, %v2195
      %v2215 = vadd.f32 %v2153, %v2195
      %v2216 = vadd.f32 %v2156, %v2195
      %v2217 = vadd.f32 %v2159, %v2195
      %v2218 = vadd.f32 %v2162, %v2195
      %v2219 = vadd.f32 %v2165, %v2195
      %v2220 = vadd.f32 %v2168, %v2195
      %v2221 = vadd.f32 %v2171, %v2195
      %v2222 = vadd.f32 %v2174, %v2195
      %v2223 = vadd.f32 %v2177, %v2195
      %v2224 = vadd.f32 %v2180, %v2195
      %v2225 = vadd.f32 %v2183, %v2195
      %v2226 = vadd.f32 %v2186, %v2195
      %v2227 = vadd.f32 %v2189, %v2195
      %v2228 = vadd.f32 %v2192, %v2195
      %vm2229 = vcmask 7168
      %2230 = vst.msk [vmem:[%s346] sm:$0xff] %vm2229, %v2197
      %2231 = vst.msk [vmem:[%s346 + $0x8] sm:$0xff] %vm2229, %v2198
      %2232 = vst.msk [vmem:[%s346 + $0x10] sm:$0xff] %vm2229, %v2199
      %2233 = vst.msk [vmem:[%s346 + $0x18] sm:$0xff] %vm2229, %v2200
      %2234 = vst.msk [vmem:[%s346 + $0x20] sm:$0xff] %vm2229, %v2201
      %2235 = vst.msk [vmem:[%s346 + $0x28] sm:$0xff] %vm2229, %v2202
      %2236 = vst.msk [vmem:[%s346 + $0x30] sm:$0xff] %vm2229, %v2203
      %2237 = vst.msk [vmem:[%s346 + $0x38] sm:$0xff] %vm2229, %v2204
      %2238 = vst.msk [vmem:[%s346 + $0x40] sm:$0xff] %vm2229, %v2205
      %2239 = vst.msk [vmem:[%s346 + $0x48] sm:$0xff] %vm2229, %v2206
      %2240 = vst.msk [vmem:[%s346 + $0x50] sm:$0xff] %vm2229, %v2207
      %2241 = vst.msk [vmem:[%s346 + $0x58] sm:$0xff] %vm2229, %v2208
      %2242 = vst.msk [vmem:[%s346 + $0x60] sm:$0xff] %vm2229, %v2209
      %2243 = vst.msk [vmem:[%s346 + $0x68] sm:$0xff] %vm2229, %v2210
      %2244 = vst.msk [vmem:[%s346 + $0x70] sm:$0xff] %vm2229, %v2211
      %2245 = vst.msk [vmem:[%s346 + $0x78] sm:$0xff] %vm2229, %v2212
      %2246 = vst.msk [vmem:[%s346 + $0x80] sm:$0xff] %vm2229, %v2213
      %2247 = vst.msk [vmem:[%s346 + $0x88] sm:$0xff] %vm2229, %v2214
      %2248 = vst.msk [vmem:[%s346 + $0x90] sm:$0xff] %vm2229, %v2215
      %2249 = vst.msk [vmem:[%s346 + $0x98] sm:$0xff] %vm2229, %v2216
      %2250 = vst.msk [vmem:[%s346 + $0xa0] sm:$0xff] %vm2229, %v2217
      %2251 = vst.msk [vmem:[%s346 + $0xa8] sm:$0xff] %vm2229, %v2218
      %2252 = vst.msk [vmem:[%s346 + $0xb0] sm:$0xff] %vm2229, %v2219
      %2253 = vst.msk [vmem:[%s346 + $0xb8] sm:$0xff] %vm2229, %v2220
      %2254 = vst.msk [vmem:[%s346 + $0xc0] sm:$0xff] %vm2229, %v2221
      %2255 = vst.msk [vmem:[%s346 + $0xc8] sm:$0xff] %vm2229, %v2222
      %2256 = vst.msk [vmem:[%s346 + $0xd0] sm:$0xff] %vm2229, %v2223
      %2257 = vst.msk [vmem:[%s346 + $0xd8] sm:$0xff] %vm2229, %v2224
      %2258 = vst.msk [vmem:[%s346 + $0xe0] sm:$0xff] %vm2229, %v2225
      %2259 = vst.msk [vmem:[%s346 + $0xe8] sm:$0xff] %vm2229, %v2226
      %2260 = vst.msk [vmem:[%s346 + $0xf0] sm:$0xff] %vm2229, %v2227
      %2261 = vst.msk [vmem:[%s346 + $0xf8] sm:$0xff] %vm2229, %v2228
      %s2262 = smul.u32 32, %s26
      %p2263 = scmp.lt.s32.totalorder %s25, 1
      %s2264 = scalar_select %p2263, %s25, 1
      %p2265 = scmp.lt.s32.totalorder %s2262, 31
      %s2266 = scalar_select %p2265, %s2262, 31
      %s2267 = smul.addr %s2264, 32
      %s2268 = sadd.s32 %s2266, %s2267
      %s2269 = smul.addr %s2268, 4
      %s2270 = scalar_lea.vmem %s6, %s2269
      %s2271 = smul.u32 32, %s26
      %p2272 = scmp.lt.s32.totalorder %s25, 1
      %s2273 = scalar_select %p2272, %s25, 1
      %p2274 = scmp.lt.s32.totalorder %s2271, 31
      %s2275 = scalar_select %p2274, %s2271, 31
      %s2276 = smul.addr %s2273, 32
      %s2277 = sadd.s32 %s2275, %s2276
      %s2278 = smul.addr %s2277, 8
      %s2279 = scalar_lea.vmem %s7, %s2278
      // Predicated region
      $region45: #{texd_forward.5} parent=43 // pred_check
        %p2280 = pneg %p189
      $region46: #{texd_forward.5} parent=43 // pred_check_branch
        %2282 = sbr.rel (%p2280) target = $region48
      $region47: #{texd_forward.5} parent=43 // pred_region
        %s2283 = smul.u32 32, %s26
      $region48: #{texd_forward.5} parent=43 // pred_fallthru
        _
      // Predicated region
      $region49: #{texd_forward.5} parent=43 // pred_check
        %p2284 = pneg %p217
      $region50: #{texd_forward.5} parent=43 // pred_check_branch
        %2286 = sbr.rel (%p2284) target = $region52
      $region51: #{texd_forward.5} parent=43 // pred_region
        %s2287 = smul.u32 32, %s26
      $region52: #{texd_forward.5} parent=43 // pred_fallthru
        _
    $region44: #{texd_forward.5} parent=5 // pred_fallthru
      _
    %p2288 = scmp.le.s32.totalorder 2, %s16
    // Predicated region
    $region53: #{texd_forward.5} parent=5 // pred_check
      %p2289 = pneg %p2288
    $region54: #{texd_forward.5} parent=5 // pred_check_branch
      %2291 = sbr.rel (%p2289) target = $region56
    $region55: #{texd_forward.5} parent=5 // pred_region
      %s2292 = ssub.s32 %s16, 2
      // Predicated region
      $region57: #{texd_forward.5} parent=55 // pred_check
        %p2293 = pneg %p195
      $region58: #{texd_forward.5} parent=55 // pred_check_branch
        %2295 = sbr.rel (%p2293) target = $region60
      $region59: #{texd_forward.5} parent=55 // pred_region
        %s2296 = smul.u32 32, %s28
        %p2297 = scmp.lt.s32.totalorder %s27, 1
        %s2298 = scalar_select %p2297, %s27, 1
        %p2299 = scmp.lt.s32.totalorder %s2296, 31
        %s2300 = scalar_select %p2299, %s2296, 31
        %s2301 = smul.addr %s2298, 32
        %s2302 = sadd.s32 %s2300, %s2301
        %s2303 = smul.addr %s2302, 4
        %s2304 = scalar_lea.vmem %s6, %s2303
      $region60: #{texd_forward.5} parent=55 // pred_fallthru
        _
      // Predicated region
      $region61: #{texd_forward.5} parent=55 // pred_check
        %p2305 = pneg %p223
      $region62: #{texd_forward.5} parent=55 // pred_check_branch
        %2307 = sbr.rel (%p2305) target = $region64
      $region63: #{texd_forward.5} parent=55 // pred_region
        %s2308 = smul.u32 32, %s28
        %p2309 = scmp.lt.s32.totalorder %s27, 1
        %s2310 = scalar_select %p2309, %s27, 1
        %p2311 = scmp.lt.s32.totalorder %s2308, 31
        %s2312 = scalar_select %p2311, %s2308, 31
        %s2313 = smul.addr %s2310, 32
        %s2314 = sadd.s32 %s2312, %s2313
        %s2315 = smul.addr %s2314, 8
        %s2316 = scalar_lea.vmem %s7, %s2315
      $region64: #{texd_forward.5} parent=55 // pred_fallthru
        _
    $region56: #{texd_forward.5} parent=5 // pred_fallthru
      _
  $region6: #{texd_forward.5} parent=0 // loop_footer
    %s20 = sadd.s32 1, %s16
  $region7: #{texd_forward.5} parent=0 // loop_footer_branch
    %15 = sbr.rel target = $region3
  $region8: #{texd_forward.5} parent=0 // loop_exit
    _

// kernel: texd_forward.6
$region0: #{texd_forward.6}
  #allocation0 [shape = 'u32[]', space=smem, size = 0x4, offset = 0x4, fixed_abs, tag = 'smem constant byte address 0x4 - core index']
  #allocation1 [shape = 'u32[72,128]{1,0:T(1,128)}', space=vmem, size = 0x9000, scoped, tag = 'internal scratch']
  #allocation2 [shape = 'f32[1,1]{1,0:T(1,128)S(1)}', space=vmem, size = 0x200, scoped, tag = 'scoped memory for texd_forward.6']
  %s0 = inlined_call_operand.vmem [shape: bf16[2,2,9,16,256], index: 0, kind: input, shape index: {}]
  %s1 = inlined_call_operand.vmem [shape: f32[2,2,9,16,4], index: 1, kind: input, shape index: {}]
  %s2 = inlined_call_operand.vmem [shape: bf16[4,256,128], index: 2, kind: input, shape index: {}]
  %s3 = inlined_call_operand.vmem [shape: f32[4,1,4], index: 3, kind: input, shape index: {}]
  %s4 = inlined_call_operand.vmem [shape: f32[1,128], index: 4, kind: input, shape index: {}]
  %s5 = inlined_call_operand.<no memory space> [shape: f32[1,1], index: 5, kind: input, shape index: {}]
  %s6 = inlined_call_operand.vmem [shape: bf16[2,128,128], index: 6, kind: output, shape index: {0}]
  %s7 = inlined_call_operand.vmem [shape: f32[2,128,1], index: 7, kind: output, shape index: {1}]
  %8 = xla_tuple %s6, %s7
  %s9 = sld [smem:[#allocation0]]
  $region65: #{texd_forward.6} parent=0
    _
  %s11 = ssub.s32 1, %s9
  %s12 = scalar_select 0, %s11, %s9
  %v13 = vstv %s5
  %14 = vst [vmem:[#allocation2] sm:$0x1] %v13
  loop: start=0, step=1, limit=4
  $region2: #{texd_forward.6} parent=0 // loop_pre_header
    _
  $region3: #{texd_forward.6} parent=0 // loop_header
    %s16 = sphi 0, %s20
    %p17 = scmp.ge.s32.totalorder %s16, 4
    %s23 = sphi 0, %s35
    %s24 = sphi 0, %s31
    %s25 = sphi 0, %s23
    %s26 = sphi 0, %s24
    %s27 = sphi 0, %s25
    %s28 = sphi 0, %s26
    %s38 = sphi 0, %s40
    %s41 = sphi 0, %s38
    %s42 = sphi 0, %s41
    %s58 = sphi 0, %s42
    %s64 = sphi 0, %s66
    %s67 = sphi 0, %s64
    %s68 = sphi 0, %s67
    %s84 = sphi 0, %s68
    %s88 = sphi 0, %s88
    %s90 = sphi 0, %s88
    %s91 = sphi 0, %s90
    %s105 = sphi 0, %s91
    %s109 = sphi 0, %s109
    %s111 = sphi 0, %s109
    %s112 = sphi 0, %s111
    %s126 = sphi 0, %s112
    %s130 = sphi 0, %s130
    %s132 = sphi 0, %s130
    %s133 = sphi 0, %s132
    %s147 = sphi 0, %s133
    %s151 = sphi 0, %s151
    %s153 = sphi 0, %s151
    %s154 = sphi 0, %s153
    %s168 = sphi 0, %s154
    %s176 = sphi 0, %s178
    %s179 = sphi 0, %s176
    %s180 = sphi 0, %s179
    %s196 = sphi 0, %s180
    %s204 = sphi 0, %s206
    %s207 = sphi 0, %s204
    %s208 = sphi 0, %s207
    %s224 = sphi 0, %s208
  $region4: #{texd_forward.6} parent=0 // loop_header_branch
    %19 = sbr.rel (%p17) target = $region8
  $region5: #{texd_forward.6} parent=0 // loop_body
    %s21 = ssub.s32 %s16, 1
    %s22 = ssub.s32 %s16, 2
    %s29 = sadd.s32 1, %s24
    %p30 = scmp.ge.s32.totalorder %s29, 1
    %s31 = scalar_select %p30, 0, %s29
    %s32 = sadd.s32 1, %s23
    %s33 = scalar_select %p30, %s32, %s23
    %p34 = scmp.ge.s32.totalorder %s33, 2
    %s35 = scalar_select %p34, 0, %s33
    %s36 = ssub.s32 %s23, %s35
    %p37 = scmp.eq.s32.totalorder %s36, 0
    %s39 = sadd.s32 %s38, 1
    %s40 = scalar_select %p37, %s38, %s39
    %p43 = pneg %p37
    %p44 = scmp.eq.s32.totalorder %s16, 1
    %p45 = por %p43, %p44
    %p46 = scmp.ne.s32.totalorder %s38, %s41
    %p47 = scmp.eq.s32.totalorder %s16, 0
    %p48 = por %p46, %p47
    %p49 = scmp.ne.s32.totalorder %s38, %s41
    %p50 = scmp.eq.s32.totalorder %s21, 1
    %p51 = por %p49, %p50
    %p52 = scmp.ne.s32.totalorder %s41, %s42
    %p53 = scmp.eq.s32.totalorder %s21, 0
    %p54 = por %p52, %p53
    %p55 = scmp.ne.s32.totalorder %s41, %s42
    %p56 = scmp.eq.s32.totalorder %s22, 1
    %p57 = por %p55, %p56
    %p59 = scmp.ne.s32.totalorder %s42, %s58
    %p60 = scmp.eq.s32.totalorder %s22, 0
    %p61 = por %p59, %p60
    %s62 = ssub.s32 %s23, %s35
    %p63 = scmp.eq.s32.totalorder %s62, 0
    %s65 = sadd.s32 %s64, 1
    %s66 = scalar_select %p63, %s64, %s65
    %p69 = pneg %p63
    %p70 = scmp.eq.s32.totalorder %s16, 1
    %p71 = por %p69, %p70
    %p72 = scmp.ne.s32.totalorder %s64, %s67
    %p73 = scmp.eq.s32.totalorder %s16, 0
    %p74 = por %p72, %p73
    %p75 = scmp.ne.s32.totalorder %s64, %s67
    %p76 = scmp.eq.s32.totalorder %s21, 1
    %p77 = por %p75, %p76
    %p78 = scmp.ne.s32.totalorder %s67, %s68
    %p79 = scmp.eq.s32.totalorder %s21, 0
    %p80 = por %p78, %p79
    %p81 = scmp.ne.s32.totalorder %s67, %s68
    %p82 = scmp.eq.s32.totalorder %s22, 1
    %p83 = por %p81, %p82
    %p85 = scmp.ne.s32.totalorder %s68, %s84
    %p86 = scmp.eq.s32.totalorder %s22, 0
    %p87 = por %p85, %p86
    %s89 = sadd.s32 %s88, 1
    %p92 = scmp.eq.s32.totalorder %s16, 1
    %p93 = scmp.ne.s32.totalorder %s88, %s90
    %p94 = scmp.eq.s32.totalorder %s16, 0
    %p95 = por %p93, %p94
    %p96 = scmp.ne.s32.totalorder %s88, %s90
    %p97 = scmp.eq.s32.totalorder %s21, 1
    %p98 = por %p96, %p97
    %p99 = scmp.ne.s32.totalorder %s90, %s91
    %p100 = scmp.eq.s32.totalorder %s21, 0
    %p101 = por %p99, %p100
    %p102 = scmp.ne.s32.totalorder %s90, %s91
    %p103 = scmp.eq.s32.totalorder %s22, 1
    %p104 = por %p102, %p103
    %p106 = scmp.ne.s32.totalorder %s91, %s105
    %p107 = scmp.eq.s32.totalorder %s22, 0
    %p108 = por %p106, %p107
    %s110 = sadd.s32 %s109, 1
    %p113 = scmp.eq.s32.totalorder %s16, 1
    %p114 = scmp.ne.s32.totalorder %s109, %s111
    %p115 = scmp.eq.s32.totalorder %s16, 0
    %p116 = por %p114, %p115
    %p117 = scmp.ne.s32.totalorder %s109, %s111
    %p118 = scmp.eq.s32.totalorder %s21, 1
    %p119 = por %p117, %p118
    %p120 = scmp.ne.s32.totalorder %s111, %s112
    %p121 = scmp.eq.s32.totalorder %s21, 0
    %p122 = por %p120, %p121
    %p123 = scmp.ne.s32.totalorder %s111, %s112
    %p124 = scmp.eq.s32.totalorder %s22, 1
    %p125 = por %p123, %p124
    %p127 = scmp.ne.s32.totalorder %s112, %s126
    %p128 = scmp.eq.s32.totalorder %s22, 0
    %p129 = por %p127, %p128
    %s131 = sadd.s32 %s130, 1
    %p134 = scmp.eq.s32.totalorder %s16, 1
    %p135 = scmp.ne.s32.totalorder %s130, %s132
    %p136 = scmp.eq.s32.totalorder %s16, 0
    %p137 = por %p135, %p136
    %p138 = scmp.ne.s32.totalorder %s130, %s132
    %p139 = scmp.eq.s32.totalorder %s21, 1
    %p140 = por %p138, %p139
    %p141 = scmp.ne.s32.totalorder %s132, %s133
    %p142 = scmp.eq.s32.totalorder %s21, 0
    %p143 = por %p141, %p142
    %p144 = scmp.ne.s32.totalorder %s132, %s133
    %p145 = scmp.eq.s32.totalorder %s22, 1
    %p146 = por %p144, %p145
    %p148 = scmp.ne.s32.totalorder %s133, %s147
    %p149 = scmp.eq.s32.totalorder %s22, 0
    %p150 = por %p148, %p149
    %s152 = sadd.s32 %s151, 1
    %p155 = scmp.eq.s32.totalorder %s16, 1
    %p156 = scmp.ne.s32.totalorder %s151, %s153
    %p157 = scmp.eq.s32.totalorder %s16, 0
    %p158 = por %p156, %p157
    %p159 = scmp.ne.s32.totalorder %s151, %s153
    %p160 = scmp.eq.s32.totalorder %s21, 1
    %p161 = por %p159, %p160
    %p162 = scmp.ne.s32.totalorder %s153, %s154
    %p163 = scmp.eq.s32.totalorder %s21, 0
    %p164 = por %p162, %p163
    %p165 = scmp.ne.s32.totalorder %s153, %s154
    %p166 = scmp.eq.s32.totalorder %s22, 1
    %p167 = por %p165, %p166
    %p169 = scmp.ne.s32.totalorder %s154, %s168
    %p170 = scmp.eq.s32.totalorder %s22, 0
    %p171 = por %p169, %p170
    %s172 = ssub.s32 %s23, %s35
    %s173 = ssub.s32 %s24, %s31
    %s174 = sor.u32 %s172, %s173
    %p175 = scmp.eq.s32.totalorder %s174, 0
    %s177 = sadd.s32 %s176, 1
    %s178 = scalar_select %p175, %s176, %s177
    %p181 = pneg %p175
    %p182 = scmp.eq.s32.totalorder %s16, 1
    %p183 = por %p181, %p182
    %p184 = scmp.ne.s32.totalorder %s176, %s179
    %p185 = scmp.eq.s32.totalorder %s16, 0
    %p186 = por %p184, %p185
    %p187 = scmp.ne.s32.totalorder %s176, %s179
    %p188 = scmp.eq.s32.totalorder %s21, 1
    %p189 = por %p187, %p188
    %p190 = scmp.ne.s32.totalorder %s179, %s180
    %p191 = scmp.eq.s32.totalorder %s21, 0
    %p192 = por %p190, %p191
    %p193 = scmp.ne.s32.totalorder %s179, %s180
    %p194 = scmp.eq.s32.totalorder %s22, 1
    %p195 = por %p193, %p194
    %p197 = scmp.ne.s32.totalorder %s180, %s196
    %p198 = scmp.eq.s32.totalorder %s22, 0
    %p199 = por %p197, %p198
    %s200 = ssub.s32 %s23, %s35
    %s201 = ssub.s32 %s24, %s31
    %s202 = sor.u32 %s200, %s201
    %p203 = scmp.eq.s32.totalorder %s202, 0
    %s205 = sadd.s32 %s204, 1
    %s206 = scalar_select %p203, %s204, %s205
    %p209 = pneg %p203
    %p210 = scmp.eq.s32.totalorder %s16, 1
    %p211 = por %p209, %p210
    %p212 = scmp.ne.s32.totalorder %s204, %s207
    %p213 = scmp.eq.s32.totalorder %s16, 0
    %p214 = por %p212, %p213
    %p215 = scmp.ne.s32.totalorder %s204, %s207
    %p216 = scmp.eq.s32.totalorder %s21, 1
    %p217 = por %p215, %p216
    %p218 = scmp.ne.s32.totalorder %s207, %s208
    %p219 = scmp.eq.s32.totalorder %s21, 0
    %p220 = por %p218, %p219
    %p221 = scmp.ne.s32.totalorder %s207, %s208
    %p222 = scmp.eq.s32.totalorder %s22, 1
    %p223 = por %p221, %p222
    %p225 = scmp.ne.s32.totalorder %s208, %s224
    %p226 = scmp.eq.s32.totalorder %s22, 0
    %p227 = por %p225, %p226
    %p228 = scmp.le.s32.totalorder 1, %s16
    %p229 = scmp.lt.s32.totalorder %s16, 3
    %p230 = pnand %p228, %p229
    %p231 = pneg %p230
    // Predicated region
    $region9: #{texd_forward.6} parent=5 // pred_check
      _
    $region10: #{texd_forward.6} parent=5 // pred_check_branch
      %233 = sbr.rel (%p230) target = $region12
    $region11: #{texd_forward.6} parent=5 // pred_region
      %s234 = ssub.s32 %s16, 1
      // Predicated region
      $region13: #{texd_forward.6} parent=11 // pred_check
        %p235 = pneg %p101
      $region14: #{texd_forward.6} parent=11 // pred_check_branch
        %237 = sbr.rel (%p235) target = $region16
      $region15: #{texd_forward.6} parent=11 // pred_region
        _
      $region16: #{texd_forward.6} parent=11 // pred_fallthru
        _
      // Predicated region
      $region17: #{texd_forward.6} parent=11 // pred_check
        %p238 = pneg %p122
      $region18: #{texd_forward.6} parent=11 // pred_check_branch
        %240 = sbr.rel (%p238) target = $region20
      $region19: #{texd_forward.6} parent=11 // pred_region
        _
      $region20: #{texd_forward.6} parent=11 // pred_fallthru
        _
      // Predicated region
      $region21: #{texd_forward.6} parent=11 // pred_check
        %p241 = pneg %p143
      $region22: #{texd_forward.6} parent=11 // pred_check_branch
        %243 = sbr.rel (%p241) target = $region24
      $region23: #{texd_forward.6} parent=11 // pred_region
        _
      $region24: #{texd_forward.6} parent=11 // pred_fallthru
        _
      // Predicated region
      $region25: #{texd_forward.6} parent=11 // pred_check
        %p244 = pneg %p164
      $region26: #{texd_forward.6} parent=11 // pred_check_branch
        %246 = sbr.rel (%p244) target = $region28
      $region27: #{texd_forward.6} parent=11 // pred_region
        _
      $region28: #{texd_forward.6} parent=11 // pred_fallthru
        _
    $region12: #{texd_forward.6} parent=5 // pred_fallthru
      _
    %p247 = scmp.lt.s32.totalorder %s16, 2
    // Predicated region
    $region29: #{texd_forward.6} parent=5 // pred_check
      %p248 = pneg %p247
    $region30: #{texd_forward.6} parent=5 // pred_check_branch
      %250 = sbr.rel (%p248) target = $region32
    $region31: #{texd_forward.6} parent=5 // pred_region
      // Predicated region
      $region33: #{texd_forward.6} parent=31 // pred_check
        %p251 = pneg %p48
      $region34: #{texd_forward.6} parent=31 // pred_check_branch
        %253 = sbr.rel (%p251) target = $region36
      $region35: #{texd_forward.6} parent=31 // pred_region
        %p254 = scmp.lt.s32.totalorder %s23, 1
        %s255 = scalar_select %p254, %s23, 1
        %s256 = smul.addr %s255, 72
        %s257 = smul.addr %s256, 4
        %s258 = scalar_lea.vmem %s0, %s257
      $region36: #{texd_forward.6} parent=31 // pred_fallthru
        _
      // Predicated region
      $region37: #{texd_forward.6} parent=31 // pred_check
        %p259 = pneg %p74
      $region38: #{texd_forward.6} parent=31 // pred_check_branch
        %261 = sbr.rel (%p259) target = $region40
      $region39: #{texd_forward.6} parent=31 // pred_region
        %p262 = scmp.lt.s32.totalorder %s23, 1
        %s263 = scalar_select %p262, %s23, 1
        %s264 = smul.addr %s263, 36
        %s265 = smul.addr %s264, 8
        %s266 = scalar_lea.vmem %s1, %s265
      $region40: #{texd_forward.6} parent=31 // pred_fallthru
        _
    $region32: #{texd_forward.6} parent=5 // pred_fallthru
      _
    %p267 = scmp.le.s32.totalorder 1, %s16
    %p268 = scmp.lt.s32.totalorder %s16, 3
    %p269 = pnand %p267, %p268
    %p270 = pneg %p269
    // Predicated region
    $region41: #{texd_forward.6} parent=5 // pred_check
      _
    $region42: #{texd_forward.6} parent=5 // pred_check_branch
      %272 = sbr.rel (%p269) target = $region44
    $region43: #{texd_forward.6} parent=5 // pred_region
      %s273 = ssub.s32 %s16, 1
      %p274 = scmp.lt.s32.totalorder %s25, 1
      %s275 = scalar_select %p274, %s25, 1
      %s276 = smul.addr %s275, 72
      %s277 = smul.addr %s276, 4
      %s278 = scalar_lea.vmem %s0, %s277
      %p279 = pneg %p54
      %p280 = pneg %p51
      %p281 = scmp.lt.s32.totalorder %s25, 1
      %s282 = scalar_select %p281, %s25, 1
      %s283 = smul.addr %s282, 36
      %s284 = smul.addr %s283, 8
      %s285 = scalar_lea.vmem %s1, %s284
      %p286 = pneg %p80
      %p287 = pneg %p77
      %p288 = pneg %p101
      %p289 = pneg %p98
      %p290 = pneg %p122
      %p291 = pneg %p119
      %p292 = pneg %p143
      %p293 = pneg %p140
      %p294 = pneg %p164
      %p295 = pneg %p161
      %p296 = pneg %p192
      %p297 = pneg %p189
      %s298 = smul.u32 16, %s26
      %p299 = scmp.lt.s32.totalorder %s25, 1
      %s300 = scalar_select %p299, %s25, 1
      %p301 = scmp.lt.s32.totalorder %s298, 15
      %s302 = scalar_select %p301, %s298, 15
      %s303 = smul.addr %s300, 16
      %s304 = sadd.s32 %s302, %s303
      %s305 = smul.addr %s304, 4
      %s306 = scalar_lea.vmem %s6, %s305
      %p307 = pneg %p220
      %p308 = pneg %p217
      %s309 = smul.u32 16, %s26
      %p310 = scmp.lt.s32.totalorder %s25, 1
      %s311 = scalar_select %p310, %s25, 1
      %p312 = scmp.lt.s32.totalorder %s309, 15
      %s313 = scalar_select %p312, %s309, 15
      %s314 = smul.addr %s311, 16
      %s315 = sadd.s32 %s313, %s314
      %s316 = smul.addr %s315, 8
      %s317 = scalar_lea.vmem %s7, %s316
      %p318 = scmp.lt.s32.totalorder %s25, 1
      %s319 = scalar_select %p318, %s25, 1
      %s320 = smul.addr %s319, 72
      %s321 = smul.addr %s320, 4
      %s322 = scalar_lea.vmem %s0, %s321
      %p323 = scmp.lt.s32.totalorder %s25, 1
      %s324 = scalar_select %p323, %s25, 1
      %s325 = smul.addr %s324, 36
      %s326 = smul.addr %s325, 8
      %s327 = scalar_lea.vmem %s1, %s326
      %s328 = smul.u32 16, %s26
      %p329 = scmp.lt.s32.totalorder %s25, 1
      %s330 = scalar_select %p329, %s25, 1
      %p331 = scmp.lt.s32.totalorder %s328, 15
      %s332 = scalar_select %p331, %s328, 15
      %s333 = smul.addr %s330, 16
      %s334 = sadd.s32 %s332, %s333
      %s335 = smul.addr %s334, 4
      %s336 = scalar_lea.vmem %s6, %s335
      %s337 = smul.u32 16, %s26
      %s338 = smul.u32 16, %s26
      %p339 = scmp.lt.s32.totalorder %s25, 1
      %s340 = scalar_select %p339, %s25, 1
      %p341 = scmp.lt.s32.totalorder %s338, 15
      %s342 = scalar_select %p341, %s338, 15
      %s343 = smul.addr %s340, 16
      %s344 = sadd.s32 %s342, %s343
      %s345 = smul.addr %s344, 8
      %s346 = scalar_lea.vmem %s7, %s345
      %s347 = smul.u32 16, %s26
      %s348 = smul.u32 %s26, 8
      %s349 = smul.u32 %s348, 4
      %s350 = smul.addr %s349, 4
      %s351 = scalar_lea.vmem %s322, %s350
      %v352 = vld [vmem:[%s351] sm:$0xff]
      %v353 = vld [vmem:[%s351 + $0x8] sm:$0xff]
      %v354 = vld [vmem:[%s351 + $0x10] sm:$0xff]
      %v355 = vld [vmem:[%s351 + $0x18] sm:$0xff]
      %v356 = vld [vmem:[%s351 + $0x20] sm:$0xff]
      %v357 = vld [vmem:[%s351 + $0x28] sm:$0xff]
      %v358 = vld [vmem:[%s351 + $0x30] sm:$0xff]
      %v359 = vld [vmem:[%s351 + $0x38] sm:$0xff]
      %v360 = vld [vmem:[%s351 + $0x40] sm:$0xff]
      %v361 = vld [vmem:[%s351 + $0x48] sm:$0xff]
      %v362 = vld [vmem:[%s351 + $0x50] sm:$0xff]
      %v363 = vld [vmem:[%s351 + $0x58] sm:$0xff]
      %v364 = vld [vmem:[%s351 + $0x60] sm:$0xff]
      %v365 = vld [vmem:[%s351 + $0x68] sm:$0xff]
      %v366 = vld [vmem:[%s351 + $0x70] sm:$0xff]
      %v367 = vld [vmem:[%s351 + $0x78] sm:$0xff]
      %v368 = vld [vmem:[%s2] sm:$0xf]
      %v369 = vld [vmem:[%s2 + $0x4] sm:$0xf]
      %v370 = vld [vmem:[%s2 + $0x8] sm:$0xf]
      %v371 = vld [vmem:[%s2 + $0xc] sm:$0xf]
      %v372 = vld [vmem:[%s2 + $0x10] sm:$0xf]
      %v373 = vld [vmem:[%s2 + $0x14] sm:$0xf]
      %v374 = vld [vmem:[%s2 + $0x18] sm:$0xf]
      %v375 = vld [vmem:[%s2 + $0x1c] sm:$0xf]
      %v376 = vld [vmem:[%s2 + $0x20] sm:$0xf]
      %v377 = vld [vmem:[%s2 + $0x24] sm:$0xf]
      %v378 = vld [vmem:[%s2 + $0x28] sm:$0xf]
      %v379 = vld [vmem:[%s2 + $0x2c] sm:$0xf]
      %v380 = vld [vmem:[%s2 + $0x30] sm:$0xf]
      %v381 = vld [vmem:[%s2 + $0x34] sm:$0xf]
      %v382 = vld [vmem:[%s2 + $0x38] sm:$0xf]
      %v383 = vld [vmem:[%s2 + $0x3c] sm:$0xf]
      %v384 = vld [vmem:[%s2 + $0x40] sm:$0xf]
      %v385 = vld [vmem:[%s2 + $0x44] sm:$0xf]
      %v386 = vld [vmem:[%s2 + $0x48] sm:$0xf]
      %v387 = vld [vmem:[%s2 + $0x4c] sm:$0xf]
      %v388 = vld [vmem:[%s2 + $0x50] sm:$0xf]
      %v389 = vld [vmem:[%s2 + $0x54] sm:$0xf]
      %v390 = vld [vmem:[%s2 + $0x58] sm:$0xf]
      %v391 = vld [vmem:[%s2 + $0x5c] sm:$0xf]
      %v392 = vld [vmem:[%s2 + $0x60] sm:$0xf]
      %v393 = vld [vmem:[%s2 + $0x64] sm:$0xf]
      %v394 = vld [vmem:[%s2 + $0x68] sm:$0xf]
      %v395 = vld [vmem:[%s2 + $0x6c] sm:$0xf]
      %v396 = vld [vmem:[%s2 + $0x70] sm:$0xf]
      %v397 = vld [vmem:[%s2 + $0x74] sm:$0xf]
      %v398 = vld [vmem:[%s2 + $0x78] sm:$0xf]
      %v399 = vld [vmem:[%s2 + $0x7c] sm:$0xf]
      %s400 = smul.u32 %s348, 16
      %s401 = scalar_lea.vmem %s327, %s400
      %v402 = vld [vmem:[%s401] sm:$0xff]
      %v403 = vld [vmem:[%s401 + $0x8] sm:$0xff]
      %v404 = vld [vmem:[%s401 + $0x10] sm:$0xff]
      %v405 = vld [vmem:[%s401 + $0x18] sm:$0xff]
      %v406 = vld [vmem:[%s401 + $0x20] sm:$0xff]
      %v407 = vld [vmem:[%s401 + $0x28] sm:$0xff]
      %v408 = vld [vmem:[%s401 + $0x30] sm:$0xff]
      %v409 = vld [vmem:[%s401 + $0x38] sm:$0xff]
      %v410 = vld [vmem:[%s401 + $0x40] sm:$0xff]
      %v411 = vld [vmem:[%s401 + $0x48] sm:$0xff]
      %v412 = vld [vmem:[%s401 + $0x50] sm:$0xff]
      %v413 = vld [vmem:[%s401 + $0x58] sm:$0xff]
      %v414 = vld [vmem:[%s401 + $0x60] sm:$0xff]
      %v415 = vld [vmem:[%s401 + $0x68] sm:$0xff]
      %v416 = vld [vmem:[%s401 + $0x70] sm:$0xff]
      %v417 = vld [vmem:[%s401 + $0x78] sm:$0xff]
      %v418 = vld [vmem:[%s3] sm:$0x1]
      %v420 = vperm.slane %v418, 0
      %v422 = vmul.f32 %v402, %v420
      %v423 = vmul.f32 %v403, %v420
      %v424 = vmul.f32 %v404, %v420
      %v425 = vmul.f32 %v405, %v420
      %v426 = vmul.f32 %v406, %v420
      %v427 = vmul.f32 %v407, %v420
      %v428 = vmul.f32 %v408, %v420
      %v429 = vmul.f32 %v409, %v420
      %v430 = vmul.f32 %v410, %v420
      %v431 = vmul.f32 %v411, %v420
      %v432 = vmul.f32 %v412, %v420
      %v433 = vmul.f32 %v413, %v420
      %v434 = vmul.f32 %v414, %v420
      %v435 = vmul.f32 %v415, %v420
      %v436 = vmul.f32 %v416, %v420
      %v437 = vmul.f32 %v417, %v420
      %s438 = sadd.s32 %s349, 36
      %s439 = smul.addr %s438, 4
      %s440 = scalar_lea.vmem %s322, %s439
      %v441 = vld [vmem:[%s440] sm:$0xff]
      %v442 = vld [vmem:[%s440 + $0x8] sm:$0xff]
      %v443 = vld [vmem:[%s440 + $0x10] sm:$0xff]
      %v444 = vld [vmem:[%s440 + $0x18] sm:$0xff]
      %v445 = vld [vmem:[%s440 + $0x20] sm:$0xff]
      %v446 = vld [vmem:[%s440 + $0x28] sm:$0xff]
      %v447 = vld [vmem:[%s440 + $0x30] sm:$0xff]
      %v448 = vld [vmem:[%s440 + $0x38] sm:$0xff]
      %v449 = vld [vmem:[%s440 + $0x40] sm:$0xff]
      %v450 = vld [vmem:[%s440 + $0x48] sm:$0xff]
      %v451 = vld [vmem:[%s440 + $0x50] sm:$0xff]
      %v452 = vld [vmem:[%s440 + $0x58] sm:$0xff]
      %v453 = vld [vmem:[%s440 + $0x60] sm:$0xff]
      %v454 = vld [vmem:[%s440 + $0x68] sm:$0xff]
      %v455 = vld [vmem:[%s440 + $0x70] sm:$0xff]
      %v456 = vld [vmem:[%s440 + $0x78] sm:$0xff]
      %s457 = scalar_lea.vmem %s2, 128
      %v458 = vld [vmem:[%s457] sm:$0xf]
      %v459 = vld [vmem:[%s457 + $0x4] sm:$0xf]
      %v460 = vld [vmem:[%s457 + $0x8] sm:$0xf]
      %v461 = vld [vmem:[%s457 + $0xc] sm:$0xf]
      %v462 = vld [vmem:[%s457 + $0x10] sm:$0xf]
      %v463 = vld [vmem:[%s457 + $0x14] sm:$0xf]
      %v464 = vld [vmem:[%s457 + $0x18] sm:$0xf]
      %v465 = vld [vmem:[%s457 + $0x1c] sm:$0xf]
      %v466 = vld [vmem:[%s457 + $0x20] sm:$0xf]
      %v467 = vld [vmem:[%s457 + $0x24] sm:$0xf]
      %v468 = vld [vmem:[%s457 + $0x28] sm:$0xf]
      %v469 = vld [vmem:[%s457 + $0x2c] sm:$0xf]
      %v470 = vld [vmem:[%s457 + $0x30] sm:$0xf]
      %v471 = vld [vmem:[%s457 + $0x34] sm:$0xf]
      %v472 = vld [vmem:[%s457 + $0x38] sm:$0xf]
      %v473 = vld [vmem:[%s457 + $0x3c] sm:$0xf]
      %v474 = vld [vmem:[%s457 + $0x40] sm:$0xf]
      %v475 = vld [vmem:[%s457 + $0x44] sm:$0xf]
      %v476 = vld [vmem:[%s457 + $0x48] sm:$0xf]
      %v477 = vld [vmem:[%s457 + $0x4c] sm:$0xf]
      %v478 = vld [vmem:[%s457 + $0x50] sm:$0xf]
      %v479 = vld [vmem:[%s457 + $0x54] sm:$0xf]
      %v480 = vld [vmem:[%s457 + $0x58] sm:$0xf]
      %v481 = vld [vmem:[%s457 + $0x5c] sm:$0xf]
      %v482 = vld [vmem:[%s457 + $0x60] sm:$0xf]
      %v483 = vld [vmem:[%s457 + $0x64] sm:$0xf]
      %v484 = vld [vmem:[%s457 + $0x68] sm:$0xf]
      %v485 = vld [vmem:[%s457 + $0x6c] sm:$0xf]
      %v486 = vld [vmem:[%s457 + $0x70] sm:$0xf]
      %v487 = vld [vmem:[%s457 + $0x74] sm:$0xf]
      %v488 = vld [vmem:[%s457 + $0x78] sm:$0xf]
      %v489 = vld [vmem:[%s457 + $0x7c] sm:$0xf]
      %v506 = vunpack.c.l.b16 %v441
      %v507 = vunpack.c.h.b16 %v441
      %v508 = vunpack.c.l.b16 %v442
      %v509 = vunpack.c.h.b16 %v442
      %v510 = vunpack.c.l.b16 %v443
      %v511 = vunpack.c.h.b16 %v443
      %v512 = vunpack.c.l.b16 %v444
      %v513 = vunpack.c.h.b16 %v444
      %v514 = vunpack.c.l.b16 %v445
      %v515 = vunpack.c.h.b16 %v445
      %v516 = vunpack.c.l.b16 %v446
      %v517 = vunpack.c.h.b16 %v446
      %v518 = vunpack.c.l.b16 %v447
      %v519 = vunpack.c.h.b16 %v447
      %v520 = vunpack.c.l.b16 %v448
      %v521 = vunpack.c.h.b16 %v448
      %v522 = vunpack.c.l.b16 %v449
      %v523 = vunpack.c.h.b16 %v449
      %v524 = vunpack.c.l.b16 %v450
      %v525 = vunpack.c.h.b16 %v450
      %v526 = vunpack.c.l.b16 %v451
      %v527 = vunpack.c.h.b16 %v451
      %v528 = vunpack.c.l.b16 %v452
      %v529 = vunpack.c.h.b16 %v452
      %v530 = vunpack.c.l.b16 %v453
      %v531 = vunpack.c.h.b16 %v453
      %v532 = vunpack.c.l.b16 %v454
      %v533 = vunpack.c.h.b16 %v454
      %v534 = vunpack.c.l.b16 %v455
      %v535 = vunpack.c.h.b16 %v455
      %v536 = vunpack.c.l.b16 %v456
      %v537 = vunpack.c.h.b16 %v456
      %v538 = vpack.c.b16 %v508, %v506
      %v539 = vpack.c.b16 %v509, %v507
      %v540 = vpack.c.b16 %v512, %v510
      %v541 = vpack.c.b16 %v513, %v511
      %v542 = vpack.c.b16 %v516, %v514
      %v543 = vpack.c.b16 %v517, %v515
      %v544 = vpack.c.b16 %v520, %v518
      %v545 = vpack.c.b16 %v521, %v519
      %v546 = vpack.c.b16 %v524, %v522
      %v547 = vpack.c.b16 %v525, %v523
      %v548 = vpack.c.b16 %v528, %v526
      %v549 = vpack.c.b16 %v529, %v527
      %v550 = vpack.c.b16 %v532, %v530
      %v551 = vpack.c.b16 %v533, %v531
      %v552 = vpack.c.b16 %v536, %v534
      %v553 = vpack.c.b16 %v537, %v535
      %v602 = vunpack.c.l.b16 %v458
      %v603 = vunpack.c.l.b16 %v459
      %v604 = vunpack.c.l.b16 %v460
      %v605 = vunpack.c.l.b16 %v461
      %v606 = vunpack.c.l.b16 %v462
      %v607 = vunpack.c.l.b16 %v463
      %v608 = vunpack.c.l.b16 %v464
      %v609 = vunpack.c.l.b16 %v465
      %v610 = vunpack.c.l.b16 %v466
      %v611 = vunpack.c.l.b16 %v467
      %v612 = vunpack.c.l.b16 %v468
      %v613 = vunpack.c.l.b16 %v469
      %v614 = vunpack.c.l.b16 %v470
      %v615 = vunpack.c.l.b16 %v471
      %v616 = vunpack.c.l.b16 %v472
      %v617 = vunpack.c.l.b16 %v473
      %v618 = vunpack.c.l.b16 %v474
      %v619 = vunpack.c.l.b16 %v475
      %v620 = vunpack.c.l.b16 %v476
      %v621 = vunpack.c.l.b16 %v477
      %v622 = vunpack.c.l.b16 %v478
      %v623 = vunpack.c.l.b16 %v479
      %v624 = vunpack.c.l.b16 %v480
      %v625 = vunpack.c.l.b16 %v481
      %v626 = vunpack.c.l.b16 %v482
      %v627 = vunpack.c.l.b16 %v483
      %v628 = vunpack.c.l.b16 %v484
      %v629 = vunpack.c.l.b16 %v485
      %v630 = vunpack.c.l.b16 %v486
      %v631 = vunpack.c.l.b16 %v487
      %v632 = vunpack.c.l.b16 %v488
      %v633 = vunpack.c.l.b16 %v489
      %v634 = vpack.c.b16 %v603, %v602
      %v635 = vpack.c.b16 %v605, %v604
      %v636 = vpack.c.b16 %v607, %v606
      %v637 = vpack.c.b16 %v609, %v608
      %v638 = vpack.c.b16 %v611, %v610
      %v639 = vpack.c.b16 %v613, %v612
      %v640 = vpack.c.b16 %v615, %v614
      %v641 = vpack.c.b16 %v617, %v616
      %v642 = vpack.c.b16 %v619, %v618
      %v643 = vpack.c.b16 %v621, %v620
      %v644 = vpack.c.b16 %v623, %v622
      %v645 = vpack.c.b16 %v625, %v624
      %v646 = vpack.c.b16 %v627, %v626
      %v647 = vpack.c.b16 %v629, %v628
      %v648 = vpack.c.b16 %v631, %v630
      %v649 = vpack.c.b16 %v633, %v632
      %666 = vmatpush.bf16.msra.mxu0 %v641
      %667 = vmatpush.bf16.msra.mxu0 %v640
      %668 = vmatpush.bf16.msra.mxu0 %v639
      %669 = vmatpush.bf16.msra.mxu0 %v638
      %670 = vmatpush.bf16.msra.mxu0 %v637
      %671 = vmatpush.bf16.msra.mxu0 %v636
      %672 = vmatpush.bf16.msra.mxu0 %v635
      %673 = vmatpush.bf16.msra.mxu0 %v634
      %674 = vmatmul.bf16.gmra.mxu0 %v538
      %v675 = vpop.f32.mrf.mxu0
      %v676 = vadd.f32 0.0, %v675
      %v677 = vpop.f32.mrf.mxu0
      %v678 = vadd.f32 0.0, %v677
      %679 = vmatmul.bf16.gmra.mxu0 %v540
      %v680 = vpop.f32.mrf.mxu0
      %v681 = vadd.f32 0.0, %v680
      %v682 = vpop.f32.mrf.mxu0
      %v683 = vadd.f32 0.0, %v682
      %684 = vmatmul.bf16.gmra.mxu0 %v542
      %v685 = vpop.f32.mrf.mxu0
      %v686 = vadd.f32 0.0, %v685
      %v687 = vpop.f32.mrf.mxu0
      %v688 = vadd.f32 0.0, %v687
      %689 = vmatmul.bf16.gmra.mxu0 %v544
      %v690 = vpop.f32.mrf.mxu0
      %v691 = vadd.f32 0.0, %v690
      %v692 = vpop.f32.mrf.mxu0
      %v693 = vadd.f32 0.0, %v692
      %694 = vmatmul.bf16.gmra.mxu0 %v546
      %v695 = vpop.f32.mrf.mxu0
      %v696 = vadd.f32 0.0, %v695
      %v697 = vpop.f32.mrf.mxu0
      %v698 = vadd.f32 0.0, %v697
      %699 = vmatmul.bf16.gmra.mxu0 %v548
      %v700 = vpop.f32.mrf.mxu0
      %v701 = vadd.f32 0.0, %v700
      %v702 = vpop.f32.mrf.mxu0
      %v703 = vadd.f32 0.0, %v702
      %704 = vmatmul.bf16.gmra.mxu0 %v550
      %v705 = vpop.f32.mrf.mxu0
      %v706 = vadd.f32 0.0, %v705
      %v707 = vpop.f32.mrf.mxu0
      %v708 = vadd.f32 0.0, %v707
      %709 = vmatmul.bf16.gmra.mxu0 %v552
      %v710 = vpop.f32.mrf.mxu0
      %v711 = vadd.f32 0.0, %v710
      %v712 = vpop.f32.mrf.mxu0
      %v713 = vadd.f32 0.0, %v712
      %714 = vdwg.mxu0
      %715 = vmatpush.bf16.msra.mxu0 %v649
      %716 = vmatpush.bf16.msra.mxu0 %v648
      %717 = vmatpush.bf16.msra.mxu0 %v647
      %718 = vmatpush.bf16.msra.mxu0 %v646
      %719 = vmatpush.bf16.msra.mxu0 %v645
      %720 = vmatpush.bf16.msra.mxu0 %v644
      %721 = vmatpush.bf16.msra.mxu0 %v643
      %722 = vmatpush.bf16.msra.mxu0 %v642
      %723 = vmatmul.bf16.gmra.mxu0 %v539
      %v724 = vpop.f32.mrf.mxu0
      %v725 = vadd.f32 %v676, %v724
      %v726 = vpop.f32.mrf.mxu0
      %v727 = vadd.f32 %v678, %v726
      %728 = vmatmul.bf16.gmra.mxu0 %v541
      %v729 = vpop.f32.mrf.mxu0
      %v730 = vadd.f32 %v681, %v729
      %v731 = vpop.f32.mrf.mxu0
      %v732 = vadd.f32 %v683, %v731
      %733 = vmatmul.bf16.gmra.mxu0 %v543
      %v734 = vpop.f32.mrf.mxu0
      %v735 = vadd.f32 %v686, %v734
      %v736 = vpop.f32.mrf.mxu0
      %v737 = vadd.f32 %v688, %v736
      %738 = vmatmul.bf16.gmra.mxu0 %v545
      %v739 = vpop.f32.mrf.mxu0
      %v740 = vadd.f32 %v691, %v739
      %v741 = vpop.f32.mrf.mxu0
      %v742 = vadd.f32 %v693, %v741
      %743 = vmatmul.bf16.gmra.mxu0 %v547
      %v744 = vpop.f32.mrf.mxu0
      %v745 = vadd.f32 %v696, %v744
      %v746 = vpop.f32.mrf.mxu0
      %v747 = vadd.f32 %v698, %v746
      %748 = vmatmul.bf16.gmra.mxu0 %v549
      %v749 = vpop.f32.mrf.mxu0
      %v750 = vadd.f32 %v701, %v749
      %v751 = vpop.f32.mrf.mxu0
      %v752 = vadd.f32 %v703, %v751
      %753 = vmatmul.bf16.gmra.mxu0 %v551
      %v754 = vpop.f32.mrf.mxu0
      %v755 = vadd.f32 %v706, %v754
      %v756 = vpop.f32.mrf.mxu0
      %v757 = vadd.f32 %v708, %v756
      %758 = vmatmul.bf16.gmra.mxu0 %v553
      %v759 = vpop.f32.mrf.mxu0
      %v760 = vadd.f32 %v711, %v759
      %v761 = vpop.f32.mrf.mxu0
      %v762 = vadd.f32 %v713, %v761
      %763 = vdwg.mxu0
      %v780 = vunpack.c.l.b16 %v352
      %v781 = vunpack.c.h.b16 %v352
      %v782 = vunpack.c.l.b16 %v353
      %v783 = vunpack.c.h.b16 %v353
      %v784 = vunpack.c.l.b16 %v354
      %v785 = vunpack.c.h.b16 %v354
      %v786 = vunpack.c.l.b16 %v355
      %v787 = vunpack.c.h.b16 %v355
      %v788 = vunpack.c.l.b16 %v356
      %v789 = vunpack.c.h.b16 %v356
      %v790 = vunpack.c.l.b16 %v357
      %v791 = vunpack.c.h.b16 %v357
      %v792 = vunpack.c.l.b16 %v358
      %v793 = vunpack.c.h.b16 %v358
      %v794 = vunpack.c.l.b16 %v359
      %v795 = vunpack.c.h.b16 %v359
      %v796 = vunpack.c.l.b16 %v360
      %v797 = vunpack.c.h.b16 %v360
      %v798 = vunpack.c.l.b16 %v361
      %v799 = vunpack.c.h.b16 %v361
      %v800 = vunpack.c.l.b16 %v362
      %v801 = vunpack.c.h.b16 %v362
      %v802 = vunpack.c.l.b16 %v363
      %v803 = vunpack.c.h.b16 %v363
      %v804 = vunpack.c.l.b16 %v364
      %v805 = vunpack.c.h.b16 %v364
      %v806 = vunpack.c.l.b16 %v365
      %v807 = vunpack.c.h.b16 %v365
      %v808 = vunpack.c.l.b16 %v366
      %v809 = vunpack.c.h.b16 %v366
      %v810 = vunpack.c.l.b16 %v367
      %v811 = vunpack.c.h.b16 %v367
      %v812 = vpack.c.b16 %v782, %v780
      %v813 = vpack.c.b16 %v783, %v781
      %v814 = vpack.c.b16 %v786, %v784
      %v815 = vpack.c.b16 %v787, %v785
      %v816 = vpack.c.b16 %v790, %v788
      %v817 = vpack.c.b16 %v791, %v789
      %v818 = vpack.c.b16 %v794, %v792
      %v819 = vpack.c.b16 %v795, %v793
      %v820 = vpack.c.b16 %v798, %v796
      %v821 = vpack.c.b16 %v799, %v797
      %v822 = vpack.c.b16 %v802, %v800
      %v823 = vpack.c.b16 %v803, %v801
      %v824 = vpack.c.b16 %v806, %v804
      %v825 = vpack.c.b16 %v807, %v805
      %v826 = vpack.c.b16 %v810, %v808
      %v827 = vpack.c.b16 %v811, %v809
      %v876 = vunpack.c.l.b16 %v368
      %v877 = vunpack.c.l.b16 %v369
      %v878 = vunpack.c.l.b16 %v370
      %v879 = vunpack.c.l.b16 %v371
      %v880 = vunpack.c.l.b16 %v372
      %v881 = vunpack.c.l.b16 %v373
      %v882 = vunpack.c.l.b16 %v374
      %v883 = vunpack.c.l.b16 %v375
      %v884 = vunpack.c.l.b16 %v376
      %v885 = vunpack.c.l.b16 %v377
      %v886 = vunpack.c.l.b16 %v378
      %v887 = vunpack.c.l.b16 %v379
      %v888 = vunpack.c.l.b16 %v380
      %v889 = vunpack.c.l.b16 %v381
      %v890 = vunpack.c.l.b16 %v382
      %v891 = vunpack.c.l.b16 %v383
      %v892 = vunpack.c.l.b16 %v384
      %v893 = vunpack.c.l.b16 %v385
      %v894 = vunpack.c.l.b16 %v386
      %v895 = vunpack.c.l.b16 %v387
      %v896 = vunpack.c.l.b16 %v388
      %v897 = vunpack.c.l.b16 %v389
      %v898 = vunpack.c.l.b16 %v390
      %v899 = vunpack.c.l.b16 %v391
      %v900 = vunpack.c.l.b16 %v392
      %v901 = vunpack.c.l.b16 %v393
      %v902 = vunpack.c.l.b16 %v394
      %v903 = vunpack.c.l.b16 %v395
      %v904 = vunpack.c.l.b16 %v396
      %v905 = vunpack.c.l.b16 %v397
      %v906 = vunpack.c.l.b16 %v398
      %v907 = vunpack.c.l.b16 %v399
      %v908 = vpack.c.b16 %v877, %v876
      %v909 = vpack.c.b16 %v879, %v878
      %v910 = vpack.c.b16 %v881, %v880
      %v911 = vpack.c.b16 %v883, %v882
      %v912 = vpack.c.b16 %v885, %v884
      %v913 = vpack.c.b16 %v887, %v886
      %v914 = vpack.c.b16 %v889, %v888
      %v915 = vpack.c.b16 %v891, %v890
      %v916 = vpack.c.b16 %v893, %v892
      %v917 = vpack.c.b16 %v895, %v894
      %v918 = vpack.c.b16 %v897, %v896
      %v919 = vpack.c.b16 %v899, %v898
      %v920 = vpack.c.b16 %v901, %v900
      %v921 = vpack.c.b16 %v903, %v902
      %v922 = vpack.c.b16 %v905, %v904
      %v923 = vpack.c.b16 %v907, %v906
      %940 = vmatpush.bf16.msra.mxu0 %v915
      %941 = vmatpush.bf16.msra.mxu0 %v914
      %942 = vmatpush.bf16.msra.mxu0 %v913
      %943 = vmatpush.bf16.msra.mxu0 %v912
      %944 = vmatpush.bf16.msra.mxu0 %v911
      %945 = vmatpush.bf16.msra.mxu0 %v910
      %946 = vmatpush.bf16.msra.mxu0 %v909
      %947 = vmatpush.bf16.msra.mxu0 %v908
      %948 = vmatmul.bf16.gmra.mxu0 %v812
      %v949 = vpop.f32.mrf.mxu0
      %v950 = vadd.f32 %v725, %v949
      %v951 = vpop.f32.mrf.mxu0
      %v952 = vadd.f32 %v727, %v951
      %953 = vmatmul.bf16.gmra.mxu0 %v814
      %v954 = vpop.f32.mrf.mxu0
      %v955 = vadd.f32 %v730, %v954
      %v956 = vpop.f32.mrf.mxu0
      %v957 = vadd.f32 %v732, %v956
      %958 = vmatmul.bf16.gmra.mxu0 %v816
      %v959 = vpop.f32.mrf.mxu0
      %v960 = vadd.f32 %v735, %v959
      %v961 = vpop.f32.mrf.mxu0
      %v962 = vadd.f32 %v737, %v961
      %963 = vmatmul.bf16.gmra.mxu0 %v818
      %v964 = vpop.f32.mrf.mxu0
      %v965 = vadd.f32 %v740, %v964
      %v966 = vpop.f32.mrf.mxu0
      %v967 = vadd.f32 %v742, %v966
      %968 = vmatmul.bf16.gmra.mxu0 %v820
      %v969 = vpop.f32.mrf.mxu0
      %v970 = vadd.f32 %v745, %v969
      %v971 = vpop.f32.mrf.mxu0
      %v972 = vadd.f32 %v747, %v971
      %973 = vmatmul.bf16.gmra.mxu0 %v822
      %v974 = vpop.f32.mrf.mxu0
      %v975 = vadd.f32 %v750, %v974
      %v976 = vpop.f32.mrf.mxu0
      %v977 = vadd.f32 %v752, %v976
      %978 = vmatmul.bf16.gmra.mxu0 %v824
      %v979 = vpop.f32.mrf.mxu0
      %v980 = vadd.f32 %v755, %v979
      %v981 = vpop.f32.mrf.mxu0
      %v982 = vadd.f32 %v757, %v981
      %983 = vmatmul.bf16.gmra.mxu0 %v826
      %v984 = vpop.f32.mrf.mxu0
      %v985 = vadd.f32 %v760, %v984
      %v986 = vpop.f32.mrf.mxu0
      %v987 = vadd.f32 %v762, %v986
      %988 = vdwg.mxu0
      %989 = vmatpush.bf16.msra.mxu0 %v923
      %990 = vmatpush.bf16.msra.mxu0 %v922
      %991 = vmatpush.bf16.msra.mxu0 %v921
      %992 = vmatpush.bf16.msra.mxu0 %v920
      %993 = vmatpush.bf16.msra.mxu0 %v919
      %994 = vmatpush.bf16.msra.mxu0 %v918
      %995 = vmatpush.bf16.msra.mxu0 %v917
      %996 = vmatpush.bf16.msra.mxu0 %v916
      %997 = vmatmul.bf16.gmra.mxu0 %v813
      %v998 = vpop.f32.mrf.mxu0
      %v999 = vadd.f32 %v950, %v998
      %v1000 = vpop.f32.mrf.mxu0
      %v1001 = vadd.f32 %v952, %v1000
      %1002 = vmatmul.bf16.gmra.mxu0 %v815
      %v1003 = vpop.f32.mrf.mxu0
      %v1004 = vadd.f32 %v955, %v1003
      %v1005 = vpop.f32.mrf.mxu0
      %v1006 = vadd.f32 %v957, %v1005
      %1007 = vmatmul.bf16.gmra.mxu0 %v817
      %v1008 = vpop.f32.mrf.mxu0
      %v1009 = vadd.f32 %v960, %v1008
      %v1010 = vpop.f32.mrf.mxu0
      %v1011 = vadd.f32 %v962, %v1010
      %1012 = vmatmul.bf16.gmra.mxu0 %v819
      %v1013 = vpop.f32.mrf.mxu0
      %v1014 = vadd.f32 %v965, %v1013
      %v1015 = vpop.f32.mrf.mxu0
      %v1016 = vadd.f32 %v967, %v1015
      %1017 = vmatmul.bf16.gmra.mxu0 %v821
      %v1018 = vpop.f32.mrf.mxu0
      %v1019 = vadd.f32 %v970, %v1018
      %v1020 = vpop.f32.mrf.mxu0
      %v1021 = vadd.f32 %v972, %v1020
      %1022 = vmatmul.bf16.gmra.mxu0 %v823
      %v1023 = vpop.f32.mrf.mxu0
      %v1024 = vadd.f32 %v975, %v1023
      %v1025 = vpop.f32.mrf.mxu0
      %v1026 = vadd.f32 %v977, %v1025
      %1027 = vmatmul.bf16.gmra.mxu0 %v825
      %v1028 = vpop.f32.mrf.mxu0
      %v1029 = vadd.f32 %v980, %v1028
      %v1030 = vpop.f32.mrf.mxu0
      %v1031 = vadd.f32 %v982, %v1030
      %1032 = vmatmul.bf16.gmra.mxu0 %v827
      %v1033 = vpop.f32.mrf.mxu0
      %v1034 = vadd.f32 %v985, %v1033
      %v1035 = vpop.f32.mrf.mxu0
      %v1036 = vadd.f32 %v987, %v1035
      %1037 = vdwg.mxu0
      %s1038 = sadd.s32 %s400, 144
      %s1039 = scalar_lea.vmem %s327, %s1038
      %v1040 = vld [vmem:[%s1039] sm:$0xff]
      %v1041 = vld [vmem:[%s1039 + $0x8] sm:$0xff]
      %v1042 = vld [vmem:[%s1039 + $0x10] sm:$0xff]
      %v1043 = vld [vmem:[%s1039 + $0x18] sm:$0xff]
      %v1044 = vld [vmem:[%s1039 + $0x20] sm:$0xff]
      %v1045 = vld [vmem:[%s1039 + $0x28] sm:$0xff]
      %v1046 = vld [vmem:[%s1039 + $0x30] sm:$0xff]
      %v1047 = vld [vmem:[%s1039 + $0x38] sm:$0xff]
      %v1048 = vld [vmem:[%s1039 + $0x40] sm:$0xff]
      %v1049 = vld [vmem:[%s1039 + $0x48] sm:$0xff]
      %v1050 = vld [vmem:[%s1039 + $0x50] sm:$0xff]
      %v1051 = vld [vmem:[%s1039 + $0x58] sm:$0xff]
      %v1052 = vld [vmem:[%s1039 + $0x60] sm:$0xff]
      %v1053 = vld [vmem:[%s1039 + $0x68] sm:$0xff]
      %v1054 = vld [vmem:[%s1039 + $0x70] sm:$0xff]
      %v1055 = vld [vmem:[%s1039 + $0x78] sm:$0xff]
      %s1056 = scalar_lea.vmem %s3, 1
      %v1057 = vld [vmem:[%s1056] sm:$0x1]
      %v1059 = vperm.slane %v1057, 0
      %v1061 = vmul.f32 %v1040, %v1059
      %v1062 = vmul.f32 %v1041, %v1059
      %v1063 = vmul.f32 %v1042, %v1059
      %v1064 = vmul.f32 %v1043, %v1059
      %v1065 = vmul.f32 %v1044, %v1059
      %v1066 = vmul.f32 %v1045, %v1059
      %v1067 = vmul.f32 %v1046, %v1059
      %v1068 = vmul.f32 %v1047, %v1059
      %v1069 = vmul.f32 %v1048, %v1059
      %v1070 = vmul.f32 %v1049, %v1059
      %v1071 = vmul.f32 %v1050, %v1059
      %v1072 = vmul.f32 %v1051, %v1059
      %v1073 = vmul.f32 %v1052, %v1059
      %v1074 = vmul.f32 %v1053, %v1059
      %v1075 = vmul.f32 %v1054, %v1059
      %v1076 = vmul.f32 %v1055, %v1059
      %v1077 = vadd.f32 %v422, %v1061
      %v1078 = vadd.f32 %v423, %v1062
      %v1079 = vadd.f32 %v424, %v1063
      %v1080 = vadd.f32 %v425, %v1064
      %v1081 = vadd.f32 %v426, %v1065
      %v1082 = vadd.f32 %v427, %v1066
      %v1083 = vadd.f32 %v428, %v1067
      %v1084 = vadd.f32 %v429, %v1068
      %v1085 = vadd.f32 %v430, %v1069
      %v1086 = vadd.f32 %v431, %v1070
      %v1087 = vadd.f32 %v432, %v1071
      %v1088 = vadd.f32 %v433, %v1072
      %v1089 = vadd.f32 %v434, %v1073
      %v1090 = vadd.f32 %v435, %v1074
      %v1091 = vadd.f32 %v436, %v1075
      %v1092 = vadd.f32 %v437, %v1076
      %s1093 = sadd.s32 %s348, 1
      %s1094 = smul.u32 %s1093, 4
      %s1095 = smul.addr %s1094, 4
      %s1096 = scalar_lea.vmem %s322, %s1095
      %v1097 = vld [vmem:[%s1096] sm:$0xff]
      %v1098 = vld [vmem:[%s1096 + $0x8] sm:$0xff]
      %v1099 = vld [vmem:[%s1096 + $0x10] sm:$0xff]
      %v1100 = vld [vmem:[%s1096 + $0x18] sm:$0xff]
      %v1101 = vld [vmem:[%s1096 + $0x20] sm:$0xff]
      %v1102 = vld [vmem:[%s1096 + $0x28] sm:$0xff]
      %v1103 = vld [vmem:[%s1096 + $0x30] sm:$0xff]
      %v1104 = vld [vmem:[%s1096 + $0x38] sm:$0xff]
      %v1105 = vld [vmem:[%s1096 + $0x40] sm:$0xff]
      %v1106 = vld [vmem:[%s1096 + $0x48] sm:$0xff]
      %v1107 = vld [vmem:[%s1096 + $0x50] sm:$0xff]
      %v1108 = vld [vmem:[%s1096 + $0x58] sm:$0xff]
      %v1109 = vld [vmem:[%s1096 + $0x60] sm:$0xff]
      %v1110 = vld [vmem:[%s1096 + $0x68] sm:$0xff]
      %v1111 = vld [vmem:[%s1096 + $0x70] sm:$0xff]
      %v1112 = vld [vmem:[%s1096 + $0x78] sm:$0xff]
      %s1113 = scalar_lea.vmem %s2, 256
      %v1114 = vld [vmem:[%s1113] sm:$0xf]
      %v1115 = vld [vmem:[%s1113 + $0x4] sm:$0xf]
      %v1116 = vld [vmem:[%s1113 + $0x8] sm:$0xf]
      %v1117 = vld [vmem:[%s1113 + $0xc] sm:$0xf]
      %v1118 = vld [vmem:[%s1113 + $0x10] sm:$0xf]
      %v1119 = vld [vmem:[%s1113 + $0x14] sm:$0xf]
      %v1120 = vld [vmem:[%s1113 + $0x18] sm:$0xf]
      %v1121 = vld [vmem:[%s1113 + $0x1c] sm:$0xf]
      %v1122 = vld [vmem:[%s1113 + $0x20] sm:$0xf]
      %v1123 = vld [vmem:[%s1113 + $0x24] sm:$0xf]
      %v1124 = vld [vmem:[%s1113 + $0x28] sm:$0xf]
      %v1125 = vld [vmem:[%s1113 + $0x2c] sm:$0xf]
      %v1126 = vld [vmem:[%s1113 + $0x30] sm:$0xf]
      %v1127 = vld [vmem:[%s1113 + $0x34] sm:$0xf]
      %v1128 = vld [vmem:[%s1113 + $0x38] sm:$0xf]
      %v1129 = vld [vmem:[%s1113 + $0x3c] sm:$0xf]
      %v1130 = vld [vmem:[%s1113 + $0x40] sm:$0xf]
      %v1131 = vld [vmem:[%s1113 + $0x44] sm:$0xf]
      %v1132 = vld [vmem:[%s1113 + $0x48] sm:$0xf]
      %v1133 = vld [vmem:[%s1113 + $0x4c] sm:$0xf]
      %v1134 = vld [vmem:[%s1113 + $0x50] sm:$0xf]
      %v1135 = vld [vmem:[%s1113 + $0x54] sm:$0xf]
      %v1136 = vld [vmem:[%s1113 + $0x58] sm:$0xf]
      %v1137 = vld [vmem:[%s1113 + $0x5c] sm:$0xf]
      %v1138 = vld [vmem:[%s1113 + $0x60] sm:$0xf]
      %v1139 = vld [vmem:[%s1113 + $0x64] sm:$0xf]
      %v1140 = vld [vmem:[%s1113 + $0x68] sm:$0xf]
      %v1141 = vld [vmem:[%s1113 + $0x6c] sm:$0xf]
      %v1142 = vld [vmem:[%s1113 + $0x70] sm:$0xf]
      %v1143 = vld [vmem:[%s1113 + $0x74] sm:$0xf]
      %v1144 = vld [vmem:[%s1113 + $0x78] sm:$0xf]
      %v1145 = vld [vmem:[%s1113 + $0x7c] sm:$0xf]
      %v1162 = vunpack.c.l.b16 %v1097
      %v1163 = vunpack.c.h.b16 %v1097
      %v1164 = vunpack.c.l.b16 %v1098
      %v1165 = vunpack.c.h.b16 %v1098
      %v1166 = vunpack.c.l.b16 %v1099
      %v1167 = vunpack.c.h.b16 %v1099
      %v1168 = vunpack.c.l.b16 %v1100
      %v1169 = vunpack.c.h.b16 %v1100
      %v1170 = vunpack.c.l.b16 %v1101
      %v1171 = vunpack.c.h.b16 %v1101
      %v1172 = vunpack.c.l.b16 %v1102
      %v1173 = vunpack.c.h.b16 %v1102
      %v1174 = vunpack.c.l.b16 %v1103
      %v1175 = vunpack.c.h.b16 %v1103
      %v1176 = vunpack.c.l.b16 %v1104
      %v1177 = vunpack.c.h.b16 %v1104
      %v1178 = vunpack.c.l.b16 %v1105
      %v1179 = vunpack.c.h.b16 %v1105
      %v1180 = vunpack.c.l.b16 %v1106
      %v1181 = vunpack.c.h.b16 %v1106
      %v1182 = vunpack.c.l.b16 %v1107
      %v1183 = vunpack.c.h.b16 %v1107
      %v1184 = vunpack.c.l.b16 %v1108
      %v1185 = vunpack.c.h.b16 %v1108
      %v1186 = vunpack.c.l.b16 %v1109
      %v1187 = vunpack.c.h.b16 %v1109
      %v1188 = vunpack.c.l.b16 %v1110
      %v1189 = vunpack.c.h.b16 %v1110
      %v1190 = vunpack.c.l.b16 %v1111
      %v1191 = vunpack.c.h.b16 %v1111
      %v1192 = vunpack.c.l.b16 %v1112
      %v1193 = vunpack.c.h.b16 %v1112
      %v1194 = vpack.c.b16 %v1164, %v1162
      %v1195 = vpack.c.b16 %v1165, %v1163
      %v1196 = vpack.c.b16 %v1168, %v1166
      %v1197 = vpack.c.b16 %v1169, %v1167
      %v1198 = vpack.c.b16 %v1172, %v1170
      %v1199 = vpack.c.b16 %v1173, %v1171
      %v1200 = vpack.c.b16 %v1176, %v1174
      %v1201 = vpack.c.b16 %v1177, %v1175
      %v1202 = vpack.c.b16 %v1180, %v1178
      %v1203 = vpack.c.b16 %v1181, %v1179
      %v1204 = vpack.c.b16 %v1184, %v1182
      %v1205 = vpack.c.b16 %v1185, %v1183
      %v1206 = vpack.c.b16 %v1188, %v1186
      %v1207 = vpack.c.b16 %v1189, %v1187
      %v1208 = vpack.c.b16 %v1192, %v1190
      %v1209 = vpack.c.b16 %v1193, %v1191
      %v1258 = vunpack.c.l.b16 %v1114
      %v1259 = vunpack.c.l.b16 %v1115
      %v1260 = vunpack.c.l.b16 %v1116
      %v1261 = vunpack.c.l.b16 %v1117
      %v1262 = vunpack.c.l.b16 %v1118
      %v1263 = vunpack.c.l.b16 %v1119
      %v1264 = vunpack.c.l.b16 %v1120
      %v1265 = vunpack.c.l.b16 %v1121
      %v1266 = vunpack.c.l.b16 %v1122
      %v1267 = vunpack.c.l.b16 %v1123
      %v1268 = vunpack.c.l.b16 %v1124
      %v1269 = vunpack.c.l.b16 %v1125
      %v1270 = vunpack.c.l.b16 %v1126
      %v1271 = vunpack.c.l.b16 %v1127
      %v1272 = vunpack.c.l.b16 %v1128
      %v1273 = vunpack.c.l.b16 %v1129
      %v1274 = vunpack.c.l.b16 %v1130
      %v1275 = vunpack.c.l.b16 %v1131
      %v1276 = vunpack.c.l.b16 %v1132
      %v1277 = vunpack.c.l.b16 %v1133
      %v1278 = vunpack.c.l.b16 %v1134
      %v1279 = vunpack.c.l.b16 %v1135
      %v1280 = vunpack.c.l.b16 %v1136
      %v1281 = vunpack.c.l.b16 %v1137
      %v1282 = vunpack.c.l.b16 %v1138
      %v1283 = vunpack.c.l.b16 %v1139
      %v1284 = vunpack.c.l.b16 %v1140
      %v1285 = vunpack.c.l.b16 %v1141
      %v1286 = vunpack.c.l.b16 %v1142
      %v1287 = vunpack.c.l.b16 %v1143
      %v1288 = vunpack.c.l.b16 %v1144
      %v1289 = vunpack.c.l.b16 %v1145
      %v1290 = vpack.c.b16 %v1259, %v1258
      %v1291 = vpack.c.b16 %v1261, %v1260
      %v1292 = vpack.c.b16 %v1263, %v1262
      %v1293 = vpack.c.b16 %v1265, %v1264
      %v1294 = vpack.c.b16 %v1267, %v1266
      %v1295 = vpack.c.b16 %v1269, %v1268
      %v1296 = vpack.c.b16 %v1271, %v1270
      %v1297 = vpack.c.b16 %v1273, %v1272
      %v1298 = vpack.c.b16 %v1275, %v1274
      %v1299 = vpack.c.b16 %v1277, %v1276
      %v1300 = vpack.c.b16 %v1279, %v1278
      %v1301 = vpack.c.b16 %v1281, %v1280
      %v1302 = vpack.c.b16 %v1283, %v1282
      %v1303 = vpack.c.b16 %v1285, %v1284
      %v1304 = vpack.c.b16 %v1287, %v1286
      %v1305 = vpack.c.b16 %v1289, %v1288
      %1322 = vmatpush.bf16.msra.mxu0 %v1297
      %1323 = vmatpush.bf16.msra.mxu0 %v1296
      %1324 = vmatpush.bf16.msra.mxu0 %v1295
      %1325 = vmatpush.bf16.msra.mxu0 %v1294
      %1326 = vmatpush.bf16.msra.mxu0 %v1293
      %1327 = vmatpush.bf16.msra.mxu0 %v1292
      %1328 = vmatpush.bf16.msra.mxu0 %v1291
      %1329 = vmatpush.bf16.msra.mxu0 %v1290
      %1330 = vmatmul.bf16.gmra.mxu0 %v1194
      %v1331 = vpop.f32.mrf.mxu0
      %v1332 = vadd.f32 0.0, %v1331
      %v1333 = vpop.f32.mrf.mxu0
      %v1334 = vadd.f32 0.0, %v1333
      %1335 = vmatmul.bf16.gmra.mxu0 %v1196
      %v1336 = vpop.f32.mrf.mxu0
      %v1337 = vadd.f32 0.0, %v1336
      %v1338 = vpop.f32.mrf.mxu0
      %v1339 = vadd.f32 0.0, %v1338
      %1340 = vmatmul.bf16.gmra.mxu0 %v1198
      %v1341 = vpop.f32.mrf.mxu0
      %v1342 = vadd.f32 0.0, %v1341
      %v1343 = vpop.f32.mrf.mxu0
      %v1344 = vadd.f32 0.0, %v1343
      %1345 = vmatmul.bf16.gmra.mxu0 %v1200
      %v1346 = vpop.f32.mrf.mxu0
      %v1347 = vadd.f32 0.0, %v1346
      %v1348 = vpop.f32.mrf.mxu0
      %v1349 = vadd.f32 0.0, %v1348
      %1350 = vmatmul.bf16.gmra.mxu0 %v1202
      %v1351 = vpop.f32.mrf.mxu0
      %v1352 = vadd.f32 0.0, %v1351
      %v1353 = vpop.f32.mrf.mxu0
      %v1354 = vadd.f32 0.0, %v1353
      %1355 = vmatmul.bf16.gmra.mxu0 %v1204
      %v1356 = vpop.f32.mrf.mxu0
      %v1357 = vadd.f32 0.0, %v1356
      %v1358 = vpop.f32.mrf.mxu0
      %v1359 = vadd.f32 0.0, %v1358
      %1360 = vmatmul.bf16.gmra.mxu0 %v1206
      %v1361 = vpop.f32.mrf.mxu0
      %v1362 = vadd.f32 0.0, %v1361
      %v1363 = vpop.f32.mrf.mxu0
      %v1364 = vadd.f32 0.0, %v1363
      %1365 = vmatmul.bf16.gmra.mxu0 %v1208
      %v1366 = vpop.f32.mrf.mxu0
      %v1367 = vadd.f32 0.0, %v1366
      %v1368 = vpop.f32.mrf.mxu0
      %v1369 = vadd.f32 0.0, %v1368
      %1370 = vdwg.mxu0
      %1371 = vmatpush.bf16.msra.mxu0 %v1305
      %1372 = vmatpush.bf16.msra.mxu0 %v1304
      %1373 = vmatpush.bf16.msra.mxu0 %v1303
      %1374 = vmatpush.bf16.msra.mxu0 %v1302
      %1375 = vmatpush.bf16.msra.mxu0 %v1301
      %1376 = vmatpush.bf16.msra.mxu0 %v1300
      %1377 = vmatpush.bf16.msra.mxu0 %v1299
      %1378 = vmatpush.bf16.msra.mxu0 %v1298
      %1379 = vmatmul.bf16.gmra.mxu0 %v1195
      %v1380 = vpop.f32.mrf.mxu0
      %v1381 = vadd.f32 %v1332, %v1380
      %v1382 = vpop.f32.mrf.mxu0
      %v1383 = vadd.f32 %v1334, %v1382
      %1384 = vmatmul.bf16.gmra.mxu0 %v1197
      %v1385 = vpop.f32.mrf.mxu0
      %v1386 = vadd.f32 %v1337, %v1385
      %v1387 = vpop.f32.mrf.mxu0
      %v1388 = vadd.f32 %v1339, %v1387
      %1389 = vmatmul.bf16.gmra.mxu0 %v1199
      %v1390 = vpop.f32.mrf.mxu0
      %v1391 = vadd.f32 %v1342, %v1390
      %v1392 = vpop.f32.mrf.mxu0
      %v1393 = vadd.f32 %v1344, %v1392
      %1394 = vmatmul.bf16.gmra.mxu0 %v1201
      %v1395 = vpop.f32.mrf.mxu0
      %v1396 = vadd.f32 %v1347, %v1395
      %v1397 = vpop.f32.mrf.mxu0
      %v1398 = vadd.f32 %v1349, %v1397
      %1399 = vmatmul.bf16.gmra.mxu0 %v1203
      %v1400 = vpop.f32.mrf.mxu0
      %v1401 = vadd.f32 %v1352, %v1400
      %v1402 = vpop.f32.mrf.mxu0
      %v1403 = vadd.f32 %v1354, %v1402
      %1404 = vmatmul.bf16.gmra.mxu0 %v1205
      %v1405 = vpop.f32.mrf.mxu0
      %v1406 = vadd.f32 %v1357, %v1405
      %v1407 = vpop.f32.mrf.mxu0
      %v1408 = vadd.f32 %v1359, %v1407
      %1409 = vmatmul.bf16.gmra.mxu0 %v1207
      %v1410 = vpop.f32.mrf.mxu0
      %v1411 = vadd.f32 %v1362, %v1410
      %v1412 = vpop.f32.mrf.mxu0
      %v1413 = vadd.f32 %v1364, %v1412
      %1414 = vmatmul.bf16.gmra.mxu0 %v1209
      %v1415 = vpop.f32.mrf.mxu0
      %v1416 = vadd.f32 %v1367, %v1415
      %v1417 = vpop.f32.mrf.mxu0
      %v1418 = vadd.f32 %v1369, %v1417
      %1419 = vdwg.mxu0
      %v1420 = vadd.f32 %v999, %v1381
      %v1421 = vadd.f32 %v1001, %v1383
      %v1422 = vadd.f32 %v1004, %v1386
      %v1423 = vadd.f32 %v1006, %v1388
      %v1424 = vadd.f32 %v1009, %v1391
      %v1425 = vadd.f32 %v1011, %v1393
      %v1426 = vadd.f32 %v1014, %v1396
      %v1427 = vadd.f32 %v1016, %v1398
      %v1428 = vadd.f32 %v1019, %v1401
      %v1429 = vadd.f32 %v1021, %v1403
      %v1430 = vadd.f32 %v1024, %v1406
      %v1431 = vadd.f32 %v1026, %v1408
      %v1432 = vadd.f32 %v1029, %v1411
      %v1433 = vadd.f32 %v1031, %v1413
      %v1434 = vadd.f32 %v1034, %v1416
      %v1435 = vadd.f32 %v1036, %v1418
      %s1436 = smul.u32 %s1093, 16
      %s1437 = scalar_lea.vmem %s327, %s1436
      %v1438 = vld [vmem:[%s1437] sm:$0xff]
      %v1439 = vld [vmem:[%s1437 + $0x8] sm:$0xff]
      %v1440 = vld [vmem:[%s1437 + $0x10] sm:$0xff]
      %v1441 = vld [vmem:[%s1437 + $0x18] sm:$0xff]
      %v1442 = vld [vmem:[%s1437 + $0x20] sm:$0xff]
      %v1443 = vld [vmem:[%s1437 + $0x28] sm:$0xff]
      %v1444 = vld [vmem:[%s1437 + $0x30] sm:$0xff]
      %v1445 = vld [vmem:[%s1437 + $0x38] sm:$0xff]
      %v1446 = vld [vmem:[%s1437 + $0x40] sm:$0xff]
      %v1447 = vld [vmem:[%s1437 + $0x48] sm:$0xff]
      %v1448 = vld [vmem:[%s1437 + $0x50] sm:$0xff]
      %v1449 = vld [vmem:[%s1437 + $0x58] sm:$0xff]
      %v1450 = vld [vmem:[%s1437 + $0x60] sm:$0xff]
      %v1451 = vld [vmem:[%s1437 + $0x68] sm:$0xff]
      %v1452 = vld [vmem:[%s1437 + $0x70] sm:$0xff]
      %v1453 = vld [vmem:[%s1437 + $0x78] sm:$0xff]
      %s1454 = scalar_lea.vmem %s3, 2
      %v1455 = vld [vmem:[%s1454] sm:$0x1]
      %v1457 = vperm.slane %v1455, 0
      %v1459 = vmul.f32 %v1438, %v1457
      %v1460 = vmul.f32 %v1439, %v1457
      %v1461 = vmul.f32 %v1440, %v1457
      %v1462 = vmul.f32 %v1441, %v1457
      %v1463 = vmul.f32 %v1442, %v1457
      %v1464 = vmul.f32 %v1443, %v1457
      %v1465 = vmul.f32 %v1444, %v1457
      %v1466 = vmul.f32 %v1445, %v1457
      %v1467 = vmul.f32 %v1446, %v1457
      %v1468 = vmul.f32 %v1447, %v1457
      %v1469 = vmul.f32 %v1448, %v1457
      %v1470 = vmul.f32 %v1449, %v1457
      %v1471 = vmul.f32 %v1450, %v1457
      %v1472 = vmul.f32 %v1451, %v1457
      %v1473 = vmul.f32 %v1452, %v1457
      %v1474 = vmul.f32 %v1453, %v1457
      %v1475 = vadd.f32 %v1077, %v1459
      %v1476 = vadd.f32 %v1078, %v1460
      %v1477 = vadd.f32 %v1079, %v1461
      %v1478 = vadd.f32 %v1080, %v1462
      %v1479 = vadd.f32 %v1081, %v1463
      %v1480 = vadd.f32 %v1082, %v1464
      %v1481 = vadd.f32 %v1083, %v1465
      %v1482 = vadd.f32 %v1084, %v1466
      %v1483 = vadd.f32 %v1085, %v1467
      %v1484 = vadd.f32 %v1086, %v1468
      %v1485 = vadd.f32 %v1087, %v1469
      %v1486 = vadd.f32 %v1088, %v1470
      %v1487 = vadd.f32 %v1089, %v1471
      %v1488 = vadd.f32 %v1090, %v1472
      %v1489 = vadd.f32 %v1091, %v1473
      %v1490 = vadd.f32 %v1092, %v1474
      %s1491 = sadd.s32 %s1094, 36
      %s1492 = smul.addr %s1491, 4
      %s1493 = scalar_lea.vmem %s322, %s1492
      %v1494 = vld [vmem:[%s1493] sm:$0xff]
      %v1495 = vld [vmem:[%s1493 + $0x8] sm:$0xff]
      %v1496 = vld [vmem:[%s1493 + $0x10] sm:$0xff]
      %v1497 = vld [vmem:[%s1493 + $0x18] sm:$0xff]
      %v1498 = vld [vmem:[%s1493 + $0x20] sm:$0xff]
      %v1499 = vld [vmem:[%s1493 + $0x28] sm:$0xff]
      %v1500 = vld [vmem:[%s1493 + $0x30] sm:$0xff]
      %v1501 = vld [vmem:[%s1493 + $0x38] sm:$0xff]
      %v1502 = vld [vmem:[%s1493 + $0x40] sm:$0xff]
      %v1503 = vld [vmem:[%s1493 + $0x48] sm:$0xff]
      %v1504 = vld [vmem:[%s1493 + $0x50] sm:$0xff]
      %v1505 = vld [vmem:[%s1493 + $0x58] sm:$0xff]
      %v1506 = vld [vmem:[%s1493 + $0x60] sm:$0xff]
      %v1507 = vld [vmem:[%s1493 + $0x68] sm:$0xff]
      %v1508 = vld [vmem:[%s1493 + $0x70] sm:$0xff]
      %v1509 = vld [vmem:[%s1493 + $0x78] sm:$0xff]
      %s1510 = scalar_lea.vmem %s2, 384
      %v1511 = vld [vmem:[%s1510] sm:$0xf]
      %v1512 = vld [vmem:[%s1510 + $0x4] sm:$0xf]
      %v1513 = vld [vmem:[%s1510 + $0x8] sm:$0xf]
      %v1514 = vld [vmem:[%s1510 + $0xc] sm:$0xf]
      %v1515 = vld [vmem:[%s1510 + $0x10] sm:$0xf]
      %v1516 = vld [vmem:[%s1510 + $0x14] sm:$0xf]
      %v1517 = vld [vmem:[%s1510 + $0x18] sm:$0xf]
      %v1518 = vld [vmem:[%s1510 + $0x1c] sm:$0xf]
      %v1519 = vld [vmem:[%s1510 + $0x20] sm:$0xf]
      %v1520 = vld [vmem:[%s1510 + $0x24] sm:$0xf]
      %v1521 = vld [vmem:[%s1510 + $0x28] sm:$0xf]
      %v1522 = vld [vmem:[%s1510 + $0x2c] sm:$0xf]
      %v1523 = vld [vmem:[%s1510 + $0x30] sm:$0xf]
      %v1524 = vld [vmem:[%s1510 + $0x34] sm:$0xf]
      %v1525 = vld [vmem:[%s1510 + $0x38] sm:$0xf]
      %v1526 = vld [vmem:[%s1510 + $0x3c] sm:$0xf]
      %v1527 = vld [vmem:[%s1510 + $0x40] sm:$0xf]
      %v1528 = vld [vmem:[%s1510 + $0x44] sm:$0xf]
      %v1529 = vld [vmem:[%s1510 + $0x48] sm:$0xf]
      %v1530 = vld [vmem:[%s1510 + $0x4c] sm:$0xf]
      %v1531 = vld [vmem:[%s1510 + $0x50] sm:$0xf]
      %v1532 = vld [vmem:[%s1510 + $0x54] sm:$0xf]
      %v1533 = vld [vmem:[%s1510 + $0x58] sm:$0xf]
      %v1534 = vld [vmem:[%s1510 + $0x5c] sm:$0xf]
      %v1535 = vld [vmem:[%s1510 + $0x60] sm:$0xf]
      %v1536 = vld [vmem:[%s1510 + $0x64] sm:$0xf]
      %v1537 = vld [vmem:[%s1510 + $0x68] sm:$0xf]
      %v1538 = vld [vmem:[%s1510 + $0x6c] sm:$0xf]
      %v1539 = vld [vmem:[%s1510 + $0x70] sm:$0xf]
      %v1540 = vld [vmem:[%s1510 + $0x74] sm:$0xf]
      %v1541 = vld [vmem:[%s1510 + $0x78] sm:$0xf]
      %v1542 = vld [vmem:[%s1510 + $0x7c] sm:$0xf]
      %v1559 = vunpack.c.l.b16 %v1494
      %v1560 = vunpack.c.h.b16 %v1494
      %v1561 = vunpack.c.l.b16 %v1495
      %v1562 = vunpack.c.h.b16 %v1495
      %v1563 = vunpack.c.l.b16 %v1496
      %v1564 = vunpack.c.h.b16 %v1496
      %v1565 = vunpack.c.l.b16 %v1497
      %v1566 = vunpack.c.h.b16 %v1497
      %v1567 = vunpack.c.l.b16 %v1498
      %v1568 = vunpack.c.h.b16 %v1498
      %v1569 = vunpack.c.l.b16 %v1499
      %v1570 = vunpack.c.h.b16 %v1499
      %v1571 = vunpack.c.l.b16 %v1500
      %v1572 = vunpack.c.h.b16 %v1500
      %v1573 = vunpack.c.l.b16 %v1501
      %v1574 = vunpack.c.h.b16 %v1501
      %v1575 = vunpack.c.l.b16 %v1502
      %v1576 = vunpack.c.h.b16 %v1502
      %v1577 = vunpack.c.l.b16 %v1503
      %v1578 = vunpack.c.h.b16 %v1503
      %v1579 = vunpack.c.l.b16 %v1504
      %v1580 = vunpack.c.h.b16 %v1504
      %v1581 = vunpack.c.l.b16 %v1505
      %v1582 = vunpack.c.h.b16 %v1505
      %v1583 = vunpack.c.l.b16 %v1506
      %v1584 = vunpack.c.h.b16 %v1506
      %v1585 = vunpack.c.l.b16 %v1507
      %v1586 = vunpack.c.h.b16 %v1507
      %v1587 = vunpack.c.l.b16 %v1508
      %v1588 = vunpack.c.h.b16 %v1508
      %v1589 = vunpack.c.l.b16 %v1509
      %v1590 = vunpack.c.h.b16 %v1509
      %v1591 = vpack.c.b16 %v1561, %v1559
      %v1592 = vpack.c.b16 %v1562, %v1560
      %v1593 = vpack.c.b16 %v1565, %v1563
      %v1594 = vpack.c.b16 %v1566, %v1564
      %v1595 = vpack.c.b16 %v1569, %v1567
      %v1596 = vpack.c.b16 %v1570, %v1568
      %v1597 = vpack.c.b16 %v1573, %v1571
      %v1598 = vpack.c.b16 %v1574, %v1572
      %v1599 = vpack.c.b16 %v1577, %v1575
      %v1600 = vpack.c.b16 %v1578, %v1576
      %v1601 = vpack.c.b16 %v1581, %v1579
      %v1602 = vpack.c.b16 %v1582, %v1580
      %v1603 = vpack.c.b16 %v1585, %v1583
      %v1604 = vpack.c.b16 %v1586, %v1584
      %v1605 = vpack.c.b16 %v1589, %v1587
      %v1606 = vpack.c.b16 %v1590, %v1588
      %v1655 = vunpack.c.l.b16 %v1511
      %v1656 = vunpack.c.l.b16 %v1512
      %v1657 = vunpack.c.l.b16 %v1513
      %v1658 = vunpack.c.l.b16 %v1514
      %v1659 = vunpack.c.l.b16 %v1515
      %v1660 = vunpack.c.l.b16 %v1516
      %v1661 = vunpack.c.l.b16 %v1517
      %v1662 = vunpack.c.l.b16 %v1518
      %v1663 = vunpack.c.l.b16 %v1519
      %v1664 = vunpack.c.l.b16 %v1520
      %v1665 = vunpack.c.l.b16 %v1521
      %v1666 = vunpack.c.l.b16 %v1522
      %v1667 = vunpack.c.l.b16 %v1523
      %v1668 = vunpack.c.l.b16 %v1524
      %v1669 = vunpack.c.l.b16 %v1525
      %v1670 = vunpack.c.l.b16 %v1526
      %v1671 = vunpack.c.l.b16 %v1527
      %v1672 = vunpack.c.l.b16 %v1528
      %v1673 = vunpack.c.l.b16 %v1529
      %v1674 = vunpack.c.l.b16 %v1530
      %v1675 = vunpack.c.l.b16 %v1531
      %v1676 = vunpack.c.l.b16 %v1532
      %v1677 = vunpack.c.l.b16 %v1533
      %v1678 = vunpack.c.l.b16 %v1534
      %v1679 = vunpack.c.l.b16 %v1535
      %v1680 = vunpack.c.l.b16 %v1536
      %v1681 = vunpack.c.l.b16 %v1537
      %v1682 = vunpack.c.l.b16 %v1538
      %v1683 = vunpack.c.l.b16 %v1539
      %v1684 = vunpack.c.l.b16 %v1540
      %v1685 = vunpack.c.l.b16 %v1541
      %v1686 = vunpack.c.l.b16 %v1542
      %v1687 = vpack.c.b16 %v1656, %v1655
      %v1688 = vpack.c.b16 %v1658, %v1657
      %v1689 = vpack.c.b16 %v1660, %v1659
      %v1690 = vpack.c.b16 %v1662, %v1661
      %v1691 = vpack.c.b16 %v1664, %v1663
      %v1692 = vpack.c.b16 %v1666, %v1665
      %v1693 = vpack.c.b16 %v1668, %v1667
      %v1694 = vpack.c.b16 %v1670, %v1669
      %v1695 = vpack.c.b16 %v1672, %v1671
      %v1696 = vpack.c.b16 %v1674, %v1673
      %v1697 = vpack.c.b16 %v1676, %v1675
      %v1698 = vpack.c.b16 %v1678, %v1677
      %v1699 = vpack.c.b16 %v1680, %v1679
      %v1700 = vpack.c.b16 %v1682, %v1681
      %v1701 = vpack.c.b16 %v1684, %v1683
      %v1702 = vpack.c.b16 %v1686, %v1685
      %1719 = vmatpush.bf16.msra.mxu0 %v1694
      %1720 = vmatpush.bf16.msra.mxu0 %v1693
      %1721 = vmatpush.bf16.msra.mxu0 %v1692
      %1722 = vmatpush.bf16.msra.mxu0 %v1691
      %1723 = vmatpush.bf16.msra.mxu0 %v1690
      %1724 = vmatpush.bf16.msra.mxu0 %v1689
      %1725 = vmatpush.bf16.msra.mxu0 %v1688
      %1726 = vmatpush.bf16.msra.mxu0 %v1687
      %1727 = vmatmul.bf16.gmra.mxu0 %v1591
      %v1728 = vpop.f32.mrf.mxu0
      %v1729 = vadd.f32 0.0, %v1728
      %v1730 = vpop.f32.mrf.mxu0
      %v1731 = vadd.f32 0.0, %v1730
      %1732 = vmatmul.bf16.gmra.mxu0 %v1593
      %v1733 = vpop.f32.mrf.mxu0
      %v1734 = vadd.f32 0.0, %v1733
      %v1735 = vpop.f32.mrf.mxu0
      %v1736 = vadd.f32 0.0, %v1735
      %1737 = vmatmul.bf16.gmra.mxu0 %v1595
      %v1738 = vpop.f32.mrf.mxu0
      %v1739 = vadd.f32 0.0, %v1738
      %v1740 = vpop.f32.mrf.mxu0
      %v1741 = vadd.f32 0.0, %v1740
      %1742 = vmatmul.bf16.gmra.mxu0 %v1597
      %v1743 = vpop.f32.mrf.mxu0
      %v1744 = vadd.f32 0.0, %v1743
      %v1745 = vpop.f32.mrf.mxu0
      %v1746 = vadd.f32 0.0, %v1745
      %1747 = vmatmul.bf16.gmra.mxu0 %v1599
      %v1748 = vpop.f32.mrf.mxu0
      %v1749 = vadd.f32 0.0, %v1748
      %v1750 = vpop.f32.mrf.mxu0
      %v1751 = vadd.f32 0.0, %v1750
      %1752 = vmatmul.bf16.gmra.mxu0 %v1601
      %v1753 = vpop.f32.mrf.mxu0
      %v1754 = vadd.f32 0.0, %v1753
      %v1755 = vpop.f32.mrf.mxu0
      %v1756 = vadd.f32 0.0, %v1755
      %1757 = vmatmul.bf16.gmra.mxu0 %v1603
      %v1758 = vpop.f32.mrf.mxu0
      %v1759 = vadd.f32 0.0, %v1758
      %v1760 = vpop.f32.mrf.mxu0
      %v1761 = vadd.f32 0.0, %v1760
      %1762 = vmatmul.bf16.gmra.mxu0 %v1605
      %v1763 = vpop.f32.mrf.mxu0
      %v1764 = vadd.f32 0.0, %v1763
      %v1765 = vpop.f32.mrf.mxu0
      %v1766 = vadd.f32 0.0, %v1765
      %1767 = vdwg.mxu0
      %1768 = vmatpush.bf16.msra.mxu0 %v1702
      %1769 = vmatpush.bf16.msra.mxu0 %v1701
      %1770 = vmatpush.bf16.msra.mxu0 %v1700
      %1771 = vmatpush.bf16.msra.mxu0 %v1699
      %1772 = vmatpush.bf16.msra.mxu0 %v1698
      %1773 = vmatpush.bf16.msra.mxu0 %v1697
      %1774 = vmatpush.bf16.msra.mxu0 %v1696
      %1775 = vmatpush.bf16.msra.mxu0 %v1695
      %1776 = vmatmul.bf16.gmra.mxu0 %v1592
      %v1777 = vpop.f32.mrf.mxu0
      %v1778 = vadd.f32 %v1729, %v1777
      %v1779 = vpop.f32.mrf.mxu0
      %v1780 = vadd.f32 %v1731, %v1779
      %1781 = vmatmul.bf16.gmra.mxu0 %v1594
      %v1782 = vpop.f32.mrf.mxu0
      %v1783 = vadd.f32 %v1734, %v1782
      %v1784 = vpop.f32.mrf.mxu0
      %v1785 = vadd.f32 %v1736, %v1784
      %1786 = vmatmul.bf16.gmra.mxu0 %v1596
      %v1787 = vpop.f32.mrf.mxu0
      %v1788 = vadd.f32 %v1739, %v1787
      %v1789 = vpop.f32.mrf.mxu0
      %v1790 = vadd.f32 %v1741, %v1789
      %1791 = vmatmul.bf16.gmra.mxu0 %v1598
      %v1792 = vpop.f32.mrf.mxu0
      %v1793 = vadd.f32 %v1744, %v1792
      %v1794 = vpop.f32.mrf.mxu0
      %v1795 = vadd.f32 %v1746, %v1794
      %1796 = vmatmul.bf16.gmra.mxu0 %v1600
      %v1797 = vpop.f32.mrf.mxu0
      %v1798 = vadd.f32 %v1749, %v1797
      %v1799 = vpop.f32.mrf.mxu0
      %v1800 = vadd.f32 %v1751, %v1799
      %1801 = vmatmul.bf16.gmra.mxu0 %v1602
      %v1802 = vpop.f32.mrf.mxu0
      %v1803 = vadd.f32 %v1754, %v1802
      %v1804 = vpop.f32.mrf.mxu0
      %v1805 = vadd.f32 %v1756, %v1804
      %1806 = vmatmul.bf16.gmra.mxu0 %v1604
      %v1807 = vpop.f32.mrf.mxu0
      %v1808 = vadd.f32 %v1759, %v1807
      %v1809 = vpop.f32.mrf.mxu0
      %v1810 = vadd.f32 %v1761, %v1809
      %1811 = vmatmul.bf16.gmra.mxu0 %v1606
      %v1812 = vpop.f32.mrf.mxu0
      %v1813 = vadd.f32 %v1764, %v1812
      %v1814 = vpop.f32.mrf.mxu0
      %v1815 = vadd.f32 %v1766, %v1814
      %1816 = vdwg.mxu0
      %v1817 = vadd.f32 %v1420, %v1778
      %v1818 = vadd.f32 %v1421, %v1780
      %v1819 = vadd.f32 %v1422, %v1783
      %v1820 = vadd.f32 %v1423, %v1785
      %v1821 = vadd.f32 %v1424, %v1788
      %v1822 = vadd.f32 %v1425, %v1790
      %v1823 = vadd.f32 %v1426, %v1793
      %v1824 = vadd.f32 %v1427, %v1795
      %v1825 = vadd.f32 %v1428, %v1798
      %v1826 = vadd.f32 %v1429, %v1800
      %v1827 = vadd.f32 %v1430, %v1803
      %v1828 = vadd.f32 %v1431, %v1805
      %v1829 = vadd.f32 %v1432, %v1808
      %v1830 = vadd.f32 %v1433, %v1810
      %v1831 = vadd.f32 %v1434, %v1813
      %v1832 = vadd.f32 %v1435, %v1815
      %s1833 = sadd.s32 %s1436, 144
      %s1834 = scalar_lea.vmem %s327, %s1833
      %v1835 = vld [vmem:[%s1834] sm:$0xff]
      %v1836 = vld [vmem:[%s1834 + $0x8] sm:$0xff]
      %v1837 = vld [vmem:[%s1834 + $0x10] sm:$0xff]
      %v1838 = vld [vmem:[%s1834 + $0x18] sm:$0xff]
      %v1839 = vld [vmem:[%s1834 + $0x20] sm:$0xff]
      %v1840 = vld [vmem:[%s1834 + $0x28] sm:$0xff]
      %v1841 = vld [vmem:[%s1834 + $0x30] sm:$0xff]
      %v1842 = vld [vmem:[%s1834 + $0x38] sm:$0xff]
      %v1843 = vld [vmem:[%s1834 + $0x40] sm:$0xff]
      %v1844 = vld [vmem:[%s1834 + $0x48] sm:$0xff]
      %v1845 = vld [vmem:[%s1834 + $0x50] sm:$0xff]
      %v1846 = vld [vmem:[%s1834 + $0x58] sm:$0xff]
      %v1847 = vld [vmem:[%s1834 + $0x60] sm:$0xff]
      %v1848 = vld [vmem:[%s1834 + $0x68] sm:$0xff]
      %v1849 = vld [vmem:[%s1834 + $0x70] sm:$0xff]
      %v1850 = vld [vmem:[%s1834 + $0x78] sm:$0xff]
      %s1851 = scalar_lea.vmem %s3, 3
      %v1852 = vld [vmem:[%s1851] sm:$0x1]
      %v1854 = vperm.slane %v1852, 0
      %v1856 = vmul.f32 %v1835, %v1854
      %v1857 = vmul.f32 %v1836, %v1854
      %v1858 = vmul.f32 %v1837, %v1854
      %v1859 = vmul.f32 %v1838, %v1854
      %v1860 = vmul.f32 %v1839, %v1854
      %v1861 = vmul.f32 %v1840, %v1854
      %v1862 = vmul.f32 %v1841, %v1854
      %v1863 = vmul.f32 %v1842, %v1854
      %v1864 = vmul.f32 %v1843, %v1854
      %v1865 = vmul.f32 %v1844, %v1854
      %v1866 = vmul.f32 %v1845, %v1854
      %v1867 = vmul.f32 %v1846, %v1854
      %v1868 = vmul.f32 %v1847, %v1854
      %v1869 = vmul.f32 %v1848, %v1854
      %v1870 = vmul.f32 %v1849, %v1854
      %v1871 = vmul.f32 %v1850, %v1854
      %v1872 = vadd.f32 %v1475, %v1856
      %v1873 = vadd.f32 %v1476, %v1857
      %v1874 = vadd.f32 %v1477, %v1858
      %v1875 = vadd.f32 %v1478, %v1859
      %v1876 = vadd.f32 %v1479, %v1860
      %v1877 = vadd.f32 %v1480, %v1861
      %v1878 = vadd.f32 %v1481, %v1862
      %v1879 = vadd.f32 %v1482, %v1863
      %v1880 = vadd.f32 %v1483, %v1864
      %v1881 = vadd.f32 %v1484, %v1865
      %v1882 = vadd.f32 %v1485, %v1866
      %v1883 = vadd.f32 %v1486, %v1867
      %v1884 = vadd.f32 %v1487, %v1868
      %v1885 = vadd.f32 %v1488, %v1869
      %v1886 = vadd.f32 %v1489, %v1870
      %v1887 = vadd.f32 %v1490, %v1871
      %v1888 = vld [vmem:[%s4] sm:$0x1]
      %v1890 = vperm.slane %v1888, 0
      %v1892 = vadd.f32 %v1817, %v1890
      %v1893 = vadd.f32 %v1818, %v1890
      %v1894 = vadd.f32 %v1819, %v1890
      %v1895 = vadd.f32 %v1820, %v1890
      %v1896 = vadd.f32 %v1821, %v1890
      %v1897 = vadd.f32 %v1822, %v1890
      %v1898 = vadd.f32 %v1823, %v1890
      %v1899 = vadd.f32 %v1824, %v1890
      %v1900 = vadd.f32 %v1825, %v1890
      %v1901 = vadd.f32 %v1826, %v1890
      %v1902 = vadd.f32 %v1827, %v1890
      %v1903 = vadd.f32 %v1828, %v1890
      %v1904 = vadd.f32 %v1829, %v1890
      %v1905 = vadd.f32 %v1830, %v1890
      %v1906 = vadd.f32 %v1831, %v1890
      %v1907 = vadd.f32 %v1832, %v1890
      %v1908 = vmul.f32 %v1892, 0.6
      %v1909 = vmul.f32 %v1893, 0.6
      %v1910 = vmul.f32 %v1894, 0.6
      %v1911 = vmul.f32 %v1895, 0.6
      %v1912 = vmul.f32 %v1896, 0.6
      %v1913 = vmul.f32 %v1897, 0.6
      %v1914 = vmul.f32 %v1898, 0.6
      %v1915 = vmul.f32 %v1899, 0.6
      %v1916 = vmul.f32 %v1900, 0.6
      %v1917 = vmul.f32 %v1901, 0.6
      %v1918 = vmul.f32 %v1902, 0.6
      %v1919 = vmul.f32 %v1903, 0.6
      %v1920 = vmul.f32 %v1904, 0.6
      %v1921 = vmul.f32 %v1905, 0.6
      %v1922 = vmul.f32 %v1906, 0.6
      %v1923 = vmul.f32 %v1907, 0.6
      %v1924 = vand.u32 2147483647, %v1892
      %v1925 = vand.u32 2147483647, %v1893
      %v1926 = vand.u32 2147483647, %v1894
      %v1927 = vand.u32 2147483647, %v1895
      %v1928 = vand.u32 2147483647, %v1896
      %v1929 = vand.u32 2147483647, %v1897
      %v1930 = vand.u32 2147483647, %v1898
      %v1931 = vand.u32 2147483647, %v1899
      %v1932 = vand.u32 2147483647, %v1900
      %v1933 = vand.u32 2147483647, %v1901
      %v1934 = vand.u32 2147483647, %v1902
      %v1935 = vand.u32 2147483647, %v1903
      %v1936 = vand.u32 2147483647, %v1904
      %v1937 = vand.u32 2147483647, %v1905
      %v1938 = vand.u32 2147483647, %v1906
      %v1939 = vand.u32 2147483647, %v1907
      %v1940 = vmul.f32 %v1924, 0.4
      %v1941 = vmul.f32 %v1925, 0.4
      %v1942 = vmul.f32 %v1926, 0.4
      %v1943 = vmul.f32 %v1927, 0.4
      %v1944 = vmul.f32 %v1928, 0.4
      %v1945 = vmul.f32 %v1929, 0.4
      %v1946 = vmul.f32 %v1930, 0.4
      %v1947 = vmul.f32 %v1931, 0.4
      %v1948 = vmul.f32 %v1932, 0.4
      %v1949 = vmul.f32 %v1933, 0.4
      %v1950 = vmul.f32 %v1934, 0.4
      %v1951 = vmul.f32 %v1935, 0.4
      %v1952 = vmul.f32 %v1936, 0.4
      %v1953 = vmul.f32 %v1937, 0.4
      %v1954 = vmul.f32 %v1938, 0.4
      %v1955 = vmul.f32 %v1939, 0.4
      %v1956 = vadd.f32 %v1908, %v1940
      %v1957 = vadd.f32 %v1909, %v1941
      %v1958 = vadd.f32 %v1910, %v1942
      %v1959 = vadd.f32 %v1911, %v1943
      %v1960 = vadd.f32 %v1912, %v1944
      %v1961 = vadd.f32 %v1913, %v1945
      %v1962 = vadd.f32 %v1914, %v1946
      %v1963 = vadd.f32 %v1915, %v1947
      %v1964 = vadd.f32 %v1916, %v1948
      %v1965 = vadd.f32 %v1917, %v1949
      %v1966 = vadd.f32 %v1918, %v1950
      %v1967 = vadd.f32 %v1919, %v1951
      %v1968 = vadd.f32 %v1920, %v1952
      %v1969 = vadd.f32 %v1921, %v1953
      %v1970 = vadd.f32 %v1922, %v1954
      %v1971 = vadd.f32 %v1923, %v1955
      %v1972 = vpack.c.bf16 %v1956, %v1956
      %v1973 = vpack.c.bf16 %v1957, %v1957
      %v1974 = vpack.c.bf16 %v1958, %v1958
      %v1975 = vpack.c.bf16 %v1959, %v1959
      %v1976 = vpack.c.bf16 %v1960, %v1960
      %v1977 = vpack.c.bf16 %v1961, %v1961
      %v1978 = vpack.c.bf16 %v1962, %v1962
      %v1979 = vpack.c.bf16 %v1963, %v1963
      %v1980 = vpack.c.bf16 %v1964, %v1964
      %v1981 = vpack.c.bf16 %v1965, %v1965
      %v1982 = vpack.c.bf16 %v1966, %v1966
      %v1983 = vpack.c.bf16 %v1967, %v1967
      %v1984 = vpack.c.bf16 %v1968, %v1968
      %v1985 = vpack.c.bf16 %v1969, %v1969
      %v1986 = vpack.c.bf16 %v1970, %v1970
      %v1987 = vpack.c.bf16 %v1971, %v1971
      %1988 = vst [vmem:[%s336] sm:$0xf] %v1972
      %1989 = vst [vmem:[%s336 + $0x4] sm:$0xf] %v1973
      %1990 = vst [vmem:[%s336 + $0x8] sm:$0xf] %v1974
      %1991 = vst [vmem:[%s336 + $0xc] sm:$0xf] %v1975
      %1992 = vst [vmem:[%s336 + $0x10] sm:$0xf] %v1976
      %1993 = vst [vmem:[%s336 + $0x14] sm:$0xf] %v1977
      %1994 = vst [vmem:[%s336 + $0x18] sm:$0xf] %v1978
      %1995 = vst [vmem:[%s336 + $0x1c] sm:$0xf] %v1979
      %1996 = vst [vmem:[%s336 + $0x20] sm:$0xf] %v1980
      %1997 = vst [vmem:[%s336 + $0x24] sm:$0xf] %v1981
      %1998 = vst [vmem:[%s336 + $0x28] sm:$0xf] %v1982
      %1999 = vst [vmem:[%s336 + $0x2c] sm:$0xf] %v1983
      %2000 = vst [vmem:[%s336 + $0x30] sm:$0xf] %v1984
      %2001 = vst [vmem:[%s336 + $0x34] sm:$0xf] %v1985
      %2002 = vst [vmem:[%s336 + $0x38] sm:$0xf] %v1986
      %2003 = vst [vmem:[%s336 + $0x3c] sm:$0xf] %v1987
      %vm2004 = vcmask 31744
      %v2005 = vsel %vm2004, %v1872, 0.0
      %2006 = vadd.xlane.f32.xlu0 %v2005
      %v2007 = vpop.xlane.xlu0 %2006
      %v2008 = vsel %vm2004, %v1873, 0.0
      %2009 = vadd.xlane.f32.xlu0 %v2008
      %v2010 = vpop.xlane.xlu0 %2009
      %v2011 = vsel %vm2004, %v1874, 0.0
      %2012 = vadd.xlane.f32.xlu0 %v2011
      %v2013 = vpop.xlane.xlu0 %2012
      %v2014 = vsel %vm2004, %v1875, 0.0
      %2015 = vadd.xlane.f32.xlu0 %v2014
      %v2016 = vpop.xlane.xlu0 %2015
      %v2017 = vsel %vm2004, %v1876, 0.0
      %2018 = vadd.xlane.f32.xlu0 %v2017
      %v2019 = vpop.xlane.xlu0 %2018
      %v2020 = vsel %vm2004, %v1877, 0.0
      %2021 = vadd.xlane.f32.xlu0 %v2020
      %v2022 = vpop.xlane.xlu0 %2021
      %v2023 = vsel %vm2004, %v1878, 0.0
      %2024 = vadd.xlane.f32.xlu0 %v2023
      %v2025 = vpop.xlane.xlu0 %2024
      %v2026 = vsel %vm2004, %v1879, 0.0
      %2027 = vadd.xlane.f32.xlu0 %v2026
      %v2028 = vpop.xlane.xlu0 %2027
      %v2029 = vsel %vm2004, %v1880, 0.0
      %2030 = vadd.xlane.f32.xlu0 %v2029
      %v2031 = vpop.xlane.xlu0 %2030
      %v2032 = vsel %vm2004, %v1881, 0.0
      %2033 = vadd.xlane.f32.xlu0 %v2032
      %v2034 = vpop.xlane.xlu0 %2033
      %v2035 = vsel %vm2004, %v1882, 0.0
      %2036 = vadd.xlane.f32.xlu0 %v2035
      %v2037 = vpop.xlane.xlu0 %2036
      %v2038 = vsel %vm2004, %v1883, 0.0
      %2039 = vadd.xlane.f32.xlu0 %v2038
      %v2040 = vpop.xlane.xlu0 %2039
      %v2041 = vsel %vm2004, %v1884, 0.0
      %2042 = vadd.xlane.f32.xlu0 %v2041
      %v2043 = vpop.xlane.xlu0 %2042
      %v2044 = vsel %vm2004, %v1885, 0.0
      %2045 = vadd.xlane.f32.xlu0 %v2044
      %v2046 = vpop.xlane.xlu0 %2045
      %v2047 = vsel %vm2004, %v1886, 0.0
      %2048 = vadd.xlane.f32.xlu0 %v2047
      %v2049 = vpop.xlane.xlu0 %2048
      %v2050 = vsel %vm2004, %v1887, 0.0
      %2051 = vadd.xlane.f32.xlu0 %v2050
      %v2052 = vpop.xlane.xlu0 %2051
      %v2053 = vld [vmem:[#allocation2] sm:$0x1]
      %v2055 = vperm.slane %v2053, 0
      %v2057 = vadd.f32 %v2007, %v2055
      %v2058 = vadd.f32 %v2010, %v2055
      %v2059 = vadd.f32 %v2013, %v2055
      %v2060 = vadd.f32 %v2016, %v2055
      %v2061 = vadd.f32 %v2019, %v2055
      %v2062 = vadd.f32 %v2022, %v2055
      %v2063 = vadd.f32 %v2025, %v2055
      %v2064 = vadd.f32 %v2028, %v2055
      %v2065 = vadd.f32 %v2031, %v2055
      %v2066 = vadd.f32 %v2034, %v2055
      %v2067 = vadd.f32 %v2037, %v2055
      %v2068 = vadd.f32 %v2040, %v2055
      %v2069 = vadd.f32 %v2043, %v2055
      %v2070 = vadd.f32 %v2046, %v2055
      %v2071 = vadd.f32 %v2049, %v2055
      %v2072 = vadd.f32 %v2052, %v2055
      %vm2073 = vcmask 7168
      %2074 = vst.msk [vmem:[%s346] sm:$0xff] %vm2073, %v2057
      %2075 = vst.msk [vmem:[%s346 + $0x8] sm:$0xff] %vm2073, %v2058
      %2076 = vst.msk [vmem:[%s346 + $0x10] sm:$0xff] %vm2073, %v2059
      %2077 = vst.msk [vmem:[%s346 + $0x18] sm:$0xff] %vm2073, %v2060
      %2078 = vst.msk [vmem:[%s346 + $0x20] sm:$0xff] %vm2073, %v2061
      %2079 = vst.msk [vmem:[%s346 + $0x28] sm:$0xff] %vm2073, %v2062
      %2080 = vst.msk [vmem:[%s346 + $0x30] sm:$0xff] %vm2073, %v2063
      %2081 = vst.msk [vmem:[%s346 + $0x38] sm:$0xff] %vm2073, %v2064
      %2082 = vst.msk [vmem:[%s346 + $0x40] sm:$0xff] %vm2073, %v2065
      %2083 = vst.msk [vmem:[%s346 + $0x48] sm:$0xff] %vm2073, %v2066
      %2084 = vst.msk [vmem:[%s346 + $0x50] sm:$0xff] %vm2073, %v2067
      %2085 = vst.msk [vmem:[%s346 + $0x58] sm:$0xff] %vm2073, %v2068
      %2086 = vst.msk [vmem:[%s346 + $0x60] sm:$0xff] %vm2073, %v2069
      %2087 = vst.msk [vmem:[%s346 + $0x68] sm:$0xff] %vm2073, %v2070
      %2088 = vst.msk [vmem:[%s346 + $0x70] sm:$0xff] %vm2073, %v2071
      %2089 = vst.msk [vmem:[%s346 + $0x78] sm:$0xff] %vm2073, %v2072
      %s2090 = smul.u32 16, %s26
      %p2091 = scmp.lt.s32.totalorder %s25, 1
      %s2092 = scalar_select %p2091, %s25, 1
      %p2093 = scmp.lt.s32.totalorder %s2090, 15
      %s2094 = scalar_select %p2093, %s2090, 15
      %s2095 = smul.addr %s2092, 16
      %s2096 = sadd.s32 %s2094, %s2095
      %s2097 = smul.addr %s2096, 4
      %s2098 = scalar_lea.vmem %s6, %s2097
      %s2099 = smul.u32 16, %s26
      %p2100 = scmp.lt.s32.totalorder %s25, 1
      %s2101 = scalar_select %p2100, %s25, 1
      %p2102 = scmp.lt.s32.totalorder %s2099, 15
      %s2103 = scalar_select %p2102, %s2099, 15
      %s2104 = smul.addr %s2101, 16
      %s2105 = sadd.s32 %s2103, %s2104
      %s2106 = smul.addr %s2105, 8
      %s2107 = scalar_lea.vmem %s7, %s2106
      // Predicated region
      $region45: #{texd_forward.6} parent=43 // pred_check
        %p2108 = pneg %p189
      $region46: #{texd_forward.6} parent=43 // pred_check_branch
        %2110 = sbr.rel (%p2108) target = $region48
      $region47: #{texd_forward.6} parent=43 // pred_region
        %s2111 = smul.u32 16, %s26
      $region48: #{texd_forward.6} parent=43 // pred_fallthru
        _
      // Predicated region
      $region49: #{texd_forward.6} parent=43 // pred_check
        %p2112 = pneg %p217
      $region50: #{texd_forward.6} parent=43 // pred_check_branch
        %2114 = sbr.rel (%p2112) target = $region52
      $region51: #{texd_forward.6} parent=43 // pred_region
        %s2115 = smul.u32 16, %s26
      $region52: #{texd_forward.6} parent=43 // pred_fallthru
        _
    $region44: #{texd_forward.6} parent=5 // pred_fallthru
      _
    %p2116 = scmp.le.s32.totalorder 2, %s16
    // Predicated region
    $region53: #{texd_forward.6} parent=5 // pred_check
      %p2117 = pneg %p2116
    $region54: #{texd_forward.6} parent=5 // pred_check_branch
      %2119 = sbr.rel (%p2117) target = $region56
    $region55: #{texd_forward.6} parent=5 // pred_region
      %s2120 = ssub.s32 %s16, 2
      // Predicated region
      $region57: #{texd_forward.6} parent=55 // pred_check
        %p2121 = pneg %p195
      $region58: #{texd_forward.6} parent=55 // pred_check_branch
        %2123 = sbr.rel (%p2121) target = $region60
      $region59: #{texd_forward.6} parent=55 // pred_region
        %s2124 = smul.u32 16, %s28
        %p2125 = scmp.lt.s32.totalorder %s27, 1
        %s2126 = scalar_select %p2125, %s27, 1
        %p2127 = scmp.lt.s32.totalorder %s2124, 15
        %s2128 = scalar_select %p2127, %s2124, 15
        %s2129 = smul.addr %s2126, 16
        %s2130 = sadd.s32 %s2128, %s2129
        %s2131 = smul.addr %s2130, 4
        %s2132 = scalar_lea.vmem %s6, %s2131
      $region60: #{texd_forward.6} parent=55 // pred_fallthru
        _
      // Predicated region
      $region61: #{texd_forward.6} parent=55 // pred_check
        %p2133 = pneg %p223
      $region62: #{texd_forward.6} parent=55 // pred_check_branch
        %2135 = sbr.rel (%p2133) target = $region64
      $region63: #{texd_forward.6} parent=55 // pred_region
        %s2136 = smul.u32 16, %s28
        %p2137 = scmp.lt.s32.totalorder %s27, 1
        %s2138 = scalar_select %p2137, %s27, 1
        %p2139 = scmp.lt.s32.totalorder %s2136, 15
        %s2140 = scalar_select %p2139, %s2136, 15
        %s2141 = smul.addr %s2138, 16
        %s2142 = sadd.s32 %s2140, %s2141
        %s2143 = smul.addr %s2142, 8
        %s2144 = scalar_lea.vmem %s7, %s2143
      $region64: #{texd_forward.6} parent=55 // pred_fallthru
        _
    $region56: #{texd_forward.6} parent=5 // pred_fallthru
      _
  $region6: #{texd_forward.6} parent=0 // loop_footer
    %s20 = sadd.s32 1, %s16
  $region7: #{texd_forward.6} parent=0 // loop_footer_branch
    %15 = sbr.rel target = $region3
  $region8: #{texd_forward.6} parent=0 // loop_exit
    _

// kernel: texd_forward.7
$region0: #{texd_forward.7}
  #allocation0 [shape = 'u32[]', space=smem, size = 0x4, offset = 0x4, fixed_abs, tag = 'smem constant byte address 0x4 - core index']
  #allocation1 [shape = 'u32[72,128]{1,0:T(1,128)}', space=vmem, size = 0x9000, scoped, tag = 'internal scratch']
  #allocation2 [shape = 'f32[1,1]{1,0:T(1,128)S(1)}', space=vmem, size = 0x200, scoped, tag = 'scoped memory for texd_forward.7']
  %s0 = inlined_call_operand.vmem [shape: bf16[2,2,5,16,512], index: 0, kind: input, shape index: {}]
  %s1 = inlined_call_operand.vmem [shape: f32[2,2,5,16,4], index: 1, kind: input, shape index: {}]
  %s2 = inlined_call_operand.vmem [shape: bf16[4,512,128], index: 2, kind: input, shape index: {}]
  %s3 = inlined_call_operand.vmem [shape: f32[4,1,4], index: 3, kind: input, shape index: {}]
  %s4 = inlined_call_operand.vmem [shape: f32[1,128], index: 4, kind: input, shape index: {}]
  %s5 = inlined_call_operand.<no memory space> [shape: f32[1,1], index: 5, kind: input, shape index: {}]
  %s6 = inlined_call_operand.vmem [shape: bf16[2,64,128], index: 6, kind: output, shape index: {0}]
  %s7 = inlined_call_operand.vmem [shape: f32[2,64,1], index: 7, kind: output, shape index: {1}]
  %8 = xla_tuple %s6, %s7
  %s9 = sld [smem:[#allocation0]]
  $region65: #{texd_forward.7} parent=0
    _
  %s11 = ssub.s32 1, %s9
  %s12 = scalar_select 0, %s11, %s9
  %v13 = vstv %s5
  %14 = vst [vmem:[#allocation2] sm:$0x1] %v13
  loop: start=0, step=1, limit=4
  $region2: #{texd_forward.7} parent=0 // loop_pre_header
    _
  $region3: #{texd_forward.7} parent=0 // loop_header
    %s16 = sphi 0, %s20
    %p17 = scmp.ge.s32.totalorder %s16, 4
    %s23 = sphi 0, %s35
    %s24 = sphi 0, %s31
    %s25 = sphi 0, %s23
    %s26 = sphi 0, %s24
    %s27 = sphi 0, %s25
    %s28 = sphi 0, %s26
    %s38 = sphi 0, %s40
    %s41 = sphi 0, %s38
    %s42 = sphi 0, %s41
    %s58 = sphi 0, %s42
    %s64 = sphi 0, %s66
    %s67 = sphi 0, %s64
    %s68 = sphi 0, %s67
    %s84 = sphi 0, %s68
    %s88 = sphi 0, %s88
    %s90 = sphi 0, %s88
    %s91 = sphi 0, %s90
    %s105 = sphi 0, %s91
    %s109 = sphi 0, %s109
    %s111 = sphi 0, %s109
    %s112 = sphi 0, %s111
    %s126 = sphi 0, %s112
    %s130 = sphi 0, %s130
    %s132 = sphi 0, %s130
    %s133 = sphi 0, %s132
    %s147 = sphi 0, %s133
    %s151 = sphi 0, %s151
    %s153 = sphi 0, %s151
    %s154 = sphi 0, %s153
    %s168 = sphi 0, %s154
    %s176 = sphi 0, %s178
    %s179 = sphi 0, %s176
    %s180 = sphi 0, %s179
    %s196 = sphi 0, %s180
    %s204 = sphi 0, %s206
    %s207 = sphi 0, %s204
    %s208 = sphi 0, %s207
    %s224 = sphi 0, %s208
  $region4: #{texd_forward.7} parent=0 // loop_header_branch
    %19 = sbr.rel (%p17) target = $region8
  $region5: #{texd_forward.7} parent=0 // loop_body
    %s21 = ssub.s32 %s16, 1
    %s22 = ssub.s32 %s16, 2
    %s29 = sadd.s32 1, %s24
    %p30 = scmp.ge.s32.totalorder %s29, 1
    %s31 = scalar_select %p30, 0, %s29
    %s32 = sadd.s32 1, %s23
    %s33 = scalar_select %p30, %s32, %s23
    %p34 = scmp.ge.s32.totalorder %s33, 2
    %s35 = scalar_select %p34, 0, %s33
    %s36 = ssub.s32 %s23, %s35
    %p37 = scmp.eq.s32.totalorder %s36, 0
    %s39 = sadd.s32 %s38, 1
    %s40 = scalar_select %p37, %s38, %s39
    %p43 = pneg %p37
    %p44 = scmp.eq.s32.totalorder %s16, 1
    %p45 = por %p43, %p44
    %p46 = scmp.ne.s32.totalorder %s38, %s41
    %p47 = scmp.eq.s32.totalorder %s16, 0
    %p48 = por %p46, %p47
    %p49 = scmp.ne.s32.totalorder %s38, %s41
    %p50 = scmp.eq.s32.totalorder %s21, 1
    %p51 = por %p49, %p50
    %p52 = scmp.ne.s32.totalorder %s41, %s42
    %p53 = scmp.eq.s32.totalorder %s21, 0
    %p54 = por %p52, %p53
    %p55 = scmp.ne.s32.totalorder %s41, %s42
    %p56 = scmp.eq.s32.totalorder %s22, 1
    %p57 = por %p55, %p56
    %p59 = scmp.ne.s32.totalorder %s42, %s58
    %p60 = scmp.eq.s32.totalorder %s22, 0
    %p61 = por %p59, %p60
    %s62 = ssub.s32 %s23, %s35
    %p63 = scmp.eq.s32.totalorder %s62, 0
    %s65 = sadd.s32 %s64, 1
    %s66 = scalar_select %p63, %s64, %s65
    %p69 = pneg %p63
    %p70 = scmp.eq.s32.totalorder %s16, 1
    %p71 = por %p69, %p70
    %p72 = scmp.ne.s32.totalorder %s64, %s67
    %p73 = scmp.eq.s32.totalorder %s16, 0
    %p74 = por %p72, %p73
    %p75 = scmp.ne.s32.totalorder %s64, %s67
    %p76 = scmp.eq.s32.totalorder %s21, 1
    %p77 = por %p75, %p76
    %p78 = scmp.ne.s32.totalorder %s67, %s68
    %p79 = scmp.eq.s32.totalorder %s21, 0
    %p80 = por %p78, %p79
    %p81 = scmp.ne.s32.totalorder %s67, %s68
    %p82 = scmp.eq.s32.totalorder %s22, 1
    %p83 = por %p81, %p82
    %p85 = scmp.ne.s32.totalorder %s68, %s84
    %p86 = scmp.eq.s32.totalorder %s22, 0
    %p87 = por %p85, %p86
    %s89 = sadd.s32 %s88, 1
    %p92 = scmp.eq.s32.totalorder %s16, 1
    %p93 = scmp.ne.s32.totalorder %s88, %s90
    %p94 = scmp.eq.s32.totalorder %s16, 0
    %p95 = por %p93, %p94
    %p96 = scmp.ne.s32.totalorder %s88, %s90
    %p97 = scmp.eq.s32.totalorder %s21, 1
    %p98 = por %p96, %p97
    %p99 = scmp.ne.s32.totalorder %s90, %s91
    %p100 = scmp.eq.s32.totalorder %s21, 0
    %p101 = por %p99, %p100
    %p102 = scmp.ne.s32.totalorder %s90, %s91
    %p103 = scmp.eq.s32.totalorder %s22, 1
    %p104 = por %p102, %p103
    %p106 = scmp.ne.s32.totalorder %s91, %s105
    %p107 = scmp.eq.s32.totalorder %s22, 0
    %p108 = por %p106, %p107
    %s110 = sadd.s32 %s109, 1
    %p113 = scmp.eq.s32.totalorder %s16, 1
    %p114 = scmp.ne.s32.totalorder %s109, %s111
    %p115 = scmp.eq.s32.totalorder %s16, 0
    %p116 = por %p114, %p115
    %p117 = scmp.ne.s32.totalorder %s109, %s111
    %p118 = scmp.eq.s32.totalorder %s21, 1
    %p119 = por %p117, %p118
    %p120 = scmp.ne.s32.totalorder %s111, %s112
    %p121 = scmp.eq.s32.totalorder %s21, 0
    %p122 = por %p120, %p121
    %p123 = scmp.ne.s32.totalorder %s111, %s112
    %p124 = scmp.eq.s32.totalorder %s22, 1
    %p125 = por %p123, %p124
    %p127 = scmp.ne.s32.totalorder %s112, %s126
    %p128 = scmp.eq.s32.totalorder %s22, 0
    %p129 = por %p127, %p128
    %s131 = sadd.s32 %s130, 1
    %p134 = scmp.eq.s32.totalorder %s16, 1
    %p135 = scmp.ne.s32.totalorder %s130, %s132
    %p136 = scmp.eq.s32.totalorder %s16, 0
    %p137 = por %p135, %p136
    %p138 = scmp.ne.s32.totalorder %s130, %s132
    %p139 = scmp.eq.s32.totalorder %s21, 1
    %p140 = por %p138, %p139
    %p141 = scmp.ne.s32.totalorder %s132, %s133
    %p142 = scmp.eq.s32.totalorder %s21, 0
    %p143 = por %p141, %p142
    %p144 = scmp.ne.s32.totalorder %s132, %s133
    %p145 = scmp.eq.s32.totalorder %s22, 1
    %p146 = por %p144, %p145
    %p148 = scmp.ne.s32.totalorder %s133, %s147
    %p149 = scmp.eq.s32.totalorder %s22, 0
    %p150 = por %p148, %p149
    %s152 = sadd.s32 %s151, 1
    %p155 = scmp.eq.s32.totalorder %s16, 1
    %p156 = scmp.ne.s32.totalorder %s151, %s153
    %p157 = scmp.eq.s32.totalorder %s16, 0
    %p158 = por %p156, %p157
    %p159 = scmp.ne.s32.totalorder %s151, %s153
    %p160 = scmp.eq.s32.totalorder %s21, 1
    %p161 = por %p159, %p160
    %p162 = scmp.ne.s32.totalorder %s153, %s154
    %p163 = scmp.eq.s32.totalorder %s21, 0
    %p164 = por %p162, %p163
    %p165 = scmp.ne.s32.totalorder %s153, %s154
    %p166 = scmp.eq.s32.totalorder %s22, 1
    %p167 = por %p165, %p166
    %p169 = scmp.ne.s32.totalorder %s154, %s168
    %p170 = scmp.eq.s32.totalorder %s22, 0
    %p171 = por %p169, %p170
    %s172 = ssub.s32 %s23, %s35
    %s173 = ssub.s32 %s24, %s31
    %s174 = sor.u32 %s172, %s173
    %p175 = scmp.eq.s32.totalorder %s174, 0
    %s177 = sadd.s32 %s176, 1
    %s178 = scalar_select %p175, %s176, %s177
    %p181 = pneg %p175
    %p182 = scmp.eq.s32.totalorder %s16, 1
    %p183 = por %p181, %p182
    %p184 = scmp.ne.s32.totalorder %s176, %s179
    %p185 = scmp.eq.s32.totalorder %s16, 0
    %p186 = por %p184, %p185
    %p187 = scmp.ne.s32.totalorder %s176, %s179
    %p188 = scmp.eq.s32.totalorder %s21, 1
    %p189 = por %p187, %p188
    %p190 = scmp.ne.s32.totalorder %s179, %s180
    %p191 = scmp.eq.s32.totalorder %s21, 0
    %p192 = por %p190, %p191
    %p193 = scmp.ne.s32.totalorder %s179, %s180
    %p194 = scmp.eq.s32.totalorder %s22, 1
    %p195 = por %p193, %p194
    %p197 = scmp.ne.s32.totalorder %s180, %s196
    %p198 = scmp.eq.s32.totalorder %s22, 0
    %p199 = por %p197, %p198
    %s200 = ssub.s32 %s23, %s35
    %s201 = ssub.s32 %s24, %s31
    %s202 = sor.u32 %s200, %s201
    %p203 = scmp.eq.s32.totalorder %s202, 0
    %s205 = sadd.s32 %s204, 1
    %s206 = scalar_select %p203, %s204, %s205
    %p209 = pneg %p203
    %p210 = scmp.eq.s32.totalorder %s16, 1
    %p211 = por %p209, %p210
    %p212 = scmp.ne.s32.totalorder %s204, %s207
    %p213 = scmp.eq.s32.totalorder %s16, 0
    %p214 = por %p212, %p213
    %p215 = scmp.ne.s32.totalorder %s204, %s207
    %p216 = scmp.eq.s32.totalorder %s21, 1
    %p217 = por %p215, %p216
    %p218 = scmp.ne.s32.totalorder %s207, %s208
    %p219 = scmp.eq.s32.totalorder %s21, 0
    %p220 = por %p218, %p219
    %p221 = scmp.ne.s32.totalorder %s207, %s208
    %p222 = scmp.eq.s32.totalorder %s22, 1
    %p223 = por %p221, %p222
    %p225 = scmp.ne.s32.totalorder %s208, %s224
    %p226 = scmp.eq.s32.totalorder %s22, 0
    %p227 = por %p225, %p226
    %p228 = scmp.le.s32.totalorder 1, %s16
    %p229 = scmp.lt.s32.totalorder %s16, 3
    %p230 = pnand %p228, %p229
    %p231 = pneg %p230
    // Predicated region
    $region9: #{texd_forward.7} parent=5 // pred_check
      _
    $region10: #{texd_forward.7} parent=5 // pred_check_branch
      %233 = sbr.rel (%p230) target = $region12
    $region11: #{texd_forward.7} parent=5 // pred_region
      %s234 = ssub.s32 %s16, 1
      // Predicated region
      $region13: #{texd_forward.7} parent=11 // pred_check
        %p235 = pneg %p101
      $region14: #{texd_forward.7} parent=11 // pred_check_branch
        %237 = sbr.rel (%p235) target = $region16
      $region15: #{texd_forward.7} parent=11 // pred_region
        _
      $region16: #{texd_forward.7} parent=11 // pred_fallthru
        _
      // Predicated region
      $region17: #{texd_forward.7} parent=11 // pred_check
        %p238 = pneg %p122
      $region18: #{texd_forward.7} parent=11 // pred_check_branch
        %240 = sbr.rel (%p238) target = $region20
      $region19: #{texd_forward.7} parent=11 // pred_region
        _
      $region20: #{texd_forward.7} parent=11 // pred_fallthru
        _
      // Predicated region
      $region21: #{texd_forward.7} parent=11 // pred_check
        %p241 = pneg %p143
      $region22: #{texd_forward.7} parent=11 // pred_check_branch
        %243 = sbr.rel (%p241) target = $region24
      $region23: #{texd_forward.7} parent=11 // pred_region
        _
      $region24: #{texd_forward.7} parent=11 // pred_fallthru
        _
      // Predicated region
      $region25: #{texd_forward.7} parent=11 // pred_check
        %p244 = pneg %p164
      $region26: #{texd_forward.7} parent=11 // pred_check_branch
        %246 = sbr.rel (%p244) target = $region28
      $region27: #{texd_forward.7} parent=11 // pred_region
        _
      $region28: #{texd_forward.7} parent=11 // pred_fallthru
        _
    $region12: #{texd_forward.7} parent=5 // pred_fallthru
      _
    %p247 = scmp.lt.s32.totalorder %s16, 2
    // Predicated region
    $region29: #{texd_forward.7} parent=5 // pred_check
      %p248 = pneg %p247
    $region30: #{texd_forward.7} parent=5 // pred_check_branch
      %250 = sbr.rel (%p248) target = $region32
    $region31: #{texd_forward.7} parent=5 // pred_region
      // Predicated region
      $region33: #{texd_forward.7} parent=31 // pred_check
        %p251 = pneg %p48
      $region34: #{texd_forward.7} parent=31 // pred_check_branch
        %253 = sbr.rel (%p251) target = $region36
      $region35: #{texd_forward.7} parent=31 // pred_region
        %p254 = scmp.lt.s32.totalorder %s23, 1
        %s255 = scalar_select %p254, %s23, 1
        %s256 = smul.addr %s255, 80
        %s257 = smul.addr %s256, 4
        %s258 = scalar_lea.vmem %s0, %s257
      $region36: #{texd_forward.7} parent=31 // pred_fallthru
        _
      // Predicated region
      $region37: #{texd_forward.7} parent=31 // pred_check
        %p259 = pneg %p74
      $region38: #{texd_forward.7} parent=31 // pred_check_branch
        %261 = sbr.rel (%p259) target = $region40
      $region39: #{texd_forward.7} parent=31 // pred_region
        %p262 = scmp.lt.s32.totalorder %s23, 1
        %s263 = scalar_select %p262, %s23, 1
        %s264 = smul.addr %s263, 20
        %s265 = smul.addr %s264, 8
        %s266 = scalar_lea.vmem %s1, %s265
      $region40: #{texd_forward.7} parent=31 // pred_fallthru
        _
    $region32: #{texd_forward.7} parent=5 // pred_fallthru
      _
    %p267 = scmp.le.s32.totalorder 1, %s16
    %p268 = scmp.lt.s32.totalorder %s16, 3
    %p269 = pnand %p267, %p268
    %p270 = pneg %p269
    // Predicated region
    $region41: #{texd_forward.7} parent=5 // pred_check
      _
    $region42: #{texd_forward.7} parent=5 // pred_check_branch
      %272 = sbr.rel (%p269) target = $region44
    $region43: #{texd_forward.7} parent=5 // pred_region
      %s273 = ssub.s32 %s16, 1
      %p274 = scmp.lt.s32.totalorder %s25, 1
      %s275 = scalar_select %p274, %s25, 1
      %s276 = smul.addr %s275, 80
      %s277 = smul.addr %s276, 4
      %s278 = scalar_lea.vmem %s0, %s277
      %p279 = pneg %p54
      %p280 = pneg %p51
      %p281 = scmp.lt.s32.totalorder %s25, 1
      %s282 = scalar_select %p281, %s25, 1
      %s283 = smul.addr %s282, 20
      %s284 = smul.addr %s283, 8
      %s285 = scalar_lea.vmem %s1, %s284
      %p286 = pneg %p80
      %p287 = pneg %p77
      %p288 = pneg %p101
      %p289 = pneg %p98
      %p290 = pneg %p122
      %p291 = pneg %p119
      %p292 = pneg %p143
      %p293 = pneg %p140
      %p294 = pneg %p164
      %p295 = pneg %p161
      %p296 = pneg %p192
      %p297 = pneg %p189
      %s298 = smul.u32 8, %s26
      %p299 = scmp.lt.s32.totalorder %s25, 1
      %s300 = scalar_select %p299, %s25, 1
      %p301 = scmp.lt.s32.totalorder %s298, 7
      %s302 = scalar_select %p301, %s298, 7
      %s303 = smul.addr %s300, 8
      %s304 = sadd.s32 %s302, %s303
      %s305 = smul.addr %s304, 4
      %s306 = scalar_lea.vmem %s6, %s305
      %p307 = pneg %p220
      %p308 = pneg %p217
      %s309 = smul.u32 8, %s26
      %p310 = scmp.lt.s32.totalorder %s25, 1
      %s311 = scalar_select %p310, %s25, 1
      %p312 = scmp.lt.s32.totalorder %s309, 7
      %s313 = scalar_select %p312, %s309, 7
      %s314 = smul.addr %s311, 8
      %s315 = sadd.s32 %s313, %s314
      %s316 = smul.addr %s315, 8
      %s317 = scalar_lea.vmem %s7, %s316
      %p318 = scmp.lt.s32.totalorder %s25, 1
      %s319 = scalar_select %p318, %s25, 1
      %s320 = smul.addr %s319, 80
      %s321 = smul.addr %s320, 4
      %s322 = scalar_lea.vmem %s0, %s321
      %p323 = scmp.lt.s32.totalorder %s25, 1
      %s324 = scalar_select %p323, %s25, 1
      %s325 = smul.addr %s324, 20
      %s326 = smul.addr %s325, 8
      %s327 = scalar_lea.vmem %s1, %s326
      %s328 = smul.u32 8, %s26
      %p329 = scmp.lt.s32.totalorder %s25, 1
      %s330 = scalar_select %p329, %s25, 1
      %p331 = scmp.lt.s32.totalorder %s328, 7
      %s332 = scalar_select %p331, %s328, 7
      %s333 = smul.addr %s330, 8
      %s334 = sadd.s32 %s332, %s333
      %s335 = smul.addr %s334, 4
      %s336 = scalar_lea.vmem %s6, %s335
      %s337 = smul.u32 8, %s26
      %s338 = smul.u32 8, %s26
      %p339 = scmp.lt.s32.totalorder %s25, 1
      %s340 = scalar_select %p339, %s25, 1
      %p341 = scmp.lt.s32.totalorder %s338, 7
      %s342 = scalar_select %p341, %s338, 7
      %s343 = smul.addr %s340, 8
      %s344 = sadd.s32 %s342, %s343
      %s345 = smul.addr %s344, 8
      %s346 = scalar_lea.vmem %s7, %s345
      %s347 = smul.u32 8, %s26
      %s348 = smul.u32 %s26, 4
      %s349 = smul.u32 %s348, 8
      %s350 = smul.addr %s349, 4
      %s351 = scalar_lea.vmem %s322, %s350
      %v352 = vld [vmem:[%s351] sm:$0xff]
      %v353 = vld [vmem:[%s351 + $0x8] sm:$0xff]
      %v354 = vld [vmem:[%s351 + $0x10] sm:$0xff]
      %v355 = vld [vmem:[%s351 + $0x18] sm:$0xff]
      %v356 = vld [vmem:[%s351 + $0x20] sm:$0xff]
      %v357 = vld [vmem:[%s351 + $0x28] sm:$0xff]
      %v358 = vld [vmem:[%s351 + $0x30] sm:$0xff]
      %v359 = vld [vmem:[%s351 + $0x38] sm:$0xff]
      %v360 = vld [vmem:[%s351 + $0x40] sm:$0xff]
      %v361 = vld [vmem:[%s351 + $0x48] sm:$0xff]
      %v362 = vld [vmem:[%s351 + $0x50] sm:$0xff]
      %v363 = vld [vmem:[%s351 + $0x58] sm:$0xff]
      %v364 = vld [vmem:[%s351 + $0x60] sm:$0xff]
      %v365 = vld [vmem:[%s351 + $0x68] sm:$0xff]
      %v366 = vld [vmem:[%s351 + $0x70] sm:$0xff]
      %v367 = vld [vmem:[%s351 + $0x78] sm:$0xff]
      %v368 = vld [vmem:[%s2] sm:$0xf]
      %v369 = vld [vmem:[%s2 + $0x4] sm:$0xf]
      %v370 = vld [vmem:[%s2 + $0x8] sm:$0xf]
      %v371 = vld [vmem:[%s2 + $0xc] sm:$0xf]
      %v372 = vld [vmem:[%s2 + $0x10] sm:$0xf]
      %v373 = vld [vmem:[%s2 + $0x14] sm:$0xf]
      %v374 = vld [vmem:[%s2 + $0x18] sm:$0xf]
      %v375 = vld [vmem:[%s2 + $0x1c] sm:$0xf]
      %v376 = vld [vmem:[%s2 + $0x20] sm:$0xf]
      %v377 = vld [vmem:[%s2 + $0x24] sm:$0xf]
      %v378 = vld [vmem:[%s2 + $0x28] sm:$0xf]
      %v379 = vld [vmem:[%s2 + $0x2c] sm:$0xf]
      %v380 = vld [vmem:[%s2 + $0x30] sm:$0xf]
      %v381 = vld [vmem:[%s2 + $0x34] sm:$0xf]
      %v382 = vld [vmem:[%s2 + $0x38] sm:$0xf]
      %v383 = vld [vmem:[%s2 + $0x3c] sm:$0xf]
      %v384 = vld [vmem:[%s2 + $0x40] sm:$0xf]
      %v385 = vld [vmem:[%s2 + $0x44] sm:$0xf]
      %v386 = vld [vmem:[%s2 + $0x48] sm:$0xf]
      %v387 = vld [vmem:[%s2 + $0x4c] sm:$0xf]
      %v388 = vld [vmem:[%s2 + $0x50] sm:$0xf]
      %v389 = vld [vmem:[%s2 + $0x54] sm:$0xf]
      %v390 = vld [vmem:[%s2 + $0x58] sm:$0xf]
      %v391 = vld [vmem:[%s2 + $0x5c] sm:$0xf]
      %v392 = vld [vmem:[%s2 + $0x60] sm:$0xf]
      %v393 = vld [vmem:[%s2 + $0x64] sm:$0xf]
      %v394 = vld [vmem:[%s2 + $0x68] sm:$0xf]
      %v395 = vld [vmem:[%s2 + $0x6c] sm:$0xf]
      %v396 = vld [vmem:[%s2 + $0x70] sm:$0xf]
      %v397 = vld [vmem:[%s2 + $0x74] sm:$0xf]
      %v398 = vld [vmem:[%s2 + $0x78] sm:$0xf]
      %v399 = vld [vmem:[%s2 + $0x7c] sm:$0xf]
      %v400 = vld [vmem:[%s2 + $0x80] sm:$0xf]
      %v401 = vld [vmem:[%s2 + $0x84] sm:$0xf]
      %v402 = vld [vmem:[%s2 + $0x88] sm:$0xf]
      %v403 = vld [vmem:[%s2 + $0x8c] sm:$0xf]
      %v404 = vld [vmem:[%s2 + $0x90] sm:$0xf]
      %v405 = vld [vmem:[%s2 + $0x94] sm:$0xf]
      %v406 = vld [vmem:[%s2 + $0x98] sm:$0xf]
      %v407 = vld [vmem:[%s2 + $0x9c] sm:$0xf]
      %v408 = vld [vmem:[%s2 + $0xa0] sm:$0xf]
      %v409 = vld [vmem:[%s2 + $0xa4] sm:$0xf]
      %v410 = vld [vmem:[%s2 + $0xa8] sm:$0xf]
      %v411 = vld [vmem:[%s2 + $0xac] sm:$0xf]
      %v412 = vld [vmem:[%s2 + $0xb0] sm:$0xf]
      %v413 = vld [vmem:[%s2 + $0xb4] sm:$0xf]
      %v414 = vld [vmem:[%s2 + $0xb8] sm:$0xf]
      %v415 = vld [vmem:[%s2 + $0xbc] sm:$0xf]
      %v416 = vld [vmem:[%s2 + $0xc0] sm:$0xf]
      %v417 = vld [vmem:[%s2 + $0xc4] sm:$0xf]
      %v418 = vld [vmem:[%s2 + $0xc8] sm:$0xf]
      %v419 = vld [vmem:[%s2 + $0xcc] sm:$0xf]
      %v420 = vld [vmem:[%s2 + $0xd0] sm:$0xf]
      %v421 = vld [vmem:[%s2 + $0xd4] sm:$0xf]
      %v422 = vld [vmem:[%s2 + $0xd8] sm:$0xf]
      %v423 = vld [vmem:[%s2 + $0xdc] sm:$0xf]
      %v424 = vld [vmem:[%s2 + $0xe0] sm:$0xf]
      %v425 = vld [vmem:[%s2 + $0xe4] sm:$0xf]
      %v426 = vld [vmem:[%s2 + $0xe8] sm:$0xf]
      %v427 = vld [vmem:[%s2 + $0xec] sm:$0xf]
      %v428 = vld [vmem:[%s2 + $0xf0] sm:$0xf]
      %v429 = vld [vmem:[%s2 + $0xf4] sm:$0xf]
      %v430 = vld [vmem:[%s2 + $0xf8] sm:$0xf]
      %v431 = vld [vmem:[%s2 + $0xfc] sm:$0xf]
      %s432 = smul.u32 %s348, 16
      %s433 = scalar_lea.vmem %s327, %s432
      %v434 = vld [vmem:[%s433] sm:$0xff]
      %v435 = vld [vmem:[%s433 + $0x8] sm:$0xff]
      %v436 = vld [vmem:[%s433 + $0x10] sm:$0xff]
      %v437 = vld [vmem:[%s433 + $0x18] sm:$0xff]
      %v438 = vld [vmem:[%s433 + $0x20] sm:$0xff]
      %v439 = vld [vmem:[%s433 + $0x28] sm:$0xff]
      %v440 = vld [vmem:[%s433 + $0x30] sm:$0xff]
      %v441 = vld [vmem:[%s433 + $0x38] sm:$0xff]
      %v442 = vld [vmem:[%s3] sm:$0x1]
      %v444 = vperm.slane %v442, 0
      %v446 = vmul.f32 %v434, %v444
      %v447 = vmul.f32 %v435, %v444
      %v448 = vmul.f32 %v436, %v444
      %v449 = vmul.f32 %v437, %v444
      %v450 = vmul.f32 %v438, %v444
      %v451 = vmul.f32 %v439, %v444
      %v452 = vmul.f32 %v440, %v444
      %v453 = vmul.f32 %v441, %v444
      %s454 = sadd.s32 %s349, 40
      %s455 = smul.addr %s454, 4
      %s456 = scalar_lea.vmem %s322, %s455
      %v457 = vld [vmem:[%s456] sm:$0xff]
      %v458 = vld [vmem:[%s456 + $0x8] sm:$0xff]
      %v459 = vld [vmem:[%s456 + $0x10] sm:$0xff]
      %v460 = vld [vmem:[%s456 + $0x18] sm:$0xff]
      %v461 = vld [vmem:[%s456 + $0x20] sm:$0xff]
      %v462 = vld [vmem:[%s456 + $0x28] sm:$0xff]
      %v463 = vld [vmem:[%s456 + $0x30] sm:$0xff]
      %v464 = vld [vmem:[%s456 + $0x38] sm:$0xff]
      %v465 = vld [vmem:[%s456 + $0x40] sm:$0xff]
      %v466 = vld [vmem:[%s456 + $0x48] sm:$0xff]
      %v467 = vld [vmem:[%s456 + $0x50] sm:$0xff]
      %v468 = vld [vmem:[%s456 + $0x58] sm:$0xff]
      %v469 = vld [vmem:[%s456 + $0x60] sm:$0xff]
      %v470 = vld [vmem:[%s456 + $0x68] sm:$0xff]
      %v471 = vld [vmem:[%s456 + $0x70] sm:$0xff]
      %v472 = vld [vmem:[%s456 + $0x78] sm:$0xff]
      %s473 = scalar_lea.vmem %s2, 256
      %v474 = vld [vmem:[%s473] sm:$0xf]
      %v475 = vld [vmem:[%s473 + $0x4] sm:$0xf]
      %v476 = vld [vmem:[%s473 + $0x8] sm:$0xf]
      %v477 = vld [vmem:[%s473 + $0xc] sm:$0xf]
      %v478 = vld [vmem:[%s473 + $0x10] sm:$0xf]
      %v479 = vld [vmem:[%s473 + $0x14] sm:$0xf]
      %v480 = vld [vmem:[%s473 + $0x18] sm:$0xf]
      %v481 = vld [vmem:[%s473 + $0x1c] sm:$0xf]
      %v482 = vld [vmem:[%s473 + $0x20] sm:$0xf]
      %v483 = vld [vmem:[%s473 + $0x24] sm:$0xf]
      %v484 = vld [vmem:[%s473 + $0x28] sm:$0xf]
      %v485 = vld [vmem:[%s473 + $0x2c] sm:$0xf]
      %v486 = vld [vmem:[%s473 + $0x30] sm:$0xf]
      %v487 = vld [vmem:[%s473 + $0x34] sm:$0xf]
      %v488 = vld [vmem:[%s473 + $0x38] sm:$0xf]
      %v489 = vld [vmem:[%s473 + $0x3c] sm:$0xf]
      %v490 = vld [vmem:[%s473 + $0x40] sm:$0xf]
      %v491 = vld [vmem:[%s473 + $0x44] sm:$0xf]
      %v492 = vld [vmem:[%s473 + $0x48] sm:$0xf]
      %v493 = vld [vmem:[%s473 + $0x4c] sm:$0xf]
      %v494 = vld [vmem:[%s473 + $0x50] sm:$0xf]
      %v495 = vld [vmem:[%s473 + $0x54] sm:$0xf]
      %v496 = vld [vmem:[%s473 + $0x58] sm:$0xf]
      %v497 = vld [vmem:[%s473 + $0x5c] sm:$0xf]
      %v498 = vld [vmem:[%s473 + $0x60] sm:$0xf]
      %v499 = vld [vmem:[%s473 + $0x64] sm:$0xf]
      %v500 = vld [vmem:[%s473 + $0x68] sm:$0xf]
      %v501 = vld [vmem:[%s473 + $0x6c] sm:$0xf]
      %v502 = vld [vmem:[%s473 + $0x70] sm:$0xf]
      %v503 = vld [vmem:[%s473 + $0x74] sm:$0xf]
      %v504 = vld [vmem:[%s473 + $0x78] sm:$0xf]
      %v505 = vld [vmem:[%s473 + $0x7c] sm:$0xf]
      %v506 = vld [vmem:[%s473 + $0x80] sm:$0xf]
      %v507 = vld [vmem:[%s473 + $0x84] sm:$0xf]
      %v508 = vld [vmem:[%s473 + $0x88] sm:$0xf]
      %v509 = vld [vmem:[%s473 + $0x8c] sm:$0xf]
      %v510 = vld [vmem:[%s473 + $0x90] sm:$0xf]
      %v511 = vld [vmem:[%s473 + $0x94] sm:$0xf]
      %v512 = vld [vmem:[%s473 + $0x98] sm:$0xf]
      %v513 = vld [vmem:[%s473 + $0x9c] sm:$0xf]
      %v514 = vld [vmem:[%s473 + $0xa0] sm:$0xf]
      %v515 = vld [vmem:[%s473 + $0xa4] sm:$0xf]
      %v516 = vld [vmem:[%s473 + $0xa8] sm:$0xf]
      %v517 = vld [vmem:[%s473 + $0xac] sm:$0xf]
      %v518 = vld [vmem:[%s473 + $0xb0] sm:$0xf]
      %v519 = vld [vmem:[%s473 + $0xb4] sm:$0xf]
      %v520 = vld [vmem:[%s473 + $0xb8] sm:$0xf]
      %v521 = vld [vmem:[%s473 + $0xbc] sm:$0xf]
      %v522 = vld [vmem:[%s473 + $0xc0] sm:$0xf]
      %v523 = vld [vmem:[%s473 + $0xc4] sm:$0xf]
      %v524 = vld [vmem:[%s473 + $0xc8] sm:$0xf]
      %v525 = vld [vmem:[%s473 + $0xcc] sm:$0xf]
      %v526 = vld [vmem:[%s473 + $0xd0] sm:$0xf]
      %v527 = vld [vmem:[%s473 + $0xd4] sm:$0xf]
      %v528 = vld [vmem:[%s473 + $0xd8] sm:$0xf]
      %v529 = vld [vmem:[%s473 + $0xdc] sm:$0xf]
      %v530 = vld [vmem:[%s473 + $0xe0] sm:$0xf]
      %v531 = vld [vmem:[%s473 + $0xe4] sm:$0xf]
      %v532 = vld [vmem:[%s473 + $0xe8] sm:$0xf]
      %v533 = vld [vmem:[%s473 + $0xec] sm:$0xf]
      %v534 = vld [vmem:[%s473 + $0xf0] sm:$0xf]
      %v535 = vld [vmem:[%s473 + $0xf4] sm:$0xf]
      %v536 = vld [vmem:[%s473 + $0xf8] sm:$0xf]
      %v537 = vld [vmem:[%s473 + $0xfc] sm:$0xf]
      %v554 = vunpack.c.l.b16 %v457
      %v555 = vunpack.c.h.b16 %v457
      %v556 = vunpack.c.l.b16 %v458
      %v557 = vunpack.c.h.b16 %v458
      %v558 = vunpack.c.l.b16 %v459
      %v559 = vunpack.c.h.b16 %v459
      %v560 = vunpack.c.l.b16 %v460
      %v561 = vunpack.c.h.b16 %v460
      %v562 = vunpack.c.l.b16 %v461
      %v563 = vunpack.c.h.b16 %v461
      %v564 = vunpack.c.l.b16 %v462
      %v565 = vunpack.c.h.b16 %v462
      %v566 = vunpack.c.l.b16 %v463
      %v567 = vunpack.c.h.b16 %v463
      %v568 = vunpack.c.l.b16 %v464
      %v569 = vunpack.c.h.b16 %v464
      %v570 = vunpack.c.l.b16 %v465
      %v571 = vunpack.c.h.b16 %v465
      %v572 = vunpack.c.l.b16 %v466
      %v573 = vunpack.c.h.b16 %v466
      %v574 = vunpack.c.l.b16 %v467
      %v575 = vunpack.c.h.b16 %v467
      %v576 = vunpack.c.l.b16 %v468
      %v577 = vunpack.c.h.b16 %v468
      %v578 = vunpack.c.l.b16 %v469
      %v579 = vunpack.c.h.b16 %v469
      %v580 = vunpack.c.l.b16 %v470
      %v581 = vunpack.c.h.b16 %v470
      %v582 = vunpack.c.l.b16 %v471
      %v583 = vunpack.c.h.b16 %v471
      %v584 = vunpack.c.l.b16 %v472
      %v585 = vunpack.c.h.b16 %v472
      %v586 = vpack.c.b16 %v558, %v554
      %v587 = vpack.c.b16 %v559, %v555
      %v588 = vpack.c.b16 %v560, %v556
      %v589 = vpack.c.b16 %v561, %v557
      %v590 = vpack.c.b16 %v566, %v562
      %v591 = vpack.c.b16 %v567, %v563
      %v592 = vpack.c.b16 %v568, %v564
      %v593 = vpack.c.b16 %v569, %v565
      %v594 = vpack.c.b16 %v574, %v570
      %v595 = vpack.c.b16 %v575, %v571
      %v596 = vpack.c.b16 %v576, %v572
      %v597 = vpack.c.b16 %v577, %v573
      %v598 = vpack.c.b16 %v582, %v578
      %v599 = vpack.c.b16 %v583, %v579
      %v600 = vpack.c.b16 %v584, %v580
      %v601 = vpack.c.b16 %v585, %v581
      %v682 = vunpack.c.l.b16 %v474
      %v683 = vunpack.c.l.b16 %v475
      %v684 = vunpack.c.l.b16 %v476
      %v685 = vunpack.c.l.b16 %v477
      %v686 = vunpack.c.l.b16 %v478
      %v687 = vunpack.c.l.b16 %v479
      %v688 = vunpack.c.l.b16 %v480
      %v689 = vunpack.c.l.b16 %v481
      %v690 = vunpack.c.l.b16 %v482
      %v691 = vunpack.c.l.b16 %v483
      %v692 = vunpack.c.l.b16 %v484
      %v693 = vunpack.c.l.b16 %v485
      %v694 = vunpack.c.l.b16 %v486
      %v695 = vunpack.c.l.b16 %v487
      %v696 = vunpack.c.l.b16 %v488
      %v697 = vunpack.c.l.b16 %v489
      %v698 = vunpack.c.l.b16 %v490
      %v699 = vunpack.c.l.b16 %v491
      %v700 = vunpack.c.l.b16 %v492
      %v701 = vunpack.c.l.b16 %v493
      %v702 = vunpack.c.l.b16 %v494
      %v703 = vunpack.c.l.b16 %v495
      %v704 = vunpack.c.l.b16 %v496
      %v705 = vunpack.c.l.b16 %v497
      %v706 = vunpack.c.l.b16 %v498
      %v707 = vunpack.c.l.b16 %v499
      %v708 = vunpack.c.l.b16 %v500
      %v709 = vunpack.c.l.b16 %v501
      %v710 = vunpack.c.l.b16 %v502
      %v711 = vunpack.c.l.b16 %v503
      %v712 = vunpack.c.l.b16 %v504
      %v713 = vunpack.c.l.b16 %v505
      %v714 = vunpack.c.l.b16 %v506
      %v715 = vunpack.c.l.b16 %v507
      %v716 = vunpack.c.l.b16 %v508
      %v717 = vunpack.c.l.b16 %v509
      %v718 = vunpack.c.l.b16 %v510
      %v719 = vunpack.c.l.b16 %v511
      %v720 = vunpack.c.l.b16 %v512
      %v721 = vunpack.c.l.b16 %v513
      %v722 = vunpack.c.l.b16 %v514
      %v723 = vunpack.c.l.b16 %v515
      %v724 = vunpack.c.l.b16 %v516
      %v725 = vunpack.c.l.b16 %v517
      %v726 = vunpack.c.l.b16 %v518
      %v727 = vunpack.c.l.b16 %v519
      %v728 = vunpack.c.l.b16 %v520
      %v729 = vunpack.c.l.b16 %v521
      %v730 = vunpack.c.l.b16 %v522
      %v731 = vunpack.c.l.b16 %v523
      %v732 = vunpack.c.l.b16 %v524
      %v733 = vunpack.c.l.b16 %v525
      %v734 = vunpack.c.l.b16 %v526
      %v735 = vunpack.c.l.b16 %v527
      %v736 = vunpack.c.l.b16 %v528
      %v737 = vunpack.c.l.b16 %v529
      %v738 = vunpack.c.l.b16 %v530
      %v739 = vunpack.c.l.b16 %v531
      %v740 = vunpack.c.l.b16 %v532
      %v741 = vunpack.c.l.b16 %v533
      %v742 = vunpack.c.l.b16 %v534
      %v743 = vunpack.c.l.b16 %v535
      %v744 = vunpack.c.l.b16 %v536
      %v745 = vunpack.c.l.b16 %v537
      %v746 = vpack.c.b16 %v683, %v682
      %v747 = vpack.c.b16 %v685, %v684
      %v748 = vpack.c.b16 %v687, %v686
      %v749 = vpack.c.b16 %v689, %v688
      %v750 = vpack.c.b16 %v691, %v690
      %v751 = vpack.c.b16 %v693, %v692
      %v752 = vpack.c.b16 %v695, %v694
      %v753 = vpack.c.b16 %v697, %v696
      %v754 = vpack.c.b16 %v699, %v698
      %v755 = vpack.c.b16 %v701, %v700
      %v756 = vpack.c.b16 %v703, %v702
      %v757 = vpack.c.b16 %v705, %v704
      %v758 = vpack.c.b16 %v707, %v706
      %v759 = vpack.c.b16 %v709, %v708
      %v760 = vpack.c.b16 %v711, %v710
      %v761 = vpack.c.b16 %v713, %v712
      %v762 = vpack.c.b16 %v715, %v714
      %v763 = vpack.c.b16 %v717, %v716
      %v764 = vpack.c.b16 %v719, %v718
      %v765 = vpack.c.b16 %v721, %v720
      %v766 = vpack.c.b16 %v723, %v722
      %v767 = vpack.c.b16 %v725, %v724
      %v768 = vpack.c.b16 %v727, %v726
      %v769 = vpack.c.b16 %v729, %v728
      %v770 = vpack.c.b16 %v731, %v730
      %v771 = vpack.c.b16 %v733, %v732
      %v772 = vpack.c.b16 %v735, %v734
      %v773 = vpack.c.b16 %v737, %v736
      %v774 = vpack.c.b16 %v739, %v738
      %v775 = vpack.c.b16 %v741, %v740
      %v776 = vpack.c.b16 %v743, %v742
      %v777 = vpack.c.b16 %v745, %v744
      %810 = vmatpush.bf16.msra.mxu0 %v753
      %811 = vmatpush.bf16.msra.mxu0 %v752
      %812 = vmatpush.bf16.msra.mxu0 %v751
      %813 = vmatpush.bf16.msra.mxu0 %v750
      %814 = vmatpush.bf16.msra.mxu0 %v749
      %815 = vmatpush.bf16.msra.mxu0 %v748
      %816 = vmatpush.bf16.msra.mxu0 %v747
      %817 = vmatpush.bf16.msra.mxu0 %v746
      %818 = vmatmul.bf16.gmra.mxu0 %v586
      %v819 = vpop.f32.mrf.mxu0
      %v820 = vadd.f32 0.0, %v819
      %v821 = vpop.f32.mrf.mxu0
      %v822 = vadd.f32 0.0, %v821
      %823 = vmatmul.bf16.gmra.mxu0 %v590
      %v824 = vpop.f32.mrf.mxu0
      %v825 = vadd.f32 0.0, %v824
      %v826 = vpop.f32.mrf.mxu0
      %v827 = vadd.f32 0.0, %v826
      %828 = vmatmul.bf16.gmra.mxu0 %v594
      %v829 = vpop.f32.mrf.mxu0
      %v830 = vadd.f32 0.0, %v829
      %v831 = vpop.f32.mrf.mxu0
      %v832 = vadd.f32 0.0, %v831
      %833 = vmatmul.bf16.gmra.mxu0 %v598
      %v834 = vpop.f32.mrf.mxu0
      %v835 = vadd.f32 0.0, %v834
      %v836 = vpop.f32.mrf.mxu0
      %v837 = vadd.f32 0.0, %v836
      %838 = vdwg.mxu0
      %839 = vmatpush.bf16.msra.mxu0 %v761
      %840 = vmatpush.bf16.msra.mxu0 %v760
      %841 = vmatpush.bf16.msra.mxu0 %v759
      %842 = vmatpush.bf16.msra.mxu0 %v758
      %843 = vmatpush.bf16.msra.mxu0 %v757
      %844 = vmatpush.bf16.msra.mxu0 %v756
      %845 = vmatpush.bf16.msra.mxu0 %v755
      %846 = vmatpush.bf16.msra.mxu0 %v754
      %847 = vmatmul.bf16.gmra.mxu0 %v587
      %v848 = vpop.f32.mrf.mxu0
      %v849 = vadd.f32 %v820, %v848
      %v850 = vpop.f32.mrf.mxu0
      %v851 = vadd.f32 %v822, %v850
      %852 = vmatmul.bf16.gmra.mxu0 %v591
      %v853 = vpop.f32.mrf.mxu0
      %v854 = vadd.f32 %v825, %v853
      %v855 = vpop.f32.mrf.mxu0
      %v856 = vadd.f32 %v827, %v855
      %857 = vmatmul.bf16.gmra.mxu0 %v595
      %v858 = vpop.f32.mrf.mxu0
      %v859 = vadd.f32 %v830, %v858
      %v860 = vpop.f32.mrf.mxu0
      %v861 = vadd.f32 %v832, %v860
      %862 = vmatmul.bf16.gmra.mxu0 %v599
      %v863 = vpop.f32.mrf.mxu0
      %v864 = vadd.f32 %v835, %v863
      %v865 = vpop.f32.mrf.mxu0
      %v866 = vadd.f32 %v837, %v865
      %867 = vdwg.mxu0
      %868 = vmatpush.bf16.msra.mxu0 %v769
      %869 = vmatpush.bf16.msra.mxu0 %v768
      %870 = vmatpush.bf16.msra.mxu0 %v767
      %871 = vmatpush.bf16.msra.mxu0 %v766
      %872 = vmatpush.bf16.msra.mxu0 %v765
      %873 = vmatpush.bf16.msra.mxu0 %v764
      %874 = vmatpush.bf16.msra.mxu0 %v763
      %875 = vmatpush.bf16.msra.mxu0 %v762
      %876 = vmatmul.bf16.gmra.mxu0 %v588
      %v877 = vpop.f32.mrf.mxu0
      %v878 = vadd.f32 %v849, %v877
      %v879 = vpop.f32.mrf.mxu0
      %v880 = vadd.f32 %v851, %v879
      %881 = vmatmul.bf16.gmra.mxu0 %v592
      %v882 = vpop.f32.mrf.mxu0
      %v883 = vadd.f32 %v854, %v882
      %v884 = vpop.f32.mrf.mxu0
      %v885 = vadd.f32 %v856, %v884
      %886 = vmatmul.bf16.gmra.mxu0 %v596
      %v887 = vpop.f32.mrf.mxu0
      %v888 = vadd.f32 %v859, %v887
      %v889 = vpop.f32.mrf.mxu0
      %v890 = vadd.f32 %v861, %v889
      %891 = vmatmul.bf16.gmra.mxu0 %v600
      %v892 = vpop.f32.mrf.mxu0
      %v893 = vadd.f32 %v864, %v892
      %v894 = vpop.f32.mrf.mxu0
      %v895 = vadd.f32 %v866, %v894
      %896 = vdwg.mxu0
      %897 = vmatpush.bf16.msra.mxu0 %v777
      %898 = vmatpush.bf16.msra.mxu0 %v776
      %899 = vmatpush.bf16.msra.mxu0 %v775
      %900 = vmatpush.bf16.msra.mxu0 %v774
      %901 = vmatpush.bf16.msra.mxu0 %v773
      %902 = vmatpush.bf16.msra.mxu0 %v772
      %903 = vmatpush.bf16.msra.mxu0 %v771
      %904 = vmatpush.bf16.msra.mxu0 %v770
      %905 = vmatmul.bf16.gmra.mxu0 %v589
      %v906 = vpop.f32.mrf.mxu0
      %v907 = vadd.f32 %v878, %v906
      %v908 = vpop.f32.mrf.mxu0
      %v909 = vadd.f32 %v880, %v908
      %910 = vmatmul.bf16.gmra.mxu0 %v593
      %v911 = vpop.f32.mrf.mxu0
      %v912 = vadd.f32 %v883, %v911
      %v913 = vpop.f32.mrf.mxu0
      %v914 = vadd.f32 %v885, %v913
      %915 = vmatmul.bf16.gmra.mxu0 %v597
      %v916 = vpop.f32.mrf.mxu0
      %v917 = vadd.f32 %v888, %v916
      %v918 = vpop.f32.mrf.mxu0
      %v919 = vadd.f32 %v890, %v918
      %920 = vmatmul.bf16.gmra.mxu0 %v601
      %v921 = vpop.f32.mrf.mxu0
      %v922 = vadd.f32 %v893, %v921
      %v923 = vpop.f32.mrf.mxu0
      %v924 = vadd.f32 %v895, %v923
      %925 = vdwg.mxu0
      %v942 = vunpack.c.l.b16 %v352
      %v943 = vunpack.c.h.b16 %v352
      %v944 = vunpack.c.l.b16 %v353
      %v945 = vunpack.c.h.b16 %v353
      %v946 = vunpack.c.l.b16 %v354
      %v947 = vunpack.c.h.b16 %v354
      %v948 = vunpack.c.l.b16 %v355
      %v949 = vunpack.c.h.b16 %v355
      %v950 = vunpack.c.l.b16 %v356
      %v951 = vunpack.c.h.b16 %v356
      %v952 = vunpack.c.l.b16 %v357
      %v953 = vunpack.c.h.b16 %v357
      %v954 = vunpack.c.l.b16 %v358
      %v955 = vunpack.c.h.b16 %v358
      %v956 = vunpack.c.l.b16 %v359
      %v957 = vunpack.c.h.b16 %v359
      %v958 = vunpack.c.l.b16 %v360
      %v959 = vunpack.c.h.b16 %v360
      %v960 = vunpack.c.l.b16 %v361
      %v961 = vunpack.c.h.b16 %v361
      %v962 = vunpack.c.l.b16 %v362
      %v963 = vunpack.c.h.b16 %v362
      %v964 = vunpack.c.l.b16 %v363
      %v965 = vunpack.c.h.b16 %v363
      %v966 = vunpack.c.l.b16 %v364
      %v967 = vunpack.c.h.b16 %v364
      %v968 = vunpack.c.l.b16 %v365
      %v969 = vunpack.c.h.b16 %v365
      %v970 = vunpack.c.l.b16 %v366
      %v971 = vunpack.c.h.b16 %v366
      %v972 = vunpack.c.l.b16 %v367
      %v973 = vunpack.c.h.b16 %v367
      %v974 = vpack.c.b16 %v946, %v942
      %v975 = vpack.c.b16 %v947, %v943
      %v976 = vpack.c.b16 %v948, %v944
      %v977 = vpack.c.b16 %v949, %v945
      %v978 = vpack.c.b16 %v954, %v950
      %v979 = vpack.c.b16 %v955, %v951
      %v980 = vpack.c.b16 %v956, %v952
      %v981 = vpack.c.b16 %v957, %v953
      %v982 = vpack.c.b16 %v962, %v958
      %v983 = vpack.c.b16 %v963, %v959
      %v984 = vpack.c.b16 %v964, %v960
      %v985 = vpack.c.b16 %v965, %v961
      %v986 = vpack.c.b16 %v970, %v966
      %v987 = vpack.c.b16 %v971, %v967
      %v988 = vpack.c.b16 %v972, %v968
      %v989 = vpack.c.b16 %v973, %v969
      %v1070 = vunpack.c.l.b16 %v368
      %v1071 = vunpack.c.l.b16 %v369
      %v1072 = vunpack.c.l.b16 %v370
      %v1073 = vunpack.c.l.b16 %v371
      %v1074 = vunpack.c.l.b16 %v372
      %v1075 = vunpack.c.l.b16 %v373
      %v1076 = vunpack.c.l.b16 %v374
      %v1077 = vunpack.c.l.b16 %v375
      %v1078 = vunpack.c.l.b16 %v376
      %v1079 = vunpack.c.l.b16 %v377
      %v1080 = vunpack.c.l.b16 %v378
      %v1081 = vunpack.c.l.b16 %v379
      %v1082 = vunpack.c.l.b16 %v380
      %v1083 = vunpack.c.l.b16 %v381
      %v1084 = vunpack.c.l.b16 %v382
      %v1085 = vunpack.c.l.b16 %v383
      %v1086 = vunpack.c.l.b16 %v384
      %v1087 = vunpack.c.l.b16 %v385
      %v1088 = vunpack.c.l.b16 %v386
      %v1089 = vunpack.c.l.b16 %v387
      %v1090 = vunpack.c.l.b16 %v388
      %v1091 = vunpack.c.l.b16 %v389
      %v1092 = vunpack.c.l.b16 %v390
      %v1093 = vunpack.c.l.b16 %v391
      %v1094 = vunpack.c.l.b16 %v392
      %v1095 = vunpack.c.l.b16 %v393
      %v1096 = vunpack.c.l.b16 %v394
      %v1097 = vunpack.c.l.b16 %v395
      %v1098 = vunpack.c.l.b16 %v396
      %v1099 = vunpack.c.l.b16 %v397
      %v1100 = vunpack.c.l.b16 %v398
      %v1101 = vunpack.c.l.b16 %v399
      %v1102 = vunpack.c.l.b16 %v400
      %v1103 = vunpack.c.l.b16 %v401
      %v1104 = vunpack.c.l.b16 %v402
      %v1105 = vunpack.c.l.b16 %v403
      %v1106 = vunpack.c.l.b16 %v404
      %v1107 = vunpack.c.l.b16 %v405
      %v1108 = vunpack.c.l.b16 %v406
      %v1109 = vunpack.c.l.b16 %v407
      %v1110 = vunpack.c.l.b16 %v408
      %v1111 = vunpack.c.l.b16 %v409
      %v1112 = vunpack.c.l.b16 %v410
      %v1113 = vunpack.c.l.b16 %v411
      %v1114 = vunpack.c.l.b16 %v412
      %v1115 = vunpack.c.l.b16 %v413
      %v1116 = vunpack.c.l.b16 %v414
      %v1117 = vunpack.c.l.b16 %v415
      %v1118 = vunpack.c.l.b16 %v416
      %v1119 = vunpack.c.l.b16 %v417
      %v1120 = vunpack.c.l.b16 %v418
      %v1121 = vunpack.c.l.b16 %v419
      %v1122 = vunpack.c.l.b16 %v420
      %v1123 = vunpack.c.l.b16 %v421
      %v1124 = vunpack.c.l.b16 %v422
      %v1125 = vunpack.c.l.b16 %v423
      %v1126 = vunpack.c.l.b16 %v424
      %v1127 = vunpack.c.l.b16 %v425
      %v1128 = vunpack.c.l.b16 %v426
      %v1129 = vunpack.c.l.b16 %v427
      %v1130 = vunpack.c.l.b16 %v428
      %v1131 = vunpack.c.l.b16 %v429
      %v1132 = vunpack.c.l.b16 %v430
      %v1133 = vunpack.c.l.b16 %v431
      %v1134 = vpack.c.b16 %v1071, %v1070
      %v1135 = vpack.c.b16 %v1073, %v1072
      %v1136 = vpack.c.b16 %v1075, %v1074
      %v1137 = vpack.c.b16 %v1077, %v1076
      %v1138 = vpack.c.b16 %v1079, %v1078
      %v1139 = vpack.c.b16 %v1081, %v1080
      %v1140 = vpack.c.b16 %v1083, %v1082
      %v1141 = vpack.c.b16 %v1085, %v1084
      %v1142 = vpack.c.b16 %v1087, %v1086
      %v1143 = vpack.c.b16 %v1089, %v1088
      %v1144 = vpack.c.b16 %v1091, %v1090
      %v1145 = vpack.c.b16 %v1093, %v1092
      %v1146 = vpack.c.b16 %v1095, %v1094
      %v1147 = vpack.c.b16 %v1097, %v1096
      %v1148 = vpack.c.b16 %v1099, %v1098
      %v1149 = vpack.c.b16 %v1101, %v1100
      %v1150 = vpack.c.b16 %v1103, %v1102
      %v1151 = vpack.c.b16 %v1105, %v1104
      %v1152 = vpack.c.b16 %v1107, %v1106
      %v1153 = vpack.c.b16 %v1109, %v1108
      %v1154 = vpack.c.b16 %v1111, %v1110
      %v1155 = vpack.c.b16 %v1113, %v1112
      %v1156 = vpack.c.b16 %v1115, %v1114
      %v1157 = vpack.c.b16 %v1117, %v1116
      %v1158 = vpack.c.b16 %v1119, %v1118
      %v1159 = vpack.c.b16 %v1121, %v1120
      %v1160 = vpack.c.b16 %v1123, %v1122
      %v1161 = vpack.c.b16 %v1125, %v1124
      %v1162 = vpack.c.b16 %v1127, %v1126
      %v1163 = vpack.c.b16 %v1129, %v1128
      %v1164 = vpack.c.b16 %v1131, %v1130
      %v1165 = vpack.c.b16 %v1133, %v1132
      %1198 = vmatpush.bf16.msra.mxu0 %v1141
      %1199 = vmatpush.bf16.msra.mxu0 %v1140
      %1200 = vmatpush.bf16.msra.mxu0 %v1139
      %1201 = vmatpush.bf16.msra.mxu0 %v1138
      %1202 = vmatpush.bf16.msra.mxu0 %v1137
      %1203 = vmatpush.bf16.msra.mxu0 %v1136
      %1204 = vmatpush.bf16.msra.mxu0 %v1135
      %1205 = vmatpush.bf16.msra.mxu0 %v1134
      %1206 = vmatmul.bf16.gmra.mxu0 %v974
      %v1207 = vpop.f32.mrf.mxu0
      %v1208 = vadd.f32 %v907, %v1207
      %v1209 = vpop.f32.mrf.mxu0
      %v1210 = vadd.f32 %v909, %v1209
      %1211 = vmatmul.bf16.gmra.mxu0 %v978
      %v1212 = vpop.f32.mrf.mxu0
      %v1213 = vadd.f32 %v912, %v1212
      %v1214 = vpop.f32.mrf.mxu0
      %v1215 = vadd.f32 %v914, %v1214
      %1216 = vmatmul.bf16.gmra.mxu0 %v982
      %v1217 = vpop.f32.mrf.mxu0
      %v1218 = vadd.f32 %v917, %v1217
      %v1219 = vpop.f32.mrf.mxu0
      %v1220 = vadd.f32 %v919, %v1219
      %1221 = vmatmul.bf16.gmra.mxu0 %v986
      %v1222 = vpop.f32.mrf.mxu0
      %v1223 = vadd.f32 %v922, %v1222
      %v1224 = vpop.f32.mrf.mxu0
      %v1225 = vadd.f32 %v924, %v1224
      %1226 = vdwg.mxu0
      %1227 = vmatpush.bf16.msra.mxu0 %v1149
      %1228 = vmatpush.bf16.msra.mxu0 %v1148
      %1229 = vmatpush.bf16.msra.mxu0 %v1147
      %1230 = vmatpush.bf16.msra.mxu0 %v1146
      %1231 = vmatpush.bf16.msra.mxu0 %v1145
      %1232 = vmatpush.bf16.msra.mxu0 %v1144
      %1233 = vmatpush.bf16.msra.mxu0 %v1143
      %1234 = vmatpush.bf16.msra.mxu0 %v1142
      %1235 = vmatmul.bf16.gmra.mxu0 %v975
      %v1236 = vpop.f32.mrf.mxu0
      %v1237 = vadd.f32 %v1208, %v1236
      %v1238 = vpop.f32.mrf.mxu0
      %v1239 = vadd.f32 %v1210, %v1238
      %1240 = vmatmul.bf16.gmra.mxu0 %v979
      %v1241 = vpop.f32.mrf.mxu0
      %v1242 = vadd.f32 %v1213, %v1241
      %v1243 = vpop.f32.mrf.mxu0
      %v1244 = vadd.f32 %v1215, %v1243
      %1245 = vmatmul.bf16.gmra.mxu0 %v983
      %v1246 = vpop.f32.mrf.mxu0
      %v1247 = vadd.f32 %v1218, %v1246
      %v1248 = vpop.f32.mrf.mxu0
      %v1249 = vadd.f32 %v1220, %v1248
      %1250 = vmatmul.bf16.gmra.mxu0 %v987
      %v1251 = vpop.f32.mrf.mxu0
      %v1252 = vadd.f32 %v1223, %v1251
      %v1253 = vpop.f32.mrf.mxu0
      %v1254 = vadd.f32 %v1225, %v1253
      %1255 = vdwg.mxu0
      %1256 = vmatpush.bf16.msra.mxu0 %v1157
      %1257 = vmatpush.bf16.msra.mxu0 %v1156
      %1258 = vmatpush.bf16.msra.mxu0 %v1155
      %1259 = vmatpush.bf16.msra.mxu0 %v1154
      %1260 = vmatpush.bf16.msra.mxu0 %v1153
      %1261 = vmatpush.bf16.msra.mxu0 %v1152
      %1262 = vmatpush.bf16.msra.mxu0 %v1151
      %1263 = vmatpush.bf16.msra.mxu0 %v1150
      %1264 = vmatmul.bf16.gmra.mxu0 %v976
      %v1265 = vpop.f32.mrf.mxu0
      %v1266 = vadd.f32 %v1237, %v1265
      %v1267 = vpop.f32.mrf.mxu0
      %v1268 = vadd.f32 %v1239, %v1267
      %1269 = vmatmul.bf16.gmra.mxu0 %v980
      %v1270 = vpop.f32.mrf.mxu0
      %v1271 = vadd.f32 %v1242, %v1270
      %v1272 = vpop.f32.mrf.mxu0
      %v1273 = vadd.f32 %v1244, %v1272
      %1274 = vmatmul.bf16.gmra.mxu0 %v984
      %v1275 = vpop.f32.mrf.mxu0
      %v1276 = vadd.f32 %v1247, %v1275
      %v1277 = vpop.f32.mrf.mxu0
      %v1278 = vadd.f32 %v1249, %v1277
      %1279 = vmatmul.bf16.gmra.mxu0 %v988
      %v1280 = vpop.f32.mrf.mxu0
      %v1281 = vadd.f32 %v1252, %v1280
      %v1282 = vpop.f32.mrf.mxu0
      %v1283 = vadd.f32 %v1254, %v1282
      %1284 = vdwg.mxu0
      %1285 = vmatpush.bf16.msra.mxu0 %v1165
      %1286 = vmatpush.bf16.msra.mxu0 %v1164
      %1287 = vmatpush.bf16.msra.mxu0 %v1163
      %1288 = vmatpush.bf16.msra.mxu0 %v1162
      %1289 = vmatpush.bf16.msra.mxu0 %v1161
      %1290 = vmatpush.bf16.msra.mxu0 %v1160
      %1291 = vmatpush.bf16.msra.mxu0 %v1159
      %1292 = vmatpush.bf16.msra.mxu0 %v1158
      %1293 = vmatmul.bf16.gmra.mxu0 %v977
      %v1294 = vpop.f32.mrf.mxu0
      %v1295 = vadd.f32 %v1266, %v1294
      %v1296 = vpop.f32.mrf.mxu0
      %v1297 = vadd.f32 %v1268, %v1296
      %1298 = vmatmul.bf16.gmra.mxu0 %v981
      %v1299 = vpop.f32.mrf.mxu0
      %v1300 = vadd.f32 %v1271, %v1299
      %v1301 = vpop.f32.mrf.mxu0
      %v1302 = vadd.f32 %v1273, %v1301
      %1303 = vmatmul.bf16.gmra.mxu0 %v985
      %v1304 = vpop.f32.mrf.mxu0
      %v1305 = vadd.f32 %v1276, %v1304
      %v1306 = vpop.f32.mrf.mxu0
      %v1307 = vadd.f32 %v1278, %v1306
      %1308 = vmatmul.bf16.gmra.mxu0 %v989
      %v1309 = vpop.f32.mrf.mxu0
      %v1310 = vadd.f32 %v1281, %v1309
      %v1311 = vpop.f32.mrf.mxu0
      %v1312 = vadd.f32 %v1283, %v1311
      %1313 = vdwg.mxu0
      %s1314 = sadd.s32 %s432, 80
      %s1315 = scalar_lea.vmem %s327, %s1314
      %v1316 = vld [vmem:[%s1315] sm:$0xff]
      %v1317 = vld [vmem:[%s1315 + $0x8] sm:$0xff]
      %v1318 = vld [vmem:[%s1315 + $0x10] sm:$0xff]
      %v1319 = vld [vmem:[%s1315 + $0x18] sm:$0xff]
      %v1320 = vld [vmem:[%s1315 + $0x20] sm:$0xff]
      %v1321 = vld [vmem:[%s1315 + $0x28] sm:$0xff]
      %v1322 = vld [vmem:[%s1315 + $0x30] sm:$0xff]
      %v1323 = vld [vmem:[%s1315 + $0x38] sm:$0xff]
      %s1324 = scalar_lea.vmem %s3, 1
      %v1325 = vld [vmem:[%s1324] sm:$0x1]
      %v1327 = vperm.slane %v1325, 0
      %v1329 = vmul.f32 %v1316, %v1327
      %v1330 = vmul.f32 %v1317, %v1327
      %v1331 = vmul.f32 %v1318, %v1327
      %v1332 = vmul.f32 %v1319, %v1327
      %v1333 = vmul.f32 %v1320, %v1327
      %v1334 = vmul.f32 %v1321, %v1327
      %v1335 = vmul.f32 %v1322, %v1327
      %v1336 = vmul.f32 %v1323, %v1327
      %v1337 = vadd.f32 %v446, %v1329
      %v1338 = vadd.f32 %v447, %v1330
      %v1339 = vadd.f32 %v448, %v1331
      %v1340 = vadd.f32 %v449, %v1332
      %v1341 = vadd.f32 %v450, %v1333
      %v1342 = vadd.f32 %v451, %v1334
      %v1343 = vadd.f32 %v452, %v1335
      %v1344 = vadd.f32 %v453, %v1336
      %s1345 = sadd.s32 %s348, 1
      %s1346 = smul.u32 %s1345, 8
      %s1347 = smul.addr %s1346, 4
      %s1348 = scalar_lea.vmem %s322, %s1347
      %v1349 = vld [vmem:[%s1348] sm:$0xff]
      %v1350 = vld [vmem:[%s1348 + $0x8] sm:$0xff]
      %v1351 = vld [vmem:[%s1348 + $0x10] sm:$0xff]
      %v1352 = vld [vmem:[%s1348 + $0x18] sm:$0xff]
      %v1353 = vld [vmem:[%s1348 + $0x20] sm:$0xff]
      %v1354 = vld [vmem:[%s1348 + $0x28] sm:$0xff]
      %v1355 = vld [vmem:[%s1348 + $0x30] sm:$0xff]
      %v1356 = vld [vmem:[%s1348 + $0x38] sm:$0xff]
      %v1357 = vld [vmem:[%s1348 + $0x40] sm:$0xff]
      %v1358 = vld [vmem:[%s1348 + $0x48] sm:$0xff]
      %v1359 = vld [vmem:[%s1348 + $0x50] sm:$0xff]
      %v1360 = vld [vmem:[%s1348 + $0x58] sm:$0xff]
      %v1361 = vld [vmem:[%s1348 + $0x60] sm:$0xff]
      %v1362 = vld [vmem:[%s1348 + $0x68] sm:$0xff]
      %v1363 = vld [vmem:[%s1348 + $0x70] sm:$0xff]
      %v1364 = vld [vmem:[%s1348 + $0x78] sm:$0xff]
      %s1365 = scalar_lea.vmem %s2, 512
      %v1366 = vld [vmem:[%s1365] sm:$0xf]
      %v1367 = vld [vmem:[%s1365 + $0x4] sm:$0xf]
      %v1368 = vld [vmem:[%s1365 + $0x8] sm:$0xf]
      %v1369 = vld [vmem:[%s1365 + $0xc] sm:$0xf]
      %v1370 = vld [vmem:[%s1365 + $0x10] sm:$0xf]
      %v1371 = vld [vmem:[%s1365 + $0x14] sm:$0xf]
      %v1372 = vld [vmem:[%s1365 + $0x18] sm:$0xf]
      %v1373 = vld [vmem:[%s1365 + $0x1c] sm:$0xf]
      %v1374 = vld [vmem:[%s1365 + $0x20] sm:$0xf]
      %v1375 = vld [vmem:[%s1365 + $0x24] sm:$0xf]
      %v1376 = vld [vmem:[%s1365 + $0x28] sm:$0xf]
      %v1377 = vld [vmem:[%s1365 + $0x2c] sm:$0xf]
      %v1378 = vld [vmem:[%s1365 + $0x30] sm:$0xf]
      %v1379 = vld [vmem:[%s1365 + $0x34] sm:$0xf]
      %v1380 = vld [vmem:[%s1365 + $0x38] sm:$0xf]
      %v1381 = vld [vmem:[%s1365 + $0x3c] sm:$0xf]
      %v1382 = vld [vmem:[%s1365 + $0x40] sm:$0xf]
      %v1383 = vld [vmem:[%s1365 + $0x44] sm:$0xf]
      %v1384 = vld [vmem:[%s1365 + $0x48] sm:$0xf]
      %v1385 = vld [vmem:[%s1365 + $0x4c] sm:$0xf]
      %v1386 = vld [vmem:[%s1365 + $0x50] sm:$0xf]
      %v1387 = vld [vmem:[%s1365 + $0x54] sm:$0xf]
      %v1388 = vld [vmem:[%s1365 + $0x58] sm:$0xf]
      %v1389 = vld [vmem:[%s1365 + $0x5c] sm:$0xf]
      %v1390 = vld [vmem:[%s1365 + $0x60] sm:$0xf]
      %v1391 = vld [vmem:[%s1365 + $0x64] sm:$0xf]
      %v1392 = vld [vmem:[%s1365 + $0x68] sm:$0xf]
      %v1393 = vld [vmem:[%s1365 + $0x6c] sm:$0xf]
      %v1394 = vld [vmem:[%s1365 + $0x70] sm:$0xf]
      %v1395 = vld [vmem:[%s1365 + $0x74] sm:$0xf]
      %v1396 = vld [vmem:[%s1365 + $0x78] sm:$0xf]
      %v1397 = vld [vmem:[%s1365 + $0x7c] sm:$0xf]
      %v1398 = vld [vmem:[%s1365 + $0x80] sm:$0xf]
      %v1399 = vld [vmem:[%s1365 + $0x84] sm:$0xf]
      %v1400 = vld [vmem:[%s1365 + $0x88] sm:$0xf]
      %v1401 = vld [vmem:[%s1365 + $0x8c] sm:$0xf]
      %v1402 = vld [vmem:[%s1365 + $0x90] sm:$0xf]
      %v1403 = vld [vmem:[%s1365 + $0x94] sm:$0xf]
      %v1404 = vld [vmem:[%s1365 + $0x98] sm:$0xf]
      %v1405 = vld [vmem:[%s1365 + $0x9c] sm:$0xf]
      %v1406 = vld [vmem:[%s1365 + $0xa0] sm:$0xf]
      %v1407 = vld [vmem:[%s1365 + $0xa4] sm:$0xf]
      %v1408 = vld [vmem:[%s1365 + $0xa8] sm:$0xf]
      %v1409 = vld [vmem:[%s1365 + $0xac] sm:$0xf]
      %v1410 = vld [vmem:[%s1365 + $0xb0] sm:$0xf]
      %v1411 = vld [vmem:[%s1365 + $0xb4] sm:$0xf]
      %v1412 = vld [vmem:[%s1365 + $0xb8] sm:$0xf]
      %v1413 = vld [vmem:[%s1365 + $0xbc] sm:$0xf]
      %v1414 = vld [vmem:[%s1365 + $0xc0] sm:$0xf]
      %v1415 = vld [vmem:[%s1365 + $0xc4] sm:$0xf]
      %v1416 = vld [vmem:[%s1365 + $0xc8] sm:$0xf]
      %v1417 = vld [vmem:[%s1365 + $0xcc] sm:$0xf]
      %v1418 = vld [vmem:[%s1365 + $0xd0] sm:$0xf]
      %v1419 = vld [vmem:[%s1365 + $0xd4] sm:$0xf]
      %v1420 = vld [vmem:[%s1365 + $0xd8] sm:$0xf]
      %v1421 = vld [vmem:[%s1365 + $0xdc] sm:$0xf]
      %v1422 = vld [vmem:[%s1365 + $0xe0] sm:$0xf]
      %v1423 = vld [vmem:[%s1365 + $0xe4] sm:$0xf]
      %v1424 = vld [vmem:[%s1365 + $0xe8] sm:$0xf]
      %v1425 = vld [vmem:[%s1365 + $0xec] sm:$0xf]
      %v1426 = vld [vmem:[%s1365 + $0xf0] sm:$0xf]
      %v1427 = vld [vmem:[%s1365 + $0xf4] sm:$0xf]
      %v1428 = vld [vmem:[%s1365 + $0xf8] sm:$0xf]
      %v1429 = vld [vmem:[%s1365 + $0xfc] sm:$0xf]
      %v1446 = vunpack.c.l.b16 %v1349
      %v1447 = vunpack.c.h.b16 %v1349
      %v1448 = vunpack.c.l.b16 %v1350
      %v1449 = vunpack.c.h.b16 %v1350
      %v1450 = vunpack.c.l.b16 %v1351
      %v1451 = vunpack.c.h.b16 %v1351
      %v1452 = vunpack.c.l.b16 %v1352
      %v1453 = vunpack.c.h.b16 %v1352
      %v1454 = vunpack.c.l.b16 %v1353
      %v1455 = vunpack.c.h.b16 %v1353
      %v1456 = vunpack.c.l.b16 %v1354
      %v1457 = vunpack.c.h.b16 %v1354
      %v1458 = vunpack.c.l.b16 %v1355
      %v1459 = vunpack.c.h.b16 %v1355
      %v1460 = vunpack.c.l.b16 %v1356
      %v1461 = vunpack.c.h.b16 %v1356
      %v1462 = vunpack.c.l.b16 %v1357
      %v1463 = vunpack.c.h.b16 %v1357
      %v1464 = vunpack.c.l.b16 %v1358
      %v1465 = vunpack.c.h.b16 %v1358
      %v1466 = vunpack.c.l.b16 %v1359
      %v1467 = vunpack.c.h.b16 %v1359
      %v1468 = vunpack.c.l.b16 %v1360
      %v1469 = vunpack.c.h.b16 %v1360
      %v1470 = vunpack.c.l.b16 %v1361
      %v1471 = vunpack.c.h.b16 %v1361
      %v1472 = vunpack.c.l.b16 %v1362
      %v1473 = vunpack.c.h.b16 %v1362
      %v1474 = vunpack.c.l.b16 %v1363
      %v1475 = vunpack.c.h.b16 %v1363
      %v1476 = vunpack.c.l.b16 %v1364
      %v1477 = vunpack.c.h.b16 %v1364
      %v1478 = vpack.c.b16 %v1450, %v1446
      %v1479 = vpack.c.b16 %v1451, %v1447
      %v1480 = vpack.c.b16 %v1452, %v1448
      %v1481 = vpack.c.b16 %v1453, %v1449
      %v1482 = vpack.c.b16 %v1458, %v1454
      %v1483 = vpack.c.b16 %v1459, %v1455
      %v1484 = vpack.c.b16 %v1460, %v1456
      %v1485 = vpack.c.b16 %v1461, %v1457
      %v1486 = vpack.c.b16 %v1466, %v1462
      %v1487 = vpack.c.b16 %v1467, %v1463
      %v1488 = vpack.c.b16 %v1468, %v1464
      %v1489 = vpack.c.b16 %v1469, %v1465
      %v1490 = vpack.c.b16 %v1474, %v1470
      %v1491 = vpack.c.b16 %v1475, %v1471
      %v1492 = vpack.c.b16 %v1476, %v1472
      %v1493 = vpack.c.b16 %v1477, %v1473
      %v1574 = vunpack.c.l.b16 %v1366
      %v1575 = vunpack.c.l.b16 %v1367
      %v1576 = vunpack.c.l.b16 %v1368
      %v1577 = vunpack.c.l.b16 %v1369
      %v1578 = vunpack.c.l.b16 %v1370
      %v1579 = vunpack.c.l.b16 %v1371
      %v1580 = vunpack.c.l.b16 %v1372
      %v1581 = vunpack.c.l.b16 %v1373
      %v1582 = vunpack.c.l.b16 %v1374
      %v1583 = vunpack.c.l.b16 %v1375
      %v1584 = vunpack.c.l.b16 %v1376
      %v1585 = vunpack.c.l.b16 %v1377
      %v1586 = vunpack.c.l.b16 %v1378
      %v1587 = vunpack.c.l.b16 %v1379
      %v1588 = vunpack.c.l.b16 %v1380
      %v1589 = vunpack.c.l.b16 %v1381
      %v1590 = vunpack.c.l.b16 %v1382
      %v1591 = vunpack.c.l.b16 %v1383
      %v1592 = vunpack.c.l.b16 %v1384
      %v1593 = vunpack.c.l.b16 %v1385
      %v1594 = vunpack.c.l.b16 %v1386
      %v1595 = vunpack.c.l.b16 %v1387
      %v1596 = vunpack.c.l.b16 %v1388
      %v1597 = vunpack.c.l.b16 %v1389
      %v1598 = vunpack.c.l.b16 %v1390
      %v1599 = vunpack.c.l.b16 %v1391
      %v1600 = vunpack.c.l.b16 %v1392
      %v1601 = vunpack.c.l.b16 %v1393
      %v1602 = vunpack.c.l.b16 %v1394
      %v1603 = vunpack.c.l.b16 %v1395
      %v1604 = vunpack.c.l.b16 %v1396
      %v1605 = vunpack.c.l.b16 %v1397
      %v1606 = vunpack.c.l.b16 %v1398
      %v1607 = vunpack.c.l.b16 %v1399
      %v1608 = vunpack.c.l.b16 %v1400
      %v1609 = vunpack.c.l.b16 %v1401
      %v1610 = vunpack.c.l.b16 %v1402
      %v1611 = vunpack.c.l.b16 %v1403
      %v1612 = vunpack.c.l.b16 %v1404
      %v1613 = vunpack.c.l.b16 %v1405
      %v1614 = vunpack.c.l.b16 %v1406
      %v1615 = vunpack.c.l.b16 %v1407
      %v1616 = vunpack.c.l.b16 %v1408
      %v1617 = vunpack.c.l.b16 %v1409
      %v1618 = vunpack.c.l.b16 %v1410
      %v1619 = vunpack.c.l.b16 %v1411
      %v1620 = vunpack.c.l.b16 %v1412
      %v1621 = vunpack.c.l.b16 %v1413
      %v1622 = vunpack.c.l.b16 %v1414
      %v1623 = vunpack.c.l.b16 %v1415
      %v1624 = vunpack.c.l.b16 %v1416
      %v1625 = vunpack.c.l.b16 %v1417
      %v1626 = vunpack.c.l.b16 %v1418
      %v1627 = vunpack.c.l.b16 %v1419
      %v1628 = vunpack.c.l.b16 %v1420
      %v1629 = vunpack.c.l.b16 %v1421
      %v1630 = vunpack.c.l.b16 %v1422
      %v1631 = vunpack.c.l.b16 %v1423
      %v1632 = vunpack.c.l.b16 %v1424
      %v1633 = vunpack.c.l.b16 %v1425
      %v1634 = vunpack.c.l.b16 %v1426
      %v1635 = vunpack.c.l.b16 %v1427
      %v1636 = vunpack.c.l.b16 %v1428
      %v1637 = vunpack.c.l.b16 %v1429
      %v1638 = vpack.c.b16 %v1575, %v1574
      %v1639 = vpack.c.b16 %v1577, %v1576
      %v1640 = vpack.c.b16 %v1579, %v1578
      %v1641 = vpack.c.b16 %v1581, %v1580
      %v1642 = vpack.c.b16 %v1583, %v1582
      %v1643 = vpack.c.b16 %v1585, %v1584
      %v1644 = vpack.c.b16 %v1587, %v1586
      %v1645 = vpack.c.b16 %v1589, %v1588
      %v1646 = vpack.c.b16 %v1591, %v1590
      %v1647 = vpack.c.b16 %v1593, %v1592
      %v1648 = vpack.c.b16 %v1595, %v1594
      %v1649 = vpack.c.b16 %v1597, %v1596
      %v1650 = vpack.c.b16 %v1599, %v1598
      %v1651 = vpack.c.b16 %v1601, %v1600
      %v1652 = vpack.c.b16 %v1603, %v1602
      %v1653 = vpack.c.b16 %v1605, %v1604
      %v1654 = vpack.c.b16 %v1607, %v1606
      %v1655 = vpack.c.b16 %v1609, %v1608
      %v1656 = vpack.c.b16 %v1611, %v1610
      %v1657 = vpack.c.b16 %v1613, %v1612
      %v1658 = vpack.c.b16 %v1615, %v1614
      %v1659 = vpack.c.b16 %v1617, %v1616
      %v1660 = vpack.c.b16 %v1619, %v1618
      %v1661 = vpack.c.b16 %v1621, %v1620
      %v1662 = vpack.c.b16 %v1623, %v1622
      %v1663 = vpack.c.b16 %v1625, %v1624
      %v1664 = vpack.c.b16 %v1627, %v1626
      %v1665 = vpack.c.b16 %v1629, %v1628
      %v1666 = vpack.c.b16 %v1631, %v1630
      %v1667 = vpack.c.b16 %v1633, %v1632
      %v1668 = vpack.c.b16 %v1635, %v1634
      %v1669 = vpack.c.b16 %v1637, %v1636
      %1702 = vmatpush.bf16.msra.mxu0 %v1645
      %1703 = vmatpush.bf16.msra.mxu0 %v1644
      %1704 = vmatpush.bf16.msra.mxu0 %v1643
      %1705 = vmatpush.bf16.msra.mxu0 %v1642
      %1706 = vmatpush.bf16.msra.mxu0 %v1641
      %1707 = vmatpush.bf16.msra.mxu0 %v1640
      %1708 = vmatpush.bf16.msra.mxu0 %v1639
      %1709 = vmatpush.bf16.msra.mxu0 %v1638
      %1710 = vmatmul.bf16.gmra.mxu0 %v1478
      %v1711 = vpop.f32.mrf.mxu0
      %v1712 = vadd.f32 0.0, %v1711
      %v1713 = vpop.f32.mrf.mxu0
      %v1714 = vadd.f32 0.0, %v1713
      %1715 = vmatmul.bf16.gmra.mxu0 %v1482
      %v1716 = vpop.f32.mrf.mxu0
      %v1717 = vadd.f32 0.0, %v1716
      %v1718 = vpop.f32.mrf.mxu0
      %v1719 = vadd.f32 0.0, %v1718
      %1720 = vmatmul.bf16.gmra.mxu0 %v1486
      %v1721 = vpop.f32.mrf.mxu0
      %v1722 = vadd.f32 0.0, %v1721
      %v1723 = vpop.f32.mrf.mxu0
      %v1724 = vadd.f32 0.0, %v1723
      %1725 = vmatmul.bf16.gmra.mxu0 %v1490
      %v1726 = vpop.f32.mrf.mxu0
      %v1727 = vadd.f32 0.0, %v1726
      %v1728 = vpop.f32.mrf.mxu0
      %v1729 = vadd.f32 0.0, %v1728
      %1730 = vdwg.mxu0
      %1731 = vmatpush.bf16.msra.mxu0 %v1653
      %1732 = vmatpush.bf16.msra.mxu0 %v1652
      %1733 = vmatpush.bf16.msra.mxu0 %v1651
      %1734 = vmatpush.bf16.msra.mxu0 %v1650
      %1735 = vmatpush.bf16.msra.mxu0 %v1649
      %1736 = vmatpush.bf16.msra.mxu0 %v1648
      %1737 = vmatpush.bf16.msra.mxu0 %v1647
      %1738 = vmatpush.bf16.msra.mxu0 %v1646
      %1739 = vmatmul.bf16.gmra.mxu0 %v1479
      %v1740 = vpop.f32.mrf.mxu0
      %v1741 = vadd.f32 %v1712, %v1740
      %v1742 = vpop.f32.mrf.mxu0
      %v1743 = vadd.f32 %v1714, %v1742
      %1744 = vmatmul.bf16.gmra.mxu0 %v1483
      %v1745 = vpop.f32.mrf.mxu0
      %v1746 = vadd.f32 %v1717, %v1745
      %v1747 = vpop.f32.mrf.mxu0
      %v1748 = vadd.f32 %v1719, %v1747
      %1749 = vmatmul.bf16.gmra.mxu0 %v1487
      %v1750 = vpop.f32.mrf.mxu0
      %v1751 = vadd.f32 %v1722, %v1750
      %v1752 = vpop.f32.mrf.mxu0
      %v1753 = vadd.f32 %v1724, %v1752
      %1754 = vmatmul.bf16.gmra.mxu0 %v1491
      %v1755 = vpop.f32.mrf.mxu0
      %v1756 = vadd.f32 %v1727, %v1755
      %v1757 = vpop.f32.mrf.mxu0
      %v1758 = vadd.f32 %v1729, %v1757
      %1759 = vdwg.mxu0
      %1760 = vmatpush.bf16.msra.mxu0 %v1661
      %1761 = vmatpush.bf16.msra.mxu0 %v1660
      %1762 = vmatpush.bf16.msra.mxu0 %v1659
      %1763 = vmatpush.bf16.msra.mxu0 %v1658
      %1764 = vmatpush.bf16.msra.mxu0 %v1657
      %1765 = vmatpush.bf16.msra.mxu0 %v1656
      %1766 = vmatpush.bf16.msra.mxu0 %v1655
      %1767 = vmatpush.bf16.msra.mxu0 %v1654
      %1768 = vmatmul.bf16.gmra.mxu0 %v1480
      %v1769 = vpop.f32.mrf.mxu0
      %v1770 = vadd.f32 %v1741, %v1769
      %v1771 = vpop.f32.mrf.mxu0
      %v1772 = vadd.f32 %v1743, %v1771
      %1773 = vmatmul.bf16.gmra.mxu0 %v1484
      %v1774 = vpop.f32.mrf.mxu0
      %v1775 = vadd.f32 %v1746, %v1774
      %v1776 = vpop.f32.mrf.mxu0
      %v1777 = vadd.f32 %v1748, %v1776
      %1778 = vmatmul.bf16.gmra.mxu0 %v1488
      %v1779 = vpop.f32.mrf.mxu0
      %v1780 = vadd.f32 %v1751, %v1779
      %v1781 = vpop.f32.mrf.mxu0
      %v1782 = vadd.f32 %v1753, %v1781
      %1783 = vmatmul.bf16.gmra.mxu0 %v1492
      %v1784 = vpop.f32.mrf.mxu0
      %v1785 = vadd.f32 %v1756, %v1784
      %v1786 = vpop.f32.mrf.mxu0
      %v1787 = vadd.f32 %v1758, %v1786
      %1788 = vdwg.mxu0
      %1789 = vmatpush.bf16.msra.mxu0 %v1669
      %1790 = vmatpush.bf16.msra.mxu0 %v1668
      %1791 = vmatpush.bf16.msra.mxu0 %v1667
      %1792 = vmatpush.bf16.msra.mxu0 %v1666
      %1793 = vmatpush.bf16.msra.mxu0 %v1665
      %1794 = vmatpush.bf16.msra.mxu0 %v1664
      %1795 = vmatpush.bf16.msra.mxu0 %v1663
      %1796 = vmatpush.bf16.msra.mxu0 %v1662
      %1797 = vmatmul.bf16.gmra.mxu0 %v1481
      %v1798 = vpop.f32.mrf.mxu0
      %v1799 = vadd.f32 %v1770, %v1798
      %v1800 = vpop.f32.mrf.mxu0
      %v1801 = vadd.f32 %v1772, %v1800
      %1802 = vmatmul.bf16.gmra.mxu0 %v1485
      %v1803 = vpop.f32.mrf.mxu0
      %v1804 = vadd.f32 %v1775, %v1803
      %v1805 = vpop.f32.mrf.mxu0
      %v1806 = vadd.f32 %v1777, %v1805
      %1807 = vmatmul.bf16.gmra.mxu0 %v1489
      %v1808 = vpop.f32.mrf.mxu0
      %v1809 = vadd.f32 %v1780, %v1808
      %v1810 = vpop.f32.mrf.mxu0
      %v1811 = vadd.f32 %v1782, %v1810
      %1812 = vmatmul.bf16.gmra.mxu0 %v1493
      %v1813 = vpop.f32.mrf.mxu0
      %v1814 = vadd.f32 %v1785, %v1813
      %v1815 = vpop.f32.mrf.mxu0
      %v1816 = vadd.f32 %v1787, %v1815
      %1817 = vdwg.mxu0
      %v1818 = vadd.f32 %v1295, %v1799
      %v1819 = vadd.f32 %v1297, %v1801
      %v1820 = vadd.f32 %v1300, %v1804
      %v1821 = vadd.f32 %v1302, %v1806
      %v1822 = vadd.f32 %v1305, %v1809
      %v1823 = vadd.f32 %v1307, %v1811
      %v1824 = vadd.f32 %v1310, %v1814
      %v1825 = vadd.f32 %v1312, %v1816
      %s1826 = smul.u32 %s1345, 16
      %s1827 = scalar_lea.vmem %s327, %s1826
      %v1828 = vld [vmem:[%s1827] sm:$0xff]
      %v1829 = vld [vmem:[%s1827 + $0x8] sm:$0xff]
      %v1830 = vld [vmem:[%s1827 + $0x10] sm:$0xff]
      %v1831 = vld [vmem:[%s1827 + $0x18] sm:$0xff]
      %v1832 = vld [vmem:[%s1827 + $0x20] sm:$0xff]
      %v1833 = vld [vmem:[%s1827 + $0x28] sm:$0xff]
      %v1834 = vld [vmem:[%s1827 + $0x30] sm:$0xff]
      %v1835 = vld [vmem:[%s1827 + $0x38] sm:$0xff]
      %s1836 = scalar_lea.vmem %s3, 2
      %v1837 = vld [vmem:[%s1836] sm:$0x1]
      %v1839 = vperm.slane %v1837, 0
      %v1841 = vmul.f32 %v1828, %v1839
      %v1842 = vmul.f32 %v1829, %v1839
      %v1843 = vmul.f32 %v1830, %v1839
      %v1844 = vmul.f32 %v1831, %v1839
      %v1845 = vmul.f32 %v1832, %v1839
      %v1846 = vmul.f32 %v1833, %v1839
      %v1847 = vmul.f32 %v1834, %v1839
      %v1848 = vmul.f32 %v1835, %v1839
      %v1849 = vadd.f32 %v1337, %v1841
      %v1850 = vadd.f32 %v1338, %v1842
      %v1851 = vadd.f32 %v1339, %v1843
      %v1852 = vadd.f32 %v1340, %v1844
      %v1853 = vadd.f32 %v1341, %v1845
      %v1854 = vadd.f32 %v1342, %v1846
      %v1855 = vadd.f32 %v1343, %v1847
      %v1856 = vadd.f32 %v1344, %v1848
      %s1857 = sadd.s32 %s1346, 40
      %s1858 = smul.addr %s1857, 4
      %s1859 = scalar_lea.vmem %s322, %s1858
      %v1860 = vld [vmem:[%s1859] sm:$0xff]
      %v1861 = vld [vmem:[%s1859 + $0x8] sm:$0xff]
      %v1862 = vld [vmem:[%s1859 + $0x10] sm:$0xff]
      %v1863 = vld [vmem:[%s1859 + $0x18] sm:$0xff]
      %v1864 = vld [vmem:[%s1859 + $0x20] sm:$0xff]
      %v1865 = vld [vmem:[%s1859 + $0x28] sm:$0xff]
      %v1866 = vld [vmem:[%s1859 + $0x30] sm:$0xff]
      %v1867 = vld [vmem:[%s1859 + $0x38] sm:$0xff]
      %v1868 = vld [vmem:[%s1859 + $0x40] sm:$0xff]
      %v1869 = vld [vmem:[%s1859 + $0x48] sm:$0xff]
      %v1870 = vld [vmem:[%s1859 + $0x50] sm:$0xff]
      %v1871 = vld [vmem:[%s1859 + $0x58] sm:$0xff]
      %v1872 = vld [vmem:[%s1859 + $0x60] sm:$0xff]
      %v1873 = vld [vmem:[%s1859 + $0x68] sm:$0xff]
      %v1874 = vld [vmem:[%s1859 + $0x70] sm:$0xff]
      %v1875 = vld [vmem:[%s1859 + $0x78] sm:$0xff]
      %s1876 = scalar_lea.vmem %s2, 768
      %v1877 = vld [vmem:[%s1876] sm:$0xf]
      %v1878 = vld [vmem:[%s1876 + $0x4] sm:$0xf]
      %v1879 = vld [vmem:[%s1876 + $0x8] sm:$0xf]
      %v1880 = vld [vmem:[%s1876 + $0xc] sm:$0xf]
      %v1881 = vld [vmem:[%s1876 + $0x10] sm:$0xf]
      %v1882 = vld [vmem:[%s1876 + $0x14] sm:$0xf]
      %v1883 = vld [vmem:[%s1876 + $0x18] sm:$0xf]
      %v1884 = vld [vmem:[%s1876 + $0x1c] sm:$0xf]
      %v1885 = vld [vmem:[%s1876 + $0x20] sm:$0xf]
      %v1886 = vld [vmem:[%s1876 + $0x24] sm:$0xf]
      %v1887 = vld [vmem:[%s1876 + $0x28] sm:$0xf]
      %v1888 = vld [vmem:[%s1876 + $0x2c] sm:$0xf]
      %v1889 = vld [vmem:[%s1876 + $0x30] sm:$0xf]
      %v1890 = vld [vmem:[%s1876 + $0x34] sm:$0xf]
      %v1891 = vld [vmem:[%s1876 + $0x38] sm:$0xf]
      %v1892 = vld [vmem:[%s1876 + $0x3c] sm:$0xf]
      %v1893 = vld [vmem:[%s1876 + $0x40] sm:$0xf]
      %v1894 = vld [vmem:[%s1876 + $0x44] sm:$0xf]
      %v1895 = vld [vmem:[%s1876 + $0x48] sm:$0xf]
      %v1896 = vld [vmem:[%s1876 + $0x4c] sm:$0xf]
      %v1897 = vld [vmem:[%s1876 + $0x50] sm:$0xf]
      %v1898 = vld [vmem:[%s1876 + $0x54] sm:$0xf]
      %v1899 = vld [vmem:[%s1876 + $0x58] sm:$0xf]
      %v1900 = vld [vmem:[%s1876 + $0x5c] sm:$0xf]
      %v1901 = vld [vmem:[%s1876 + $0x60] sm:$0xf]
      %v1902 = vld [vmem:[%s1876 + $0x64] sm:$0xf]
      %v1903 = vld [vmem:[%s1876 + $0x68] sm:$0xf]
      %v1904 = vld [vmem:[%s1876 + $0x6c] sm:$0xf]
      %v1905 = vld [vmem:[%s1876 + $0x70] sm:$0xf]
      %v1906 = vld [vmem:[%s1876 + $0x74] sm:$0xf]
      %v1907 = vld [vmem:[%s1876 + $0x78] sm:$0xf]
      %v1908 = vld [vmem:[%s1876 + $0x7c] sm:$0xf]
      %v1909 = vld [vmem:[%s1876 + $0x80] sm:$0xf]
      %v1910 = vld [vmem:[%s1876 + $0x84] sm:$0xf]
      %v1911 = vld [vmem:[%s1876 + $0x88] sm:$0xf]
      %v1912 = vld [vmem:[%s1876 + $0x8c] sm:$0xf]
      %v1913 = vld [vmem:[%s1876 + $0x90] sm:$0xf]
      %v1914 = vld [vmem:[%s1876 + $0x94] sm:$0xf]
      %v1915 = vld [vmem:[%s1876 + $0x98] sm:$0xf]
      %v1916 = vld [vmem:[%s1876 + $0x9c] sm:$0xf]
      %v1917 = vld [vmem:[%s1876 + $0xa0] sm:$0xf]
      %v1918 = vld [vmem:[%s1876 + $0xa4] sm:$0xf]
      %v1919 = vld [vmem:[%s1876 + $0xa8] sm:$0xf]
      %v1920 = vld [vmem:[%s1876 + $0xac] sm:$0xf]
      %v1921 = vld [vmem:[%s1876 + $0xb0] sm:$0xf]
      %v1922 = vld [vmem:[%s1876 + $0xb4] sm:$0xf]
      %v1923 = vld [vmem:[%s1876 + $0xb8] sm:$0xf]
      %v1924 = vld [vmem:[%s1876 + $0xbc] sm:$0xf]
      %v1925 = vld [vmem:[%s1876 + $0xc0] sm:$0xf]
      %v1926 = vld [vmem:[%s1876 + $0xc4] sm:$0xf]
      %v1927 = vld [vmem:[%s1876 + $0xc8] sm:$0xf]
      %v1928 = vld [vmem:[%s1876 + $0xcc] sm:$0xf]
      %v1929 = vld [vmem:[%s1876 + $0xd0] sm:$0xf]
      %v1930 = vld [vmem:[%s1876 + $0xd4] sm:$0xf]
      %v1931 = vld [vmem:[%s1876 + $0xd8] sm:$0xf]
      %v1932 = vld [vmem:[%s1876 + $0xdc] sm:$0xf]
      %v1933 = vld [vmem:[%s1876 + $0xe0] sm:$0xf]
      %v1934 = vld [vmem:[%s1876 + $0xe4] sm:$0xf]
      %v1935 = vld [vmem:[%s1876 + $0xe8] sm:$0xf]
      %v1936 = vld [vmem:[%s1876 + $0xec] sm:$0xf]
      %v1937 = vld [vmem:[%s1876 + $0xf0] sm:$0xf]
      %v1938 = vld [vmem:[%s1876 + $0xf4] sm:$0xf]
      %v1939 = vld [vmem:[%s1876 + $0xf8] sm:$0xf]
      %v1940 = vld [vmem:[%s1876 + $0xfc] sm:$0xf]
      %v1957 = vunpack.c.l.b16 %v1860
      %v1958 = vunpack.c.h.b16 %v1860
      %v1959 = vunpack.c.l.b16 %v1861
      %v1960 = vunpack.c.h.b16 %v1861
      %v1961 = vunpack.c.l.b16 %v1862
      %v1962 = vunpack.c.h.b16 %v1862
      %v1963 = vunpack.c.l.b16 %v1863
      %v1964 = vunpack.c.h.b16 %v1863
      %v1965 = vunpack.c.l.b16 %v1864
      %v1966 = vunpack.c.h.b16 %v1864
      %v1967 = vunpack.c.l.b16 %v1865
      %v1968 = vunpack.c.h.b16 %v1865
      %v1969 = vunpack.c.l.b16 %v1866
      %v1970 = vunpack.c.h.b16 %v1866
      %v1971 = vunpack.c.l.b16 %v1867
      %v1972 = vunpack.c.h.b16 %v1867
      %v1973 = vunpack.c.l.b16 %v1868
      %v1974 = vunpack.c.h.b16 %v1868
      %v1975 = vunpack.c.l.b16 %v1869
      %v1976 = vunpack.c.h.b16 %v1869
      %v1977 = vunpack.c.l.b16 %v1870
      %v1978 = vunpack.c.h.b16 %v1870
      %v1979 = vunpack.c.l.b16 %v1871
      %v1980 = vunpack.c.h.b16 %v1871
      %v1981 = vunpack.c.l.b16 %v1872
      %v1982 = vunpack.c.h.b16 %v1872
      %v1983 = vunpack.c.l.b16 %v1873
      %v1984 = vunpack.c.h.b16 %v1873
      %v1985 = vunpack.c.l.b16 %v1874
      %v1986 = vunpack.c.h.b16 %v1874
      %v1987 = vunpack.c.l.b16 %v1875
      %v1988 = vunpack.c.h.b16 %v1875
      %v1989 = vpack.c.b16 %v1961, %v1957
      %v1990 = vpack.c.b16 %v1962, %v1958
      %v1991 = vpack.c.b16 %v1963, %v1959
      %v1992 = vpack.c.b16 %v1964, %v1960
      %v1993 = vpack.c.b16 %v1969, %v1965
      %v1994 = vpack.c.b16 %v1970, %v1966
      %v1995 = vpack.c.b16 %v1971, %v1967
      %v1996 = vpack.c.b16 %v1972, %v1968
      %v1997 = vpack.c.b16 %v1977, %v1973
      %v1998 = vpack.c.b16 %v1978, %v1974
      %v1999 = vpack.c.b16 %v1979, %v1975
      %v2000 = vpack.c.b16 %v1980, %v1976
      %v2001 = vpack.c.b16 %v1985, %v1981
      %v2002 = vpack.c.b16 %v1986, %v1982
      %v2003 = vpack.c.b16 %v1987, %v1983
      %v2004 = vpack.c.b16 %v1988, %v1984
      %v2085 = vunpack.c.l.b16 %v1877
      %v2086 = vunpack.c.l.b16 %v1878
      %v2087 = vunpack.c.l.b16 %v1879
      %v2088 = vunpack.c.l.b16 %v1880
      %v2089 = vunpack.c.l.b16 %v1881
      %v2090 = vunpack.c.l.b16 %v1882
      %v2091 = vunpack.c.l.b16 %v1883
      %v2092 = vunpack.c.l.b16 %v1884
      %v2093 = vunpack.c.l.b16 %v1885
      %v2094 = vunpack.c.l.b16 %v1886
      %v2095 = vunpack.c.l.b16 %v1887
      %v2096 = vunpack.c.l.b16 %v1888
      %v2097 = vunpack.c.l.b16 %v1889
      %v2098 = vunpack.c.l.b16 %v1890
      %v2099 = vunpack.c.l.b16 %v1891
      %v2100 = vunpack.c.l.b16 %v1892
      %v2101 = vunpack.c.l.b16 %v1893
      %v2102 = vunpack.c.l.b16 %v1894
      %v2103 = vunpack.c.l.b16 %v1895
      %v2104 = vunpack.c.l.b16 %v1896
      %v2105 = vunpack.c.l.b16 %v1897
      %v2106 = vunpack.c.l.b16 %v1898
      %v2107 = vunpack.c.l.b16 %v1899
      %v2108 = vunpack.c.l.b16 %v1900
      %v2109 = vunpack.c.l.b16 %v1901
      %v2110 = vunpack.c.l.b16 %v1902
      %v2111 = vunpack.c.l.b16 %v1903
      %v2112 = vunpack.c.l.b16 %v1904
      %v2113 = vunpack.c.l.b16 %v1905
      %v2114 = vunpack.c.l.b16 %v1906
      %v2115 = vunpack.c.l.b16 %v1907
      %v2116 = vunpack.c.l.b16 %v1908
      %v2117 = vunpack.c.l.b16 %v1909
      %v2118 = vunpack.c.l.b16 %v1910
      %v2119 = vunpack.c.l.b16 %v1911
      %v2120 = vunpack.c.l.b16 %v1912
      %v2121 = vunpack.c.l.b16 %v1913
      %v2122 = vunpack.c.l.b16 %v1914
      %v2123 = vunpack.c.l.b16 %v1915
      %v2124 = vunpack.c.l.b16 %v1916
      %v2125 = vunpack.c.l.b16 %v1917
      %v2126 = vunpack.c.l.b16 %v1918
      %v2127 = vunpack.c.l.b16 %v1919
      %v2128 = vunpack.c.l.b16 %v1920
      %v2129 = vunpack.c.l.b16 %v1921
      %v2130 = vunpack.c.l.b16 %v1922
      %v2131 = vunpack.c.l.b16 %v1923
      %v2132 = vunpack.c.l.b16 %v1924
      %v2133 = vunpack.c.l.b16 %v1925
      %v2134 = vunpack.c.l.b16 %v1926
      %v2135 = vunpack.c.l.b16 %v1927
      %v2136 = vunpack.c.l.b16 %v1928
      %v2137 = vunpack.c.l.b16 %v1929
      %v2138 = vunpack.c.l.b16 %v1930
      %v2139 = vunpack.c.l.b16 %v1931
      %v2140 = vunpack.c.l.b16 %v1932
      %v2141 = vunpack.c.l.b16 %v1933
      %v2142 = vunpack.c.l.b16 %v1934
      %v2143 = vunpack.c.l.b16 %v1935
      %v2144 = vunpack.c.l.b16 %v1936
      %v2145 = vunpack.c.l.b16 %v1937
      %v2146 = vunpack.c.l.b16 %v1938
      %v2147 = vunpack.c.l.b16 %v1939
      %v2148 = vunpack.c.l.b16 %v1940
      %v2149 = vpack.c.b16 %v2086, %v2085
      %v2150 = vpack.c.b16 %v2088, %v2087
      %v2151 = vpack.c.b16 %v2090, %v2089
      %v2152 = vpack.c.b16 %v2092, %v2091
      %v2153 = vpack.c.b16 %v2094, %v2093
      %v2154 = vpack.c.b16 %v2096, %v2095
      %v2155 = vpack.c.b16 %v2098, %v2097
      %v2156 = vpack.c.b16 %v2100, %v2099
      %v2157 = vpack.c.b16 %v2102, %v2101
      %v2158 = vpack.c.b16 %v2104, %v2103
      %v2159 = vpack.c.b16 %v2106, %v2105
      %v2160 = vpack.c.b16 %v2108, %v2107
      %v2161 = vpack.c.b16 %v2110, %v2109
      %v2162 = vpack.c.b16 %v2112, %v2111
      %v2163 = vpack.c.b16 %v2114, %v2113
      %v2164 = vpack.c.b16 %v2116, %v2115
      %v2165 = vpack.c.b16 %v2118, %v2117
      %v2166 = vpack.c.b16 %v2120, %v2119
      %v2167 = vpack.c.b16 %v2122, %v2121
      %v2168 = vpack.c.b16 %v2124, %v2123
      %v2169 = vpack.c.b16 %v2126, %v2125
      %v2170 = vpack.c.b16 %v2128, %v2127
      %v2171 = vpack.c.b16 %v2130, %v2129
      %v2172 = vpack.c.b16 %v2132, %v2131
      %v2173 = vpack.c.b16 %v2134, %v2133
      %v2174 = vpack.c.b16 %v2136, %v2135
      %v2175 = vpack.c.b16 %v2138, %v2137
      %v2176 = vpack.c.b16 %v2140, %v2139
      %v2177 = vpack.c.b16 %v2142, %v2141
      %v2178 = vpack.c.b16 %v2144, %v2143
      %v2179 = vpack.c.b16 %v2146, %v2145
      %v2180 = vpack.c.b16 %v2148, %v2147
      %2213 = vmatpush.bf16.msra.mxu0 %v2156
      %2214 = vmatpush.bf16.msra.mxu0 %v2155
      %2215 = vmatpush.bf16.msra.mxu0 %v2154
      %2216 = vmatpush.bf16.msra.mxu0 %v2153
      %2217 = vmatpush.bf16.msra.mxu0 %v2152
      %2218 = vmatpush.bf16.msra.mxu0 %v2151
      %2219 = vmatpush.bf16.msra.mxu0 %v2150
      %2220 = vmatpush.bf16.msra.mxu0 %v2149
      %2221 = vmatmul.bf16.gmra.mxu0 %v1989
      %v2222 = vpop.f32.mrf.mxu0
      %v2223 = vadd.f32 0.0, %v2222
      %v2224 = vpop.f32.mrf.mxu0
      %v2225 = vadd.f32 0.0, %v2224
      %2226 = vmatmul.bf16.gmra.mxu0 %v1993
      %v2227 = vpop.f32.mrf.mxu0
      %v2228 = vadd.f32 0.0, %v2227
      %v2229 = vpop.f32.mrf.mxu0
      %v2230 = vadd.f32 0.0, %v2229
      %2231 = vmatmul.bf16.gmra.mxu0 %v1997
      %v2232 = vpop.f32.mrf.mxu0
      %v2233 = vadd.f32 0.0, %v2232
      %v2234 = vpop.f32.mrf.mxu0
      %v2235 = vadd.f32 0.0, %v2234
      %2236 = vmatmul.bf16.gmra.mxu0 %v2001
      %v2237 = vpop.f32.mrf.mxu0
      %v2238 = vadd.f32 0.0, %v2237
      %v2239 = vpop.f32.mrf.mxu0
      %v2240 = vadd.f32 0.0, %v2239
      %2241 = vdwg.mxu0
      %2242 = vmatpush.bf16.msra.mxu0 %v2164
      %2243 = vmatpush.bf16.msra.mxu0 %v2163
      %2244 = vmatpush.bf16.msra.mxu0 %v2162
      %2245 = vmatpush.bf16.msra.mxu0 %v2161
      %2246 = vmatpush.bf16.msra.mxu0 %v2160
      %2247 = vmatpush.bf16.msra.mxu0 %v2159
      %2248 = vmatpush.bf16.msra.mxu0 %v2158
      %2249 = vmatpush.bf16.msra.mxu0 %v2157
      %2250 = vmatmul.bf16.gmra.mxu0 %v1990
      %v2251 = vpop.f32.mrf.mxu0
      %v2252 = vadd.f32 %v2223, %v2251
      %v2253 = vpop.f32.mrf.mxu0
      %v2254 = vadd.f32 %v2225, %v2253
      %2255 = vmatmul.bf16.gmra.mxu0 %v1994
      %v2256 = vpop.f32.mrf.mxu0
      %v2257 = vadd.f32 %v2228, %v2256
      %v2258 = vpop.f32.mrf.mxu0
      %v2259 = vadd.f32 %v2230, %v2258
      %2260 = vmatmul.bf16.gmra.mxu0 %v1998
      %v2261 = vpop.f32.mrf.mxu0
      %v2262 = vadd.f32 %v2233, %v2261
      %v2263 = vpop.f32.mrf.mxu0
      %v2264 = vadd.f32 %v2235, %v2263
      %2265 = vmatmul.bf16.gmra.mxu0 %v2002
      %v2266 = vpop.f32.mrf.mxu0
      %v2267 = vadd.f32 %v2238, %v2266
      %v2268 = vpop.f32.mrf.mxu0
      %v2269 = vadd.f32 %v2240, %v2268
      %2270 = vdwg.mxu0
      %2271 = vmatpush.bf16.msra.mxu0 %v2172
      %2272 = vmatpush.bf16.msra.mxu0 %v2171
      %2273 = vmatpush.bf16.msra.mxu0 %v2170
      %2274 = vmatpush.bf16.msra.mxu0 %v2169
      %2275 = vmatpush.bf16.msra.mxu0 %v2168
      %2276 = vmatpush.bf16.msra.mxu0 %v2167
      %2277 = vmatpush.bf16.msra.mxu0 %v2166
      %2278 = vmatpush.bf16.msra.mxu0 %v2165
      %2279 = vmatmul.bf16.gmra.mxu0 %v1991
      %v2280 = vpop.f32.mrf.mxu0
      %v2281 = vadd.f32 %v2252, %v2280
      %v2282 = vpop.f32.mrf.mxu0
      %v2283 = vadd.f32 %v2254, %v2282
      %2284 = vmatmul.bf16.gmra.mxu0 %v1995
      %v2285 = vpop.f32.mrf.mxu0
      %v2286 = vadd.f32 %v2257, %v2285
      %v2287 = vpop.f32.mrf.mxu0
      %v2288 = vadd.f32 %v2259, %v2287
      %2289 = vmatmul.bf16.gmra.mxu0 %v1999
      %v2290 = vpop.f32.mrf.mxu0
      %v2291 = vadd.f32 %v2262, %v2290
      %v2292 = vpop.f32.mrf.mxu0
      %v2293 = vadd.f32 %v2264, %v2292
      %2294 = vmatmul.bf16.gmra.mxu0 %v2003
      %v2295 = vpop.f32.mrf.mxu0
      %v2296 = vadd.f32 %v2267, %v2295
      %v2297 = vpop.f32.mrf.mxu0
      %v2298 = vadd.f32 %v2269, %v2297
      %2299 = vdwg.mxu0
      %2300 = vmatpush.bf16.msra.mxu0 %v2180
      %2301 = vmatpush.bf16.msra.mxu0 %v2179
      %2302 = vmatpush.bf16.msra.mxu0 %v2178
      %2303 = vmatpush.bf16.msra.mxu0 %v2177
      %2304 = vmatpush.bf16.msra.mxu0 %v2176
      %2305 = vmatpush.bf16.msra.mxu0 %v2175
      %2306 = vmatpush.bf16.msra.mxu0 %v2174
      %2307 = vmatpush.bf16.msra.mxu0 %v2173
      %2308 = vmatmul.bf16.gmra.mxu0 %v1992
      %v2309 = vpop.f32.mrf.mxu0
      %v2310 = vadd.f32 %v2281, %v2309
      %v2311 = vpop.f32.mrf.mxu0
      %v2312 = vadd.f32 %v2283, %v2311
      %2313 = vmatmul.bf16.gmra.mxu0 %v1996
      %v2314 = vpop.f32.mrf.mxu0
      %v2315 = vadd.f32 %v2286, %v2314
      %v2316 = vpop.f32.mrf.mxu0
      %v2317 = vadd.f32 %v2288, %v2316
      %2318 = vmatmul.bf16.gmra.mxu0 %v2000
      %v2319 = vpop.f32.mrf.mxu0
      %v2320 = vadd.f32 %v2291, %v2319
      %v2321 = vpop.f32.mrf.mxu0
      %v2322 = vadd.f32 %v2293, %v2321
      %2323 = vmatmul.bf16.gmra.mxu0 %v2004
      %v2324 = vpop.f32.mrf.mxu0
      %v2325 = vadd.f32 %v2296, %v2324
      %v2326 = vpop.f32.mrf.mxu0
      %v2327 = vadd.f32 %v2298, %v2326
      %2328 = vdwg.mxu0
      %v2329 = vadd.f32 %v1818, %v2310
      %v2330 = vadd.f32 %v1819, %v2312
      %v2331 = vadd.f32 %v1820, %v2315
      %v2332 = vadd.f32 %v1821, %v2317
      %v2333 = vadd.f32 %v1822, %v2320
      %v2334 = vadd.f32 %v1823, %v2322
      %v2335 = vadd.f32 %v1824, %v2325
      %v2336 = vadd.f32 %v1825, %v2327
      %s2337 = sadd.s32 %s1826, 80
      %s2338 = scalar_lea.vmem %s327, %s2337
      %v2339 = vld [vmem:[%s2338] sm:$0xff]
      %v2340 = vld [vmem:[%s2338 + $0x8] sm:$0xff]
      %v2341 = vld [vmem:[%s2338 + $0x10] sm:$0xff]
      %v2342 = vld [vmem:[%s2338 + $0x18] sm:$0xff]
      %v2343 = vld [vmem:[%s2338 + $0x20] sm:$0xff]
      %v2344 = vld [vmem:[%s2338 + $0x28] sm:$0xff]
      %v2345 = vld [vmem:[%s2338 + $0x30] sm:$0xff]
      %v2346 = vld [vmem:[%s2338 + $0x38] sm:$0xff]
      %s2347 = scalar_lea.vmem %s3, 3
      %v2348 = vld [vmem:[%s2347] sm:$0x1]
      %v2350 = vperm.slane %v2348, 0
      %v2352 = vmul.f32 %v2339, %v2350
      %v2353 = vmul.f32 %v2340, %v2350
      %v2354 = vmul.f32 %v2341, %v2350
      %v2355 = vmul.f32 %v2342, %v2350
      %v2356 = vmul.f32 %v2343, %v2350
      %v2357 = vmul.f32 %v2344, %v2350
      %v2358 = vmul.f32 %v2345, %v2350
      %v2359 = vmul.f32 %v2346, %v2350
      %v2360 = vadd.f32 %v1849, %v2352
      %v2361 = vadd.f32 %v1850, %v2353
      %v2362 = vadd.f32 %v1851, %v2354
      %v2363 = vadd.f32 %v1852, %v2355
      %v2364 = vadd.f32 %v1853, %v2356
      %v2365 = vadd.f32 %v1854, %v2357
      %v2366 = vadd.f32 %v1855, %v2358
      %v2367 = vadd.f32 %v1856, %v2359
      %v2368 = vld [vmem:[%s4] sm:$0x1]
      %v2370 = vperm.slane %v2368, 0
      %v2372 = vadd.f32 %v2329, %v2370
      %v2373 = vadd.f32 %v2330, %v2370
      %v2374 = vadd.f32 %v2331, %v2370
      %v2375 = vadd.f32 %v2332, %v2370
      %v2376 = vadd.f32 %v2333, %v2370
      %v2377 = vadd.f32 %v2334, %v2370
      %v2378 = vadd.f32 %v2335, %v2370
      %v2379 = vadd.f32 %v2336, %v2370
      %v2380 = vmul.f32 %v2372, 0.6
      %v2381 = vmul.f32 %v2373, 0.6
      %v2382 = vmul.f32 %v2374, 0.6
      %v2383 = vmul.f32 %v2375, 0.6
      %v2384 = vmul.f32 %v2376, 0.6
      %v2385 = vmul.f32 %v2377, 0.6
      %v2386 = vmul.f32 %v2378, 0.6
      %v2387 = vmul.f32 %v2379, 0.6
      %v2388 = vand.u32 2147483647, %v2372
      %v2389 = vand.u32 2147483647, %v2373
      %v2390 = vand.u32 2147483647, %v2374
      %v2391 = vand.u32 2147483647, %v2375
      %v2392 = vand.u32 2147483647, %v2376
      %v2393 = vand.u32 2147483647, %v2377
      %v2394 = vand.u32 2147483647, %v2378
      %v2395 = vand.u32 2147483647, %v2379
      %v2396 = vmul.f32 %v2388, 0.4
      %v2397 = vmul.f32 %v2389, 0.4
      %v2398 = vmul.f32 %v2390, 0.4
      %v2399 = vmul.f32 %v2391, 0.4
      %v2400 = vmul.f32 %v2392, 0.4
      %v2401 = vmul.f32 %v2393, 0.4
      %v2402 = vmul.f32 %v2394, 0.4
      %v2403 = vmul.f32 %v2395, 0.4
      %v2404 = vadd.f32 %v2380, %v2396
      %v2405 = vadd.f32 %v2381, %v2397
      %v2406 = vadd.f32 %v2382, %v2398
      %v2407 = vadd.f32 %v2383, %v2399
      %v2408 = vadd.f32 %v2384, %v2400
      %v2409 = vadd.f32 %v2385, %v2401
      %v2410 = vadd.f32 %v2386, %v2402
      %v2411 = vadd.f32 %v2387, %v2403
      %v2412 = vpack.c.bf16 %v2404, %v2404
      %v2413 = vpack.c.bf16 %v2405, %v2405
      %v2414 = vpack.c.bf16 %v2406, %v2406
      %v2415 = vpack.c.bf16 %v2407, %v2407
      %v2416 = vpack.c.bf16 %v2408, %v2408
      %v2417 = vpack.c.bf16 %v2409, %v2409
      %v2418 = vpack.c.bf16 %v2410, %v2410
      %v2419 = vpack.c.bf16 %v2411, %v2411
      %2420 = vst [vmem:[%s336] sm:$0xf] %v2412
      %2421 = vst [vmem:[%s336 + $0x4] sm:$0xf] %v2413
      %2422 = vst [vmem:[%s336 + $0x8] sm:$0xf] %v2414
      %2423 = vst [vmem:[%s336 + $0xc] sm:$0xf] %v2415
      %2424 = vst [vmem:[%s336 + $0x10] sm:$0xf] %v2416
      %2425 = vst [vmem:[%s336 + $0x14] sm:$0xf] %v2417
      %2426 = vst [vmem:[%s336 + $0x18] sm:$0xf] %v2418
      %2427 = vst [vmem:[%s336 + $0x1c] sm:$0xf] %v2419
      %vm2428 = vcmask 31744
      %v2429 = vsel %vm2428, %v2360, 0.0
      %2430 = vadd.xlane.f32.xlu0 %v2429
      %v2431 = vpop.xlane.xlu0 %2430
      %v2432 = vsel %vm2428, %v2361, 0.0
      %2433 = vadd.xlane.f32.xlu0 %v2432
      %v2434 = vpop.xlane.xlu0 %2433
      %v2435 = vsel %vm2428, %v2362, 0.0
      %2436 = vadd.xlane.f32.xlu0 %v2435
      %v2437 = vpop.xlane.xlu0 %2436
      %v2438 = vsel %vm2428, %v2363, 0.0
      %2439 = vadd.xlane.f32.xlu0 %v2438
      %v2440 = vpop.xlane.xlu0 %2439
      %v2441 = vsel %vm2428, %v2364, 0.0
      %2442 = vadd.xlane.f32.xlu0 %v2441
      %v2443 = vpop.xlane.xlu0 %2442
      %v2444 = vsel %vm2428, %v2365, 0.0
      %2445 = vadd.xlane.f32.xlu0 %v2444
      %v2446 = vpop.xlane.xlu0 %2445
      %v2447 = vsel %vm2428, %v2366, 0.0
      %2448 = vadd.xlane.f32.xlu0 %v2447
      %v2449 = vpop.xlane.xlu0 %2448
      %v2450 = vsel %vm2428, %v2367, 0.0
      %2451 = vadd.xlane.f32.xlu0 %v2450
      %v2452 = vpop.xlane.xlu0 %2451
      %v2453 = vld [vmem:[#allocation2] sm:$0x1]
      %v2455 = vperm.slane %v2453, 0
      %v2457 = vadd.f32 %v2431, %v2455
      %v2458 = vadd.f32 %v2434, %v2455
      %v2459 = vadd.f32 %v2437, %v2455
      %v2460 = vadd.f32 %v2440, %v2455
      %v2461 = vadd.f32 %v2443, %v2455
      %v2462 = vadd.f32 %v2446, %v2455
      %v2463 = vadd.f32 %v2449, %v2455
      %v2464 = vadd.f32 %v2452, %v2455
      %vm2465 = vcmask 7168
      %2466 = vst.msk [vmem:[%s346] sm:$0xff] %vm2465, %v2457
      %2467 = vst.msk [vmem:[%s346 + $0x8] sm:$0xff] %vm2465, %v2458
      %2468 = vst.msk [vmem:[%s346 + $0x10] sm:$0xff] %vm2465, %v2459
      %2469 = vst.msk [vmem:[%s346 + $0x18] sm:$0xff] %vm2465, %v2460
      %2470 = vst.msk [vmem:[%s346 + $0x20] sm:$0xff] %vm2465, %v2461
      %2471 = vst.msk [vmem:[%s346 + $0x28] sm:$0xff] %vm2465, %v2462
      %2472 = vst.msk [vmem:[%s346 + $0x30] sm:$0xff] %vm2465, %v2463
      %2473 = vst.msk [vmem:[%s346 + $0x38] sm:$0xff] %vm2465, %v2464
      %s2474 = smul.u32 8, %s26
      %p2475 = scmp.lt.s32.totalorder %s25, 1
      %s2476 = scalar_select %p2475, %s25, 1
      %p2477 = scmp.lt.s32.totalorder %s2474, 7
      %s2478 = scalar_select %p2477, %s2474, 7
      %s2479 = smul.addr %s2476, 8
      %s2480 = sadd.s32 %s2478, %s2479
      %s2481 = smul.addr %s2480, 4
      %s2482 = scalar_lea.vmem %s6, %s2481
      %s2483 = smul.u32 8, %s26
      %p2484 = scmp.lt.s32.totalorder %s25, 1
      %s2485 = scalar_select %p2484, %s25, 1
      %p2486 = scmp.lt.s32.totalorder %s2483, 7
      %s2487 = scalar_select %p2486, %s2483, 7
      %s2488 = smul.addr %s2485, 8
      %s2489 = sadd.s32 %s2487, %s2488
      %s2490 = smul.addr %s2489, 8
      %s2491 = scalar_lea.vmem %s7, %s2490
      // Predicated region
      $region45: #{texd_forward.7} parent=43 // pred_check
        %p2492 = pneg %p189
      $region46: #{texd_forward.7} parent=43 // pred_check_branch
        %2494 = sbr.rel (%p2492) target = $region48
      $region47: #{texd_forward.7} parent=43 // pred_region
        %s2495 = smul.u32 8, %s26
      $region48: #{texd_forward.7} parent=43 // pred_fallthru
        _
      // Predicated region
      $region49: #{texd_forward.7} parent=43 // pred_check
        %p2496 = pneg %p217
      $region50: #{texd_forward.7} parent=43 // pred_check_branch
        %2498 = sbr.rel (%p2496) target = $region52
      $region51: #{texd_forward.7} parent=43 // pred_region
        %s2499 = smul.u32 8, %s26
      $region52: #{texd_forward.7} parent=43 // pred_fallthru
        _
    $region44: #{texd_forward.7} parent=5 // pred_fallthru
      _
    %p2500 = scmp.le.s32.totalorder 2, %s16
    // Predicated region
    $region53: #{texd_forward.7} parent=5 // pred_check
      %p2501 = pneg %p2500
    $region54: #{texd_forward.7} parent=5 // pred_check_branch
      %2503 = sbr.rel (%p2501) target = $region56
    $region55: #{texd_forward.7} parent=5 // pred_region
      %s2504 = ssub.s32 %s16, 2
      // Predicated region
      $region57: #{texd_forward.7} parent=55 // pred_check
        %p2505 = pneg %p195
      $region58: #{texd_forward.7} parent=55 // pred_check_branch
        %2507 = sbr.rel (%p2505) target = $region60
      $region59: #{texd_forward.7} parent=55 // pred_region
        %s2508 = smul.u32 8, %s28
        %p2509 = scmp.lt.s32.totalorder %s27, 1
        %s2510 = scalar_select %p2509, %s27, 1
        %p2511 = scmp.lt.s32.totalorder %s2508, 7
        %s2512 = scalar_select %p2511, %s2508, 7
        %s2513 = smul.addr %s2510, 8
        %s2514 = sadd.s32 %s2512, %s2513
        %s2515 = smul.addr %s2514, 4
        %s2516 = scalar_lea.vmem %s6, %s2515
      $region60: #{texd_forward.7} parent=55 // pred_fallthru
        _
      // Predicated region
      $region61: #{texd_forward.7} parent=55 // pred_check
        %p2517 = pneg %p223
      $region62: #{texd_forward.7} parent=55 // pred_check_branch
        %2519 = sbr.rel (%p2517) target = $region64
      $region63: #{texd_forward.7} parent=55 // pred_region
        %s2520 = smul.u32 8, %s28
        %p2521 = scmp.lt.s32.totalorder %s27, 1
        %s2522 = scalar_select %p2521, %s27, 1
        %p2523 = scmp.lt.s32.totalorder %s2520, 7
        %s2524 = scalar_select %p2523, %s2520, 7
        %s2525 = smul.addr %s2522, 8
        %s2526 = sadd.s32 %s2524, %s2525
        %s2527 = smul.addr %s2526, 8
        %s2528 = scalar_lea.vmem %s7, %s2527
      $region64: #{texd_forward.7} parent=55 // pred_fallthru
        _
    $region56: #{texd_forward.7} parent=5 // pred_fallthru
      _
  $region6: #{texd_forward.7} parent=0 // loop_footer
    %s20 = sadd.s32 1, %s16
  $region7: #{texd_forward.7} parent=0 // loop_footer_branch
    %15 = sbr.rel target = $region3
  $region8: #{texd_forward.7} parent=0 // loop_exit
    _

// kernel: texd_forward.8
$region0: #{texd_forward.8}
  #allocation0 [shape = 'u32[]', space=smem, size = 0x4, offset = 0x4, fixed_abs, tag = 'smem constant byte address 0x4 - core index']
  #allocation1 [shape = 'u32[72,128]{1,0:T(1,128)}', space=vmem, size = 0x9000, scoped, tag = 'internal scratch']
  #allocation2 [shape = 'f32[1,1]{1,0:T(1,128)S(1)}', space=vmem, size = 0x200, scoped, tag = 'scoped memory for texd_forward.8']
  %s0 = inlined_call_operand.vmem [shape: bf16[2,1,6,16,512], index: 0, kind: input, shape index: {}]
  %s1 = inlined_call_operand.vmem [shape: f32[2,1,6,16,4], index: 1, kind: input, shape index: {}]
  %s2 = inlined_call_operand.vmem [shape: bf16[4,512,128], index: 2, kind: input, shape index: {}]
  %s3 = inlined_call_operand.vmem [shape: f32[4,1,4], index: 3, kind: input, shape index: {}]
  %s4 = inlined_call_operand.vmem [shape: f32[1,128], index: 4, kind: input, shape index: {}]
  %s5 = inlined_call_operand.<no memory space> [shape: f32[1,1], index: 5, kind: input, shape index: {}]
  %s6 = inlined_call_operand.vmem [shape: bf16[2,48,128], index: 6, kind: output, shape index: {0}]
  %s7 = inlined_call_operand.vmem [shape: f32[2,48,1], index: 7, kind: output, shape index: {1}]
  %8 = xla_tuple %s6, %s7
  %s9 = sld [smem:[#allocation0]]
  $region65: #{texd_forward.8} parent=0
    _
  %s11 = ssub.s32 1, %s9
  %s12 = scalar_select 0, %s11, %s9
  %v13 = vstv %s5
  %14 = vst [vmem:[#allocation2] sm:$0x1] %v13
  loop: start=0, step=1, limit=4
  $region2: #{texd_forward.8} parent=0 // loop_pre_header
    _
  $region3: #{texd_forward.8} parent=0 // loop_header
    %s16 = sphi 0, %s20
    %p17 = scmp.ge.s32.totalorder %s16, 4
    %s23 = sphi 0, %s35
    %s24 = sphi 0, %s31
    %s25 = sphi 0, %s23
    %s26 = sphi 0, %s24
    %s27 = sphi 0, %s25
    %s28 = sphi 0, %s26
    %s38 = sphi 0, %s40
    %s41 = sphi 0, %s38
    %s42 = sphi 0, %s41
    %s58 = sphi 0, %s42
    %s64 = sphi 0, %s66
    %s67 = sphi 0, %s64
    %s68 = sphi 0, %s67
    %s84 = sphi 0, %s68
    %s88 = sphi 0, %s88
    %s90 = sphi 0, %s88
    %s91 = sphi 0, %s90
    %s105 = sphi 0, %s91
    %s109 = sphi 0, %s109
    %s111 = sphi 0, %s109
    %s112 = sphi 0, %s111
    %s126 = sphi 0, %s112
    %s130 = sphi 0, %s130
    %s132 = sphi 0, %s130
    %s133 = sphi 0, %s132
    %s147 = sphi 0, %s133
    %s151 = sphi 0, %s151
    %s153 = sphi 0, %s151
    %s154 = sphi 0, %s153
    %s168 = sphi 0, %s154
    %s176 = sphi 0, %s178
    %s179 = sphi 0, %s176
    %s180 = sphi 0, %s179
    %s196 = sphi 0, %s180
    %s204 = sphi 0, %s206
    %s207 = sphi 0, %s204
    %s208 = sphi 0, %s207
    %s224 = sphi 0, %s208
  $region4: #{texd_forward.8} parent=0 // loop_header_branch
    %19 = sbr.rel (%p17) target = $region8
  $region5: #{texd_forward.8} parent=0 // loop_body
    %s21 = ssub.s32 %s16, 1
    %s22 = ssub.s32 %s16, 2
    %s29 = sadd.s32 1, %s24
    %p30 = scmp.ge.s32.totalorder %s29, 1
    %s31 = scalar_select %p30, 0, %s29
    %s32 = sadd.s32 1, %s23
    %s33 = scalar_select %p30, %s32, %s23
    %p34 = scmp.ge.s32.totalorder %s33, 2
    %s35 = scalar_select %p34, 0, %s33
    %s36 = ssub.s32 %s23, %s35
    %p37 = scmp.eq.s32.totalorder %s36, 0
    %s39 = sadd.s32 %s38, 1
    %s40 = scalar_select %p37, %s38, %s39
    %p43 = pneg %p37
    %p44 = scmp.eq.s32.totalorder %s16, 1
    %p45 = por %p43, %p44
    %p46 = scmp.ne.s32.totalorder %s38, %s41
    %p47 = scmp.eq.s32.totalorder %s16, 0
    %p48 = por %p46, %p47
    %p49 = scmp.ne.s32.totalorder %s38, %s41
    %p50 = scmp.eq.s32.totalorder %s21, 1
    %p51 = por %p49, %p50
    %p52 = scmp.ne.s32.totalorder %s41, %s42
    %p53 = scmp.eq.s32.totalorder %s21, 0
    %p54 = por %p52, %p53
    %p55 = scmp.ne.s32.totalorder %s41, %s42
    %p56 = scmp.eq.s32.totalorder %s22, 1
    %p57 = por %p55, %p56
    %p59 = scmp.ne.s32.totalorder %s42, %s58
    %p60 = scmp.eq.s32.totalorder %s22, 0
    %p61 = por %p59, %p60
    %s62 = ssub.s32 %s23, %s35
    %p63 = scmp.eq.s32.totalorder %s62, 0
    %s65 = sadd.s32 %s64, 1
    %s66 = scalar_select %p63, %s64, %s65
    %p69 = pneg %p63
    %p70 = scmp.eq.s32.totalorder %s16, 1
    %p71 = por %p69, %p70
    %p72 = scmp.ne.s32.totalorder %s64, %s67
    %p73 = scmp.eq.s32.totalorder %s16, 0
    %p74 = por %p72, %p73
    %p75 = scmp.ne.s32.totalorder %s64, %s67
    %p76 = scmp.eq.s32.totalorder %s21, 1
    %p77 = por %p75, %p76
    %p78 = scmp.ne.s32.totalorder %s67, %s68
    %p79 = scmp.eq.s32.totalorder %s21, 0
    %p80 = por %p78, %p79
    %p81 = scmp.ne.s32.totalorder %s67, %s68
    %p82 = scmp.eq.s32.totalorder %s22, 1
    %p83 = por %p81, %p82
    %p85 = scmp.ne.s32.totalorder %s68, %s84
    %p86 = scmp.eq.s32.totalorder %s22, 0
    %p87 = por %p85, %p86
    %s89 = sadd.s32 %s88, 1
    %p92 = scmp.eq.s32.totalorder %s16, 1
    %p93 = scmp.ne.s32.totalorder %s88, %s90
    %p94 = scmp.eq.s32.totalorder %s16, 0
    %p95 = por %p93, %p94
    %p96 = scmp.ne.s32.totalorder %s88, %s90
    %p97 = scmp.eq.s32.totalorder %s21, 1
    %p98 = por %p96, %p97
    %p99 = scmp.ne.s32.totalorder %s90, %s91
    %p100 = scmp.eq.s32.totalorder %s21, 0
    %p101 = por %p99, %p100
    %p102 = scmp.ne.s32.totalorder %s90, %s91
    %p103 = scmp.eq.s32.totalorder %s22, 1
    %p104 = por %p102, %p103
    %p106 = scmp.ne.s32.totalorder %s91, %s105
    %p107 = scmp.eq.s32.totalorder %s22, 0
    %p108 = por %p106, %p107
    %s110 = sadd.s32 %s109, 1
    %p113 = scmp.eq.s32.totalorder %s16, 1
    %p114 = scmp.ne.s32.totalorder %s109, %s111
    %p115 = scmp.eq.s32.totalorder %s16, 0
    %p116 = por %p114, %p115
    %p117 = scmp.ne.s32.totalorder %s109, %s111
    %p118 = scmp.eq.s32.totalorder %s21, 1
    %p119 = por %p117, %p118
    %p120 = scmp.ne.s32.totalorder %s111, %s112
    %p121 = scmp.eq.s32.totalorder %s21, 0
    %p122 = por %p120, %p121
    %p123 = scmp.ne.s32.totalorder %s111, %s112
    %p124 = scmp.eq.s32.totalorder %s22, 1
    %p125 = por %p123, %p124
    %p127 = scmp.ne.s32.totalorder %s112, %s126
    %p128 = scmp.eq.s32.totalorder %s22, 0
    %p129 = por %p127, %p128
    %s131 = sadd.s32 %s130, 1
    %p134 = scmp.eq.s32.totalorder %s16, 1
    %p135 = scmp.ne.s32.totalorder %s130, %s132
    %p136 = scmp.eq.s32.totalorder %s16, 0
    %p137 = por %p135, %p136
    %p138 = scmp.ne.s32.totalorder %s130, %s132
    %p139 = scmp.eq.s32.totalorder %s21, 1
    %p140 = por %p138, %p139
    %p141 = scmp.ne.s32.totalorder %s132, %s133
    %p142 = scmp.eq.s32.totalorder %s21, 0
    %p143 = por %p141, %p142
    %p144 = scmp.ne.s32.totalorder %s132, %s133
    %p145 = scmp.eq.s32.totalorder %s22, 1
    %p146 = por %p144, %p145
    %p148 = scmp.ne.s32.totalorder %s133, %s147
    %p149 = scmp.eq.s32.totalorder %s22, 0
    %p150 = por %p148, %p149
    %s152 = sadd.s32 %s151, 1
    %p155 = scmp.eq.s32.totalorder %s16, 1
    %p156 = scmp.ne.s32.totalorder %s151, %s153
    %p157 = scmp.eq.s32.totalorder %s16, 0
    %p158 = por %p156, %p157
    %p159 = scmp.ne.s32.totalorder %s151, %s153
    %p160 = scmp.eq.s32.totalorder %s21, 1
    %p161 = por %p159, %p160
    %p162 = scmp.ne.s32.totalorder %s153, %s154
    %p163 = scmp.eq.s32.totalorder %s21, 0
    %p164 = por %p162, %p163
    %p165 = scmp.ne.s32.totalorder %s153, %s154
    %p166 = scmp.eq.s32.totalorder %s22, 1
    %p167 = por %p165, %p166
    %p169 = scmp.ne.s32.totalorder %s154, %s168
    %p170 = scmp.eq.s32.totalorder %s22, 0
    %p171 = por %p169, %p170
    %s172 = ssub.s32 %s23, %s35
    %s173 = ssub.s32 %s24, %s31
    %s174 = sor.u32 %s172, %s173
    %p175 = scmp.eq.s32.totalorder %s174, 0
    %s177 = sadd.s32 %s176, 1
    %s178 = scalar_select %p175, %s176, %s177
    %p181 = pneg %p175
    %p182 = scmp.eq.s32.totalorder %s16, 1
    %p183 = por %p181, %p182
    %p184 = scmp.ne.s32.totalorder %s176, %s179
    %p185 = scmp.eq.s32.totalorder %s16, 0
    %p186 = por %p184, %p185
    %p187 = scmp.ne.s32.totalorder %s176, %s179
    %p188 = scmp.eq.s32.totalorder %s21, 1
    %p189 = por %p187, %p188
    %p190 = scmp.ne.s32.totalorder %s179, %s180
    %p191 = scmp.eq.s32.totalorder %s21, 0
    %p192 = por %p190, %p191
    %p193 = scmp.ne.s32.totalorder %s179, %s180
    %p194 = scmp.eq.s32.totalorder %s22, 1
    %p195 = por %p193, %p194
    %p197 = scmp.ne.s32.totalorder %s180, %s196
    %p198 = scmp.eq.s32.totalorder %s22, 0
    %p199 = por %p197, %p198
    %s200 = ssub.s32 %s23, %s35
    %s201 = ssub.s32 %s24, %s31
    %s202 = sor.u32 %s200, %s201
    %p203 = scmp.eq.s32.totalorder %s202, 0
    %s205 = sadd.s32 %s204, 1
    %s206 = scalar_select %p203, %s204, %s205
    %p209 = pneg %p203
    %p210 = scmp.eq.s32.totalorder %s16, 1
    %p211 = por %p209, %p210
    %p212 = scmp.ne.s32.totalorder %s204, %s207
    %p213 = scmp.eq.s32.totalorder %s16, 0
    %p214 = por %p212, %p213
    %p215 = scmp.ne.s32.totalorder %s204, %s207
    %p216 = scmp.eq.s32.totalorder %s21, 1
    %p217 = por %p215, %p216
    %p218 = scmp.ne.s32.totalorder %s207, %s208
    %p219 = scmp.eq.s32.totalorder %s21, 0
    %p220 = por %p218, %p219
    %p221 = scmp.ne.s32.totalorder %s207, %s208
    %p222 = scmp.eq.s32.totalorder %s22, 1
    %p223 = por %p221, %p222
    %p225 = scmp.ne.s32.totalorder %s208, %s224
    %p226 = scmp.eq.s32.totalorder %s22, 0
    %p227 = por %p225, %p226
    %p228 = scmp.le.s32.totalorder 1, %s16
    %p229 = scmp.lt.s32.totalorder %s16, 3
    %p230 = pnand %p228, %p229
    %p231 = pneg %p230
    // Predicated region
    $region9: #{texd_forward.8} parent=5 // pred_check
      _
    $region10: #{texd_forward.8} parent=5 // pred_check_branch
      %233 = sbr.rel (%p230) target = $region12
    $region11: #{texd_forward.8} parent=5 // pred_region
      %s234 = ssub.s32 %s16, 1
      // Predicated region
      $region13: #{texd_forward.8} parent=11 // pred_check
        %p235 = pneg %p101
      $region14: #{texd_forward.8} parent=11 // pred_check_branch
        %237 = sbr.rel (%p235) target = $region16
      $region15: #{texd_forward.8} parent=11 // pred_region
        _
      $region16: #{texd_forward.8} parent=11 // pred_fallthru
        _
      // Predicated region
      $region17: #{texd_forward.8} parent=11 // pred_check
        %p238 = pneg %p122
      $region18: #{texd_forward.8} parent=11 // pred_check_branch
        %240 = sbr.rel (%p238) target = $region20
      $region19: #{texd_forward.8} parent=11 // pred_region
        _
      $region20: #{texd_forward.8} parent=11 // pred_fallthru
        _
      // Predicated region
      $region21: #{texd_forward.8} parent=11 // pred_check
        %p241 = pneg %p143
      $region22: #{texd_forward.8} parent=11 // pred_check_branch
        %243 = sbr.rel (%p241) target = $region24
      $region23: #{texd_forward.8} parent=11 // pred_region
        _
      $region24: #{texd_forward.8} parent=11 // pred_fallthru
        _
      // Predicated region
      $region25: #{texd_forward.8} parent=11 // pred_check
        %p244 = pneg %p164
      $region26: #{texd_forward.8} parent=11 // pred_check_branch
        %246 = sbr.rel (%p244) target = $region28
      $region27: #{texd_forward.8} parent=11 // pred_region
        _
      $region28: #{texd_forward.8} parent=11 // pred_fallthru
        _
    $region12: #{texd_forward.8} parent=5 // pred_fallthru
      _
    %p247 = scmp.lt.s32.totalorder %s16, 2
    // Predicated region
    $region29: #{texd_forward.8} parent=5 // pred_check
      %p248 = pneg %p247
    $region30: #{texd_forward.8} parent=5 // pred_check_branch
      %250 = sbr.rel (%p248) target = $region32
    $region31: #{texd_forward.8} parent=5 // pred_region
      // Predicated region
      $region33: #{texd_forward.8} parent=31 // pred_check
        %p251 = pneg %p48
      $region34: #{texd_forward.8} parent=31 // pred_check_branch
        %253 = sbr.rel (%p251) target = $region36
      $region35: #{texd_forward.8} parent=31 // pred_region
        %p254 = scmp.lt.s32.totalorder %s23, 1
        %s255 = scalar_select %p254, %s23, 1
        %s256 = smul.addr %s255, 48
        %s257 = smul.addr %s256, 4
        %s258 = scalar_lea.vmem %s0, %s257
      $region36: #{texd_forward.8} parent=31 // pred_fallthru
        _
      // Predicated region
      $region37: #{texd_forward.8} parent=31 // pred_check
        %p259 = pneg %p74
      $region38: #{texd_forward.8} parent=31 // pred_check_branch
        %261 = sbr.rel (%p259) target = $region40
      $region39: #{texd_forward.8} parent=31 // pred_region
        %p262 = scmp.lt.s32.totalorder %s23, 1
        %s263 = scalar_select %p262, %s23, 1
        %s264 = smul.addr %s263, 12
        %s265 = smul.addr %s264, 8
        %s266 = scalar_lea.vmem %s1, %s265
      $region40: #{texd_forward.8} parent=31 // pred_fallthru
        _
    $region32: #{texd_forward.8} parent=5 // pred_fallthru
      _
    %p267 = scmp.le.s32.totalorder 1, %s16
    %p268 = scmp.lt.s32.totalorder %s16, 3
    %p269 = pnand %p267, %p268
    %p270 = pneg %p269
    // Predicated region
    $region41: #{texd_forward.8} parent=5 // pred_check
      _
    $region42: #{texd_forward.8} parent=5 // pred_check_branch
      %272 = sbr.rel (%p269) target = $region44
    $region43: #{texd_forward.8} parent=5 // pred_region
      %s273 = ssub.s32 %s16, 1
      %p274 = scmp.lt.s32.totalorder %s25, 1
      %s275 = scalar_select %p274, %s25, 1
      %s276 = smul.addr %s275, 48
      %s277 = smul.addr %s276, 4
      %s278 = scalar_lea.vmem %s0, %s277
      %p279 = pneg %p54
      %p280 = pneg %p51
      %p281 = scmp.lt.s32.totalorder %s25, 1
      %s282 = scalar_select %p281, %s25, 1
      %s283 = smul.addr %s282, 12
      %s284 = smul.addr %s283, 8
      %s285 = scalar_lea.vmem %s1, %s284
      %p286 = pneg %p80
      %p287 = pneg %p77
      %p288 = pneg %p101
      %p289 = pneg %p98
      %p290 = pneg %p122
      %p291 = pneg %p119
      %p292 = pneg %p143
      %p293 = pneg %p140
      %p294 = pneg %p164
      %p295 = pneg %p161
      %p296 = pneg %p192
      %p297 = pneg %p189
      %s298 = smul.u32 6, %s26
      %p299 = scmp.lt.s32.totalorder %s25, 1
      %s300 = scalar_select %p299, %s25, 1
      %p301 = scmp.lt.s32.totalorder %s298, 5
      %s302 = scalar_select %p301, %s298, 5
      %s303 = smul.addr %s300, 6
      %s304 = sadd.s32 %s302, %s303
      %s305 = smul.addr %s304, 4
      %s306 = scalar_lea.vmem %s6, %s305
      %p307 = pneg %p220
      %p308 = pneg %p217
      %s309 = smul.u32 6, %s26
      %p310 = scmp.lt.s32.totalorder %s25, 1
      %s311 = scalar_select %p310, %s25, 1
      %p312 = scmp.lt.s32.totalorder %s309, 5
      %s313 = scalar_select %p312, %s309, 5
      %s314 = smul.addr %s311, 6
      %s315 = sadd.s32 %s313, %s314
      %s316 = smul.addr %s315, 8
      %s317 = scalar_lea.vmem %s7, %s316
      %p318 = scmp.lt.s32.totalorder %s25, 1
      %s319 = scalar_select %p318, %s25, 1
      %s320 = smul.addr %s319, 48
      %s321 = smul.addr %s320, 4
      %s322 = scalar_lea.vmem %s0, %s321
      %p323 = scmp.lt.s32.totalorder %s25, 1
      %s324 = scalar_select %p323, %s25, 1
      %s325 = smul.addr %s324, 12
      %s326 = smul.addr %s325, 8
      %s327 = scalar_lea.vmem %s1, %s326
      %s328 = smul.u32 6, %s26
      %p329 = scmp.lt.s32.totalorder %s25, 1
      %s330 = scalar_select %p329, %s25, 1
      %p331 = scmp.lt.s32.totalorder %s328, 5
      %s332 = scalar_select %p331, %s328, 5
      %s333 = smul.addr %s330, 6
      %s334 = sadd.s32 %s332, %s333
      %s335 = smul.addr %s334, 4
      %s336 = scalar_lea.vmem %s6, %s335
      %s337 = smul.u32 6, %s26
      %s338 = smul.u32 6, %s26
      %p339 = scmp.lt.s32.totalorder %s25, 1
      %s340 = scalar_select %p339, %s25, 1
      %p341 = scmp.lt.s32.totalorder %s338, 5
      %s342 = scalar_select %p341, %s338, 5
      %s343 = smul.addr %s340, 6
      %s344 = sadd.s32 %s342, %s343
      %s345 = smul.addr %s344, 8
      %s346 = scalar_lea.vmem %s7, %s345
      %s347 = smul.u32 6, %s26
      %s348 = smul.u32 %s26, 3
      %s349 = smul.u32 %s348, 8
      %s350 = smul.addr %s349, 4
      %s351 = scalar_lea.vmem %s322, %s350
      %v352 = vld [vmem:[%s351] sm:$0xff]
      %v353 = vld [vmem:[%s351 + $0x8] sm:$0xff]
      %v354 = vld [vmem:[%s351 + $0x10] sm:$0xff]
      %v355 = vld [vmem:[%s351 + $0x18] sm:$0xff]
      %v356 = vld [vmem:[%s351 + $0x20] sm:$0xff]
      %v357 = vld [vmem:[%s351 + $0x28] sm:$0xff]
      %v358 = vld [vmem:[%s351 + $0x30] sm:$0xff]
      %v359 = vld [vmem:[%s351 + $0x38] sm:$0xff]
      %v360 = vld [vmem:[%s351 + $0x40] sm:$0xff]
      %v361 = vld [vmem:[%s351 + $0x48] sm:$0xff]
      %v362 = vld [vmem:[%s351 + $0x50] sm:$0xff]
      %v363 = vld [vmem:[%s351 + $0x58] sm:$0xff]
      %v364 = vld [vmem:[%s2] sm:$0xf]
      %v365 = vld [vmem:[%s2 + $0x4] sm:$0xf]
      %v366 = vld [vmem:[%s2 + $0x8] sm:$0xf]
      %v367 = vld [vmem:[%s2 + $0xc] sm:$0xf]
      %v368 = vld [vmem:[%s2 + $0x10] sm:$0xf]
      %v369 = vld [vmem:[%s2 + $0x14] sm:$0xf]
      %v370 = vld [vmem:[%s2 + $0x18] sm:$0xf]
      %v371 = vld [vmem:[%s2 + $0x1c] sm:$0xf]
      %v372 = vld [vmem:[%s2 + $0x20] sm:$0xf]
      %v373 = vld [vmem:[%s2 + $0x24] sm:$0xf]
      %v374 = vld [vmem:[%s2 + $0x28] sm:$0xf]
      %v375 = vld [vmem:[%s2 + $0x2c] sm:$0xf]
      %v376 = vld [vmem:[%s2 + $0x30] sm:$0xf]
      %v377 = vld [vmem:[%s2 + $0x34] sm:$0xf]
      %v378 = vld [vmem:[%s2 + $0x38] sm:$0xf]
      %v379 = vld [vmem:[%s2 + $0x3c] sm:$0xf]
      %v380 = vld [vmem:[%s2 + $0x40] sm:$0xf]
      %v381 = vld [vmem:[%s2 + $0x44] sm:$0xf]
      %v382 = vld [vmem:[%s2 + $0x48] sm:$0xf]
      %v383 = vld [vmem:[%s2 + $0x4c] sm:$0xf]
      %v384 = vld [vmem:[%s2 + $0x50] sm:$0xf]
      %v385 = vld [vmem:[%s2 + $0x54] sm:$0xf]
      %v386 = vld [vmem:[%s2 + $0x58] sm:$0xf]
      %v387 = vld [vmem:[%s2 + $0x5c] sm:$0xf]
      %v388 = vld [vmem:[%s2 + $0x60] sm:$0xf]
      %v389 = vld [vmem:[%s2 + $0x64] sm:$0xf]
      %v390 = vld [vmem:[%s2 + $0x68] sm:$0xf]
      %v391 = vld [vmem:[%s2 + $0x6c] sm:$0xf]
      %v392 = vld [vmem:[%s2 + $0x70] sm:$0xf]
      %v393 = vld [vmem:[%s2 + $0x74] sm:$0xf]
      %v394 = vld [vmem:[%s2 + $0x78] sm:$0xf]
      %v395 = vld [vmem:[%s2 + $0x7c] sm:$0xf]
      %v396 = vld [vmem:[%s2 + $0x80] sm:$0xf]
      %v397 = vld [vmem:[%s2 + $0x84] sm:$0xf]
      %v398 = vld [vmem:[%s2 + $0x88] sm:$0xf]
      %v399 = vld [vmem:[%s2 + $0x8c] sm:$0xf]
      %v400 = vld [vmem:[%s2 + $0x90] sm:$0xf]
      %v401 = vld [vmem:[%s2 + $0x94] sm:$0xf]
      %v402 = vld [vmem:[%s2 + $0x98] sm:$0xf]
      %v403 = vld [vmem:[%s2 + $0x9c] sm:$0xf]
      %v404 = vld [vmem:[%s2 + $0xa0] sm:$0xf]
      %v405 = vld [vmem:[%s2 + $0xa4] sm:$0xf]
      %v406 = vld [vmem:[%s2 + $0xa8] sm:$0xf]
      %v407 = vld [vmem:[%s2 + $0xac] sm:$0xf]
      %v408 = vld [vmem:[%s2 + $0xb0] sm:$0xf]
      %v409 = vld [vmem:[%s2 + $0xb4] sm:$0xf]
      %v410 = vld [vmem:[%s2 + $0xb8] sm:$0xf]
      %v411 = vld [vmem:[%s2 + $0xbc] sm:$0xf]
      %v412 = vld [vmem:[%s2 + $0xc0] sm:$0xf]
      %v413 = vld [vmem:[%s2 + $0xc4] sm:$0xf]
      %v414 = vld [vmem:[%s2 + $0xc8] sm:$0xf]
      %v415 = vld [vmem:[%s2 + $0xcc] sm:$0xf]
      %v416 = vld [vmem:[%s2 + $0xd0] sm:$0xf]
      %v417 = vld [vmem:[%s2 + $0xd4] sm:$0xf]
      %v418 = vld [vmem:[%s2 + $0xd8] sm:$0xf]
      %v419 = vld [vmem:[%s2 + $0xdc] sm:$0xf]
      %v420 = vld [vmem:[%s2 + $0xe0] sm:$0xf]
      %v421 = vld [vmem:[%s2 + $0xe4] sm:$0xf]
      %v422 = vld [vmem:[%s2 + $0xe8] sm:$0xf]
      %v423 = vld [vmem:[%s2 + $0xec] sm:$0xf]
      %v424 = vld [vmem:[%s2 + $0xf0] sm:$0xf]
      %v425 = vld [vmem:[%s2 + $0xf4] sm:$0xf]
      %v426 = vld [vmem:[%s2 + $0xf8] sm:$0xf]
      %v427 = vld [vmem:[%s2 + $0xfc] sm:$0xf]
      %s428 = smul.u32 %s348, 16
      %s429 = scalar_lea.vmem %s327, %s428
      %v430 = vld [vmem:[%s429] sm:$0xff]
      %v431 = vld [vmem:[%s429 + $0x8] sm:$0xff]
      %v432 = vld [vmem:[%s429 + $0x10] sm:$0xff]
      %v433 = vld [vmem:[%s429 + $0x18] sm:$0xff]
      %v434 = vld [vmem:[%s429 + $0x20] sm:$0xff]
      %v435 = vld [vmem:[%s429 + $0x28] sm:$0xff]
      %v436 = vld [vmem:[%s3] sm:$0x1]
      %v438 = vperm.slane %v436, 0
      %v440 = vmul.f32 %v430, %v438
      %v441 = vmul.f32 %v431, %v438
      %v442 = vmul.f32 %v432, %v438
      %v443 = vmul.f32 %v433, %v438
      %v444 = vmul.f32 %v434, %v438
      %v445 = vmul.f32 %v435, %v438
      %s446 = sadd.s32 %s348, 1
      %s447 = smul.u32 %s446, 8
      %s448 = smul.addr %s447, 4
      %s449 = scalar_lea.vmem %s322, %s448
      %v450 = vld [vmem:[%s449] sm:$0xff]
      %v451 = vld [vmem:[%s449 + $0x8] sm:$0xff]
      %v452 = vld [vmem:[%s449 + $0x10] sm:$0xff]
      %v453 = vld [vmem:[%s449 + $0x18] sm:$0xff]
      %v454 = vld [vmem:[%s449 + $0x20] sm:$0xff]
      %v455 = vld [vmem:[%s449 + $0x28] sm:$0xff]
      %v456 = vld [vmem:[%s449 + $0x30] sm:$0xff]
      %v457 = vld [vmem:[%s449 + $0x38] sm:$0xff]
      %v458 = vld [vmem:[%s449 + $0x40] sm:$0xff]
      %v459 = vld [vmem:[%s449 + $0x48] sm:$0xff]
      %v460 = vld [vmem:[%s449 + $0x50] sm:$0xff]
      %v461 = vld [vmem:[%s449 + $0x58] sm:$0xff]
      %s462 = scalar_lea.vmem %s2, 256
      %v463 = vld [vmem:[%s462] sm:$0xf]
      %v464 = vld [vmem:[%s462 + $0x4] sm:$0xf]
      %v465 = vld [vmem:[%s462 + $0x8] sm:$0xf]
      %v466 = vld [vmem:[%s462 + $0xc] sm:$0xf]
      %v467 = vld [vmem:[%s462 + $0x10] sm:$0xf]
      %v468 = vld [vmem:[%s462 + $0x14] sm:$0xf]
      %v469 = vld [vmem:[%s462 + $0x18] sm:$0xf]
      %v470 = vld [vmem:[%s462 + $0x1c] sm:$0xf]
      %v471 = vld [vmem:[%s462 + $0x20] sm:$0xf]
      %v472 = vld [vmem:[%s462 + $0x24] sm:$0xf]
      %v473 = vld [vmem:[%s462 + $0x28] sm:$0xf]
      %v474 = vld [vmem:[%s462 + $0x2c] sm:$0xf]
      %v475 = vld [vmem:[%s462 + $0x30] sm:$0xf]
      %v476 = vld [vmem:[%s462 + $0x34] sm:$0xf]
      %v477 = vld [vmem:[%s462 + $0x38] sm:$0xf]
      %v478 = vld [vmem:[%s462 + $0x3c] sm:$0xf]
      %v479 = vld [vmem:[%s462 + $0x40] sm:$0xf]
      %v480 = vld [vmem:[%s462 + $0x44] sm:$0xf]
      %v481 = vld [vmem:[%s462 + $0x48] sm:$0xf]
      %v482 = vld [vmem:[%s462 + $0x4c] sm:$0xf]
      %v483 = vld [vmem:[%s462 + $0x50] sm:$0xf]
      %v484 = vld [vmem:[%s462 + $0x54] sm:$0xf]
      %v485 = vld [vmem:[%s462 + $0x58] sm:$0xf]
      %v486 = vld [vmem:[%s462 + $0x5c] sm:$0xf]
      %v487 = vld [vmem:[%s462 + $0x60] sm:$0xf]
      %v488 = vld [vmem:[%s462 + $0x64] sm:$0xf]
      %v489 = vld [vmem:[%s462 + $0x68] sm:$0xf]
      %v490 = vld [vmem:[%s462 + $0x6c] sm:$0xf]
      %v491 = vld [vmem:[%s462 + $0x70] sm:$0xf]
      %v492 = vld [vmem:[%s462 + $0x74] sm:$0xf]
      %v493 = vld [vmem:[%s462 + $0x78] sm:$0xf]
      %v494 = vld [vmem:[%s462 + $0x7c] sm:$0xf]
      %v495 = vld [vmem:[%s462 + $0x80] sm:$0xf]
      %v496 = vld [vmem:[%s462 + $0x84] sm:$0xf]
      %v497 = vld [vmem:[%s462 + $0x88] sm:$0xf]
      %v498 = vld [vmem:[%s462 + $0x8c] sm:$0xf]
      %v499 = vld [vmem:[%s462 + $0x90] sm:$0xf]
      %v500 = vld [vmem:[%s462 + $0x94] sm:$0xf]
      %v501 = vld [vmem:[%s462 + $0x98] sm:$0xf]
      %v502 = vld [vmem:[%s462 + $0x9c] sm:$0xf]
      %v503 = vld [vmem:[%s462 + $0xa0] sm:$0xf]
      %v504 = vld [vmem:[%s462 + $0xa4] sm:$0xf]
      %v505 = vld [vmem:[%s462 + $0xa8] sm:$0xf]
      %v506 = vld [vmem:[%s462 + $0xac] sm:$0xf]
      %v507 = vld [vmem:[%s462 + $0xb0] sm:$0xf]
      %v508 = vld [vmem:[%s462 + $0xb4] sm:$0xf]
      %v509 = vld [vmem:[%s462 + $0xb8] sm:$0xf]
      %v510 = vld [vmem:[%s462 + $0xbc] sm:$0xf]
      %v511 = vld [vmem:[%s462 + $0xc0] sm:$0xf]
      %v512 = vld [vmem:[%s462 + $0xc4] sm:$0xf]
      %v513 = vld [vmem:[%s462 + $0xc8] sm:$0xf]
      %v514 = vld [vmem:[%s462 + $0xcc] sm:$0xf]
      %v515 = vld [vmem:[%s462 + $0xd0] sm:$0xf]
      %v516 = vld [vmem:[%s462 + $0xd4] sm:$0xf]
      %v517 = vld [vmem:[%s462 + $0xd8] sm:$0xf]
      %v518 = vld [vmem:[%s462 + $0xdc] sm:$0xf]
      %v519 = vld [vmem:[%s462 + $0xe0] sm:$0xf]
      %v520 = vld [vmem:[%s462 + $0xe4] sm:$0xf]
      %v521 = vld [vmem:[%s462 + $0xe8] sm:$0xf]
      %v522 = vld [vmem:[%s462 + $0xec] sm:$0xf]
      %v523 = vld [vmem:[%s462 + $0xf0] sm:$0xf]
      %v524 = vld [vmem:[%s462 + $0xf4] sm:$0xf]
      %v525 = vld [vmem:[%s462 + $0xf8] sm:$0xf]
      %v526 = vld [vmem:[%s462 + $0xfc] sm:$0xf]
      %v539 = vunpack.c.l.b16 %v450
      %v540 = vunpack.c.h.b16 %v450
      %v541 = vunpack.c.l.b16 %v451
      %v542 = vunpack.c.h.b16 %v451
      %v543 = vunpack.c.l.b16 %v452
      %v544 = vunpack.c.h.b16 %v452
      %v545 = vunpack.c.l.b16 %v453
      %v546 = vunpack.c.h.b16 %v453
      %v547 = vunpack.c.l.b16 %v454
      %v548 = vunpack.c.h.b16 %v454
      %v549 = vunpack.c.l.b16 %v455
      %v550 = vunpack.c.h.b16 %v455
      %v551 = vunpack.c.l.b16 %v456
      %v552 = vunpack.c.h.b16 %v456
      %v553 = vunpack.c.l.b16 %v457
      %v554 = vunpack.c.h.b16 %v457
      %v555 = vunpack.c.l.b16 %v458
      %v556 = vunpack.c.h.b16 %v458
      %v557 = vunpack.c.l.b16 %v459
      %v558 = vunpack.c.h.b16 %v459
      %v559 = vunpack.c.l.b16 %v460
      %v560 = vunpack.c.h.b16 %v460
      %v561 = vunpack.c.l.b16 %v461
      %v562 = vunpack.c.h.b16 %v461
      %v563 = vpack.c.b16 %v543, %v539
      %v564 = vpack.c.b16 %v544, %v540
      %v565 = vpack.c.b16 %v545, %v541
      %v566 = vpack.c.b16 %v546, %v542
      %v567 = vpack.c.b16 %v551, %v547
      %v568 = vpack.c.b16 %v552, %v548
      %v569 = vpack.c.b16 %v553, %v549
      %v570 = vpack.c.b16 %v554, %v550
      %v571 = vpack.c.b16 %v559, %v555
      %v572 = vpack.c.b16 %v560, %v556
      %v573 = vpack.c.b16 %v561, %v557
      %v574 = vpack.c.b16 %v562, %v558
      %v651 = vunpack.c.l.b16 %v463
      %v652 = vunpack.c.l.b16 %v464
      %v653 = vunpack.c.l.b16 %v465
      %v654 = vunpack.c.l.b16 %v466
      %v655 = vunpack.c.l.b16 %v467
      %v656 = vunpack.c.l.b16 %v468
      %v657 = vunpack.c.l.b16 %v469
      %v658 = vunpack.c.l.b16 %v470
      %v659 = vunpack.c.l.b16 %v471
      %v660 = vunpack.c.l.b16 %v472
      %v661 = vunpack.c.l.b16 %v473
      %v662 = vunpack.c.l.b16 %v474
      %v663 = vunpack.c.l.b16 %v475
      %v664 = vunpack.c.l.b16 %v476
      %v665 = vunpack.c.l.b16 %v477
      %v666 = vunpack.c.l.b16 %v478
      %v667 = vunpack.c.l.b16 %v479
      %v668 = vunpack.c.l.b16 %v480
      %v669 = vunpack.c.l.b16 %v481
      %v670 = vunpack.c.l.b16 %v482
      %v671 = vunpack.c.l.b16 %v483
      %v672 = vunpack.c.l.b16 %v484
      %v673 = vunpack.c.l.b16 %v485
      %v674 = vunpack.c.l.b16 %v486
      %v675 = vunpack.c.l.b16 %v487
      %v676 = vunpack.c.l.b16 %v488
      %v677 = vunpack.c.l.b16 %v489
      %v678 = vunpack.c.l.b16 %v490
      %v679 = vunpack.c.l.b16 %v491
      %v680 = vunpack.c.l.b16 %v492
      %v681 = vunpack.c.l.b16 %v493
      %v682 = vunpack.c.l.b16 %v494
      %v683 = vunpack.c.l.b16 %v495
      %v684 = vunpack.c.l.b16 %v496
      %v685 = vunpack.c.l.b16 %v497
      %v686 = vunpack.c.l.b16 %v498
      %v687 = vunpack.c.l.b16 %v499
      %v688 = vunpack.c.l.b16 %v500
      %v689 = vunpack.c.l.b16 %v501
      %v690 = vunpack.c.l.b16 %v502
      %v691 = vunpack.c.l.b16 %v503
      %v692 = vunpack.c.l.b16 %v504
      %v693 = vunpack.c.l.b16 %v505
      %v694 = vunpack.c.l.b16 %v506
      %v695 = vunpack.c.l.b16 %v507
      %v696 = vunpack.c.l.b16 %v508
      %v697 = vunpack.c.l.b16 %v509
      %v698 = vunpack.c.l.b16 %v510
      %v699 = vunpack.c.l.b16 %v511
      %v700 = vunpack.c.l.b16 %v512
      %v701 = vunpack.c.l.b16 %v513
      %v702 = vunpack.c.l.b16 %v514
      %v703 = vunpack.c.l.b16 %v515
      %v704 = vunpack.c.l.b16 %v516
      %v705 = vunpack.c.l.b16 %v517
      %v706 = vunpack.c.l.b16 %v518
      %v707 = vunpack.c.l.b16 %v519
      %v708 = vunpack.c.l.b16 %v520
      %v709 = vunpack.c.l.b16 %v521
      %v710 = vunpack.c.l.b16 %v522
      %v711 = vunpack.c.l.b16 %v523
      %v712 = vunpack.c.l.b16 %v524
      %v713 = vunpack.c.l.b16 %v525
      %v714 = vunpack.c.l.b16 %v526
      %v715 = vpack.c.b16 %v652, %v651
      %v716 = vpack.c.b16 %v654, %v653
      %v717 = vpack.c.b16 %v656, %v655
      %v718 = vpack.c.b16 %v658, %v657
      %v719 = vpack.c.b16 %v660, %v659
      %v720 = vpack.c.b16 %v662, %v661
      %v721 = vpack.c.b16 %v664, %v663
      %v722 = vpack.c.b16 %v666, %v665
      %v723 = vpack.c.b16 %v668, %v667
      %v724 = vpack.c.b16 %v670, %v669
      %v725 = vpack.c.b16 %v672, %v671
      %v726 = vpack.c.b16 %v674, %v673
      %v727 = vpack.c.b16 %v676, %v675
      %v728 = vpack.c.b16 %v678, %v677
      %v729 = vpack.c.b16 %v680, %v679
      %v730 = vpack.c.b16 %v682, %v681
      %v731 = vpack.c.b16 %v684, %v683
      %v732 = vpack.c.b16 %v686, %v685
      %v733 = vpack.c.b16 %v688, %v687
      %v734 = vpack.c.b16 %v690, %v689
      %v735 = vpack.c.b16 %v692, %v691
      %v736 = vpack.c.b16 %v694, %v693
      %v737 = vpack.c.b16 %v696, %v695
      %v738 = vpack.c.b16 %v698, %v697
      %v739 = vpack.c.b16 %v700, %v699
      %v740 = vpack.c.b16 %v702, %v701
      %v741 = vpack.c.b16 %v704, %v703
      %v742 = vpack.c.b16 %v706, %v705
      %v743 = vpack.c.b16 %v708, %v707
      %v744 = vpack.c.b16 %v710, %v709
      %v745 = vpack.c.b16 %v712, %v711
      %v746 = vpack.c.b16 %v714, %v713
      %779 = vmatpush.bf16.msra.mxu0 %v722
      %780 = vmatpush.bf16.msra.mxu0 %v721
      %781 = vmatpush.bf16.msra.mxu0 %v720
      %782 = vmatpush.bf16.msra.mxu0 %v719
      %783 = vmatpush.bf16.msra.mxu0 %v718
      %784 = vmatpush.bf16.msra.mxu0 %v717
      %785 = vmatpush.bf16.msra.mxu0 %v716
      %786 = vmatpush.bf16.msra.mxu0 %v715
      %787 = vmatmul.bf16.gmra.mxu0 %v563
      %v788 = vpop.f32.mrf.mxu0
      %v789 = vadd.f32 0.0, %v788
      %v790 = vpop.f32.mrf.mxu0
      %v791 = vadd.f32 0.0, %v790
      %792 = vmatmul.bf16.gmra.mxu0 %v567
      %v793 = vpop.f32.mrf.mxu0
      %v794 = vadd.f32 0.0, %v793
      %v795 = vpop.f32.mrf.mxu0
      %v796 = vadd.f32 0.0, %v795
      %797 = vmatmul.bf16.gmra.mxu0 %v571
      %v798 = vpop.f32.mrf.mxu0
      %v799 = vadd.f32 0.0, %v798
      %v800 = vpop.f32.mrf.mxu0
      %v801 = vadd.f32 0.0, %v800
      %802 = vdwg.mxu0
      %803 = vmatpush.bf16.msra.mxu0 %v730
      %804 = vmatpush.bf16.msra.mxu0 %v729
      %805 = vmatpush.bf16.msra.mxu0 %v728
      %806 = vmatpush.bf16.msra.mxu0 %v727
      %807 = vmatpush.bf16.msra.mxu0 %v726
      %808 = vmatpush.bf16.msra.mxu0 %v725
      %809 = vmatpush.bf16.msra.mxu0 %v724
      %810 = vmatpush.bf16.msra.mxu0 %v723
      %811 = vmatmul.bf16.gmra.mxu0 %v564
      %v812 = vpop.f32.mrf.mxu0
      %v813 = vadd.f32 %v789, %v812
      %v814 = vpop.f32.mrf.mxu0
      %v815 = vadd.f32 %v791, %v814
      %816 = vmatmul.bf16.gmra.mxu0 %v568
      %v817 = vpop.f32.mrf.mxu0
      %v818 = vadd.f32 %v794, %v817
      %v819 = vpop.f32.mrf.mxu0
      %v820 = vadd.f32 %v796, %v819
      %821 = vmatmul.bf16.gmra.mxu0 %v572
      %v822 = vpop.f32.mrf.mxu0
      %v823 = vadd.f32 %v799, %v822
      %v824 = vpop.f32.mrf.mxu0
      %v825 = vadd.f32 %v801, %v824
      %826 = vdwg.mxu0
      %827 = vmatpush.bf16.msra.mxu0 %v738
      %828 = vmatpush.bf16.msra.mxu0 %v737
      %829 = vmatpush.bf16.msra.mxu0 %v736
      %830 = vmatpush.bf16.msra.mxu0 %v735
      %831 = vmatpush.bf16.msra.mxu0 %v734
      %832 = vmatpush.bf16.msra.mxu0 %v733
      %833 = vmatpush.bf16.msra.mxu0 %v732
      %834 = vmatpush.bf16.msra.mxu0 %v731
      %835 = vmatmul.bf16.gmra.mxu0 %v565
      %v836 = vpop.f32.mrf.mxu0
      %v837 = vadd.f32 %v813, %v836
      %v838 = vpop.f32.mrf.mxu0
      %v839 = vadd.f32 %v815, %v838
      %840 = vmatmul.bf16.gmra.mxu0 %v569
      %v841 = vpop.f32.mrf.mxu0
      %v842 = vadd.f32 %v818, %v841
      %v843 = vpop.f32.mrf.mxu0
      %v844 = vadd.f32 %v820, %v843
      %845 = vmatmul.bf16.gmra.mxu0 %v573
      %v846 = vpop.f32.mrf.mxu0
      %v847 = vadd.f32 %v823, %v846
      %v848 = vpop.f32.mrf.mxu0
      %v849 = vadd.f32 %v825, %v848
      %850 = vdwg.mxu0
      %851 = vmatpush.bf16.msra.mxu0 %v746
      %852 = vmatpush.bf16.msra.mxu0 %v745
      %853 = vmatpush.bf16.msra.mxu0 %v744
      %854 = vmatpush.bf16.msra.mxu0 %v743
      %855 = vmatpush.bf16.msra.mxu0 %v742
      %856 = vmatpush.bf16.msra.mxu0 %v741
      %857 = vmatpush.bf16.msra.mxu0 %v740
      %858 = vmatpush.bf16.msra.mxu0 %v739
      %859 = vmatmul.bf16.gmra.mxu0 %v566
      %v860 = vpop.f32.mrf.mxu0
      %v861 = vadd.f32 %v837, %v860
      %v862 = vpop.f32.mrf.mxu0
      %v863 = vadd.f32 %v839, %v862
      %864 = vmatmul.bf16.gmra.mxu0 %v570
      %v865 = vpop.f32.mrf.mxu0
      %v866 = vadd.f32 %v842, %v865
      %v867 = vpop.f32.mrf.mxu0
      %v868 = vadd.f32 %v844, %v867
      %869 = vmatmul.bf16.gmra.mxu0 %v574
      %v870 = vpop.f32.mrf.mxu0
      %v871 = vadd.f32 %v847, %v870
      %v872 = vpop.f32.mrf.mxu0
      %v873 = vadd.f32 %v849, %v872
      %874 = vdwg.mxu0
      %v887 = vunpack.c.l.b16 %v352
      %v888 = vunpack.c.h.b16 %v352
      %v889 = vunpack.c.l.b16 %v353
      %v890 = vunpack.c.h.b16 %v353
      %v891 = vunpack.c.l.b16 %v354
      %v892 = vunpack.c.h.b16 %v354
      %v893 = vunpack.c.l.b16 %v355
      %v894 = vunpack.c.h.b16 %v355
      %v895 = vunpack.c.l.b16 %v356
      %v896 = vunpack.c.h.b16 %v356
      %v897 = vunpack.c.l.b16 %v357
      %v898 = vunpack.c.h.b16 %v357
      %v899 = vunpack.c.l.b16 %v358
      %v900 = vunpack.c.h.b16 %v358
      %v901 = vunpack.c.l.b16 %v359
      %v902 = vunpack.c.h.b16 %v359
      %v903 = vunpack.c.l.b16 %v360
      %v904 = vunpack.c.h.b16 %v360
      %v905 = vunpack.c.l.b16 %v361
      %v906 = vunpack.c.h.b16 %v361
      %v907 = vunpack.c.l.b16 %v362
      %v908 = vunpack.c.h.b16 %v362
      %v909 = vunpack.c.l.b16 %v363
      %v910 = vunpack.c.h.b16 %v363
      %v911 = vpack.c.b16 %v891, %v887
      %v912 = vpack.c.b16 %v892, %v888
      %v913 = vpack.c.b16 %v893, %v889
      %v914 = vpack.c.b16 %v894, %v890
      %v915 = vpack.c.b16 %v899, %v895
      %v916 = vpack.c.b16 %v900, %v896
      %v917 = vpack.c.b16 %v901, %v897
      %v918 = vpack.c.b16 %v902, %v898
      %v919 = vpack.c.b16 %v907, %v903
      %v920 = vpack.c.b16 %v908, %v904
      %v921 = vpack.c.b16 %v909, %v905
      %v922 = vpack.c.b16 %v910, %v906
      %v999 = vunpack.c.l.b16 %v364
      %v1000 = vunpack.c.l.b16 %v365
      %v1001 = vunpack.c.l.b16 %v366
      %v1002 = vunpack.c.l.b16 %v367
      %v1003 = vunpack.c.l.b16 %v368
      %v1004 = vunpack.c.l.b16 %v369
      %v1005 = vunpack.c.l.b16 %v370
      %v1006 = vunpack.c.l.b16 %v371
      %v1007 = vunpack.c.l.b16 %v372
      %v1008 = vunpack.c.l.b16 %v373
      %v1009 = vunpack.c.l.b16 %v374
      %v1010 = vunpack.c.l.b16 %v375
      %v1011 = vunpack.c.l.b16 %v376
      %v1012 = vunpack.c.l.b16 %v377
      %v1013 = vunpack.c.l.b16 %v378
      %v1014 = vunpack.c.l.b16 %v379
      %v1015 = vunpack.c.l.b16 %v380
      %v1016 = vunpack.c.l.b16 %v381
      %v1017 = vunpack.c.l.b16 %v382
      %v1018 = vunpack.c.l.b16 %v383
      %v1019 = vunpack.c.l.b16 %v384
      %v1020 = vunpack.c.l.b16 %v385
      %v1021 = vunpack.c.l.b16 %v386
      %v1022 = vunpack.c.l.b16 %v387
      %v1023 = vunpack.c.l.b16 %v388
      %v1024 = vunpack.c.l.b16 %v389
      %v1025 = vunpack.c.l.b16 %v390
      %v1026 = vunpack.c.l.b16 %v391
      %v1027 = vunpack.c.l.b16 %v392
      %v1028 = vunpack.c.l.b16 %v393
      %v1029 = vunpack.c.l.b16 %v394
      %v1030 = vunpack.c.l.b16 %v395
      %v1031 = vunpack.c.l.b16 %v396
      %v1032 = vunpack.c.l.b16 %v397
      %v1033 = vunpack.c.l.b16 %v398
      %v1034 = vunpack.c.l.b16 %v399
      %v1035 = vunpack.c.l.b16 %v400
      %v1036 = vunpack.c.l.b16 %v401
      %v1037 = vunpack.c.l.b16 %v402
      %v1038 = vunpack.c.l.b16 %v403
      %v1039 = vunpack.c.l.b16 %v404
      %v1040 = vunpack.c.l.b16 %v405
      %v1041 = vunpack.c.l.b16 %v406
      %v1042 = vunpack.c.l.b16 %v407
      %v1043 = vunpack.c.l.b16 %v408
      %v1044 = vunpack.c.l.b16 %v409
      %v1045 = vunpack.c.l.b16 %v410
      %v1046 = vunpack.c.l.b16 %v411
      %v1047 = vunpack.c.l.b16 %v412
      %v1048 = vunpack.c.l.b16 %v413
      %v1049 = vunpack.c.l.b16 %v414
      %v1050 = vunpack.c.l.b16 %v415
      %v1051 = vunpack.c.l.b16 %v416
      %v1052 = vunpack.c.l.b16 %v417
      %v1053 = vunpack.c.l.b16 %v418
      %v1054 = vunpack.c.l.b16 %v419
      %v1055 = vunpack.c.l.b16 %v420
      %v1056 = vunpack.c.l.b16 %v421
      %v1057 = vunpack.c.l.b16 %v422
      %v1058 = vunpack.c.l.b16 %v423
      %v1059 = vunpack.c.l.b16 %v424
      %v1060 = vunpack.c.l.b16 %v425
      %v1061 = vunpack.c.l.b16 %v426
      %v1062 = vunpack.c.l.b16 %v427
      %v1063 = vpack.c.b16 %v1000, %v999
      %v1064 = vpack.c.b16 %v1002, %v1001
      %v1065 = vpack.c.b16 %v1004, %v1003
      %v1066 = vpack.c.b16 %v1006, %v1005
      %v1067 = vpack.c.b16 %v1008, %v1007
      %v1068 = vpack.c.b16 %v1010, %v1009
      %v1069 = vpack.c.b16 %v1012, %v1011
      %v1070 = vpack.c.b16 %v1014, %v1013
      %v1071 = vpack.c.b16 %v1016, %v1015
      %v1072 = vpack.c.b16 %v1018, %v1017
      %v1073 = vpack.c.b16 %v1020, %v1019
      %v1074 = vpack.c.b16 %v1022, %v1021
      %v1075 = vpack.c.b16 %v1024, %v1023
      %v1076 = vpack.c.b16 %v1026, %v1025
      %v1077 = vpack.c.b16 %v1028, %v1027
      %v1078 = vpack.c.b16 %v1030, %v1029
      %v1079 = vpack.c.b16 %v1032, %v1031
      %v1080 = vpack.c.b16 %v1034, %v1033
      %v1081 = vpack.c.b16 %v1036, %v1035
      %v1082 = vpack.c.b16 %v1038, %v1037
      %v1083 = vpack.c.b16 %v1040, %v1039
      %v1084 = vpack.c.b16 %v1042, %v1041
      %v1085 = vpack.c.b16 %v1044, %v1043
      %v1086 = vpack.c.b16 %v1046, %v1045
      %v1087 = vpack.c.b16 %v1048, %v1047
      %v1088 = vpack.c.b16 %v1050, %v1049
      %v1089 = vpack.c.b16 %v1052, %v1051
      %v1090 = vpack.c.b16 %v1054, %v1053
      %v1091 = vpack.c.b16 %v1056, %v1055
      %v1092 = vpack.c.b16 %v1058, %v1057
      %v1093 = vpack.c.b16 %v1060, %v1059
      %v1094 = vpack.c.b16 %v1062, %v1061
      %1127 = vmatpush.bf16.msra.mxu0 %v1070
      %1128 = vmatpush.bf16.msra.mxu0 %v1069
      %1129 = vmatpush.bf16.msra.mxu0 %v1068
      %1130 = vmatpush.bf16.msra.mxu0 %v1067
      %1131 = vmatpush.bf16.msra.mxu0 %v1066
      %1132 = vmatpush.bf16.msra.mxu0 %v1065
      %1133 = vmatpush.bf16.msra.mxu0 %v1064
      %1134 = vmatpush.bf16.msra.mxu0 %v1063
      %1135 = vmatmul.bf16.gmra.mxu0 %v911
      %v1136 = vpop.f32.mrf.mxu0
      %v1137 = vadd.f32 %v861, %v1136
      %v1138 = vpop.f32.mrf.mxu0
      %v1139 = vadd.f32 %v863, %v1138
      %1140 = vmatmul.bf16.gmra.mxu0 %v915
      %v1141 = vpop.f32.mrf.mxu0
      %v1142 = vadd.f32 %v866, %v1141
      %v1143 = vpop.f32.mrf.mxu0
      %v1144 = vadd.f32 %v868, %v1143
      %1145 = vmatmul.bf16.gmra.mxu0 %v919
      %v1146 = vpop.f32.mrf.mxu0
      %v1147 = vadd.f32 %v871, %v1146
      %v1148 = vpop.f32.mrf.mxu0
      %v1149 = vadd.f32 %v873, %v1148
      %1150 = vdwg.mxu0
      %1151 = vmatpush.bf16.msra.mxu0 %v1078
      %1152 = vmatpush.bf16.msra.mxu0 %v1077
      %1153 = vmatpush.bf16.msra.mxu0 %v1076
      %1154 = vmatpush.bf16.msra.mxu0 %v1075
      %1155 = vmatpush.bf16.msra.mxu0 %v1074
      %1156 = vmatpush.bf16.msra.mxu0 %v1073
      %1157 = vmatpush.bf16.msra.mxu0 %v1072
      %1158 = vmatpush.bf16.msra.mxu0 %v1071
      %1159 = vmatmul.bf16.gmra.mxu0 %v912
      %v1160 = vpop.f32.mrf.mxu0
      %v1161 = vadd.f32 %v1137, %v1160
      %v1162 = vpop.f32.mrf.mxu0
      %v1163 = vadd.f32 %v1139, %v1162
      %1164 = vmatmul.bf16.gmra.mxu0 %v916
      %v1165 = vpop.f32.mrf.mxu0
      %v1166 = vadd.f32 %v1142, %v1165
      %v1167 = vpop.f32.mrf.mxu0
      %v1168 = vadd.f32 %v1144, %v1167
      %1169 = vmatmul.bf16.gmra.mxu0 %v920
      %v1170 = vpop.f32.mrf.mxu0
      %v1171 = vadd.f32 %v1147, %v1170
      %v1172 = vpop.f32.mrf.mxu0
      %v1173 = vadd.f32 %v1149, %v1172
      %1174 = vdwg.mxu0
      %1175 = vmatpush.bf16.msra.mxu0 %v1086
      %1176 = vmatpush.bf16.msra.mxu0 %v1085
      %1177 = vmatpush.bf16.msra.mxu0 %v1084
      %1178 = vmatpush.bf16.msra.mxu0 %v1083
      %1179 = vmatpush.bf16.msra.mxu0 %v1082
      %1180 = vmatpush.bf16.msra.mxu0 %v1081
      %1181 = vmatpush.bf16.msra.mxu0 %v1080
      %1182 = vmatpush.bf16.msra.mxu0 %v1079
      %1183 = vmatmul.bf16.gmra.mxu0 %v913
      %v1184 = vpop.f32.mrf.mxu0
      %v1185 = vadd.f32 %v1161, %v1184
      %v1186 = vpop.f32.mrf.mxu0
      %v1187 = vadd.f32 %v1163, %v1186
      %1188 = vmatmul.bf16.gmra.mxu0 %v917
      %v1189 = vpop.f32.mrf.mxu0
      %v1190 = vadd.f32 %v1166, %v1189
      %v1191 = vpop.f32.mrf.mxu0
      %v1192 = vadd.f32 %v1168, %v1191
      %1193 = vmatmul.bf16.gmra.mxu0 %v921
      %v1194 = vpop.f32.mrf.mxu0
      %v1195 = vadd.f32 %v1171, %v1194
      %v1196 = vpop.f32.mrf.mxu0
      %v1197 = vadd.f32 %v1173, %v1196
      %1198 = vdwg.mxu0
      %1199 = vmatpush.bf16.msra.mxu0 %v1094
      %1200 = vmatpush.bf16.msra.mxu0 %v1093
      %1201 = vmatpush.bf16.msra.mxu0 %v1092
      %1202 = vmatpush.bf16.msra.mxu0 %v1091
      %1203 = vmatpush.bf16.msra.mxu0 %v1090
      %1204 = vmatpush.bf16.msra.mxu0 %v1089
      %1205 = vmatpush.bf16.msra.mxu0 %v1088
      %1206 = vmatpush.bf16.msra.mxu0 %v1087
      %1207 = vmatmul.bf16.gmra.mxu0 %v914
      %v1208 = vpop.f32.mrf.mxu0
      %v1209 = vadd.f32 %v1185, %v1208
      %v1210 = vpop.f32.mrf.mxu0
      %v1211 = vadd.f32 %v1187, %v1210
      %1212 = vmatmul.bf16.gmra.mxu0 %v918
      %v1213 = vpop.f32.mrf.mxu0
      %v1214 = vadd.f32 %v1190, %v1213
      %v1215 = vpop.f32.mrf.mxu0
      %v1216 = vadd.f32 %v1192, %v1215
      %1217 = vmatmul.bf16.gmra.mxu0 %v922
      %v1218 = vpop.f32.mrf.mxu0
      %v1219 = vadd.f32 %v1195, %v1218
      %v1220 = vpop.f32.mrf.mxu0
      %v1221 = vadd.f32 %v1197, %v1220
      %1222 = vdwg.mxu0
      %s1223 = smul.u32 %s446, 16
      %s1224 = scalar_lea.vmem %s327, %s1223
      %v1225 = vld [vmem:[%s1224] sm:$0xff]
      %v1226 = vld [vmem:[%s1224 + $0x8] sm:$0xff]
      %v1227 = vld [vmem:[%s1224 + $0x10] sm:$0xff]
      %v1228 = vld [vmem:[%s1224 + $0x18] sm:$0xff]
      %v1229 = vld [vmem:[%s1224 + $0x20] sm:$0xff]
      %v1230 = vld [vmem:[%s1224 + $0x28] sm:$0xff]
      %s1231 = scalar_lea.vmem %s3, 1
      %v1232 = vld [vmem:[%s1231] sm:$0x1]
      %v1234 = vperm.slane %v1232, 0
      %v1236 = vmul.f32 %v1225, %v1234
      %v1237 = vmul.f32 %v1226, %v1234
      %v1238 = vmul.f32 %v1227, %v1234
      %v1239 = vmul.f32 %v1228, %v1234
      %v1240 = vmul.f32 %v1229, %v1234
      %v1241 = vmul.f32 %v1230, %v1234
      %v1242 = vadd.f32 %v440, %v1236
      %v1243 = vadd.f32 %v441, %v1237
      %v1244 = vadd.f32 %v442, %v1238
      %v1245 = vadd.f32 %v443, %v1239
      %v1246 = vadd.f32 %v444, %v1240
      %v1247 = vadd.f32 %v445, %v1241
      %s1248 = sadd.s32 %s348, 2
      %s1249 = smul.u32 %s1248, 8
      %s1250 = smul.addr %s1249, 4
      %s1251 = scalar_lea.vmem %s322, %s1250
      %v1252 = vld [vmem:[%s1251] sm:$0xff]
      %v1253 = vld [vmem:[%s1251 + $0x8] sm:$0xff]
      %v1254 = vld [vmem:[%s1251 + $0x10] sm:$0xff]
      %v1255 = vld [vmem:[%s1251 + $0x18] sm:$0xff]
      %v1256 = vld [vmem:[%s1251 + $0x20] sm:$0xff]
      %v1257 = vld [vmem:[%s1251 + $0x28] sm:$0xff]
      %v1258 = vld [vmem:[%s1251 + $0x30] sm:$0xff]
      %v1259 = vld [vmem:[%s1251 + $0x38] sm:$0xff]
      %v1260 = vld [vmem:[%s1251 + $0x40] sm:$0xff]
      %v1261 = vld [vmem:[%s1251 + $0x48] sm:$0xff]
      %v1262 = vld [vmem:[%s1251 + $0x50] sm:$0xff]
      %v1263 = vld [vmem:[%s1251 + $0x58] sm:$0xff]
      %s1264 = scalar_lea.vmem %s2, 512
      %v1265 = vld [vmem:[%s1264] sm:$0xf]
      %v1266 = vld [vmem:[%s1264 + $0x4] sm:$0xf]
      %v1267 = vld [vmem:[%s1264 + $0x8] sm:$0xf]
      %v1268 = vld [vmem:[%s1264 + $0xc] sm:$0xf]
      %v1269 = vld [vmem:[%s1264 + $0x10] sm:$0xf]
      %v1270 = vld [vmem:[%s1264 + $0x14] sm:$0xf]
      %v1271 = vld [vmem:[%s1264 + $0x18] sm:$0xf]
      %v1272 = vld [vmem:[%s1264 + $0x1c] sm:$0xf]
      %v1273 = vld [vmem:[%s1264 + $0x20] sm:$0xf]
      %v1274 = vld [vmem:[%s1264 + $0x24] sm:$0xf]
      %v1275 = vld [vmem:[%s1264 + $0x28] sm:$0xf]
      %v1276 = vld [vmem:[%s1264 + $0x2c] sm:$0xf]
      %v1277 = vld [vmem:[%s1264 + $0x30] sm:$0xf]
      %v1278 = vld [vmem:[%s1264 + $0x34] sm:$0xf]
      %v1279 = vld [vmem:[%s1264 + $0x38] sm:$0xf]
      %v1280 = vld [vmem:[%s1264 + $0x3c] sm:$0xf]
      %v1281 = vld [vmem:[%s1264 + $0x40] sm:$0xf]
      %v1282 = vld [vmem:[%s1264 + $0x44] sm:$0xf]
      %v1283 = vld [vmem:[%s1264 + $0x48] sm:$0xf]
      %v1284 = vld [vmem:[%s1264 + $0x4c] sm:$0xf]
      %v1285 = vld [vmem:[%s1264 + $0x50] sm:$0xf]
      %v1286 = vld [vmem:[%s1264 + $0x54] sm:$0xf]
      %v1287 = vld [vmem:[%s1264 + $0x58] sm:$0xf]
      %v1288 = vld [vmem:[%s1264 + $0x5c] sm:$0xf]
      %v1289 = vld [vmem:[%s1264 + $0x60] sm:$0xf]
      %v1290 = vld [vmem:[%s1264 + $0x64] sm:$0xf]
      %v1291 = vld [vmem:[%s1264 + $0x68] sm:$0xf]
      %v1292 = vld [vmem:[%s1264 + $0x6c] sm:$0xf]
      %v1293 = vld [vmem:[%s1264 + $0x70] sm:$0xf]
      %v1294 = vld [vmem:[%s1264 + $0x74] sm:$0xf]
      %v1295 = vld [vmem:[%s1264 + $0x78] sm:$0xf]
      %v1296 = vld [vmem:[%s1264 + $0x7c] sm:$0xf]
      %v1297 = vld [vmem:[%s1264 + $0x80] sm:$0xf]
      %v1298 = vld [vmem:[%s1264 + $0x84] sm:$0xf]
      %v1299 = vld [vmem:[%s1264 + $0x88] sm:$0xf]
      %v1300 = vld [vmem:[%s1264 + $0x8c] sm:$0xf]
      %v1301 = vld [vmem:[%s1264 + $0x90] sm:$0xf]
      %v1302 = vld [vmem:[%s1264 + $0x94] sm:$0xf]
      %v1303 = vld [vmem:[%s1264 + $0x98] sm:$0xf]
      %v1304 = vld [vmem:[%s1264 + $0x9c] sm:$0xf]
      %v1305 = vld [vmem:[%s1264 + $0xa0] sm:$0xf]
      %v1306 = vld [vmem:[%s1264 + $0xa4] sm:$0xf]
      %v1307 = vld [vmem:[%s1264 + $0xa8] sm:$0xf]
      %v1308 = vld [vmem:[%s1264 + $0xac] sm:$0xf]
      %v1309 = vld [vmem:[%s1264 + $0xb0] sm:$0xf]
      %v1310 = vld [vmem:[%s1264 + $0xb4] sm:$0xf]
      %v1311 = vld [vmem:[%s1264 + $0xb8] sm:$0xf]
      %v1312 = vld [vmem:[%s1264 + $0xbc] sm:$0xf]
      %v1313 = vld [vmem:[%s1264 + $0xc0] sm:$0xf]
      %v1314 = vld [vmem:[%s1264 + $0xc4] sm:$0xf]
      %v1315 = vld [vmem:[%s1264 + $0xc8] sm:$0xf]
      %v1316 = vld [vmem:[%s1264 + $0xcc] sm:$0xf]
      %v1317 = vld [vmem:[%s1264 + $0xd0] sm:$0xf]
      %v1318 = vld [vmem:[%s1264 + $0xd4] sm:$0xf]
      %v1319 = vld [vmem:[%s1264 + $0xd8] sm:$0xf]
      %v1320 = vld [vmem:[%s1264 + $0xdc] sm:$0xf]
      %v1321 = vld [vmem:[%s1264 + $0xe0] sm:$0xf]
      %v1322 = vld [vmem:[%s1264 + $0xe4] sm:$0xf]
      %v1323 = vld [vmem:[%s1264 + $0xe8] sm:$0xf]
      %v1324 = vld [vmem:[%s1264 + $0xec] sm:$0xf]
      %v1325 = vld [vmem:[%s1264 + $0xf0] sm:$0xf]
      %v1326 = vld [vmem:[%s1264 + $0xf4] sm:$0xf]
      %v1327 = vld [vmem:[%s1264 + $0xf8] sm:$0xf]
      %v1328 = vld [vmem:[%s1264 + $0xfc] sm:$0xf]
      %v1341 = vunpack.c.l.b16 %v1252
      %v1342 = vunpack.c.h.b16 %v1252
      %v1343 = vunpack.c.l.b16 %v1253
      %v1344 = vunpack.c.h.b16 %v1253
      %v1345 = vunpack.c.l.b16 %v1254
      %v1346 = vunpack.c.h.b16 %v1254
      %v1347 = vunpack.c.l.b16 %v1255
      %v1348 = vunpack.c.h.b16 %v1255
      %v1349 = vunpack.c.l.b16 %v1256
      %v1350 = vunpack.c.h.b16 %v1256
      %v1351 = vunpack.c.l.b16 %v1257
      %v1352 = vunpack.c.h.b16 %v1257
      %v1353 = vunpack.c.l.b16 %v1258
      %v1354 = vunpack.c.h.b16 %v1258
      %v1355 = vunpack.c.l.b16 %v1259
      %v1356 = vunpack.c.h.b16 %v1259
      %v1357 = vunpack.c.l.b16 %v1260
      %v1358 = vunpack.c.h.b16 %v1260
      %v1359 = vunpack.c.l.b16 %v1261
      %v1360 = vunpack.c.h.b16 %v1261
      %v1361 = vunpack.c.l.b16 %v1262
      %v1362 = vunpack.c.h.b16 %v1262
      %v1363 = vunpack.c.l.b16 %v1263
      %v1364 = vunpack.c.h.b16 %v1263
      %v1365 = vpack.c.b16 %v1345, %v1341
      %v1366 = vpack.c.b16 %v1346, %v1342
      %v1367 = vpack.c.b16 %v1347, %v1343
      %v1368 = vpack.c.b16 %v1348, %v1344
      %v1369 = vpack.c.b16 %v1353, %v1349
      %v1370 = vpack.c.b16 %v1354, %v1350
      %v1371 = vpack.c.b16 %v1355, %v1351
      %v1372 = vpack.c.b16 %v1356, %v1352
      %v1373 = vpack.c.b16 %v1361, %v1357
      %v1374 = vpack.c.b16 %v1362, %v1358
      %v1375 = vpack.c.b16 %v1363, %v1359
      %v1376 = vpack.c.b16 %v1364, %v1360
      %v1453 = vunpack.c.l.b16 %v1265
      %v1454 = vunpack.c.l.b16 %v1266
      %v1455 = vunpack.c.l.b16 %v1267
      %v1456 = vunpack.c.l.b16 %v1268
      %v1457 = vunpack.c.l.b16 %v1269
      %v1458 = vunpack.c.l.b16 %v1270
      %v1459 = vunpack.c.l.b16 %v1271
      %v1460 = vunpack.c.l.b16 %v1272
      %v1461 = vunpack.c.l.b16 %v1273
      %v1462 = vunpack.c.l.b16 %v1274
      %v1463 = vunpack.c.l.b16 %v1275
      %v1464 = vunpack.c.l.b16 %v1276
      %v1465 = vunpack.c.l.b16 %v1277
      %v1466 = vunpack.c.l.b16 %v1278
      %v1467 = vunpack.c.l.b16 %v1279
      %v1468 = vunpack.c.l.b16 %v1280
      %v1469 = vunpack.c.l.b16 %v1281
      %v1470 = vunpack.c.l.b16 %v1282
      %v1471 = vunpack.c.l.b16 %v1283
      %v1472 = vunpack.c.l.b16 %v1284
      %v1473 = vunpack.c.l.b16 %v1285
      %v1474 = vunpack.c.l.b16 %v1286
      %v1475 = vunpack.c.l.b16 %v1287
      %v1476 = vunpack.c.l.b16 %v1288
      %v1477 = vunpack.c.l.b16 %v1289
      %v1478 = vunpack.c.l.b16 %v1290
      %v1479 = vunpack.c.l.b16 %v1291
      %v1480 = vunpack.c.l.b16 %v1292
      %v1481 = vunpack.c.l.b16 %v1293
      %v1482 = vunpack.c.l.b16 %v1294
      %v1483 = vunpack.c.l.b16 %v1295
      %v1484 = vunpack.c.l.b16 %v1296
      %v1485 = vunpack.c.l.b16 %v1297
      %v1486 = vunpack.c.l.b16 %v1298
      %v1487 = vunpack.c.l.b16 %v1299
      %v1488 = vunpack.c.l.b16 %v1300
      %v1489 = vunpack.c.l.b16 %v1301
      %v1490 = vunpack.c.l.b16 %v1302
      %v1491 = vunpack.c.l.b16 %v1303
      %v1492 = vunpack.c.l.b16 %v1304
      %v1493 = vunpack.c.l.b16 %v1305
      %v1494 = vunpack.c.l.b16 %v1306
      %v1495 = vunpack.c.l.b16 %v1307
      %v1496 = vunpack.c.l.b16 %v1308
      %v1497 = vunpack.c.l.b16 %v1309
      %v1498 = vunpack.c.l.b16 %v1310
      %v1499 = vunpack.c.l.b16 %v1311
      %v1500 = vunpack.c.l.b16 %v1312
      %v1501 = vunpack.c.l.b16 %v1313
      %v1502 = vunpack.c.l.b16 %v1314
      %v1503 = vunpack.c.l.b16 %v1315
      %v1504 = vunpack.c.l.b16 %v1316
      %v1505 = vunpack.c.l.b16 %v1317
      %v1506 = vunpack.c.l.b16 %v1318
      %v1507 = vunpack.c.l.b16 %v1319
      %v1508 = vunpack.c.l.b16 %v1320
      %v1509 = vunpack.c.l.b16 %v1321
      %v1510 = vunpack.c.l.b16 %v1322
      %v1511 = vunpack.c.l.b16 %v1323
      %v1512 = vunpack.c.l.b16 %v1324
      %v1513 = vunpack.c.l.b16 %v1325
      %v1514 = vunpack.c.l.b16 %v1326
      %v1515 = vunpack.c.l.b16 %v1327
      %v1516 = vunpack.c.l.b16 %v1328
      %v1517 = vpack.c.b16 %v1454, %v1453
      %v1518 = vpack.c.b16 %v1456, %v1455
      %v1519 = vpack.c.b16 %v1458, %v1457
      %v1520 = vpack.c.b16 %v1460, %v1459
      %v1521 = vpack.c.b16 %v1462, %v1461
      %v1522 = vpack.c.b16 %v1464, %v1463
      %v1523 = vpack.c.b16 %v1466, %v1465
      %v1524 = vpack.c.b16 %v1468, %v1467
      %v1525 = vpack.c.b16 %v1470, %v1469
      %v1526 = vpack.c.b16 %v1472, %v1471
      %v1527 = vpack.c.b16 %v1474, %v1473
      %v1528 = vpack.c.b16 %v1476, %v1475
      %v1529 = vpack.c.b16 %v1478, %v1477
      %v1530 = vpack.c.b16 %v1480, %v1479
      %v1531 = vpack.c.b16 %v1482, %v1481
      %v1532 = vpack.c.b16 %v1484, %v1483
      %v1533 = vpack.c.b16 %v1486, %v1485
      %v1534 = vpack.c.b16 %v1488, %v1487
      %v1535 = vpack.c.b16 %v1490, %v1489
      %v1536 = vpack.c.b16 %v1492, %v1491
      %v1537 = vpack.c.b16 %v1494, %v1493
      %v1538 = vpack.c.b16 %v1496, %v1495
      %v1539 = vpack.c.b16 %v1498, %v1497
      %v1540 = vpack.c.b16 %v1500, %v1499
      %v1541 = vpack.c.b16 %v1502, %v1501
      %v1542 = vpack.c.b16 %v1504, %v1503
      %v1543 = vpack.c.b16 %v1506, %v1505
      %v1544 = vpack.c.b16 %v1508, %v1507
      %v1545 = vpack.c.b16 %v1510, %v1509
      %v1546 = vpack.c.b16 %v1512, %v1511
      %v1547 = vpack.c.b16 %v1514, %v1513
      %v1548 = vpack.c.b16 %v1516, %v1515
      %1581 = vmatpush.bf16.msra.mxu0 %v1524
      %1582 = vmatpush.bf16.msra.mxu0 %v1523
      %1583 = vmatpush.bf16.msra.mxu0 %v1522
      %1584 = vmatpush.bf16.msra.mxu0 %v1521
      %1585 = vmatpush.bf16.msra.mxu0 %v1520
      %1586 = vmatpush.bf16.msra.mxu0 %v1519
      %1587 = vmatpush.bf16.msra.mxu0 %v1518
      %1588 = vmatpush.bf16.msra.mxu0 %v1517
      %1589 = vmatmul.bf16.gmra.mxu0 %v1365
      %v1590 = vpop.f32.mrf.mxu0
      %v1591 = vadd.f32 0.0, %v1590
      %v1592 = vpop.f32.mrf.mxu0
      %v1593 = vadd.f32 0.0, %v1592
      %1594 = vmatmul.bf16.gmra.mxu0 %v1369
      %v1595 = vpop.f32.mrf.mxu0
      %v1596 = vadd.f32 0.0, %v1595
      %v1597 = vpop.f32.mrf.mxu0
      %v1598 = vadd.f32 0.0, %v1597
      %1599 = vmatmul.bf16.gmra.mxu0 %v1373
      %v1600 = vpop.f32.mrf.mxu0
      %v1601 = vadd.f32 0.0, %v1600
      %v1602 = vpop.f32.mrf.mxu0
      %v1603 = vadd.f32 0.0, %v1602
      %1604 = vdwg.mxu0
      %1605 = vmatpush.bf16.msra.mxu0 %v1532
      %1606 = vmatpush.bf16.msra.mxu0 %v1531
      %1607 = vmatpush.bf16.msra.mxu0 %v1530
      %1608 = vmatpush.bf16.msra.mxu0 %v1529
      %1609 = vmatpush.bf16.msra.mxu0 %v1528
      %1610 = vmatpush.bf16.msra.mxu0 %v1527
      %1611 = vmatpush.bf16.msra.mxu0 %v1526
      %1612 = vmatpush.bf16.msra.mxu0 %v1525
      %1613 = vmatmul.bf16.gmra.mxu0 %v1366
      %v1614 = vpop.f32.mrf.mxu0
      %v1615 = vadd.f32 %v1591, %v1614
      %v1616 = vpop.f32.mrf.mxu0
      %v1617 = vadd.f32 %v1593, %v1616
      %1618 = vmatmul.bf16.gmra.mxu0 %v1370
      %v1619 = vpop.f32.mrf.mxu0
      %v1620 = vadd.f32 %v1596, %v1619
      %v1621 = vpop.f32.mrf.mxu0
      %v1622 = vadd.f32 %v1598, %v1621
      %1623 = vmatmul.bf16.gmra.mxu0 %v1374
      %v1624 = vpop.f32.mrf.mxu0
      %v1625 = vadd.f32 %v1601, %v1624
      %v1626 = vpop.f32.mrf.mxu0
      %v1627 = vadd.f32 %v1603, %v1626
      %1628 = vdwg.mxu0
      %1629 = vmatpush.bf16.msra.mxu0 %v1540
      %1630 = vmatpush.bf16.msra.mxu0 %v1539
      %1631 = vmatpush.bf16.msra.mxu0 %v1538
      %1632 = vmatpush.bf16.msra.mxu0 %v1537
      %1633 = vmatpush.bf16.msra.mxu0 %v1536
      %1634 = vmatpush.bf16.msra.mxu0 %v1535
      %1635 = vmatpush.bf16.msra.mxu0 %v1534
      %1636 = vmatpush.bf16.msra.mxu0 %v1533
      %1637 = vmatmul.bf16.gmra.mxu0 %v1367
      %v1638 = vpop.f32.mrf.mxu0
      %v1639 = vadd.f32 %v1615, %v1638
      %v1640 = vpop.f32.mrf.mxu0
      %v1641 = vadd.f32 %v1617, %v1640
      %1642 = vmatmul.bf16.gmra.mxu0 %v1371
      %v1643 = vpop.f32.mrf.mxu0
      %v1644 = vadd.f32 %v1620, %v1643
      %v1645 = vpop.f32.mrf.mxu0
      %v1646 = vadd.f32 %v1622, %v1645
      %1647 = vmatmul.bf16.gmra.mxu0 %v1375
      %v1648 = vpop.f32.mrf.mxu0
      %v1649 = vadd.f32 %v1625, %v1648
      %v1650 = vpop.f32.mrf.mxu0
      %v1651 = vadd.f32 %v1627, %v1650
      %1652 = vdwg.mxu0
      %1653 = vmatpush.bf16.msra.mxu0 %v1548
      %1654 = vmatpush.bf16.msra.mxu0 %v1547
      %1655 = vmatpush.bf16.msra.mxu0 %v1546
      %1656 = vmatpush.bf16.msra.mxu0 %v1545
      %1657 = vmatpush.bf16.msra.mxu0 %v1544
      %1658 = vmatpush.bf16.msra.mxu0 %v1543
      %1659 = vmatpush.bf16.msra.mxu0 %v1542
      %1660 = vmatpush.bf16.msra.mxu0 %v1541
      %1661 = vmatmul.bf16.gmra.mxu0 %v1368
      %v1662 = vpop.f32.mrf.mxu0
      %v1663 = vadd.f32 %v1639, %v1662
      %v1664 = vpop.f32.mrf.mxu0
      %v1665 = vadd.f32 %v1641, %v1664
      %1666 = vmatmul.bf16.gmra.mxu0 %v1372
      %v1667 = vpop.f32.mrf.mxu0
      %v1668 = vadd.f32 %v1644, %v1667
      %v1669 = vpop.f32.mrf.mxu0
      %v1670 = vadd.f32 %v1646, %v1669
      %1671 = vmatmul.bf16.gmra.mxu0 %v1376
      %v1672 = vpop.f32.mrf.mxu0
      %v1673 = vadd.f32 %v1649, %v1672
      %v1674 = vpop.f32.mrf.mxu0
      %v1675 = vadd.f32 %v1651, %v1674
      %1676 = vdwg.mxu0
      %v1677 = vadd.f32 %v1209, %v1663
      %v1678 = vadd.f32 %v1211, %v1665
      %v1679 = vadd.f32 %v1214, %v1668
      %v1680 = vadd.f32 %v1216, %v1670
      %v1681 = vadd.f32 %v1219, %v1673
      %v1682 = vadd.f32 %v1221, %v1675
      %s1683 = smul.u32 %s1248, 16
      %s1684 = scalar_lea.vmem %s327, %s1683
      %v1685 = vld [vmem:[%s1684] sm:$0xff]
      %v1686 = vld [vmem:[%s1684 + $0x8] sm:$0xff]
      %v1687 = vld [vmem:[%s1684 + $0x10] sm:$0xff]
      %v1688 = vld [vmem:[%s1684 + $0x18] sm:$0xff]
      %v1689 = vld [vmem:[%s1684 + $0x20] sm:$0xff]
      %v1690 = vld [vmem:[%s1684 + $0x28] sm:$0xff]
      %s1691 = scalar_lea.vmem %s3, 2
      %v1692 = vld [vmem:[%s1691] sm:$0x1]
      %v1694 = vperm.slane %v1692, 0
      %v1696 = vmul.f32 %v1685, %v1694
      %v1697 = vmul.f32 %v1686, %v1694
      %v1698 = vmul.f32 %v1687, %v1694
      %v1699 = vmul.f32 %v1688, %v1694
      %v1700 = vmul.f32 %v1689, %v1694
      %v1701 = vmul.f32 %v1690, %v1694
      %v1702 = vadd.f32 %v1242, %v1696
      %v1703 = vadd.f32 %v1243, %v1697
      %v1704 = vadd.f32 %v1244, %v1698
      %v1705 = vadd.f32 %v1245, %v1699
      %v1706 = vadd.f32 %v1246, %v1700
      %v1707 = vadd.f32 %v1247, %v1701
      %s1708 = sadd.s32 %s348, 3
      %s1709 = smul.u32 %s1708, 8
      %s1710 = smul.addr %s1709, 4
      %s1711 = scalar_lea.vmem %s322, %s1710
      %v1712 = vld [vmem:[%s1711] sm:$0xff]
      %v1713 = vld [vmem:[%s1711 + $0x8] sm:$0xff]
      %v1714 = vld [vmem:[%s1711 + $0x10] sm:$0xff]
      %v1715 = vld [vmem:[%s1711 + $0x18] sm:$0xff]
      %v1716 = vld [vmem:[%s1711 + $0x20] sm:$0xff]
      %v1717 = vld [vmem:[%s1711 + $0x28] sm:$0xff]
      %v1718 = vld [vmem:[%s1711 + $0x30] sm:$0xff]
      %v1719 = vld [vmem:[%s1711 + $0x38] sm:$0xff]
      %v1720 = vld [vmem:[%s1711 + $0x40] sm:$0xff]
      %v1721 = vld [vmem:[%s1711 + $0x48] sm:$0xff]
      %v1722 = vld [vmem:[%s1711 + $0x50] sm:$0xff]
      %v1723 = vld [vmem:[%s1711 + $0x58] sm:$0xff]
      %s1724 = scalar_lea.vmem %s2, 768
      %v1725 = vld [vmem:[%s1724] sm:$0xf]
      %v1726 = vld [vmem:[%s1724 + $0x4] sm:$0xf]
      %v1727 = vld [vmem:[%s1724 + $0x8] sm:$0xf]
      %v1728 = vld [vmem:[%s1724 + $0xc] sm:$0xf]
      %v1729 = vld [vmem:[%s1724 + $0x10] sm:$0xf]
      %v1730 = vld [vmem:[%s1724 + $0x14] sm:$0xf]
      %v1731 = vld [vmem:[%s1724 + $0x18] sm:$0xf]
      %v1732 = vld [vmem:[%s1724 + $0x1c] sm:$0xf]
      %v1733 = vld [vmem:[%s1724 + $0x20] sm:$0xf]
      %v1734 = vld [vmem:[%s1724 + $0x24] sm:$0xf]
      %v1735 = vld [vmem:[%s1724 + $0x28] sm:$0xf]
      %v1736 = vld [vmem:[%s1724 + $0x2c] sm:$0xf]
      %v1737 = vld [vmem:[%s1724 + $0x30] sm:$0xf]
      %v1738 = vld [vmem:[%s1724 + $0x34] sm:$0xf]
      %v1739 = vld [vmem:[%s1724 + $0x38] sm:$0xf]
      %v1740 = vld [vmem:[%s1724 + $0x3c] sm:$0xf]
      %v1741 = vld [vmem:[%s1724 + $0x40] sm:$0xf]
      %v1742 = vld [vmem:[%s1724 + $0x44] sm:$0xf]
      %v1743 = vld [vmem:[%s1724 + $0x48] sm:$0xf]
      %v1744 = vld [vmem:[%s1724 + $0x4c] sm:$0xf]
      %v1745 = vld [vmem:[%s1724 + $0x50] sm:$0xf]
      %v1746 = vld [vmem:[%s1724 + $0x54] sm:$0xf]
      %v1747 = vld [vmem:[%s1724 + $0x58] sm:$0xf]
      %v1748 = vld [vmem:[%s1724 + $0x5c] sm:$0xf]
      %v1749 = vld [vmem:[%s1724 + $0x60] sm:$0xf]
      %v1750 = vld [vmem:[%s1724 + $0x64] sm:$0xf]
      %v1751 = vld [vmem:[%s1724 + $0x68] sm:$0xf]
      %v1752 = vld [vmem:[%s1724 + $0x6c] sm:$0xf]
      %v1753 = vld [vmem:[%s1724 + $0x70] sm:$0xf]
      %v1754 = vld [vmem:[%s1724 + $0x74] sm:$0xf]
      %v1755 = vld [vmem:[%s1724 + $0x78] sm:$0xf]
      %v1756 = vld [vmem:[%s1724 + $0x7c] sm:$0xf]
      %v1757 = vld [vmem:[%s1724 + $0x80] sm:$0xf]
      %v1758 = vld [vmem:[%s1724 + $0x84] sm:$0xf]
      %v1759 = vld [vmem:[%s1724 + $0x88] sm:$0xf]
      %v1760 = vld [vmem:[%s1724 + $0x8c] sm:$0xf]
      %v1761 = vld [vmem:[%s1724 + $0x90] sm:$0xf]
      %v1762 = vld [vmem:[%s1724 + $0x94] sm:$0xf]
      %v1763 = vld [vmem:[%s1724 + $0x98] sm:$0xf]
      %v1764 = vld [vmem:[%s1724 + $0x9c] sm:$0xf]
      %v1765 = vld [vmem:[%s1724 + $0xa0] sm:$0xf]
      %v1766 = vld [vmem:[%s1724 + $0xa4] sm:$0xf]
      %v1767 = vld [vmem:[%s1724 + $0xa8] sm:$0xf]
      %v1768 = vld [vmem:[%s1724 + $0xac] sm:$0xf]
      %v1769 = vld [vmem:[%s1724 + $0xb0] sm:$0xf]
      %v1770 = vld [vmem:[%s1724 + $0xb4] sm:$0xf]
      %v1771 = vld [vmem:[%s1724 + $0xb8] sm:$0xf]
      %v1772 = vld [vmem:[%s1724 + $0xbc] sm:$0xf]
      %v1773 = vld [vmem:[%s1724 + $0xc0] sm:$0xf]
      %v1774 = vld [vmem:[%s1724 + $0xc4] sm:$0xf]
      %v1775 = vld [vmem:[%s1724 + $0xc8] sm:$0xf]
      %v1776 = vld [vmem:[%s1724 + $0xcc] sm:$0xf]
      %v1777 = vld [vmem:[%s1724 + $0xd0] sm:$0xf]
      %v1778 = vld [vmem:[%s1724 + $0xd4] sm:$0xf]
      %v1779 = vld [vmem:[%s1724 + $0xd8] sm:$0xf]
      %v1780 = vld [vmem:[%s1724 + $0xdc] sm:$0xf]
      %v1781 = vld [vmem:[%s1724 + $0xe0] sm:$0xf]
      %v1782 = vld [vmem:[%s1724 + $0xe4] sm:$0xf]
      %v1783 = vld [vmem:[%s1724 + $0xe8] sm:$0xf]
      %v1784 = vld [vmem:[%s1724 + $0xec] sm:$0xf]
      %v1785 = vld [vmem:[%s1724 + $0xf0] sm:$0xf]
      %v1786 = vld [vmem:[%s1724 + $0xf4] sm:$0xf]
      %v1787 = vld [vmem:[%s1724 + $0xf8] sm:$0xf]
      %v1788 = vld [vmem:[%s1724 + $0xfc] sm:$0xf]
      %v1801 = vunpack.c.l.b16 %v1712
      %v1802 = vunpack.c.h.b16 %v1712
      %v1803 = vunpack.c.l.b16 %v1713
      %v1804 = vunpack.c.h.b16 %v1713
      %v1805 = vunpack.c.l.b16 %v1714
      %v1806 = vunpack.c.h.b16 %v1714
      %v1807 = vunpack.c.l.b16 %v1715
      %v1808 = vunpack.c.h.b16 %v1715
      %v1809 = vunpack.c.l.b16 %v1716
      %v1810 = vunpack.c.h.b16 %v1716
      %v1811 = vunpack.c.l.b16 %v1717
      %v1812 = vunpack.c.h.b16 %v1717
      %v1813 = vunpack.c.l.b16 %v1718
      %v1814 = vunpack.c.h.b16 %v1718
      %v1815 = vunpack.c.l.b16 %v1719
      %v1816 = vunpack.c.h.b16 %v1719
      %v1817 = vunpack.c.l.b16 %v1720
      %v1818 = vunpack.c.h.b16 %v1720
      %v1819 = vunpack.c.l.b16 %v1721
      %v1820 = vunpack.c.h.b16 %v1721
      %v1821 = vunpack.c.l.b16 %v1722
      %v1822 = vunpack.c.h.b16 %v1722
      %v1823 = vunpack.c.l.b16 %v1723
      %v1824 = vunpack.c.h.b16 %v1723
      %v1825 = vpack.c.b16 %v1805, %v1801
      %v1826 = vpack.c.b16 %v1806, %v1802
      %v1827 = vpack.c.b16 %v1807, %v1803
      %v1828 = vpack.c.b16 %v1808, %v1804
      %v1829 = vpack.c.b16 %v1813, %v1809
      %v1830 = vpack.c.b16 %v1814, %v1810
      %v1831 = vpack.c.b16 %v1815, %v1811
      %v1832 = vpack.c.b16 %v1816, %v1812
      %v1833 = vpack.c.b16 %v1821, %v1817
      %v1834 = vpack.c.b16 %v1822, %v1818
      %v1835 = vpack.c.b16 %v1823, %v1819
      %v1836 = vpack.c.b16 %v1824, %v1820
      %v1913 = vunpack.c.l.b16 %v1725
      %v1914 = vunpack.c.l.b16 %v1726
      %v1915 = vunpack.c.l.b16 %v1727
      %v1916 = vunpack.c.l.b16 %v1728
      %v1917 = vunpack.c.l.b16 %v1729
      %v1918 = vunpack.c.l.b16 %v1730
      %v1919 = vunpack.c.l.b16 %v1731
      %v1920 = vunpack.c.l.b16 %v1732
      %v1921 = vunpack.c.l.b16 %v1733
      %v1922 = vunpack.c.l.b16 %v1734
      %v1923 = vunpack.c.l.b16 %v1735
      %v1924 = vunpack.c.l.b16 %v1736
      %v1925 = vunpack.c.l.b16 %v1737
      %v1926 = vunpack.c.l.b16 %v1738
      %v1927 = vunpack.c.l.b16 %v1739
      %v1928 = vunpack.c.l.b16 %v1740
      %v1929 = vunpack.c.l.b16 %v1741
      %v1930 = vunpack.c.l.b16 %v1742
      %v1931 = vunpack.c.l.b16 %v1743
      %v1932 = vunpack.c.l.b16 %v1744
      %v1933 = vunpack.c.l.b16 %v1745
      %v1934 = vunpack.c.l.b16 %v1746
      %v1935 = vunpack.c.l.b16 %v1747
      %v1936 = vunpack.c.l.b16 %v1748
      %v1937 = vunpack.c.l.b16 %v1749
      %v1938 = vunpack.c.l.b16 %v1750
      %v1939 = vunpack.c.l.b16 %v1751
      %v1940 = vunpack.c.l.b16 %v1752
      %v1941 = vunpack.c.l.b16 %v1753
      %v1942 = vunpack.c.l.b16 %v1754
      %v1943 = vunpack.c.l.b16 %v1755
      %v1944 = vunpack.c.l.b16 %v1756
      %v1945 = vunpack.c.l.b16 %v1757
      %v1946 = vunpack.c.l.b16 %v1758
      %v1947 = vunpack.c.l.b16 %v1759
      %v1948 = vunpack.c.l.b16 %v1760
      %v1949 = vunpack.c.l.b16 %v1761
      %v1950 = vunpack.c.l.b16 %v1762
      %v1951 = vunpack.c.l.b16 %v1763
      %v1952 = vunpack.c.l.b16 %v1764
      %v1953 = vunpack.c.l.b16 %v1765
      %v1954 = vunpack.c.l.b16 %v1766
      %v1955 = vunpack.c.l.b16 %v1767
      %v1956 = vunpack.c.l.b16 %v1768
      %v1957 = vunpack.c.l.b16 %v1769
      %v1958 = vunpack.c.l.b16 %v1770
      %v1959 = vunpack.c.l.b16 %v1771
      %v1960 = vunpack.c.l.b16 %v1772
      %v1961 = vunpack.c.l.b16 %v1773
      %v1962 = vunpack.c.l.b16 %v1774
      %v1963 = vunpack.c.l.b16 %v1775
      %v1964 = vunpack.c.l.b16 %v1776
      %v1965 = vunpack.c.l.b16 %v1777
      %v1966 = vunpack.c.l.b16 %v1778
      %v1967 = vunpack.c.l.b16 %v1779
      %v1968 = vunpack.c.l.b16 %v1780
      %v1969 = vunpack.c.l.b16 %v1781
      %v1970 = vunpack.c.l.b16 %v1782
      %v1971 = vunpack.c.l.b16 %v1783
      %v1972 = vunpack.c.l.b16 %v1784
      %v1973 = vunpack.c.l.b16 %v1785
      %v1974 = vunpack.c.l.b16 %v1786
      %v1975 = vunpack.c.l.b16 %v1787
      %v1976 = vunpack.c.l.b16 %v1788
      %v1977 = vpack.c.b16 %v1914, %v1913
      %v1978 = vpack.c.b16 %v1916, %v1915
      %v1979 = vpack.c.b16 %v1918, %v1917
      %v1980 = vpack.c.b16 %v1920, %v1919
      %v1981 = vpack.c.b16 %v1922, %v1921
      %v1982 = vpack.c.b16 %v1924, %v1923
      %v1983 = vpack.c.b16 %v1926, %v1925
      %v1984 = vpack.c.b16 %v1928, %v1927
      %v1985 = vpack.c.b16 %v1930, %v1929
      %v1986 = vpack.c.b16 %v1932, %v1931
      %v1987 = vpack.c.b16 %v1934, %v1933
      %v1988 = vpack.c.b16 %v1936, %v1935
      %v1989 = vpack.c.b16 %v1938, %v1937
      %v1990 = vpack.c.b16 %v1940, %v1939
      %v1991 = vpack.c.b16 %v1942, %v1941
      %v1992 = vpack.c.b16 %v1944, %v1943
      %v1993 = vpack.c.b16 %v1946, %v1945
      %v1994 = vpack.c.b16 %v1948, %v1947
      %v1995 = vpack.c.b16 %v1950, %v1949
      %v1996 = vpack.c.b16 %v1952, %v1951
      %v1997 = vpack.c.b16 %v1954, %v1953
      %v1998 = vpack.c.b16 %v1956, %v1955
      %v1999 = vpack.c.b16 %v1958, %v1957
      %v2000 = vpack.c.b16 %v1960, %v1959
      %v2001 = vpack.c.b16 %v1962, %v1961
      %v2002 = vpack.c.b16 %v1964, %v1963
      %v2003 = vpack.c.b16 %v1966, %v1965
      %v2004 = vpack.c.b16 %v1968, %v1967
      %v2005 = vpack.c.b16 %v1970, %v1969
      %v2006 = vpack.c.b16 %v1972, %v1971
      %v2007 = vpack.c.b16 %v1974, %v1973
      %v2008 = vpack.c.b16 %v1976, %v1975
      %2041 = vmatpush.bf16.msra.mxu0 %v1984
      %2042 = vmatpush.bf16.msra.mxu0 %v1983
      %2043 = vmatpush.bf16.msra.mxu0 %v1982
      %2044 = vmatpush.bf16.msra.mxu0 %v1981
      %2045 = vmatpush.bf16.msra.mxu0 %v1980
      %2046 = vmatpush.bf16.msra.mxu0 %v1979
      %2047 = vmatpush.bf16.msra.mxu0 %v1978
      %2048 = vmatpush.bf16.msra.mxu0 %v1977
      %2049 = vmatmul.bf16.gmra.mxu0 %v1825
      %v2050 = vpop.f32.mrf.mxu0
      %v2051 = vadd.f32 0.0, %v2050
      %v2052 = vpop.f32.mrf.mxu0
      %v2053 = vadd.f32 0.0, %v2052
      %2054 = vmatmul.bf16.gmra.mxu0 %v1829
      %v2055 = vpop.f32.mrf.mxu0
      %v2056 = vadd.f32 0.0, %v2055
      %v2057 = vpop.f32.mrf.mxu0
      %v2058 = vadd.f32 0.0, %v2057
      %2059 = vmatmul.bf16.gmra.mxu0 %v1833
      %v2060 = vpop.f32.mrf.mxu0
      %v2061 = vadd.f32 0.0, %v2060
      %v2062 = vpop.f32.mrf.mxu0
      %v2063 = vadd.f32 0.0, %v2062
      %2064 = vdwg.mxu0
      %2065 = vmatpush.bf16.msra.mxu0 %v1992
      %2066 = vmatpush.bf16.msra.mxu0 %v1991
      %2067 = vmatpush.bf16.msra.mxu0 %v1990
      %2068 = vmatpush.bf16.msra.mxu0 %v1989
      %2069 = vmatpush.bf16.msra.mxu0 %v1988
      %2070 = vmatpush.bf16.msra.mxu0 %v1987
      %2071 = vmatpush.bf16.msra.mxu0 %v1986
      %2072 = vmatpush.bf16.msra.mxu0 %v1985
      %2073 = vmatmul.bf16.gmra.mxu0 %v1826
      %v2074 = vpop.f32.mrf.mxu0
      %v2075 = vadd.f32 %v2051, %v2074
      %v2076 = vpop.f32.mrf.mxu0
      %v2077 = vadd.f32 %v2053, %v2076
      %2078 = vmatmul.bf16.gmra.mxu0 %v1830
      %v2079 = vpop.f32.mrf.mxu0
      %v2080 = vadd.f32 %v2056, %v2079
      %v2081 = vpop.f32.mrf.mxu0
      %v2082 = vadd.f32 %v2058, %v2081
      %2083 = vmatmul.bf16.gmra.mxu0 %v1834
      %v2084 = vpop.f32.mrf.mxu0
      %v2085 = vadd.f32 %v2061, %v2084
      %v2086 = vpop.f32.mrf.mxu0
      %v2087 = vadd.f32 %v2063, %v2086
      %2088 = vdwg.mxu0
      %2089 = vmatpush.bf16.msra.mxu0 %v2000
      %2090 = vmatpush.bf16.msra.mxu0 %v1999
      %2091 = vmatpush.bf16.msra.mxu0 %v1998
      %2092 = vmatpush.bf16.msra.mxu0 %v1997
      %2093 = vmatpush.bf16.msra.mxu0 %v1996
      %2094 = vmatpush.bf16.msra.mxu0 %v1995
      %2095 = vmatpush.bf16.msra.mxu0 %v1994
      %2096 = vmatpush.bf16.msra.mxu0 %v1993
      %2097 = vmatmul.bf16.gmra.mxu0 %v1827
      %v2098 = vpop.f32.mrf.mxu0
      %v2099 = vadd.f32 %v2075, %v2098
      %v2100 = vpop.f32.mrf.mxu0
      %v2101 = vadd.f32 %v2077, %v2100
      %2102 = vmatmul.bf16.gmra.mxu0 %v1831
      %v2103 = vpop.f32.mrf.mxu0
      %v2104 = vadd.f32 %v2080, %v2103
      %v2105 = vpop.f32.mrf.mxu0
      %v2106 = vadd.f32 %v2082, %v2105
      %2107 = vmatmul.bf16.gmra.mxu0 %v1835
      %v2108 = vpop.f32.mrf.mxu0
      %v2109 = vadd.f32 %v2085, %v2108
      %v2110 = vpop.f32.mrf.mxu0
      %v2111 = vadd.f32 %v2087, %v2110
      %2112 = vdwg.mxu0
      %2113 = vmatpush.bf16.msra.mxu0 %v2008
      %2114 = vmatpush.bf16.msra.mxu0 %v2007
      %2115 = vmatpush.bf16.msra.mxu0 %v2006
      %2116 = vmatpush.bf16.msra.mxu0 %v2005
      %2117 = vmatpush.bf16.msra.mxu0 %v2004
      %2118 = vmatpush.bf16.msra.mxu0 %v2003
      %2119 = vmatpush.bf16.msra.mxu0 %v2002
      %2120 = vmatpush.bf16.msra.mxu0 %v2001
      %2121 = vmatmul.bf16.gmra.mxu0 %v1828
      %v2122 = vpop.f32.mrf.mxu0
      %v2123 = vadd.f32 %v2099, %v2122
      %v2124 = vpop.f32.mrf.mxu0
      %v2125 = vadd.f32 %v2101, %v2124
      %2126 = vmatmul.bf16.gmra.mxu0 %v1832
      %v2127 = vpop.f32.mrf.mxu0
      %v2128 = vadd.f32 %v2104, %v2127
      %v2129 = vpop.f32.mrf.mxu0
      %v2130 = vadd.f32 %v2106, %v2129
      %2131 = vmatmul.bf16.gmra.mxu0 %v1836
      %v2132 = vpop.f32.mrf.mxu0
      %v2133 = vadd.f32 %v2109, %v2132
      %v2134 = vpop.f32.mrf.mxu0
      %v2135 = vadd.f32 %v2111, %v2134
      %2136 = vdwg.mxu0
      %v2137 = vadd.f32 %v1677, %v2123
      %v2138 = vadd.f32 %v1678, %v2125
      %v2139 = vadd.f32 %v1679, %v2128
      %v2140 = vadd.f32 %v1680, %v2130
      %v2141 = vadd.f32 %v1681, %v2133
      %v2142 = vadd.f32 %v1682, %v2135
      %s2143 = smul.u32 %s1708, 16
      %s2144 = scalar_lea.vmem %s327, %s2143
      %v2145 = vld [vmem:[%s2144] sm:$0xff]
      %v2146 = vld [vmem:[%s2144 + $0x8] sm:$0xff]
      %v2147 = vld [vmem:[%s2144 + $0x10] sm:$0xff]
      %v2148 = vld [vmem:[%s2144 + $0x18] sm:$0xff]
      %v2149 = vld [vmem:[%s2144 + $0x20] sm:$0xff]
      %v2150 = vld [vmem:[%s2144 + $0x28] sm:$0xff]
      %s2151 = scalar_lea.vmem %s3, 3
      %v2152 = vld [vmem:[%s2151] sm:$0x1]
      %v2154 = vperm.slane %v2152, 0
      %v2156 = vmul.f32 %v2145, %v2154
      %v2157 = vmul.f32 %v2146, %v2154
      %v2158 = vmul.f32 %v2147, %v2154
      %v2159 = vmul.f32 %v2148, %v2154
      %v2160 = vmul.f32 %v2149, %v2154
      %v2161 = vmul.f32 %v2150, %v2154
      %v2162 = vadd.f32 %v1702, %v2156
      %v2163 = vadd.f32 %v1703, %v2157
      %v2164 = vadd.f32 %v1704, %v2158
      %v2165 = vadd.f32 %v1705, %v2159
      %v2166 = vadd.f32 %v1706, %v2160
      %v2167 = vadd.f32 %v1707, %v2161
      %v2168 = vld [vmem:[%s4] sm:$0x1]
      %v2170 = vperm.slane %v2168, 0
      %v2172 = vadd.f32 %v2137, %v2170
      %v2173 = vadd.f32 %v2138, %v2170
      %v2174 = vadd.f32 %v2139, %v2170
      %v2175 = vadd.f32 %v2140, %v2170
      %v2176 = vadd.f32 %v2141, %v2170
      %v2177 = vadd.f32 %v2142, %v2170
      %v2178 = vmul.f32 %v2172, 0.6
      %v2179 = vmul.f32 %v2173, 0.6
      %v2180 = vmul.f32 %v2174, 0.6
      %v2181 = vmul.f32 %v2175, 0.6
      %v2182 = vmul.f32 %v2176, 0.6
      %v2183 = vmul.f32 %v2177, 0.6
      %v2184 = vand.u32 2147483647, %v2172
      %v2185 = vand.u32 2147483647, %v2173
      %v2186 = vand.u32 2147483647, %v2174
      %v2187 = vand.u32 2147483647, %v2175
      %v2188 = vand.u32 2147483647, %v2176
      %v2189 = vand.u32 2147483647, %v2177
      %v2190 = vmul.f32 %v2184, 0.4
      %v2191 = vmul.f32 %v2185, 0.4
      %v2192 = vmul.f32 %v2186, 0.4
      %v2193 = vmul.f32 %v2187, 0.4
      %v2194 = vmul.f32 %v2188, 0.4
      %v2195 = vmul.f32 %v2189, 0.4
      %v2196 = vadd.f32 %v2178, %v2190
      %v2197 = vadd.f32 %v2179, %v2191
      %v2198 = vadd.f32 %v2180, %v2192
      %v2199 = vadd.f32 %v2181, %v2193
      %v2200 = vadd.f32 %v2182, %v2194
      %v2201 = vadd.f32 %v2183, %v2195
      %v2202 = vpack.c.bf16 %v2196, %v2196
      %v2203 = vpack.c.bf16 %v2197, %v2197
      %v2204 = vpack.c.bf16 %v2198, %v2198
      %v2205 = vpack.c.bf16 %v2199, %v2199
      %v2206 = vpack.c.bf16 %v2200, %v2200
      %v2207 = vpack.c.bf16 %v2201, %v2201
      %2208 = vst [vmem:[%s336] sm:$0xf] %v2202
      %2209 = vst [vmem:[%s336 + $0x4] sm:$0xf] %v2203
      %2210 = vst [vmem:[%s336 + $0x8] sm:$0xf] %v2204
      %2211 = vst [vmem:[%s336 + $0xc] sm:$0xf] %v2205
      %2212 = vst [vmem:[%s336 + $0x10] sm:$0xf] %v2206
      %2213 = vst [vmem:[%s336 + $0x14] sm:$0xf] %v2207
      %vm2214 = vcmask 31744
      %v2215 = vsel %vm2214, %v2162, 0.0
      %2216 = vadd.xlane.f32.xlu0 %v2215
      %v2217 = vpop.xlane.xlu0 %2216
      %v2218 = vsel %vm2214, %v2163, 0.0
      %2219 = vadd.xlane.f32.xlu0 %v2218
      %v2220 = vpop.xlane.xlu0 %2219
      %v2221 = vsel %vm2214, %v2164, 0.0
      %2222 = vadd.xlane.f32.xlu0 %v2221
      %v2223 = vpop.xlane.xlu0 %2222
      %v2224 = vsel %vm2214, %v2165, 0.0
      %2225 = vadd.xlane.f32.xlu0 %v2224
      %v2226 = vpop.xlane.xlu0 %2225
      %v2227 = vsel %vm2214, %v2166, 0.0
      %2228 = vadd.xlane.f32.xlu0 %v2227
      %v2229 = vpop.xlane.xlu0 %2228
      %v2230 = vsel %vm2214, %v2167, 0.0
      %2231 = vadd.xlane.f32.xlu0 %v2230
      %v2232 = vpop.xlane.xlu0 %2231
      %v2233 = vld [vmem:[#allocation2] sm:$0x1]
      %v2235 = vperm.slane %v2233, 0
      %v2237 = vadd.f32 %v2217, %v2235
      %v2238 = vadd.f32 %v2220, %v2235
      %v2239 = vadd.f32 %v2223, %v2235
      %v2240 = vadd.f32 %v2226, %v2235
      %v2241 = vadd.f32 %v2229, %v2235
      %v2242 = vadd.f32 %v2232, %v2235
      %vm2243 = vcmask 7168
      %2244 = vst.msk [vmem:[%s346] sm:$0xff] %vm2243, %v2237
      %2245 = vst.msk [vmem:[%s346 + $0x8] sm:$0xff] %vm2243, %v2238
      %2246 = vst.msk [vmem:[%s346 + $0x10] sm:$0xff] %vm2243, %v2239
      %2247 = vst.msk [vmem:[%s346 + $0x18] sm:$0xff] %vm2243, %v2240
      %2248 = vst.msk [vmem:[%s346 + $0x20] sm:$0xff] %vm2243, %v2241
      %2249 = vst.msk [vmem:[%s346 + $0x28] sm:$0xff] %vm2243, %v2242
      %s2250 = smul.u32 6, %s26
      %p2251 = scmp.lt.s32.totalorder %s25, 1
      %s2252 = scalar_select %p2251, %s25, 1
      %p2253 = scmp.lt.s32.totalorder %s2250, 5
      %s2254 = scalar_select %p2253, %s2250, 5
      %s2255 = smul.addr %s2252, 6
      %s2256 = sadd.s32 %s2254, %s2255
      %s2257 = smul.addr %s2256, 4
      %s2258 = scalar_lea.vmem %s6, %s2257
      %s2259 = smul.u32 6, %s26
      %p2260 = scmp.lt.s32.totalorder %s25, 1
      %s2261 = scalar_select %p2260, %s25, 1
      %p2262 = scmp.lt.s32.totalorder %s2259, 5
      %s2263 = scalar_select %p2262, %s2259, 5
      %s2264 = smul.addr %s2261, 6
      %s2265 = sadd.s32 %s2263, %s2264
      %s2266 = smul.addr %s2265, 8
      %s2267 = scalar_lea.vmem %s7, %s2266
      // Predicated region
      $region45: #{texd_forward.8} parent=43 // pred_check
        %p2268 = pneg %p189
      $region46: #{texd_forward.8} parent=43 // pred_check_branch
        %2270 = sbr.rel (%p2268) target = $region48
      $region47: #{texd_forward.8} parent=43 // pred_region
        %s2271 = smul.u32 6, %s26
      $region48: #{texd_forward.8} parent=43 // pred_fallthru
        _
      // Predicated region
      $region49: #{texd_forward.8} parent=43 // pred_check
        %p2272 = pneg %p217
      $region50: #{texd_forward.8} parent=43 // pred_check_branch
        %2274 = sbr.rel (%p2272) target = $region52
      $region51: #{texd_forward.8} parent=43 // pred_region
        %s2275 = smul.u32 6, %s26
      $region52: #{texd_forward.8} parent=43 // pred_fallthru
        _
    $region44: #{texd_forward.8} parent=5 // pred_fallthru
      _
    %p2276 = scmp.le.s32.totalorder 2, %s16
    // Predicated region
    $region53: #{texd_forward.8} parent=5 // pred_check
      %p2277 = pneg %p2276
    $region54: #{texd_forward.8} parent=5 // pred_check_branch
      %2279 = sbr.rel (%p2277) target = $region56
    $region55: #{texd_forward.8} parent=5 // pred_region
      %s2280 = ssub.s32 %s16, 2
      // Predicated region
      $region57: #{texd_forward.8} parent=55 // pred_check
        %p2281 = pneg %p195
      $region58: #{texd_forward.8} parent=55 // pred_check_branch
        %2283 = sbr.rel (%p2281) target = $region60
      $region59: #{texd_forward.8} parent=55 // pred_region
        %s2284 = smul.u32 6, %s28
        %p2285 = scmp.lt.s32.totalorder %s27, 1
        %s2286 = scalar_select %p2285, %s27, 1
        %p2287 = scmp.lt.s32.totalorder %s2284, 5
        %s2288 = scalar_select %p2287, %s2284, 5
        %s2289 = smul.addr %s2286, 6
        %s2290 = sadd.s32 %s2288, %s2289
        %s2291 = smul.addr %s2290, 4
        %s2292 = scalar_lea.vmem %s6, %s2291
      $region60: #{texd_forward.8} parent=55 // pred_fallthru
        _
      // Predicated region
      $region61: #{texd_forward.8} parent=55 // pred_check
        %p2293 = pneg %p223
      $region62: #{texd_forward.8} parent=55 // pred_check_branch
        %2295 = sbr.rel (%p2293) target = $region64
      $region63: #{texd_forward.8} parent=55 // pred_region
        %s2296 = smul.u32 6, %s28
        %p2297 = scmp.lt.s32.totalorder %s27, 1
        %s2298 = scalar_select %p2297, %s27, 1
        %p2299 = scmp.lt.s32.totalorder %s2296, 5
        %s2300 = scalar_select %p2299, %s2296, 5
        %s2301 = smul.addr %s2298, 6
        %s2302 = sadd.s32 %s2300, %s2301
        %s2303 = smul.addr %s2302, 8
        %s2304 = scalar_lea.vmem %s7, %s2303
      $region64: #{texd_forward.8} parent=55 // pred_fallthru
        _
    $region56: #{texd_forward.8} parent=5 // pred_fallthru
      _
  $region6: #{texd_forward.8} parent=0 // loop_footer
    %s20 = sadd.s32 1, %s16
  $region7: #{texd_forward.8} parent=0 // loop_footer_branch
    %15 = sbr.rel target = $region3
  $region8: #{texd_forward.8} parent=0 // loop_exit
    _

// kernel: texd_forward.9
$region0: #{texd_forward.9}
  #allocation0 [shape = 'u32[]', space=smem, size = 0x4, offset = 0x4, fixed_abs, tag = 'smem constant byte address 0x4 - core index']
  #allocation1 [shape = 'u32[72,128]{1,0:T(1,128)}', space=vmem, size = 0x9000, scoped, tag = 'internal scratch']
  #allocation2 [shape = 'f32[1,1]{1,0:T(1,128)S(1)}', space=vmem, size = 0x200, scoped, tag = 'scoped memory for texd_forward.9']
  #allocation3 [shape = 'f32[1,1]{1,0:T(1,128)S(1)}', space=vmem, size = 0x200, scoped, tag = 'scoped memory for texd_forward.9']
  %s0 = inlined_call_operand.vmem [shape: bf16[2,1,5,16,512], index: 0, kind: input, shape index: {}]
  %s1 = inlined_call_operand.vmem [shape: f32[2,1,5,16,4], index: 1, kind: input, shape index: {}]
  %s2 = inlined_call_operand.vmem [shape: bf16[4,512,1], index: 2, kind: input, shape index: {}]
  %s3 = inlined_call_operand.vmem [shape: f32[4,1,4], index: 3, kind: input, shape index: {}]
  %s4 = inlined_call_operand.<no memory space> [shape: f32[1,1], index: 4, kind: input, shape index: {}]
  %s5 = inlined_call_operand.<no memory space> [shape: f32[1,1], index: 5, kind: input, shape index: {}]
  %s6 = inlined_call_operand.vmem [shape: f32[2,32,1], index: 6, kind: output, shape index: {0}]
  %s7 = inlined_call_operand.vmem [shape: f32[2,32,1], index: 7, kind: output, shape index: {1}]
  %8 = xla_tuple %s6, %s7
  %s9 = sld [smem:[#allocation0]]
  $region65: #{texd_forward.9} parent=0
    _
  %s11 = ssub.s32 1, %s9
  %s12 = scalar_select 0, %s11, %s9
  %v13 = vstv %s4
  %14 = vst [vmem:[#allocation2] sm:$0x1] %v13
  %v15 = vstv %s5
  %16 = vst [vmem:[#allocation3] sm:$0x1] %v15
  loop: start=0, step=1, limit=4
  $region2: #{texd_forward.9} parent=0 // loop_pre_header
    _
  $region3: #{texd_forward.9} parent=0 // loop_header
    %s18 = sphi 0, %s22
    %p19 = scmp.ge.s32.totalorder %s18, 4
    %s25 = sphi 0, %s37
    %s26 = sphi 0, %s33
    %s27 = sphi 0, %s25
    %s28 = sphi 0, %s26
    %s29 = sphi 0, %s27
    %s30 = sphi 0, %s28
    %s40 = sphi 0, %s42
    %s43 = sphi 0, %s40
    %s44 = sphi 0, %s43
    %s60 = sphi 0, %s44
    %s66 = sphi 0, %s68
    %s69 = sphi 0, %s66
    %s70 = sphi 0, %s69
    %s86 = sphi 0, %s70
    %s90 = sphi 0, %s90
    %s92 = sphi 0, %s90
    %s93 = sphi 0, %s92
    %s107 = sphi 0, %s93
    %s111 = sphi 0, %s111
    %s113 = sphi 0, %s111
    %s114 = sphi 0, %s113
    %s128 = sphi 0, %s114
    %s132 = sphi 0, %s132
    %s134 = sphi 0, %s132
    %s135 = sphi 0, %s134
    %s149 = sphi 0, %s135
    %s153 = sphi 0, %s153
    %s155 = sphi 0, %s153
    %s156 = sphi 0, %s155
    %s170 = sphi 0, %s156
    %s178 = sphi 0, %s180
    %s181 = sphi 0, %s178
    %s182 = sphi 0, %s181
    %s198 = sphi 0, %s182
    %s206 = sphi 0, %s208
    %s209 = sphi 0, %s206
    %s210 = sphi 0, %s209
    %s226 = sphi 0, %s210
  $region4: #{texd_forward.9} parent=0 // loop_header_branch
    %21 = sbr.rel (%p19) target = $region8
  $region5: #{texd_forward.9} parent=0 // loop_body
    %s23 = ssub.s32 %s18, 1
    %s24 = ssub.s32 %s18, 2
    %s31 = sadd.s32 1, %s26
    %p32 = scmp.ge.s32.totalorder %s31, 1
    %s33 = scalar_select %p32, 0, %s31
    %s34 = sadd.s32 1, %s25
    %s35 = scalar_select %p32, %s34, %s25
    %p36 = scmp.ge.s32.totalorder %s35, 2
    %s37 = scalar_select %p36, 0, %s35
    %s38 = ssub.s32 %s25, %s37
    %p39 = scmp.eq.s32.totalorder %s38, 0
    %s41 = sadd.s32 %s40, 1
    %s42 = scalar_select %p39, %s40, %s41
    %p45 = pneg %p39
    %p46 = scmp.eq.s32.totalorder %s18, 1
    %p47 = por %p45, %p46
    %p48 = scmp.ne.s32.totalorder %s40, %s43
    %p49 = scmp.eq.s32.totalorder %s18, 0
    %p50 = por %p48, %p49
    %p51 = scmp.ne.s32.totalorder %s40, %s43
    %p52 = scmp.eq.s32.totalorder %s23, 1
    %p53 = por %p51, %p52
    %p54 = scmp.ne.s32.totalorder %s43, %s44
    %p55 = scmp.eq.s32.totalorder %s23, 0
    %p56 = por %p54, %p55
    %p57 = scmp.ne.s32.totalorder %s43, %s44
    %p58 = scmp.eq.s32.totalorder %s24, 1
    %p59 = por %p57, %p58
    %p61 = scmp.ne.s32.totalorder %s44, %s60
    %p62 = scmp.eq.s32.totalorder %s24, 0
    %p63 = por %p61, %p62
    %s64 = ssub.s32 %s25, %s37
    %p65 = scmp.eq.s32.totalorder %s64, 0
    %s67 = sadd.s32 %s66, 1
    %s68 = scalar_select %p65, %s66, %s67
    %p71 = pneg %p65
    %p72 = scmp.eq.s32.totalorder %s18, 1
    %p73 = por %p71, %p72
    %p74 = scmp.ne.s32.totalorder %s66, %s69
    %p75 = scmp.eq.s32.totalorder %s18, 0
    %p76 = por %p74, %p75
    %p77 = scmp.ne.s32.totalorder %s66, %s69
    %p78 = scmp.eq.s32.totalorder %s23, 1
    %p79 = por %p77, %p78
    %p80 = scmp.ne.s32.totalorder %s69, %s70
    %p81 = scmp.eq.s32.totalorder %s23, 0
    %p82 = por %p80, %p81
    %p83 = scmp.ne.s32.totalorder %s69, %s70
    %p84 = scmp.eq.s32.totalorder %s24, 1
    %p85 = por %p83, %p84
    %p87 = scmp.ne.s32.totalorder %s70, %s86
    %p88 = scmp.eq.s32.totalorder %s24, 0
    %p89 = por %p87, %p88
    %s91 = sadd.s32 %s90, 1
    %p94 = scmp.eq.s32.totalorder %s18, 1
    %p95 = scmp.ne.s32.totalorder %s90, %s92
    %p96 = scmp.eq.s32.totalorder %s18, 0
    %p97 = por %p95, %p96
    %p98 = scmp.ne.s32.totalorder %s90, %s92
    %p99 = scmp.eq.s32.totalorder %s23, 1
    %p100 = por %p98, %p99
    %p101 = scmp.ne.s32.totalorder %s92, %s93
    %p102 = scmp.eq.s32.totalorder %s23, 0
    %p103 = por %p101, %p102
    %p104 = scmp.ne.s32.totalorder %s92, %s93
    %p105 = scmp.eq.s32.totalorder %s24, 1
    %p106 = por %p104, %p105
    %p108 = scmp.ne.s32.totalorder %s93, %s107
    %p109 = scmp.eq.s32.totalorder %s24, 0
    %p110 = por %p108, %p109
    %s112 = sadd.s32 %s111, 1
    %p115 = scmp.eq.s32.totalorder %s18, 1
    %p116 = scmp.ne.s32.totalorder %s111, %s113
    %p117 = scmp.eq.s32.totalorder %s18, 0
    %p118 = por %p116, %p117
    %p119 = scmp.ne.s32.totalorder %s111, %s113
    %p120 = scmp.eq.s32.totalorder %s23, 1
    %p121 = por %p119, %p120
    %p122 = scmp.ne.s32.totalorder %s113, %s114
    %p123 = scmp.eq.s32.totalorder %s23, 0
    %p124 = por %p122, %p123
    %p125 = scmp.ne.s32.totalorder %s113, %s114
    %p126 = scmp.eq.s32.totalorder %s24, 1
    %p127 = por %p125, %p126
    %p129 = scmp.ne.s32.totalorder %s114, %s128
    %p130 = scmp.eq.s32.totalorder %s24, 0
    %p131 = por %p129, %p130
    %s133 = sadd.s32 %s132, 1
    %p136 = scmp.eq.s32.totalorder %s18, 1
    %p137 = scmp.ne.s32.totalorder %s132, %s134
    %p138 = scmp.eq.s32.totalorder %s18, 0
    %p139 = por %p137, %p138
    %p140 = scmp.ne.s32.totalorder %s132, %s134
    %p141 = scmp.eq.s32.totalorder %s23, 1
    %p142 = por %p140, %p141
    %p143 = scmp.ne.s32.totalorder %s134, %s135
    %p144 = scmp.eq.s32.totalorder %s23, 0
    %p145 = por %p143, %p144
    %p146 = scmp.ne.s32.totalorder %s134, %s135
    %p147 = scmp.eq.s32.totalorder %s24, 1
    %p148 = por %p146, %p147
    %p150 = scmp.ne.s32.totalorder %s135, %s149
    %p151 = scmp.eq.s32.totalorder %s24, 0
    %p152 = por %p150, %p151
    %s154 = sadd.s32 %s153, 1
    %p157 = scmp.eq.s32.totalorder %s18, 1
    %p158 = scmp.ne.s32.totalorder %s153, %s155
    %p159 = scmp.eq.s32.totalorder %s18, 0
    %p160 = por %p158, %p159
    %p161 = scmp.ne.s32.totalorder %s153, %s155
    %p162 = scmp.eq.s32.totalorder %s23, 1
    %p163 = por %p161, %p162
    %p164 = scmp.ne.s32.totalorder %s155, %s156
    %p165 = scmp.eq.s32.totalorder %s23, 0
    %p166 = por %p164, %p165
    %p167 = scmp.ne.s32.totalorder %s155, %s156
    %p168 = scmp.eq.s32.totalorder %s24, 1
    %p169 = por %p167, %p168
    %p171 = scmp.ne.s32.totalorder %s156, %s170
    %p172 = scmp.eq.s32.totalorder %s24, 0
    %p173 = por %p171, %p172
    %s174 = ssub.s32 %s25, %s37
    %s175 = ssub.s32 %s26, %s33
    %s176 = sor.u32 %s174, %s175
    %p177 = scmp.eq.s32.totalorder %s176, 0
    %s179 = sadd.s32 %s178, 1
    %s180 = scalar_select %p177, %s178, %s179
    %p183 = pneg %p177
    %p184 = scmp.eq.s32.totalorder %s18, 1
    %p185 = por %p183, %p184
    %p186 = scmp.ne.s32.totalorder %s178, %s181
    %p187 = scmp.eq.s32.totalorder %s18, 0
    %p188 = por %p186, %p187
    %p189 = scmp.ne.s32.totalorder %s178, %s181
    %p190 = scmp.eq.s32.totalorder %s23, 1
    %p191 = por %p189, %p190
    %p192 = scmp.ne.s32.totalorder %s181, %s182
    %p193 = scmp.eq.s32.totalorder %s23, 0
    %p194 = por %p192, %p193
    %p195 = scmp.ne.s32.totalorder %s181, %s182
    %p196 = scmp.eq.s32.totalorder %s24, 1
    %p197 = por %p195, %p196
    %p199 = scmp.ne.s32.totalorder %s182, %s198
    %p200 = scmp.eq.s32.totalorder %s24, 0
    %p201 = por %p199, %p200
    %s202 = ssub.s32 %s25, %s37
    %s203 = ssub.s32 %s26, %s33
    %s204 = sor.u32 %s202, %s203
    %p205 = scmp.eq.s32.totalorder %s204, 0
    %s207 = sadd.s32 %s206, 1
    %s208 = scalar_select %p205, %s206, %s207
    %p211 = pneg %p205
    %p212 = scmp.eq.s32.totalorder %s18, 1
    %p213 = por %p211, %p212
    %p214 = scmp.ne.s32.totalorder %s206, %s209
    %p215 = scmp.eq.s32.totalorder %s18, 0
    %p216 = por %p214, %p215
    %p217 = scmp.ne.s32.totalorder %s206, %s209
    %p218 = scmp.eq.s32.totalorder %s23, 1
    %p219 = por %p217, %p218
    %p220 = scmp.ne.s32.totalorder %s209, %s210
    %p221 = scmp.eq.s32.totalorder %s23, 0
    %p222 = por %p220, %p221
    %p223 = scmp.ne.s32.totalorder %s209, %s210
    %p224 = scmp.eq.s32.totalorder %s24, 1
    %p225 = por %p223, %p224
    %p227 = scmp.ne.s32.totalorder %s210, %s226
    %p228 = scmp.eq.s32.totalorder %s24, 0
    %p229 = por %p227, %p228
    %p230 = scmp.le.s32.totalorder 1, %s18
    %p231 = scmp.lt.s32.totalorder %s18, 3
    %p232 = pnand %p230, %p231
    %p233 = pneg %p232
    // Predicated region
    $region9: #{texd_forward.9} parent=5 // pred_check
      _
    $region10: #{texd_forward.9} parent=5 // pred_check_branch
      %235 = sbr.rel (%p232) target = $region12
    $region11: #{texd_forward.9} parent=5 // pred_region
      %s236 = ssub.s32 %s18, 1
      // Predicated region
      $region13: #{texd_forward.9} parent=11 // pred_check
        %p237 = pneg %p103
      $region14: #{texd_forward.9} parent=11 // pred_check_branch
        %239 = sbr.rel (%p237) target = $region16
      $region15: #{texd_forward.9} parent=11 // pred_region
        _
      $region16: #{texd_forward.9} parent=11 // pred_fallthru
        _
      // Predicated region
      $region17: #{texd_forward.9} parent=11 // pred_check
        %p240 = pneg %p124
      $region18: #{texd_forward.9} parent=11 // pred_check_branch
        %242 = sbr.rel (%p240) target = $region20
      $region19: #{texd_forward.9} parent=11 // pred_region
        _
      $region20: #{texd_forward.9} parent=11 // pred_fallthru
        _
      // Predicated region
      $region21: #{texd_forward.9} parent=11 // pred_check
        %p243 = pneg %p145
      $region22: #{texd_forward.9} parent=11 // pred_check_branch
        %245 = sbr.rel (%p243) target = $region24
      $region23: #{texd_forward.9} parent=11 // pred_region
        _
      $region24: #{texd_forward.9} parent=11 // pred_fallthru
        _
      // Predicated region
      $region25: #{texd_forward.9} parent=11 // pred_check
        %p246 = pneg %p166
      $region26: #{texd_forward.9} parent=11 // pred_check_branch
        %248 = sbr.rel (%p246) target = $region28
      $region27: #{texd_forward.9} parent=11 // pred_region
        _
      $region28: #{texd_forward.9} parent=11 // pred_fallthru
        _
    $region12: #{texd_forward.9} parent=5 // pred_fallthru
      _
    %p249 = scmp.lt.s32.totalorder %s18, 2
    // Predicated region
    $region29: #{texd_forward.9} parent=5 // pred_check
      %p250 = pneg %p249
    $region30: #{texd_forward.9} parent=5 // pred_check_branch
      %252 = sbr.rel (%p250) target = $region32
    $region31: #{texd_forward.9} parent=5 // pred_region
      // Predicated region
      $region33: #{texd_forward.9} parent=31 // pred_check
        %p253 = pneg %p50
      $region34: #{texd_forward.9} parent=31 // pred_check_branch
        %255 = sbr.rel (%p253) target = $region36
      $region35: #{texd_forward.9} parent=31 // pred_region
        %p256 = scmp.lt.s32.totalorder %s25, 1
        %s257 = scalar_select %p256, %s25, 1
        %s258 = smul.addr %s257, 40
        %s259 = smul.addr %s258, 4
        %s260 = scalar_lea.vmem %s0, %s259
      $region36: #{texd_forward.9} parent=31 // pred_fallthru
        _
      // Predicated region
      $region37: #{texd_forward.9} parent=31 // pred_check
        %p261 = pneg %p76
      $region38: #{texd_forward.9} parent=31 // pred_check_branch
        %263 = sbr.rel (%p261) target = $region40
      $region39: #{texd_forward.9} parent=31 // pred_region
        %p264 = scmp.lt.s32.totalorder %s25, 1
        %s265 = scalar_select %p264, %s25, 1
        %s266 = smul.addr %s265, 10
        %s267 = smul.addr %s266, 8
        %s268 = scalar_lea.vmem %s1, %s267
      $region40: #{texd_forward.9} parent=31 // pred_fallthru
        _
    $region32: #{texd_forward.9} parent=5 // pred_fallthru
      _
    %p269 = scmp.le.s32.totalorder 1, %s18
    %p270 = scmp.lt.s32.totalorder %s18, 3
    %p271 = pnand %p269, %p270
    %p272 = pneg %p271
    // Predicated region
    $region41: #{texd_forward.9} parent=5 // pred_check
      _
    $region42: #{texd_forward.9} parent=5 // pred_check_branch
      %274 = sbr.rel (%p271) target = $region44
    $region43: #{texd_forward.9} parent=5 // pred_region
      %s275 = ssub.s32 %s18, 1
      %p276 = scmp.lt.s32.totalorder %s27, 1
      %s277 = scalar_select %p276, %s27, 1
      %s278 = smul.addr %s277, 40
      %s279 = smul.addr %s278, 4
      %s280 = scalar_lea.vmem %s0, %s279
      %p281 = pneg %p56
      %p282 = pneg %p53
      %p283 = scmp.lt.s32.totalorder %s27, 1
      %s284 = scalar_select %p283, %s27, 1
      %s285 = smul.addr %s284, 10
      %s286 = smul.addr %s285, 8
      %s287 = scalar_lea.vmem %s1, %s286
      %p288 = pneg %p82
      %p289 = pneg %p79
      %p290 = pneg %p103
      %p291 = pneg %p100
      %p292 = pneg %p124
      %p293 = pneg %p121
      %p294 = pneg %p145
      %p295 = pneg %p142
      %p296 = pneg %p166
      %p297 = pneg %p163
      %p298 = pneg %p194
      %p299 = pneg %p191
      %s300 = smul.u32 4, %s28
      %p301 = scmp.lt.s32.totalorder %s27, 1
      %s302 = scalar_select %p301, %s27, 1
      %p303 = scmp.lt.s32.totalorder %s300, 3
      %s304 = scalar_select %p303, %s300, 3
      %s305 = smul.addr %s302, 4
      %s306 = sadd.s32 %s304, %s305
      %s307 = smul.addr %s306, 8
      %s308 = scalar_lea.vmem %s6, %s307
      %p309 = pneg %p222
      %p310 = pneg %p219
      %s311 = smul.u32 4, %s28
      %p312 = scmp.lt.s32.totalorder %s27, 1
      %s313 = scalar_select %p312, %s27, 1
      %p314 = scmp.lt.s32.totalorder %s311, 3
      %s315 = scalar_select %p314, %s311, 3
      %s316 = smul.addr %s313, 4
      %s317 = sadd.s32 %s315, %s316
      %s318 = smul.addr %s317, 8
      %s319 = scalar_lea.vmem %s7, %s318
      %p320 = scmp.lt.s32.totalorder %s27, 1
      %s321 = scalar_select %p320, %s27, 1
      %s322 = smul.addr %s321, 40
      %s323 = smul.addr %s322, 4
      %s324 = scalar_lea.vmem %s0, %s323
      %p325 = scmp.lt.s32.totalorder %s27, 1
      %s326 = scalar_select %p325, %s27, 1
      %s327 = smul.addr %s326, 10
      %s328 = smul.addr %s327, 8
      %s329 = scalar_lea.vmem %s1, %s328
      %s330 = smul.u32 4, %s28
      %p331 = scmp.lt.s32.totalorder %s27, 1
      %s332 = scalar_select %p331, %s27, 1
      %p333 = scmp.lt.s32.totalorder %s330, 3
      %s334 = scalar_select %p333, %s330, 3
      %s335 = smul.addr %s332, 4
      %s336 = sadd.s32 %s334, %s335
      %s337 = smul.addr %s336, 8
      %s338 = scalar_lea.vmem %s6, %s337
      %s339 = smul.u32 4, %s28
      %s340 = smul.u32 4, %s28
      %p341 = scmp.lt.s32.totalorder %s27, 1
      %s342 = scalar_select %p341, %s27, 1
      %p343 = scmp.lt.s32.totalorder %s340, 3
      %s344 = scalar_select %p343, %s340, 3
      %s345 = smul.addr %s342, 4
      %s346 = sadd.s32 %s344, %s345
      %s347 = smul.addr %s346, 8
      %s348 = scalar_lea.vmem %s7, %s347
      %s349 = smul.u32 4, %s28
      %s350 = smul.u32 %s28, 2
      %s351 = smul.u32 %s350, 8
      %s352 = smul.addr %s351, 4
      %s353 = scalar_lea.vmem %s324, %s352
      %v354 = vld [vmem:[%s353] sm:$0xff]
      %v355 = vld [vmem:[%s353 + $0x8] sm:$0xff]
      %v356 = vld [vmem:[%s353 + $0x10] sm:$0xff]
      %v357 = vld [vmem:[%s353 + $0x18] sm:$0xff]
      %v358 = vld [vmem:[%s353 + $0x20] sm:$0xff]
      %v359 = vld [vmem:[%s353 + $0x28] sm:$0xff]
      %v360 = vld [vmem:[%s353 + $0x30] sm:$0xff]
      %v361 = vld [vmem:[%s353 + $0x38] sm:$0xff]
      %v362 = vld [vmem:[%s2] sm:$0xf]
      %v363 = vld [vmem:[%s2 + $0x4] sm:$0xf]
      %v364 = vld [vmem:[%s2 + $0x8] sm:$0xf]
      %v365 = vld [vmem:[%s2 + $0xc] sm:$0xf]
      %v366 = vld [vmem:[%s2 + $0x10] sm:$0xf]
      %v367 = vld [vmem:[%s2 + $0x14] sm:$0xf]
      %v368 = vld [vmem:[%s2 + $0x18] sm:$0xf]
      %v369 = vld [vmem:[%s2 + $0x1c] sm:$0xf]
      %v370 = vld [vmem:[%s2 + $0x20] sm:$0xf]
      %v371 = vld [vmem:[%s2 + $0x24] sm:$0xf]
      %v372 = vld [vmem:[%s2 + $0x28] sm:$0xf]
      %v373 = vld [vmem:[%s2 + $0x2c] sm:$0xf]
      %v374 = vld [vmem:[%s2 + $0x30] sm:$0xf]
      %v375 = vld [vmem:[%s2 + $0x34] sm:$0xf]
      %v376 = vld [vmem:[%s2 + $0x38] sm:$0xf]
      %v377 = vld [vmem:[%s2 + $0x3c] sm:$0xf]
      %v378 = vld [vmem:[%s2 + $0x40] sm:$0xf]
      %v379 = vld [vmem:[%s2 + $0x44] sm:$0xf]
      %v380 = vld [vmem:[%s2 + $0x48] sm:$0xf]
      %v381 = vld [vmem:[%s2 + $0x4c] sm:$0xf]
      %v382 = vld [vmem:[%s2 + $0x50] sm:$0xf]
      %v383 = vld [vmem:[%s2 + $0x54] sm:$0xf]
      %v384 = vld [vmem:[%s2 + $0x58] sm:$0xf]
      %v385 = vld [vmem:[%s2 + $0x5c] sm:$0xf]
      %v386 = vld [vmem:[%s2 + $0x60] sm:$0xf]
      %v387 = vld [vmem:[%s2 + $0x64] sm:$0xf]
      %v388 = vld [vmem:[%s2 + $0x68] sm:$0xf]
      %v389 = vld [vmem:[%s2 + $0x6c] sm:$0xf]
      %v390 = vld [vmem:[%s2 + $0x70] sm:$0xf]
      %v391 = vld [vmem:[%s2 + $0x74] sm:$0xf]
      %v392 = vld [vmem:[%s2 + $0x78] sm:$0xf]
      %v393 = vld [vmem:[%s2 + $0x7c] sm:$0xf]
      %v394 = vld [vmem:[%s2 + $0x80] sm:$0xf]
      %v395 = vld [vmem:[%s2 + $0x84] sm:$0xf]
      %v396 = vld [vmem:[%s2 + $0x88] sm:$0xf]
      %v397 = vld [vmem:[%s2 + $0x8c] sm:$0xf]
      %v398 = vld [vmem:[%s2 + $0x90] sm:$0xf]
      %v399 = vld [vmem:[%s2 + $0x94] sm:$0xf]
      %v400 = vld [vmem:[%s2 + $0x98] sm:$0xf]
      %v401 = vld [vmem:[%s2 + $0x9c] sm:$0xf]
      %v402 = vld [vmem:[%s2 + $0xa0] sm:$0xf]
      %v403 = vld [vmem:[%s2 + $0xa4] sm:$0xf]
      %v404 = vld [vmem:[%s2 + $0xa8] sm:$0xf]
      %v405 = vld [vmem:[%s2 + $0xac] sm:$0xf]
      %v406 = vld [vmem:[%s2 + $0xb0] sm:$0xf]
      %v407 = vld [vmem:[%s2 + $0xb4] sm:$0xf]
      %v408 = vld [vmem:[%s2 + $0xb8] sm:$0xf]
      %v409 = vld [vmem:[%s2 + $0xbc] sm:$0xf]
      %v410 = vld [vmem:[%s2 + $0xc0] sm:$0xf]
      %v411 = vld [vmem:[%s2 + $0xc4] sm:$0xf]
      %v412 = vld [vmem:[%s2 + $0xc8] sm:$0xf]
      %v413 = vld [vmem:[%s2 + $0xcc] sm:$0xf]
      %v414 = vld [vmem:[%s2 + $0xd0] sm:$0xf]
      %v415 = vld [vmem:[%s2 + $0xd4] sm:$0xf]
      %v416 = vld [vmem:[%s2 + $0xd8] sm:$0xf]
      %v417 = vld [vmem:[%s2 + $0xdc] sm:$0xf]
      %v418 = vld [vmem:[%s2 + $0xe0] sm:$0xf]
      %v419 = vld [vmem:[%s2 + $0xe4] sm:$0xf]
      %v420 = vld [vmem:[%s2 + $0xe8] sm:$0xf]
      %v421 = vld [vmem:[%s2 + $0xec] sm:$0xf]
      %v422 = vld [vmem:[%s2 + $0xf0] sm:$0xf]
      %v423 = vld [vmem:[%s2 + $0xf4] sm:$0xf]
      %v424 = vld [vmem:[%s2 + $0xf8] sm:$0xf]
      %v425 = vld [vmem:[%s2 + $0xfc] sm:$0xf]
      %s426 = smul.u32 %s350, 16
      %s427 = scalar_lea.vmem %s329, %s426
      %v428 = vld [vmem:[%s427] sm:$0xff]
      %v429 = vld [vmem:[%s427 + $0x8] sm:$0xff]
      %v430 = vld [vmem:[%s427 + $0x10] sm:$0xff]
      %v431 = vld [vmem:[%s427 + $0x18] sm:$0xff]
      %v432 = vld [vmem:[%s3] sm:$0x1]
      %v434 = vperm.slane %v432, 0
      %v436 = vmul.f32 %v428, %v434
      %v437 = vmul.f32 %v429, %v434
      %v438 = vmul.f32 %v430, %v434
      %v439 = vmul.f32 %v431, %v434
      %s440 = sadd.s32 %s350, 1
      %s441 = smul.u32 %s440, 8
      %s442 = smul.addr %s441, 4
      %s443 = scalar_lea.vmem %s324, %s442
      %v444 = vld [vmem:[%s443] sm:$0xff]
      %v445 = vld [vmem:[%s443 + $0x8] sm:$0xff]
      %v446 = vld [vmem:[%s443 + $0x10] sm:$0xff]
      %v447 = vld [vmem:[%s443 + $0x18] sm:$0xff]
      %v448 = vld [vmem:[%s443 + $0x20] sm:$0xff]
      %v449 = vld [vmem:[%s443 + $0x28] sm:$0xff]
      %v450 = vld [vmem:[%s443 + $0x30] sm:$0xff]
      %v451 = vld [vmem:[%s443 + $0x38] sm:$0xff]
      %s452 = scalar_lea.vmem %s2, 256
      %v453 = vld [vmem:[%s452] sm:$0xf]
      %v454 = vld [vmem:[%s452 + $0x4] sm:$0xf]
      %v455 = vld [vmem:[%s452 + $0x8] sm:$0xf]
      %v456 = vld [vmem:[%s452 + $0xc] sm:$0xf]
      %v457 = vld [vmem:[%s452 + $0x10] sm:$0xf]
      %v458 = vld [vmem:[%s452 + $0x14] sm:$0xf]
      %v459 = vld [vmem:[%s452 + $0x18] sm:$0xf]
      %v460 = vld [vmem:[%s452 + $0x1c] sm:$0xf]
      %v461 = vld [vmem:[%s452 + $0x20] sm:$0xf]
      %v462 = vld [vmem:[%s452 + $0x24] sm:$0xf]
      %v463 = vld [vmem:[%s452 + $0x28] sm:$0xf]
      %v464 = vld [vmem:[%s452 + $0x2c] sm:$0xf]
      %v465 = vld [vmem:[%s452 + $0x30] sm:$0xf]
      %v466 = vld [vmem:[%s452 + $0x34] sm:$0xf]
      %v467 = vld [vmem:[%s452 + $0x38] sm:$0xf]
      %v468 = vld [vmem:[%s452 + $0x3c] sm:$0xf]
      %v469 = vld [vmem:[%s452 + $0x40] sm:$0xf]
      %v470 = vld [vmem:[%s452 + $0x44] sm:$0xf]
      %v471 = vld [vmem:[%s452 + $0x48] sm:$0xf]
      %v472 = vld [vmem:[%s452 + $0x4c] sm:$0xf]
      %v473 = vld [vmem:[%s452 + $0x50] sm:$0xf]
      %v474 = vld [vmem:[%s452 + $0x54] sm:$0xf]
      %v475 = vld [vmem:[%s452 + $0x58] sm:$0xf]
      %v476 = vld [vmem:[%s452 + $0x5c] sm:$0xf]
      %v477 = vld [vmem:[%s452 + $0x60] sm:$0xf]
      %v478 = vld [vmem:[%s452 + $0x64] sm:$0xf]
      %v479 = vld [vmem:[%s452 + $0x68] sm:$0xf]
      %v480 = vld [vmem:[%s452 + $0x6c] sm:$0xf]
      %v481 = vld [vmem:[%s452 + $0x70] sm:$0xf]
      %v482 = vld [vmem:[%s452 + $0x74] sm:$0xf]
      %v483 = vld [vmem:[%s452 + $0x78] sm:$0xf]
      %v484 = vld [vmem:[%s452 + $0x7c] sm:$0xf]
      %v485 = vld [vmem:[%s452 + $0x80] sm:$0xf]
      %v486 = vld [vmem:[%s452 + $0x84] sm:$0xf]
      %v487 = vld [vmem:[%s452 + $0x88] sm:$0xf]
      %v488 = vld [vmem:[%s452 + $0x8c] sm:$0xf]
      %v489 = vld [vmem:[%s452 + $0x90] sm:$0xf]
      %v490 = vld [vmem:[%s452 + $0x94] sm:$0xf]
      %v491 = vld [vmem:[%s452 + $0x98] sm:$0xf]
      %v492 = vld [vmem:[%s452 + $0x9c] sm:$0xf]
      %v493 = vld [vmem:[%s452 + $0xa0] sm:$0xf]
      %v494 = vld [vmem:[%s452 + $0xa4] sm:$0xf]
      %v495 = vld [vmem:[%s452 + $0xa8] sm:$0xf]
      %v496 = vld [vmem:[%s452 + $0xac] sm:$0xf]
      %v497 = vld [vmem:[%s452 + $0xb0] sm:$0xf]
      %v498 = vld [vmem:[%s452 + $0xb4] sm:$0xf]
      %v499 = vld [vmem:[%s452 + $0xb8] sm:$0xf]
      %v500 = vld [vmem:[%s452 + $0xbc] sm:$0xf]
      %v501 = vld [vmem:[%s452 + $0xc0] sm:$0xf]
      %v502 = vld [vmem:[%s452 + $0xc4] sm:$0xf]
      %v503 = vld [vmem:[%s452 + $0xc8] sm:$0xf]
      %v504 = vld [vmem:[%s452 + $0xcc] sm:$0xf]
      %v505 = vld [vmem:[%s452 + $0xd0] sm:$0xf]
      %v506 = vld [vmem:[%s452 + $0xd4] sm:$0xf]
      %v507 = vld [vmem:[%s452 + $0xd8] sm:$0xf]
      %v508 = vld [vmem:[%s452 + $0xdc] sm:$0xf]
      %v509 = vld [vmem:[%s452 + $0xe0] sm:$0xf]
      %v510 = vld [vmem:[%s452 + $0xe4] sm:$0xf]
      %v511 = vld [vmem:[%s452 + $0xe8] sm:$0xf]
      %v512 = vld [vmem:[%s452 + $0xec] sm:$0xf]
      %v513 = vld [vmem:[%s452 + $0xf0] sm:$0xf]
      %v514 = vld [vmem:[%s452 + $0xf4] sm:$0xf]
      %v515 = vld [vmem:[%s452 + $0xf8] sm:$0xf]
      %v516 = vld [vmem:[%s452 + $0xfc] sm:$0xf]
      %v525 = vunpack.c.l.b16 %v444
      %v526 = vunpack.c.h.b16 %v444
      %v527 = vunpack.c.l.b16 %v445
      %v528 = vunpack.c.h.b16 %v445
      %v529 = vunpack.c.l.b16 %v446
      %v530 = vunpack.c.h.b16 %v446
      %v531 = vunpack.c.l.b16 %v447
      %v532 = vunpack.c.h.b16 %v447
      %v533 = vunpack.c.l.b16 %v448
      %v534 = vunpack.c.h.b16 %v448
      %v535 = vunpack.c.l.b16 %v449
      %v536 = vunpack.c.h.b16 %v449
      %v537 = vunpack.c.l.b16 %v450
      %v538 = vunpack.c.h.b16 %v450
      %v539 = vunpack.c.l.b16 %v451
      %v540 = vunpack.c.h.b16 %v451
      %v541 = vpack.c.b16 %v529, %v525
      %v542 = vpack.c.b16 %v530, %v526
      %v543 = vpack.c.b16 %v531, %v527
      %v544 = vpack.c.b16 %v532, %v528
      %v545 = vpack.c.b16 %v537, %v533
      %v546 = vpack.c.b16 %v538, %v534
      %v547 = vpack.c.b16 %v539, %v535
      %v548 = vpack.c.b16 %v540, %v536
      %v621 = vunpack.c.l.b16 %v453
      %v622 = vunpack.c.l.b16 %v454
      %v623 = vunpack.c.l.b16 %v455
      %v624 = vunpack.c.l.b16 %v456
      %v625 = vunpack.c.l.b16 %v457
      %v626 = vunpack.c.l.b16 %v458
      %v627 = vunpack.c.l.b16 %v459
      %v628 = vunpack.c.l.b16 %v460
      %v629 = vunpack.c.l.b16 %v461
      %v630 = vunpack.c.l.b16 %v462
      %v631 = vunpack.c.l.b16 %v463
      %v632 = vunpack.c.l.b16 %v464
      %v633 = vunpack.c.l.b16 %v465
      %v634 = vunpack.c.l.b16 %v466
      %v635 = vunpack.c.l.b16 %v467
      %v636 = vunpack.c.l.b16 %v468
      %v637 = vunpack.c.l.b16 %v469
      %v638 = vunpack.c.l.b16 %v470
      %v639 = vunpack.c.l.b16 %v471
      %v640 = vunpack.c.l.b16 %v472
      %v641 = vunpack.c.l.b16 %v473
      %v642 = vunpack.c.l.b16 %v474
      %v643 = vunpack.c.l.b16 %v475
      %v644 = vunpack.c.l.b16 %v476
      %v645 = vunpack.c.l.b16 %v477
      %v646 = vunpack.c.l.b16 %v478
      %v647 = vunpack.c.l.b16 %v479
      %v648 = vunpack.c.l.b16 %v480
      %v649 = vunpack.c.l.b16 %v481
      %v650 = vunpack.c.l.b16 %v482
      %v651 = vunpack.c.l.b16 %v483
      %v652 = vunpack.c.l.b16 %v484
      %v653 = vunpack.c.l.b16 %v485
      %v654 = vunpack.c.l.b16 %v486
      %v655 = vunpack.c.l.b16 %v487
      %v656 = vunpack.c.l.b16 %v488
      %v657 = vunpack.c.l.b16 %v489
      %v658 = vunpack.c.l.b16 %v490
      %v659 = vunpack.c.l.b16 %v491
      %v660 = vunpack.c.l.b16 %v492
      %v661 = vunpack.c.l.b16 %v493
      %v662 = vunpack.c.l.b16 %v494
      %v663 = vunpack.c.l.b16 %v495
      %v664 = vunpack.c.l.b16 %v496
      %v665 = vunpack.c.l.b16 %v497
      %v666 = vunpack.c.l.b16 %v498
      %v667 = vunpack.c.l.b16 %v499
      %v668 = vunpack.c.l.b16 %v500
      %v669 = vunpack.c.l.b16 %v501
      %v670 = vunpack.c.l.b16 %v502
      %v671 = vunpack.c.l.b16 %v503
      %v672 = vunpack.c.l.b16 %v504
      %v673 = vunpack.c.l.b16 %v505
      %v674 = vunpack.c.l.b16 %v506
      %v675 = vunpack.c.l.b16 %v507
      %v676 = vunpack.c.l.b16 %v508
      %v677 = vunpack.c.l.b16 %v509
      %v678 = vunpack.c.l.b16 %v510
      %v679 = vunpack.c.l.b16 %v511
      %v680 = vunpack.c.l.b16 %v512
      %v681 = vunpack.c.l.b16 %v513
      %v682 = vunpack.c.l.b16 %v514
      %v683 = vunpack.c.l.b16 %v515
      %v684 = vunpack.c.l.b16 %v516
      %v685 = vpack.c.b16 %v622, %v621
      %v686 = vpack.c.b16 %v624, %v623
      %v687 = vpack.c.b16 %v626, %v625
      %v688 = vpack.c.b16 %v628, %v627
      %v689 = vpack.c.b16 %v630, %v629
      %v690 = vpack.c.b16 %v632, %v631
      %v691 = vpack.c.b16 %v634, %v633
      %v692 = vpack.c.b16 %v636, %v635
      %v693 = vpack.c.b16 %v638, %v637
      %v694 = vpack.c.b16 %v640, %v639
      %v695 = vpack.c.b16 %v642, %v641
      %v696 = vpack.c.b16 %v644, %v643
      %v697 = vpack.c.b16 %v646, %v645
      %v698 = vpack.c.b16 %v648, %v647
      %v699 = vpack.c.b16 %v650, %v649
      %v700 = vpack.c.b16 %v652, %v651
      %v701 = vpack.c.b16 %v654, %v653
      %v702 = vpack.c.b16 %v656, %v655
      %v703 = vpack.c.b16 %v658, %v657
      %v704 = vpack.c.b16 %v660, %v659
      %v705 = vpack.c.b16 %v662, %v661
      %v706 = vpack.c.b16 %v664, %v663
      %v707 = vpack.c.b16 %v666, %v665
      %v708 = vpack.c.b16 %v668, %v667
      %v709 = vpack.c.b16 %v670, %v669
      %v710 = vpack.c.b16 %v672, %v671
      %v711 = vpack.c.b16 %v674, %v673
      %v712 = vpack.c.b16 %v676, %v675
      %v713 = vpack.c.b16 %v678, %v677
      %v714 = vpack.c.b16 %v680, %v679
      %v715 = vpack.c.b16 %v682, %v681
      %v716 = vpack.c.b16 %v684, %v683
      %749 = vmatpush.bf16.msra.mxu0 %v692
      %750 = vmatpush.bf16.msra.mxu0 %v691
      %751 = vmatpush.bf16.msra.mxu0 %v690
      %752 = vmatpush.bf16.msra.mxu0 %v689
      %753 = vmatpush.bf16.msra.mxu0 %v688
      %754 = vmatpush.bf16.msra.mxu0 %v687
      %755 = vmatpush.bf16.msra.mxu0 %v686
      %756 = vmatpush.bf16.msra.mxu0 %v685
      %757 = vmatmul.bf16.gmra.mxu0 %v541
      %v758 = vpop.f32.mrf.mxu0
      %v759 = vadd.f32 0.0, %v758
      %v760 = vpop.f32.mrf.mxu0
      %v761 = vadd.f32 0.0, %v760
      %762 = vmatmul.bf16.gmra.mxu0 %v545
      %v763 = vpop.f32.mrf.mxu0
      %v764 = vadd.f32 0.0, %v763
      %v765 = vpop.f32.mrf.mxu0
      %v766 = vadd.f32 0.0, %v765
      %767 = vdwg.mxu0
      %768 = vmatpush.bf16.msra.mxu0 %v700
      %769 = vmatpush.bf16.msra.mxu0 %v699
      %770 = vmatpush.bf16.msra.mxu0 %v698
      %771 = vmatpush.bf16.msra.mxu0 %v697
      %772 = vmatpush.bf16.msra.mxu0 %v696
      %773 = vmatpush.bf16.msra.mxu0 %v695
      %774 = vmatpush.bf16.msra.mxu0 %v694
      %775 = vmatpush.bf16.msra.mxu0 %v693
      %776 = vmatmul.bf16.gmra.mxu0 %v542
      %v777 = vpop.f32.mrf.mxu0
      %v778 = vadd.f32 %v759, %v777
      %v779 = vpop.f32.mrf.mxu0
      %v780 = vadd.f32 %v761, %v779
      %781 = vmatmul.bf16.gmra.mxu0 %v546
      %v782 = vpop.f32.mrf.mxu0
      %v783 = vadd.f32 %v764, %v782
      %v784 = vpop.f32.mrf.mxu0
      %v785 = vadd.f32 %v766, %v784
      %786 = vdwg.mxu0
      %787 = vmatpush.bf16.msra.mxu0 %v708
      %788 = vmatpush.bf16.msra.mxu0 %v707
      %789 = vmatpush.bf16.msra.mxu0 %v706
      %790 = vmatpush.bf16.msra.mxu0 %v705
      %791 = vmatpush.bf16.msra.mxu0 %v704
      %792 = vmatpush.bf16.msra.mxu0 %v703
      %793 = vmatpush.bf16.msra.mxu0 %v702
      %794 = vmatpush.bf16.msra.mxu0 %v701
      %795 = vmatmul.bf16.gmra.mxu0 %v543
      %v796 = vpop.f32.mrf.mxu0
      %v797 = vadd.f32 %v778, %v796
      %v798 = vpop.f32.mrf.mxu0
      %v799 = vadd.f32 %v780, %v798
      %800 = vmatmul.bf16.gmra.mxu0 %v547
      %v801 = vpop.f32.mrf.mxu0
      %v802 = vadd.f32 %v783, %v801
      %v803 = vpop.f32.mrf.mxu0
      %v804 = vadd.f32 %v785, %v803
      %805 = vdwg.mxu0
      %806 = vmatpush.bf16.msra.mxu0 %v716
      %807 = vmatpush.bf16.msra.mxu0 %v715
      %808 = vmatpush.bf16.msra.mxu0 %v714
      %809 = vmatpush.bf16.msra.mxu0 %v713
      %810 = vmatpush.bf16.msra.mxu0 %v712
      %811 = vmatpush.bf16.msra.mxu0 %v711
      %812 = vmatpush.bf16.msra.mxu0 %v710
      %813 = vmatpush.bf16.msra.mxu0 %v709
      %814 = vmatmul.bf16.gmra.mxu0 %v544
      %v815 = vpop.f32.mrf.mxu0
      %v816 = vadd.f32 %v797, %v815
      %v817 = vpop.f32.mrf.mxu0
      %v818 = vadd.f32 %v799, %v817
      %819 = vmatmul.bf16.gmra.mxu0 %v548
      %v820 = vpop.f32.mrf.mxu0
      %v821 = vadd.f32 %v802, %v820
      %v822 = vpop.f32.mrf.mxu0
      %v823 = vadd.f32 %v804, %v822
      %824 = vdwg.mxu0
      %v833 = vunpack.c.l.b16 %v354
      %v834 = vunpack.c.h.b16 %v354
      %v835 = vunpack.c.l.b16 %v355
      %v836 = vunpack.c.h.b16 %v355
      %v837 = vunpack.c.l.b16 %v356
      %v838 = vunpack.c.h.b16 %v356
      %v839 = vunpack.c.l.b16 %v357
      %v840 = vunpack.c.h.b16 %v357
      %v841 = vunpack.c.l.b16 %v358
      %v842 = vunpack.c.h.b16 %v358
      %v843 = vunpack.c.l.b16 %v359
      %v844 = vunpack.c.h.b16 %v359
      %v845 = vunpack.c.l.b16 %v360
      %v846 = vunpack.c.h.b16 %v360
      %v847 = vunpack.c.l.b16 %v361
      %v848 = vunpack.c.h.b16 %v361
      %v849 = vpack.c.b16 %v837, %v833
      %v850 = vpack.c.b16 %v838, %v834
      %v851 = vpack.c.b16 %v839, %v835
      %v852 = vpack.c.b16 %v840, %v836
      %v853 = vpack.c.b16 %v845, %v841
      %v854 = vpack.c.b16 %v846, %v842
      %v855 = vpack.c.b16 %v847, %v843
      %v856 = vpack.c.b16 %v848, %v844
      %v929 = vunpack.c.l.b16 %v362
      %v930 = vunpack.c.l.b16 %v363
      %v931 = vunpack.c.l.b16 %v364
      %v932 = vunpack.c.l.b16 %v365
      %v933 = vunpack.c.l.b16 %v366
      %v934 = vunpack.c.l.b16 %v367
      %v935 = vunpack.c.l.b16 %v368
      %v936 = vunpack.c.l.b16 %v369
      %v937 = vunpack.c.l.b16 %v370
      %v938 = vunpack.c.l.b16 %v371
      %v939 = vunpack.c.l.b16 %v372
      %v940 = vunpack.c.l.b16 %v373
      %v941 = vunpack.c.l.b16 %v374
      %v942 = vunpack.c.l.b16 %v375
      %v943 = vunpack.c.l.b16 %v376
      %v944 = vunpack.c.l.b16 %v377
      %v945 = vunpack.c.l.b16 %v378
      %v946 = vunpack.c.l.b16 %v379
      %v947 = vunpack.c.l.b16 %v380
      %v948 = vunpack.c.l.b16 %v381
      %v949 = vunpack.c.l.b16 %v382
      %v950 = vunpack.c.l.b16 %v383
      %v951 = vunpack.c.l.b16 %v384
      %v952 = vunpack.c.l.b16 %v385
      %v953 = vunpack.c.l.b16 %v386
      %v954 = vunpack.c.l.b16 %v387
      %v955 = vunpack.c.l.b16 %v388
      %v956 = vunpack.c.l.b16 %v389
      %v957 = vunpack.c.l.b16 %v390
      %v958 = vunpack.c.l.b16 %v391
      %v959 = vunpack.c.l.b16 %v392
      %v960 = vunpack.c.l.b16 %v393
      %v961 = vunpack.c.l.b16 %v394
      %v962 = vunpack.c.l.b16 %v395
      %v963 = vunpack.c.l.b16 %v396
      %v964 = vunpack.c.l.b16 %v397
      %v965 = vunpack.c.l.b16 %v398
      %v966 = vunpack.c.l.b16 %v399
      %v967 = vunpack.c.l.b16 %v400
      %v968 = vunpack.c.l.b16 %v401
      %v969 = vunpack.c.l.b16 %v402
      %v970 = vunpack.c.l.b16 %v403
      %v971 = vunpack.c.l.b16 %v404
      %v972 = vunpack.c.l.b16 %v405
      %v973 = vunpack.c.l.b16 %v406
      %v974 = vunpack.c.l.b16 %v407
      %v975 = vunpack.c.l.b16 %v408
      %v976 = vunpack.c.l.b16 %v409
      %v977 = vunpack.c.l.b16 %v410
      %v978 = vunpack.c.l.b16 %v411
      %v979 = vunpack.c.l.b16 %v412
      %v980 = vunpack.c.l.b16 %v413
      %v981 = vunpack.c.l.b16 %v414
      %v982 = vunpack.c.l.b16 %v415
      %v983 = vunpack.c.l.b16 %v416
      %v984 = vunpack.c.l.b16 %v417
      %v985 = vunpack.c.l.b16 %v418
      %v986 = vunpack.c.l.b16 %v419
      %v987 = vunpack.c.l.b16 %v420
      %v988 = vunpack.c.l.b16 %v421
      %v989 = vunpack.c.l.b16 %v422
      %v990 = vunpack.c.l.b16 %v423
      %v991 = vunpack.c.l.b16 %v424
      %v992 = vunpack.c.l.b16 %v425
      %v993 = vpack.c.b16 %v930, %v929
      %v994 = vpack.c.b16 %v932, %v931
      %v995 = vpack.c.b16 %v934, %v933
      %v996 = vpack.c.b16 %v936, %v935
      %v997 = vpack.c.b16 %v938, %v937
      %v998 = vpack.c.b16 %v940, %v939
      %v999 = vpack.c.b16 %v942, %v941
      %v1000 = vpack.c.b16 %v944, %v943
      %v1001 = vpack.c.b16 %v946, %v945
      %v1002 = vpack.c.b16 %v948, %v947
      %v1003 = vpack.c.b16 %v950, %v949
      %v1004 = vpack.c.b16 %v952, %v951
      %v1005 = vpack.c.b16 %v954, %v953
      %v1006 = vpack.c.b16 %v956, %v955
      %v1007 = vpack.c.b16 %v958, %v957
      %v1008 = vpack.c.b16 %v960, %v959
      %v1009 = vpack.c.b16 %v962, %v961
      %v1010 = vpack.c.b16 %v964, %v963
      %v1011 = vpack.c.b16 %v966, %v965
      %v1012 = vpack.c.b16 %v968, %v967
      %v1013 = vpack.c.b16 %v970, %v969
      %v1014 = vpack.c.b16 %v972, %v971
      %v1015 = vpack.c.b16 %v974, %v973
      %v1016 = vpack.c.b16 %v976, %v975
      %v1017 = vpack.c.b16 %v978, %v977
      %v1018 = vpack.c.b16 %v980, %v979
      %v1019 = vpack.c.b16 %v982, %v981
      %v1020 = vpack.c.b16 %v984, %v983
      %v1021 = vpack.c.b16 %v986, %v985
      %v1022 = vpack.c.b16 %v988, %v987
      %v1023 = vpack.c.b16 %v990, %v989
      %v1024 = vpack.c.b16 %v992, %v991
      %1057 = vmatpush.bf16.msra.mxu0 %v1000
      %1058 = vmatpush.bf16.msra.mxu0 %v999
      %1059 = vmatpush.bf16.msra.mxu0 %v998
      %1060 = vmatpush.bf16.msra.mxu0 %v997
      %1061 = vmatpush.bf16.msra.mxu0 %v996
      %1062 = vmatpush.bf16.msra.mxu0 %v995
      %1063 = vmatpush.bf16.msra.mxu0 %v994
      %1064 = vmatpush.bf16.msra.mxu0 %v993
      %1065 = vmatmul.bf16.gmra.mxu0 %v849
      %v1066 = vpop.f32.mrf.mxu0
      %v1067 = vadd.f32 %v816, %v1066
      %v1068 = vpop.f32.mrf.mxu0
      %v1069 = vadd.f32 %v818, %v1068
      %1070 = vmatmul.bf16.gmra.mxu0 %v853
      %v1071 = vpop.f32.mrf.mxu0
      %v1072 = vadd.f32 %v821, %v1071
      %v1073 = vpop.f32.mrf.mxu0
      %v1074 = vadd.f32 %v823, %v1073
      %1075 = vdwg.mxu0
      %1076 = vmatpush.bf16.msra.mxu0 %v1008
      %1077 = vmatpush.bf16.msra.mxu0 %v1007
      %1078 = vmatpush.bf16.msra.mxu0 %v1006
      %1079 = vmatpush.bf16.msra.mxu0 %v1005
      %1080 = vmatpush.bf16.msra.mxu0 %v1004
      %1081 = vmatpush.bf16.msra.mxu0 %v1003
      %1082 = vmatpush.bf16.msra.mxu0 %v1002
      %1083 = vmatpush.bf16.msra.mxu0 %v1001
      %1084 = vmatmul.bf16.gmra.mxu0 %v850
      %v1085 = vpop.f32.mrf.mxu0
      %v1086 = vadd.f32 %v1067, %v1085
      %v1087 = vpop.f32.mrf.mxu0
      %v1088 = vadd.f32 %v1069, %v1087
      %1089 = vmatmul.bf16.gmra.mxu0 %v854
      %v1090 = vpop.f32.mrf.mxu0
      %v1091 = vadd.f32 %v1072, %v1090
      %v1092 = vpop.f32.mrf.mxu0
      %v1093 = vadd.f32 %v1074, %v1092
      %1094 = vdwg.mxu0
      %1095 = vmatpush.bf16.msra.mxu0 %v1016
      %1096 = vmatpush.bf16.msra.mxu0 %v1015
      %1097 = vmatpush.bf16.msra.mxu0 %v1014
      %1098 = vmatpush.bf16.msra.mxu0 %v1013
      %1099 = vmatpush.bf16.msra.mxu0 %v1012
      %1100 = vmatpush.bf16.msra.mxu0 %v1011
      %1101 = vmatpush.bf16.msra.mxu0 %v1010
      %1102 = vmatpush.bf16.msra.mxu0 %v1009
      %1103 = vmatmul.bf16.gmra.mxu0 %v851
      %v1104 = vpop.f32.mrf.mxu0
      %v1105 = vadd.f32 %v1086, %v1104
      %v1106 = vpop.f32.mrf.mxu0
      %v1107 = vadd.f32 %v1088, %v1106
      %1108 = vmatmul.bf16.gmra.mxu0 %v855
      %v1109 = vpop.f32.mrf.mxu0
      %v1110 = vadd.f32 %v1091, %v1109
      %v1111 = vpop.f32.mrf.mxu0
      %v1112 = vadd.f32 %v1093, %v1111
      %1113 = vdwg.mxu0
      %1114 = vmatpush.bf16.msra.mxu0 %v1024
      %1115 = vmatpush.bf16.msra.mxu0 %v1023
      %1116 = vmatpush.bf16.msra.mxu0 %v1022
      %1117 = vmatpush.bf16.msra.mxu0 %v1021
      %1118 = vmatpush.bf16.msra.mxu0 %v1020
      %1119 = vmatpush.bf16.msra.mxu0 %v1019
      %1120 = vmatpush.bf16.msra.mxu0 %v1018
      %1121 = vmatpush.bf16.msra.mxu0 %v1017
      %1122 = vmatmul.bf16.gmra.mxu0 %v852
      %v1123 = vpop.f32.mrf.mxu0
      %v1124 = vadd.f32 %v1105, %v1123
      %v1125 = vpop.f32.mrf.mxu0
      %v1126 = vadd.f32 %v1107, %v1125
      %1127 = vmatmul.bf16.gmra.mxu0 %v856
      %v1128 = vpop.f32.mrf.mxu0
      %v1129 = vadd.f32 %v1110, %v1128
      %v1130 = vpop.f32.mrf.mxu0
      %v1131 = vadd.f32 %v1112, %v1130
      %1132 = vdwg.mxu0
      %s1133 = smul.u32 %s440, 16
      %s1134 = scalar_lea.vmem %s329, %s1133
      %v1135 = vld [vmem:[%s1134] sm:$0xff]
      %v1136 = vld [vmem:[%s1134 + $0x8] sm:$0xff]
      %v1137 = vld [vmem:[%s1134 + $0x10] sm:$0xff]
      %v1138 = vld [vmem:[%s1134 + $0x18] sm:$0xff]
      %s1139 = scalar_lea.vmem %s3, 1
      %v1140 = vld [vmem:[%s1139] sm:$0x1]
      %v1142 = vperm.slane %v1140, 0
      %v1144 = vmul.f32 %v1135, %v1142
      %v1145 = vmul.f32 %v1136, %v1142
      %v1146 = vmul.f32 %v1137, %v1142
      %v1147 = vmul.f32 %v1138, %v1142
      %v1148 = vadd.f32 %v436, %v1144
      %v1149 = vadd.f32 %v437, %v1145
      %v1150 = vadd.f32 %v438, %v1146
      %v1151 = vadd.f32 %v439, %v1147
      %s1152 = sadd.s32 %s350, 2
      %s1153 = smul.u32 %s1152, 8
      %s1154 = smul.addr %s1153, 4
      %s1155 = scalar_lea.vmem %s324, %s1154
      %v1156 = vld [vmem:[%s1155] sm:$0xff]
      %v1157 = vld [vmem:[%s1155 + $0x8] sm:$0xff]
      %v1158 = vld [vmem:[%s1155 + $0x10] sm:$0xff]
      %v1159 = vld [vmem:[%s1155 + $0x18] sm:$0xff]
      %v1160 = vld [vmem:[%s1155 + $0x20] sm:$0xff]
      %v1161 = vld [vmem:[%s1155 + $0x28] sm:$0xff]
      %v1162 = vld [vmem:[%s1155 + $0x30] sm:$0xff]
      %v1163 = vld [vmem:[%s1155 + $0x38] sm:$0xff]
      %s1164 = scalar_lea.vmem %s2, 512
      %v1165 = vld [vmem:[%s1164] sm:$0xf]
      %v1166 = vld [vmem:[%s1164 + $0x4] sm:$0xf]
      %v1167 = vld [vmem:[%s1164 + $0x8] sm:$0xf]
      %v1168 = vld [vmem:[%s1164 + $0xc] sm:$0xf]
      %v1169 = vld [vmem:[%s1164 + $0x10] sm:$0xf]
      %v1170 = vld [vmem:[%s1164 + $0x14] sm:$0xf]
      %v1171 = vld [vmem:[%s1164 + $0x18] sm:$0xf]
      %v1172 = vld [vmem:[%s1164 + $0x1c] sm:$0xf]
      %v1173 = vld [vmem:[%s1164 + $0x20] sm:$0xf]
      %v1174 = vld [vmem:[%s1164 + $0x24] sm:$0xf]
      %v1175 = vld [vmem:[%s1164 + $0x28] sm:$0xf]
      %v1176 = vld [vmem:[%s1164 + $0x2c] sm:$0xf]
      %v1177 = vld [vmem:[%s1164 + $0x30] sm:$0xf]
      %v1178 = vld [vmem:[%s1164 + $0x34] sm:$0xf]
      %v1179 = vld [vmem:[%s1164 + $0x38] sm:$0xf]
      %v1180 = vld [vmem:[%s1164 + $0x3c] sm:$0xf]
      %v1181 = vld [vmem:[%s1164 + $0x40] sm:$0xf]
      %v1182 = vld [vmem:[%s1164 + $0x44] sm:$0xf]
      %v1183 = vld [vmem:[%s1164 + $0x48] sm:$0xf]
      %v1184 = vld [vmem:[%s1164 + $0x4c] sm:$0xf]
      %v1185 = vld [vmem:[%s1164 + $0x50] sm:$0xf]
      %v1186 = vld [vmem:[%s1164 + $0x54] sm:$0xf]
      %v1187 = vld [vmem:[%s1164 + $0x58] sm:$0xf]
      %v1188 = vld [vmem:[%s1164 + $0x5c] sm:$0xf]
      %v1189 = vld [vmem:[%s1164 + $0x60] sm:$0xf]
      %v1190 = vld [vmem:[%s1164 + $0x64] sm:$0xf]
      %v1191 = vld [vmem:[%s1164 + $0x68] sm:$0xf]
      %v1192 = vld [vmem:[%s1164 + $0x6c] sm:$0xf]
      %v1193 = vld [vmem:[%s1164 + $0x70] sm:$0xf]
      %v1194 = vld [vmem:[%s1164 + $0x74] sm:$0xf]
      %v1195 = vld [vmem:[%s1164 + $0x78] sm:$0xf]
      %v1196 = vld [vmem:[%s1164 + $0x7c] sm:$0xf]
      %v1197 = vld [vmem:[%s1164 + $0x80] sm:$0xf]
      %v1198 = vld [vmem:[%s1164 + $0x84] sm:$0xf]
      %v1199 = vld [vmem:[%s1164 + $0x88] sm:$0xf]
      %v1200 = vld [vmem:[%s1164 + $0x8c] sm:$0xf]
      %v1201 = vld [vmem:[%s1164 + $0x90] sm:$0xf]
      %v1202 = vld [vmem:[%s1164 + $0x94] sm:$0xf]
      %v1203 = vld [vmem:[%s1164 + $0x98] sm:$0xf]
      %v1204 = vld [vmem:[%s1164 + $0x9c] sm:$0xf]
      %v1205 = vld [vmem:[%s1164 + $0xa0] sm:$0xf]
      %v1206 = vld [vmem:[%s1164 + $0xa4] sm:$0xf]
      %v1207 = vld [vmem:[%s1164 + $0xa8] sm:$0xf]
      %v1208 = vld [vmem:[%s1164 + $0xac] sm:$0xf]
      %v1209 = vld [vmem:[%s1164 + $0xb0] sm:$0xf]
      %v1210 = vld [vmem:[%s1164 + $0xb4] sm:$0xf]
      %v1211 = vld [vmem:[%s1164 + $0xb8] sm:$0xf]
      %v1212 = vld [vmem:[%s1164 + $0xbc] sm:$0xf]
      %v1213 = vld [vmem:[%s1164 + $0xc0] sm:$0xf]
      %v1214 = vld [vmem:[%s1164 + $0xc4] sm:$0xf]
      %v1215 = vld [vmem:[%s1164 + $0xc8] sm:$0xf]
      %v1216 = vld [vmem:[%s1164 + $0xcc] sm:$0xf]
      %v1217 = vld [vmem:[%s1164 + $0xd0] sm:$0xf]
      %v1218 = vld [vmem:[%s1164 + $0xd4] sm:$0xf]
      %v1219 = vld [vmem:[%s1164 + $0xd8] sm:$0xf]
      %v1220 = vld [vmem:[%s1164 + $0xdc] sm:$0xf]
      %v1221 = vld [vmem:[%s1164 + $0xe0] sm:$0xf]
      %v1222 = vld [vmem:[%s1164 + $0xe4] sm:$0xf]
      %v1223 = vld [vmem:[%s1164 + $0xe8] sm:$0xf]
      %v1224 = vld [vmem:[%s1164 + $0xec] sm:$0xf]
      %v1225 = vld [vmem:[%s1164 + $0xf0] sm:$0xf]
      %v1226 = vld [vmem:[%s1164 + $0xf4] sm:$0xf]
      %v1227 = vld [vmem:[%s1164 + $0xf8] sm:$0xf]
      %v1228 = vld [vmem:[%s1164 + $0xfc] sm:$0xf]
      %v1237 = vunpack.c.l.b16 %v1156
      %v1238 = vunpack.c.h.b16 %v1156
      %v1239 = vunpack.c.l.b16 %v1157
      %v1240 = vunpack.c.h.b16 %v1157
      %v1241 = vunpack.c.l.b16 %v1158
      %v1242 = vunpack.c.h.b16 %v1158
      %v1243 = vunpack.c.l.b16 %v1159
      %v1244 = vunpack.c.h.b16 %v1159
      %v1245 = vunpack.c.l.b16 %v1160
      %v1246 = vunpack.c.h.b16 %v1160
      %v1247 = vunpack.c.l.b16 %v1161
      %v1248 = vunpack.c.h.b16 %v1161
      %v1249 = vunpack.c.l.b16 %v1162
      %v1250 = vunpack.c.h.b16 %v1162
      %v1251 = vunpack.c.l.b16 %v1163
      %v1252 = vunpack.c.h.b16 %v1163
      %v1253 = vpack.c.b16 %v1241, %v1237
      %v1254 = vpack.c.b16 %v1242, %v1238
      %v1255 = vpack.c.b16 %v1243, %v1239
      %v1256 = vpack.c.b16 %v1244, %v1240
      %v1257 = vpack.c.b16 %v1249, %v1245
      %v1258 = vpack.c.b16 %v1250, %v1246
      %v1259 = vpack.c.b16 %v1251, %v1247
      %v1260 = vpack.c.b16 %v1252, %v1248
      %v1333 = vunpack.c.l.b16 %v1165
      %v1334 = vunpack.c.l.b16 %v1166
      %v1335 = vunpack.c.l.b16 %v1167
      %v1336 = vunpack.c.l.b16 %v1168
      %v1337 = vunpack.c.l.b16 %v1169
      %v1338 = vunpack.c.l.b16 %v1170
      %v1339 = vunpack.c.l.b16 %v1171
      %v1340 = vunpack.c.l.b16 %v1172
      %v1341 = vunpack.c.l.b16 %v1173
      %v1342 = vunpack.c.l.b16 %v1174
      %v1343 = vunpack.c.l.b16 %v1175
      %v1344 = vunpack.c.l.b16 %v1176
      %v1345 = vunpack.c.l.b16 %v1177
      %v1346 = vunpack.c.l.b16 %v1178
      %v1347 = vunpack.c.l.b16 %v1179
      %v1348 = vunpack.c.l.b16 %v1180
      %v1349 = vunpack.c.l.b16 %v1181
      %v1350 = vunpack.c.l.b16 %v1182
      %v1351 = vunpack.c.l.b16 %v1183
      %v1352 = vunpack.c.l.b16 %v1184
      %v1353 = vunpack.c.l.b16 %v1185
      %v1354 = vunpack.c.l.b16 %v1186
      %v1355 = vunpack.c.l.b16 %v1187
      %v1356 = vunpack.c.l.b16 %v1188
      %v1357 = vunpack.c.l.b16 %v1189
      %v1358 = vunpack.c.l.b16 %v1190
      %v1359 = vunpack.c.l.b16 %v1191
      %v1360 = vunpack.c.l.b16 %v1192
      %v1361 = vunpack.c.l.b16 %v1193
      %v1362 = vunpack.c.l.b16 %v1194
      %v1363 = vunpack.c.l.b16 %v1195
      %v1364 = vunpack.c.l.b16 %v1196
      %v1365 = vunpack.c.l.b16 %v1197
      %v1366 = vunpack.c.l.b16 %v1198
      %v1367 = vunpack.c.l.b16 %v1199
      %v1368 = vunpack.c.l.b16 %v1200
      %v1369 = vunpack.c.l.b16 %v1201
      %v1370 = vunpack.c.l.b16 %v1202
      %v1371 = vunpack.c.l.b16 %v1203
      %v1372 = vunpack.c.l.b16 %v1204
      %v1373 = vunpack.c.l.b16 %v1205
      %v1374 = vunpack.c.l.b16 %v1206
      %v1375 = vunpack.c.l.b16 %v1207
      %v1376 = vunpack.c.l.b16 %v1208
      %v1377 = vunpack.c.l.b16 %v1209
      %v1378 = vunpack.c.l.b16 %v1210
      %v1379 = vunpack.c.l.b16 %v1211
      %v1380 = vunpack.c.l.b16 %v1212
      %v1381 = vunpack.c.l.b16 %v1213
      %v1382 = vunpack.c.l.b16 %v1214
      %v1383 = vunpack.c.l.b16 %v1215
      %v1384 = vunpack.c.l.b16 %v1216
      %v1385 = vunpack.c.l.b16 %v1217
      %v1386 = vunpack.c.l.b16 %v1218
      %v1387 = vunpack.c.l.b16 %v1219
      %v1388 = vunpack.c.l.b16 %v1220
      %v1389 = vunpack.c.l.b16 %v1221
      %v1390 = vunpack.c.l.b16 %v1222
      %v1391 = vunpack.c.l.b16 %v1223
      %v1392 = vunpack.c.l.b16 %v1224
      %v1393 = vunpack.c.l.b16 %v1225
      %v1394 = vunpack.c.l.b16 %v1226
      %v1395 = vunpack.c.l.b16 %v1227
      %v1396 = vunpack.c.l.b16 %v1228
      %v1397 = vpack.c.b16 %v1334, %v1333
      %v1398 = vpack.c.b16 %v1336, %v1335
      %v1399 = vpack.c.b16 %v1338, %v1337
      %v1400 = vpack.c.b16 %v1340, %v1339
      %v1401 = vpack.c.b16 %v1342, %v1341
      %v1402 = vpack.c.b16 %v1344, %v1343
      %v1403 = vpack.c.b16 %v1346, %v1345
      %v1404 = vpack.c.b16 %v1348, %v1347
      %v1405 = vpack.c.b16 %v1350, %v1349
      %v1406 = vpack.c.b16 %v1352, %v1351
      %v1407 = vpack.c.b16 %v1354, %v1353
      %v1408 = vpack.c.b16 %v1356, %v1355
      %v1409 = vpack.c.b16 %v1358, %v1357
      %v1410 = vpack.c.b16 %v1360, %v1359
      %v1411 = vpack.c.b16 %v1362, %v1361
      %v1412 = vpack.c.b16 %v1364, %v1363
      %v1413 = vpack.c.b16 %v1366, %v1365
      %v1414 = vpack.c.b16 %v1368, %v1367
      %v1415 = vpack.c.b16 %v1370, %v1369
      %v1416 = vpack.c.b16 %v1372, %v1371
      %v1417 = vpack.c.b16 %v1374, %v1373
      %v1418 = vpack.c.b16 %v1376, %v1375
      %v1419 = vpack.c.b16 %v1378, %v1377
      %v1420 = vpack.c.b16 %v1380, %v1379
      %v1421 = vpack.c.b16 %v1382, %v1381
      %v1422 = vpack.c.b16 %v1384, %v1383
      %v1423 = vpack.c.b16 %v1386, %v1385
      %v1424 = vpack.c.b16 %v1388, %v1387
      %v1425 = vpack.c.b16 %v1390, %v1389
      %v1426 = vpack.c.b16 %v1392, %v1391
      %v1427 = vpack.c.b16 %v1394, %v1393
      %v1428 = vpack.c.b16 %v1396, %v1395
      %1461 = vmatpush.bf16.msra.mxu0 %v1404
      %1462 = vmatpush.bf16.msra.mxu0 %v1403
      %1463 = vmatpush.bf16.msra.mxu0 %v1402
      %1464 = vmatpush.bf16.msra.mxu0 %v1401
      %1465 = vmatpush.bf16.msra.mxu0 %v1400
      %1466 = vmatpush.bf16.msra.mxu0 %v1399
      %1467 = vmatpush.bf16.msra.mxu0 %v1398
      %1468 = vmatpush.bf16.msra.mxu0 %v1397
      %1469 = vmatmul.bf16.gmra.mxu0 %v1253
      %v1470 = vpop.f32.mrf.mxu0
      %v1471 = vadd.f32 0.0, %v1470
      %v1472 = vpop.f32.mrf.mxu0
      %v1473 = vadd.f32 0.0, %v1472
      %1474 = vmatmul.bf16.gmra.mxu0 %v1257
      %v1475 = vpop.f32.mrf.mxu0
      %v1476 = vadd.f32 0.0, %v1475
      %v1477 = vpop.f32.mrf.mxu0
      %v1478 = vadd.f32 0.0, %v1477
      %1479 = vdwg.mxu0
      %1480 = vmatpush.bf16.msra.mxu0 %v1412
      %1481 = vmatpush.bf16.msra.mxu0 %v1411
      %1482 = vmatpush.bf16.msra.mxu0 %v1410
      %1483 = vmatpush.bf16.msra.mxu0 %v1409
      %1484 = vmatpush.bf16.msra.mxu0 %v1408
      %1485 = vmatpush.bf16.msra.mxu0 %v1407
      %1486 = vmatpush.bf16.msra.mxu0 %v1406
      %1487 = vmatpush.bf16.msra.mxu0 %v1405
      %1488 = vmatmul.bf16.gmra.mxu0 %v1254
      %v1489 = vpop.f32.mrf.mxu0
      %v1490 = vadd.f32 %v1471, %v1489
      %v1491 = vpop.f32.mrf.mxu0
      %v1492 = vadd.f32 %v1473, %v1491
      %1493 = vmatmul.bf16.gmra.mxu0 %v1258
      %v1494 = vpop.f32.mrf.mxu0
      %v1495 = vadd.f32 %v1476, %v1494
      %v1496 = vpop.f32.mrf.mxu0
      %v1497 = vadd.f32 %v1478, %v1496
      %1498 = vdwg.mxu0
      %1499 = vmatpush.bf16.msra.mxu0 %v1420
      %1500 = vmatpush.bf16.msra.mxu0 %v1419
      %1501 = vmatpush.bf16.msra.mxu0 %v1418
      %1502 = vmatpush.bf16.msra.mxu0 %v1417
      %1503 = vmatpush.bf16.msra.mxu0 %v1416
      %1504 = vmatpush.bf16.msra.mxu0 %v1415
      %1505 = vmatpush.bf16.msra.mxu0 %v1414
      %1506 = vmatpush.bf16.msra.mxu0 %v1413
      %1507 = vmatmul.bf16.gmra.mxu0 %v1255
      %v1508 = vpop.f32.mrf.mxu0
      %v1509 = vadd.f32 %v1490, %v1508
      %v1510 = vpop.f32.mrf.mxu0
      %v1511 = vadd.f32 %v1492, %v1510
      %1512 = vmatmul.bf16.gmra.mxu0 %v1259
      %v1513 = vpop.f32.mrf.mxu0
      %v1514 = vadd.f32 %v1495, %v1513
      %v1515 = vpop.f32.mrf.mxu0
      %v1516 = vadd.f32 %v1497, %v1515
      %1517 = vdwg.mxu0
      %1518 = vmatpush.bf16.msra.mxu0 %v1428
      %1519 = vmatpush.bf16.msra.mxu0 %v1427
      %1520 = vmatpush.bf16.msra.mxu0 %v1426
      %1521 = vmatpush.bf16.msra.mxu0 %v1425
      %1522 = vmatpush.bf16.msra.mxu0 %v1424
      %1523 = vmatpush.bf16.msra.mxu0 %v1423
      %1524 = vmatpush.bf16.msra.mxu0 %v1422
      %1525 = vmatpush.bf16.msra.mxu0 %v1421
      %1526 = vmatmul.bf16.gmra.mxu0 %v1256
      %v1527 = vpop.f32.mrf.mxu0
      %v1528 = vadd.f32 %v1509, %v1527
      %v1529 = vpop.f32.mrf.mxu0
      %v1530 = vadd.f32 %v1511, %v1529
      %1531 = vmatmul.bf16.gmra.mxu0 %v1260
      %v1532 = vpop.f32.mrf.mxu0
      %v1533 = vadd.f32 %v1514, %v1532
      %v1534 = vpop.f32.mrf.mxu0
      %v1535 = vadd.f32 %v1516, %v1534
      %1536 = vdwg.mxu0
      %v1537 = vadd.f32 %v1124, %v1528
      %v1538 = vadd.f32 %v1126, %v1530
      %v1539 = vadd.f32 %v1129, %v1533
      %v1540 = vadd.f32 %v1131, %v1535
      %s1541 = smul.u32 %s1152, 16
      %s1542 = scalar_lea.vmem %s329, %s1541
      %v1543 = vld [vmem:[%s1542] sm:$0xff]
      %v1544 = vld [vmem:[%s1542 + $0x8] sm:$0xff]
      %v1545 = vld [vmem:[%s1542 + $0x10] sm:$0xff]
      %v1546 = vld [vmem:[%s1542 + $0x18] sm:$0xff]
      %s1547 = scalar_lea.vmem %s3, 2
      %v1548 = vld [vmem:[%s1547] sm:$0x1]
      %v1550 = vperm.slane %v1548, 0
      %v1552 = vmul.f32 %v1543, %v1550
      %v1553 = vmul.f32 %v1544, %v1550
      %v1554 = vmul.f32 %v1545, %v1550
      %v1555 = vmul.f32 %v1546, %v1550
      %v1556 = vadd.f32 %v1148, %v1552
      %v1557 = vadd.f32 %v1149, %v1553
      %v1558 = vadd.f32 %v1150, %v1554
      %v1559 = vadd.f32 %v1151, %v1555
      %s1560 = sadd.s32 %s350, 3
      %s1561 = smul.u32 %s1560, 8
      %s1562 = smul.addr %s1561, 4
      %s1563 = scalar_lea.vmem %s324, %s1562
      %v1564 = vld [vmem:[%s1563] sm:$0xff]
      %v1565 = vld [vmem:[%s1563 + $0x8] sm:$0xff]
      %v1566 = vld [vmem:[%s1563 + $0x10] sm:$0xff]
      %v1567 = vld [vmem:[%s1563 + $0x18] sm:$0xff]
      %v1568 = vld [vmem:[%s1563 + $0x20] sm:$0xff]
      %v1569 = vld [vmem:[%s1563 + $0x28] sm:$0xff]
      %v1570 = vld [vmem:[%s1563 + $0x30] sm:$0xff]
      %v1571 = vld [vmem:[%s1563 + $0x38] sm:$0xff]
      %s1572 = scalar_lea.vmem %s2, 768
      %v1573 = vld [vmem:[%s1572] sm:$0xf]
      %v1574 = vld [vmem:[%s1572 + $0x4] sm:$0xf]
      %v1575 = vld [vmem:[%s1572 + $0x8] sm:$0xf]
      %v1576 = vld [vmem:[%s1572 + $0xc] sm:$0xf]
      %v1577 = vld [vmem:[%s1572 + $0x10] sm:$0xf]
      %v1578 = vld [vmem:[%s1572 + $0x14] sm:$0xf]
      %v1579 = vld [vmem:[%s1572 + $0x18] sm:$0xf]
      %v1580 = vld [vmem:[%s1572 + $0x1c] sm:$0xf]
      %v1581 = vld [vmem:[%s1572 + $0x20] sm:$0xf]
      %v1582 = vld [vmem:[%s1572 + $0x24] sm:$0xf]
      %v1583 = vld [vmem:[%s1572 + $0x28] sm:$0xf]
      %v1584 = vld [vmem:[%s1572 + $0x2c] sm:$0xf]
      %v1585 = vld [vmem:[%s1572 + $0x30] sm:$0xf]
      %v1586 = vld [vmem:[%s1572 + $0x34] sm:$0xf]
      %v1587 = vld [vmem:[%s1572 + $0x38] sm:$0xf]
      %v1588 = vld [vmem:[%s1572 + $0x3c] sm:$0xf]
      %v1589 = vld [vmem:[%s1572 + $0x40] sm:$0xf]
      %v1590 = vld [vmem:[%s1572 + $0x44] sm:$0xf]
      %v1591 = vld [vmem:[%s1572 + $0x48] sm:$0xf]
      %v1592 = vld [vmem:[%s1572 + $0x4c] sm:$0xf]
      %v1593 = vld [vmem:[%s1572 + $0x50] sm:$0xf]
      %v1594 = vld [vmem:[%s1572 + $0x54] sm:$0xf]
      %v1595 = vld [vmem:[%s1572 + $0x58] sm:$0xf]
      %v1596 = vld [vmem:[%s1572 + $0x5c] sm:$0xf]
      %v1597 = vld [vmem:[%s1572 + $0x60] sm:$0xf]
      %v1598 = vld [vmem:[%s1572 + $0x64] sm:$0xf]
      %v1599 = vld [vmem:[%s1572 + $0x68] sm:$0xf]
      %v1600 = vld [vmem:[%s1572 + $0x6c] sm:$0xf]
      %v1601 = vld [vmem:[%s1572 + $0x70] sm:$0xf]
      %v1602 = vld [vmem:[%s1572 + $0x74] sm:$0xf]
      %v1603 = vld [vmem:[%s1572 + $0x78] sm:$0xf]
      %v1604 = vld [vmem:[%s1572 + $0x7c] sm:$0xf]
      %v1605 = vld [vmem:[%s1572 + $0x80] sm:$0xf]
      %v1606 = vld [vmem:[%s1572 + $0x84] sm:$0xf]
      %v1607 = vld [vmem:[%s1572 + $0x88] sm:$0xf]
      %v1608 = vld [vmem:[%s1572 + $0x8c] sm:$0xf]
      %v1609 = vld [vmem:[%s1572 + $0x90] sm:$0xf]
      %v1610 = vld [vmem:[%s1572 + $0x94] sm:$0xf]
      %v1611 = vld [vmem:[%s1572 + $0x98] sm:$0xf]
      %v1612 = vld [vmem:[%s1572 + $0x9c] sm:$0xf]
      %v1613 = vld [vmem:[%s1572 + $0xa0] sm:$0xf]
      %v1614 = vld [vmem:[%s1572 + $0xa4] sm:$0xf]
      %v1615 = vld [vmem:[%s1572 + $0xa8] sm:$0xf]
      %v1616 = vld [vmem:[%s1572 + $0xac] sm:$0xf]
      %v1617 = vld [vmem:[%s1572 + $0xb0] sm:$0xf]
      %v1618 = vld [vmem:[%s1572 + $0xb4] sm:$0xf]
      %v1619 = vld [vmem:[%s1572 + $0xb8] sm:$0xf]
      %v1620 = vld [vmem:[%s1572 + $0xbc] sm:$0xf]
      %v1621 = vld [vmem:[%s1572 + $0xc0] sm:$0xf]
      %v1622 = vld [vmem:[%s1572 + $0xc4] sm:$0xf]
      %v1623 = vld [vmem:[%s1572 + $0xc8] sm:$0xf]
      %v1624 = vld [vmem:[%s1572 + $0xcc] sm:$0xf]
      %v1625 = vld [vmem:[%s1572 + $0xd0] sm:$0xf]
      %v1626 = vld [vmem:[%s1572 + $0xd4] sm:$0xf]
      %v1627 = vld [vmem:[%s1572 + $0xd8] sm:$0xf]
      %v1628 = vld [vmem:[%s1572 + $0xdc] sm:$0xf]
      %v1629 = vld [vmem:[%s1572 + $0xe0] sm:$0xf]
      %v1630 = vld [vmem:[%s1572 + $0xe4] sm:$0xf]
      %v1631 = vld [vmem:[%s1572 + $0xe8] sm:$0xf]
      %v1632 = vld [vmem:[%s1572 + $0xec] sm:$0xf]
      %v1633 = vld [vmem:[%s1572 + $0xf0] sm:$0xf]
      %v1634 = vld [vmem:[%s1572 + $0xf4] sm:$0xf]
      %v1635 = vld [vmem:[%s1572 + $0xf8] sm:$0xf]
      %v1636 = vld [vmem:[%s1572 + $0xfc] sm:$0xf]
      %v1645 = vunpack.c.l.b16 %v1564
      %v1646 = vunpack.c.h.b16 %v1564
      %v1647 = vunpack.c.l.b16 %v1565
      %v1648 = vunpack.c.h.b16 %v1565
      %v1649 = vunpack.c.l.b16 %v1566
      %v1650 = vunpack.c.h.b16 %v1566
      %v1651 = vunpack.c.l.b16 %v1567
      %v1652 = vunpack.c.h.b16 %v1567
      %v1653 = vunpack.c.l.b16 %v1568
      %v1654 = vunpack.c.h.b16 %v1568
      %v1655 = vunpack.c.l.b16 %v1569
      %v1656 = vunpack.c.h.b16 %v1569
      %v1657 = vunpack.c.l.b16 %v1570
      %v1658 = vunpack.c.h.b16 %v1570
      %v1659 = vunpack.c.l.b16 %v1571
      %v1660 = vunpack.c.h.b16 %v1571
      %v1661 = vpack.c.b16 %v1649, %v1645
      %v1662 = vpack.c.b16 %v1650, %v1646
      %v1663 = vpack.c.b16 %v1651, %v1647
      %v1664 = vpack.c.b16 %v1652, %v1648
      %v1665 = vpack.c.b16 %v1657, %v1653
      %v1666 = vpack.c.b16 %v1658, %v1654
      %v1667 = vpack.c.b16 %v1659, %v1655
      %v1668 = vpack.c.b16 %v1660, %v1656
      %v1741 = vunpack.c.l.b16 %v1573
      %v1742 = vunpack.c.l.b16 %v1574
      %v1743 = vunpack.c.l.b16 %v1575
      %v1744 = vunpack.c.l.b16 %v1576
      %v1745 = vunpack.c.l.b16 %v1577
      %v1746 = vunpack.c.l.b16 %v1578
      %v1747 = vunpack.c.l.b16 %v1579
      %v1748 = vunpack.c.l.b16 %v1580
      %v1749 = vunpack.c.l.b16 %v1581
      %v1750 = vunpack.c.l.b16 %v1582
      %v1751 = vunpack.c.l.b16 %v1583
      %v1752 = vunpack.c.l.b16 %v1584
      %v1753 = vunpack.c.l.b16 %v1585
      %v1754 = vunpack.c.l.b16 %v1586
      %v1755 = vunpack.c.l.b16 %v1587
      %v1756 = vunpack.c.l.b16 %v1588
      %v1757 = vunpack.c.l.b16 %v1589
      %v1758 = vunpack.c.l.b16 %v1590
      %v1759 = vunpack.c.l.b16 %v1591
      %v1760 = vunpack.c.l.b16 %v1592
      %v1761 = vunpack.c.l.b16 %v1593
      %v1762 = vunpack.c.l.b16 %v1594
      %v1763 = vunpack.c.l.b16 %v1595
      %v1764 = vunpack.c.l.b16 %v1596
      %v1765 = vunpack.c.l.b16 %v1597
      %v1766 = vunpack.c.l.b16 %v1598
      %v1767 = vunpack.c.l.b16 %v1599
      %v1768 = vunpack.c.l.b16 %v1600
      %v1769 = vunpack.c.l.b16 %v1601
      %v1770 = vunpack.c.l.b16 %v1602
      %v1771 = vunpack.c.l.b16 %v1603
      %v1772 = vunpack.c.l.b16 %v1604
      %v1773 = vunpack.c.l.b16 %v1605
      %v1774 = vunpack.c.l.b16 %v1606
      %v1775 = vunpack.c.l.b16 %v1607
      %v1776 = vunpack.c.l.b16 %v1608
      %v1777 = vunpack.c.l.b16 %v1609
      %v1778 = vunpack.c.l.b16 %v1610
      %v1779 = vunpack.c.l.b16 %v1611
      %v1780 = vunpack.c.l.b16 %v1612
      %v1781 = vunpack.c.l.b16 %v1613
      %v1782 = vunpack.c.l.b16 %v1614
      %v1783 = vunpack.c.l.b16 %v1615
      %v1784 = vunpack.c.l.b16 %v1616
      %v1785 = vunpack.c.l.b16 %v1617
      %v1786 = vunpack.c.l.b16 %v1618
      %v1787 = vunpack.c.l.b16 %v1619
      %v1788 = vunpack.c.l.b16 %v1620
      %v1789 = vunpack.c.l.b16 %v1621
      %v1790 = vunpack.c.l.b16 %v1622
      %v1791 = vunpack.c.l.b16 %v1623
      %v1792 = vunpack.c.l.b16 %v1624
      %v1793 = vunpack.c.l.b16 %v1625
      %v1794 = vunpack.c.l.b16 %v1626
      %v1795 = vunpack.c.l.b16 %v1627
      %v1796 = vunpack.c.l.b16 %v1628
      %v1797 = vunpack.c.l.b16 %v1629
      %v1798 = vunpack.c.l.b16 %v1630
      %v1799 = vunpack.c.l.b16 %v1631
      %v1800 = vunpack.c.l.b16 %v1632
      %v1801 = vunpack.c.l.b16 %v1633
      %v1802 = vunpack.c.l.b16 %v1634
      %v1803 = vunpack.c.l.b16 %v1635
      %v1804 = vunpack.c.l.b16 %v1636
      %v1805 = vpack.c.b16 %v1742, %v1741
      %v1806 = vpack.c.b16 %v1744, %v1743
      %v1807 = vpack.c.b16 %v1746, %v1745
      %v1808 = vpack.c.b16 %v1748, %v1747
      %v1809 = vpack.c.b16 %v1750, %v1749
      %v1810 = vpack.c.b16 %v1752, %v1751
      %v1811 = vpack.c.b16 %v1754, %v1753
      %v1812 = vpack.c.b16 %v1756, %v1755
      %v1813 = vpack.c.b16 %v1758, %v1757
      %v1814 = vpack.c.b16 %v1760, %v1759
      %v1815 = vpack.c.b16 %v1762, %v1761
      %v1816 = vpack.c.b16 %v1764, %v1763
      %v1817 = vpack.c.b16 %v1766, %v1765
      %v1818 = vpack.c.b16 %v1768, %v1767
      %v1819 = vpack.c.b16 %v1770, %v1769
      %v1820 = vpack.c.b16 %v1772, %v1771
      %v1821 = vpack.c.b16 %v1774, %v1773
      %v1822 = vpack.c.b16 %v1776, %v1775
      %v1823 = vpack.c.b16 %v1778, %v1777
      %v1824 = vpack.c.b16 %v1780, %v1779
      %v1825 = vpack.c.b16 %v1782, %v1781
      %v1826 = vpack.c.b16 %v1784, %v1783
      %v1827 = vpack.c.b16 %v1786, %v1785
      %v1828 = vpack.c.b16 %v1788, %v1787
      %v1829 = vpack.c.b16 %v1790, %v1789
      %v1830 = vpack.c.b16 %v1792, %v1791
      %v1831 = vpack.c.b16 %v1794, %v1793
      %v1832 = vpack.c.b16 %v1796, %v1795
      %v1833 = vpack.c.b16 %v1798, %v1797
      %v1834 = vpack.c.b16 %v1800, %v1799
      %v1835 = vpack.c.b16 %v1802, %v1801
      %v1836 = vpack.c.b16 %v1804, %v1803
      %1869 = vmatpush.bf16.msra.mxu0 %v1812
      %1870 = vmatpush.bf16.msra.mxu0 %v1811
      %1871 = vmatpush.bf16.msra.mxu0 %v1810
      %1872 = vmatpush.bf16.msra.mxu0 %v1809
      %1873 = vmatpush.bf16.msra.mxu0 %v1808
      %1874 = vmatpush.bf16.msra.mxu0 %v1807
      %1875 = vmatpush.bf16.msra.mxu0 %v1806
      %1876 = vmatpush.bf16.msra.mxu0 %v1805
      %1877 = vmatmul.bf16.gmra.mxu0 %v1661
      %v1878 = vpop.f32.mrf.mxu0
      %v1879 = vadd.f32 0.0, %v1878
      %v1880 = vpop.f32.mrf.mxu0
      %v1881 = vadd.f32 0.0, %v1880
      %1882 = vmatmul.bf16.gmra.mxu0 %v1665
      %v1883 = vpop.f32.mrf.mxu0
      %v1884 = vadd.f32 0.0, %v1883
      %v1885 = vpop.f32.mrf.mxu0
      %v1886 = vadd.f32 0.0, %v1885
      %1887 = vdwg.mxu0
      %1888 = vmatpush.bf16.msra.mxu0 %v1820
      %1889 = vmatpush.bf16.msra.mxu0 %v1819
      %1890 = vmatpush.bf16.msra.mxu0 %v1818
      %1891 = vmatpush.bf16.msra.mxu0 %v1817
      %1892 = vmatpush.bf16.msra.mxu0 %v1816
      %1893 = vmatpush.bf16.msra.mxu0 %v1815
      %1894 = vmatpush.bf16.msra.mxu0 %v1814
      %1895 = vmatpush.bf16.msra.mxu0 %v1813
      %1896 = vmatmul.bf16.gmra.mxu0 %v1662
      %v1897 = vpop.f32.mrf.mxu0
      %v1898 = vadd.f32 %v1879, %v1897
      %v1899 = vpop.f32.mrf.mxu0
      %v1900 = vadd.f32 %v1881, %v1899
      %1901 = vmatmul.bf16.gmra.mxu0 %v1666
      %v1902 = vpop.f32.mrf.mxu0
      %v1903 = vadd.f32 %v1884, %v1902
      %v1904 = vpop.f32.mrf.mxu0
      %v1905 = vadd.f32 %v1886, %v1904
      %1906 = vdwg.mxu0
      %1907 = vmatpush.bf16.msra.mxu0 %v1828
      %1908 = vmatpush.bf16.msra.mxu0 %v1827
      %1909 = vmatpush.bf16.msra.mxu0 %v1826
      %1910 = vmatpush.bf16.msra.mxu0 %v1825
      %1911 = vmatpush.bf16.msra.mxu0 %v1824
      %1912 = vmatpush.bf16.msra.mxu0 %v1823
      %1913 = vmatpush.bf16.msra.mxu0 %v1822
      %1914 = vmatpush.bf16.msra.mxu0 %v1821
      %1915 = vmatmul.bf16.gmra.mxu0 %v1663
      %v1916 = vpop.f32.mrf.mxu0
      %v1917 = vadd.f32 %v1898, %v1916
      %v1918 = vpop.f32.mrf.mxu0
      %v1919 = vadd.f32 %v1900, %v1918
      %1920 = vmatmul.bf16.gmra.mxu0 %v1667
      %v1921 = vpop.f32.mrf.mxu0
      %v1922 = vadd.f32 %v1903, %v1921
      %v1923 = vpop.f32.mrf.mxu0
      %v1924 = vadd.f32 %v1905, %v1923
      %1925 = vdwg.mxu0
      %1926 = vmatpush.bf16.msra.mxu0 %v1836
      %1927 = vmatpush.bf16.msra.mxu0 %v1835
      %1928 = vmatpush.bf16.msra.mxu0 %v1834
      %1929 = vmatpush.bf16.msra.mxu0 %v1833
      %1930 = vmatpush.bf16.msra.mxu0 %v1832
      %1931 = vmatpush.bf16.msra.mxu0 %v1831
      %1932 = vmatpush.bf16.msra.mxu0 %v1830
      %1933 = vmatpush.bf16.msra.mxu0 %v1829
      %1934 = vmatmul.bf16.gmra.mxu0 %v1664
      %v1935 = vpop.f32.mrf.mxu0
      %v1936 = vadd.f32 %v1917, %v1935
      %v1937 = vpop.f32.mrf.mxu0
      %v1938 = vadd.f32 %v1919, %v1937
      %1939 = vmatmul.bf16.gmra.mxu0 %v1668
      %v1940 = vpop.f32.mrf.mxu0
      %v1941 = vadd.f32 %v1922, %v1940
      %v1942 = vpop.f32.mrf.mxu0
      %v1943 = vadd.f32 %v1924, %v1942
      %1944 = vdwg.mxu0
      %v1945 = vadd.f32 %v1537, %v1936
      %v1946 = vadd.f32 %v1538, %v1938
      %v1947 = vadd.f32 %v1539, %v1941
      %v1948 = vadd.f32 %v1540, %v1943
      %s1949 = smul.u32 %s1560, 16
      %s1950 = scalar_lea.vmem %s329, %s1949
      %v1951 = vld [vmem:[%s1950] sm:$0xff]
      %v1952 = vld [vmem:[%s1950 + $0x8] sm:$0xff]
      %v1953 = vld [vmem:[%s1950 + $0x10] sm:$0xff]
      %v1954 = vld [vmem:[%s1950 + $0x18] sm:$0xff]
      %s1955 = scalar_lea.vmem %s3, 3
      %v1956 = vld [vmem:[%s1955] sm:$0x1]
      %v1958 = vperm.slane %v1956, 0
      %v1960 = vmul.f32 %v1951, %v1958
      %v1961 = vmul.f32 %v1952, %v1958
      %v1962 = vmul.f32 %v1953, %v1958
      %v1963 = vmul.f32 %v1954, %v1958
      %v1964 = vadd.f32 %v1556, %v1960
      %v1965 = vadd.f32 %v1557, %v1961
      %v1966 = vadd.f32 %v1558, %v1962
      %v1967 = vadd.f32 %v1559, %v1963
      %v1968 = vld [vmem:[#allocation2] sm:$0x1]
      %v1970 = vperm.slane %v1968, 0
      %v1972 = vadd.f32 %v1945, %v1970
      %v1973 = vadd.f32 %v1946, %v1970
      %v1974 = vadd.f32 %v1947, %v1970
      %v1975 = vadd.f32 %v1948, %v1970
      %v1976 = vxor.u32 %v1972, 2147483648
      %v1977 = vxor.u32 %v1973, 2147483648
      %v1978 = vxor.u32 %v1974, 2147483648
      %v1979 = vxor.u32 %v1975, 2147483648
      %v1980 = vmul.f32 %v1976, 1.442695
      %v1981 = vpow.pop %v1980
      %v1982 = vmul.f32 %v1977, 1.442695
      %v1983 = vpow.pop %v1982
      %v1984 = vmul.f32 %v1978, 1.442695
      %v1985 = vpow.pop %v1984
      %v1986 = vmul.f32 %v1979, 1.442695
      %v1987 = vpow.pop %v1986
      %v1988 = vadd.f32 %v1981, 1.0
      %v1989 = vadd.f32 %v1983, 1.0
      %v1990 = vadd.f32 %v1985, 1.0
      %v1991 = vadd.f32 %v1987, 1.0
      %v1992 = vrcp.pop %v1988
      %v1993 = vmul.f32 %v1988, %v1992
      %v1994 = vsub.f32 1.0, %v1993
      %v1995 = vmul.f32 %v1992, %v1994
      %v1996 = vadd.f32 %v1992, %v1995
      %vm1997 = vweird.f32 %v1988
      %vm1998 = vweird.f32 %v1992
      %vm1999 = vmor %vm1997, %vm1998
      %v2000 = vsel %vm1999, %v1992, %v1996
      %v2001 = vand.u32 2147483647, %v1988
      %vm2002 = vcmp.eq.f32.partialorder %v2001, 8.507059e+37
      %v2003 = vand.u32 %v1988, 2147483648
      %v2004 = vor.u32 1.1754944e-38, %v2003
      %v2005 = vsel %vm2002, %v2004, %v2000
      %v2006 = vmul.f32 1.0, %v2005
      %v2007 = vrcp.pop %v1989
      %v2008 = vmul.f32 %v1989, %v2007
      %v2009 = vsub.f32 1.0, %v2008
      %v2010 = vmul.f32 %v2007, %v2009
      %v2011 = vadd.f32 %v2007, %v2010
      %vm2012 = vweird.f32 %v1989
      %vm2013 = vweird.f32 %v2007
      %vm2014 = vmor %vm2012, %vm2013
      %v2015 = vsel %vm2014, %v2007, %v2011
      %v2016 = vand.u32 2147483647, %v1989
      %vm2017 = vcmp.eq.f32.partialorder %v2016, 8.507059e+37
      %v2018 = vand.u32 %v1989, 2147483648
      %v2019 = vor.u32 1.1754944e-38, %v2018
      %v2020 = vsel %vm2017, %v2019, %v2015
      %v2021 = vmul.f32 1.0, %v2020
      %v2022 = vrcp.pop %v1990
      %v2023 = vmul.f32 %v1990, %v2022
      %v2024 = vsub.f32 1.0, %v2023
      %v2025 = vmul.f32 %v2022, %v2024
      %v2026 = vadd.f32 %v2022, %v2025
      %vm2027 = vweird.f32 %v1990
      %vm2028 = vweird.f32 %v2022
      %vm2029 = vmor %vm2027, %vm2028
      %v2030 = vsel %vm2029, %v2022, %v2026
      %v2031 = vand.u32 2147483647, %v1990
      %vm2032 = vcmp.eq.f32.partialorder %v2031, 8.507059e+37
      %v2033 = vand.u32 %v1990, 2147483648
      %v2034 = vor.u32 1.1754944e-38, %v2033
      %v2035 = vsel %vm2032, %v2034, %v2030
      %v2036 = vmul.f32 1.0, %v2035
      %v2037 = vrcp.pop %v1991
      %v2038 = vmul.f32 %v1991, %v2037
      %v2039 = vsub.f32 1.0, %v2038
      %v2040 = vmul.f32 %v2037, %v2039
      %v2041 = vadd.f32 %v2037, %v2040
      %vm2042 = vweird.f32 %v1991
      %vm2043 = vweird.f32 %v2037
      %vm2044 = vmor %vm2042, %vm2043
      %v2045 = vsel %vm2044, %v2037, %v2041
      %v2046 = vand.u32 2147483647, %v1991
      %vm2047 = vcmp.eq.f32.partialorder %v2046, 8.507059e+37
      %v2048 = vand.u32 %v1991, 2147483648
      %v2049 = vor.u32 1.1754944e-38, %v2048
      %v2050 = vsel %vm2047, %v2049, %v2045
      %v2051 = vmul.f32 1.0, %v2050
      %vm2052 = vcmask 7168
      %2053 = vst.msk [vmem:[%s338] sm:$0xff] %vm2052, %v2006
      %2054 = vst.msk [vmem:[%s338 + $0x8] sm:$0xff] %vm2052, %v2021
      %2055 = vst.msk [vmem:[%s338 + $0x10] sm:$0xff] %vm2052, %v2036
      %2056 = vst.msk [vmem:[%s338 + $0x18] sm:$0xff] %vm2052, %v2051
      %vm2057 = vcmask 31744
      %v2058 = vsel %vm2057, %v1964, 0.0
      %2059 = vadd.xlane.f32.xlu0 %v2058
      %v2060 = vpop.xlane.xlu0 %2059
      %v2061 = vsel %vm2057, %v1965, 0.0
      %2062 = vadd.xlane.f32.xlu0 %v2061
      %v2063 = vpop.xlane.xlu0 %2062
      %v2064 = vsel %vm2057, %v1966, 0.0
      %2065 = vadd.xlane.f32.xlu0 %v2064
      %v2066 = vpop.xlane.xlu0 %2065
      %v2067 = vsel %vm2057, %v1967, 0.0
      %2068 = vadd.xlane.f32.xlu0 %v2067
      %v2069 = vpop.xlane.xlu0 %2068
      %v2070 = vld [vmem:[#allocation3] sm:$0x1]
      %v2072 = vperm.slane %v2070, 0
      %v2074 = vadd.f32 %v2060, %v2072
      %v2075 = vadd.f32 %v2063, %v2072
      %v2076 = vadd.f32 %v2066, %v2072
      %v2077 = vadd.f32 %v2069, %v2072
      %2078 = vst.msk [vmem:[%s348] sm:$0xff] %vm2052, %v2074
      %2079 = vst.msk [vmem:[%s348 + $0x8] sm:$0xff] %vm2052, %v2075
      %2080 = vst.msk [vmem:[%s348 + $0x10] sm:$0xff] %vm2052, %v2076
      %2081 = vst.msk [vmem:[%s348 + $0x18] sm:$0xff] %vm2052, %v2077
      %s2082 = smul.u32 4, %s28
      %p2083 = scmp.lt.s32.totalorder %s27, 1
      %s2084 = scalar_select %p2083, %s27, 1
      %p2085 = scmp.lt.s32.totalorder %s2082, 3
      %s2086 = scalar_select %p2085, %s2082, 3
      %s2087 = smul.addr %s2084, 4
      %s2088 = sadd.s32 %s2086, %s2087
      %s2089 = smul.addr %s2088, 8
      %s2090 = scalar_lea.vmem %s6, %s2089
      %s2091 = smul.u32 4, %s28
      %p2092 = scmp.lt.s32.totalorder %s27, 1
      %s2093 = scalar_select %p2092, %s27, 1
      %p2094 = scmp.lt.s32.totalorder %s2091, 3
      %s2095 = scalar_select %p2094, %s2091, 3
      %s2096 = smul.addr %s2093, 4
      %s2097 = sadd.s32 %s2095, %s2096
      %s2098 = smul.addr %s2097, 8
      %s2099 = scalar_lea.vmem %s7, %s2098
      // Predicated region
      $region45: #{texd_forward.9} parent=43 // pred_check
        %p2100 = pneg %p191
      $region46: #{texd_forward.9} parent=43 // pred_check_branch
        %2102 = sbr.rel (%p2100) target = $region48
      $region47: #{texd_forward.9} parent=43 // pred_region
        %s2103 = smul.u32 4, %s28
      $region48: #{texd_forward.9} parent=43 // pred_fallthru
        _
      // Predicated region
      $region49: #{texd_forward.9} parent=43 // pred_check
        %p2104 = pneg %p219
      $region50: #{texd_forward.9} parent=43 // pred_check_branch
        %2106 = sbr.rel (%p2104) target = $region52
      $region51: #{texd_forward.9} parent=43 // pred_region
        %s2107 = smul.u32 4, %s28
      $region52: #{texd_forward.9} parent=43 // pred_fallthru
        _
    $region44: #{texd_forward.9} parent=5 // pred_fallthru
      _
    %p2108 = scmp.le.s32.totalorder 2, %s18
    // Predicated region
    $region53: #{texd_forward.9} parent=5 // pred_check
      %p2109 = pneg %p2108
    $region54: #{texd_forward.9} parent=5 // pred_check_branch
      %2111 = sbr.rel (%p2109) target = $region56
    $region55: #{texd_forward.9} parent=5 // pred_region
      %s2112 = ssub.s32 %s18, 2
      // Predicated region
      $region57: #{texd_forward.9} parent=55 // pred_check
        %p2113 = pneg %p197
      $region58: #{texd_forward.9} parent=55 // pred_check_branch
        %2115 = sbr.rel (%p2113) target = $region60
      $region59: #{texd_forward.9} parent=55 // pred_region
        %s2116 = smul.u32 4, %s30
        %p2117 = scmp.lt.s32.totalorder %s29, 1
        %s2118 = scalar_select %p2117, %s29, 1
        %p2119 = scmp.lt.s32.totalorder %s2116, 3
        %s2120 = scalar_select %p2119, %s2116, 3
        %s2121 = smul.addr %s2118, 4
        %s2122 = sadd.s32 %s2120, %s2121
        %s2123 = smul.addr %s2122, 8
        %s2124 = scalar_lea.vmem %s6, %s2123
      $region60: #{texd_forward.9} parent=55 // pred_fallthru
        _
      // Predicated region
      $region61: #{texd_forward.9} parent=55 // pred_check
        %p2125 = pneg %p225
      $region62: #{texd_forward.9} parent=55 // pred_check_branch
        %2127 = sbr.rel (%p2125) target = $region64
      $region63: #{texd_forward.9} parent=55 // pred_region
        %s2128 = smul.u32 4, %s30
        %p2129 = scmp.lt.s32.totalorder %s29, 1
        %s2130 = scalar_select %p2129, %s29, 1
        %p2131 = scmp.lt.s32.totalorder %s2128, 3
        %s2132 = scalar_select %p2131, %s2128, 3
        %s2133 = smul.addr %s2130, 4
        %s2134 = sadd.s32 %s2132, %s2133
        %s2135 = smul.addr %s2134, 8
        %s2136 = scalar_lea.vmem %s7, %s2135
      $region64: #{texd_forward.9} parent=55 // pred_fallthru
        _
    $region56: #{texd_forward.9} parent=5 // pred_fallthru
      _
  $region6: #{texd_forward.9} parent=0 // loop_footer
    %s22 = sadd.s32 1, %s18
  $region7: #{texd_forward.9} parent=0 // loop_footer_branch
    %17 = sbr.rel target = $region3
  $region8: #{texd_forward.9} parent=0 // loop_exit
    _

</llo_original>
